<compile_context>
chip_gen: v5e
topology: v5e:2x2
jax: 0.10.0
libtpu: 0.0.40
codegen_flags: <defaults>
</compile_context>

<pallas_src>
import functools

import jax
import jax.numpy as jnp
from jax.experimental import pallas as pl
from jax.experimental.pallas import tpu as pltpu


def _fused_cnn_kernel(x_ref, w1_ref, b1_ref, w2_ref, b2_ref, w3_ref, b3_ref,
                      w4_ref, b4_ref, o_ref, p1_ref, p2_ref, p3_ref, *, H, W):
    """Whole BaselineCNN forward for one image, fully VMEM-resident.

    x_ref : (1, H, W, C0)       f32   input image (NHWC)
    wN_ref: (9*Cin_N, Cout_N)   bf16  im2col-flattened 3x3 weights (N=1..3)
    bN_ref: (1, Cout_N)         f32   biases
    w4_ref: (1, 128)            f32   1x1-conv weight row
    b4_ref: (1, 1)              f32
    o_ref : (1, 1, H*W)         f32   layer-4 output, lane-dense
    pN_ref: (H+2, W+2, Cin_N)   bf16  zero-padded activation scratch (VMEM)
    """
    HW = H * W

    def fill_padded(pad_ref, interior_hwc):
        # Zero the halo (and interior), then overwrite the interior. Cheap in
        # VMEM; replaces the per-layer jnp.pad HBM round-trip of the old code.
        pad_ref[...] = jnp.zeros_like(pad_ref)
        pad_ref[1:H + 1, 1:W + 1, :] = interior_hwc.astype(pad_ref.dtype)

    def conv3x3_relu(pad_ref, w_ref, b_ref):
        cin = pad_ref.shape[-1]
        # im2col: build one (HW, 9*Cin) bf16 slab, then a single big-K matmul.
        cols = []
        for ky in range(3):                      # static -> fully unrolled
            for kx in range(3):
                win = pad_ref[ky:ky + H, kx:kx + W, :]      # (H, W, Cin) bf16
                cols.append(win.reshape(HW, cin))
        slab = jnp.concatenate(cols, axis=-1)               # (HW, 9*Cin) bf16
        acc = jnp.dot(slab, w_ref[...],
                      preferred_element_type=jnp.float32)   # (HW, Cout) f32
        acc = acc + b_ref[...]                               # f32 bias  (VPU)
        return jnp.maximum(acc, 0.0)                         # f32 ReLU  (VPU)

    # ---- layer 1: C0 -> 32 ----
    fill_padded(p1_ref, x_ref[0])
    a1 = conv3x3_relu(p1_ref, w1_ref, b1_ref)                # (HW, 32)
    # ---- layer 2: 32 -> 64 ----
    fill_padded(p2_ref, a1.reshape(H, W, a1.shape[-1]))
    a2 = conv3x3_relu(p2_ref, w2_ref, b2_ref)                # (HW, 64)
    # ---- layer 3: 64 -> 128 ----
    fill_padded(p3_ref, a2.reshape(H, W, a2.shape[-1]))
    a3 = conv3x3_relu(p3_ref, w3_ref, b3_ref)                # (HW, 128)
    # ---- layer 4: 1x1 conv, Cout=1, fused lane-dense epilogue ----
    # Transposed dot (1,128)@(128,HW) instead of (HW,128)@(128,1): keeps the
    # stored output lane-dense (1, HW) and avoids masked partial stores.
    y = jnp.dot(w4_ref[...], jnp.transpose(a3),
                preferred_element_type=jnp.float32)          # (1, HW) f32
    y = y + b4_ref[...]                                      # (1, HW) + (1, 1)
    o_ref[0] = y.astype(o_ref.dtype)


def baseline_cnn_pallas(x_nchw, params):
    """Forward pass matching BaselineCNN.forward (input/output in NCHW)."""
    N, C0, H, W = x_nchw.shape
    (w1, b1), (w2, b2), (w3, b3), (w4, b4) = params
    HW = H * W

    # Kernel-ready parameter forms (tiny, folded by XLA):
    #   3x3 HWIO weights -> (9*Cin, Cout) bf16 im2col matrices; row order is
    #   (ky, kx, cin), matching the slab built inside the kernel.
    #   1x1 weight -> (1, 128) f32 row (valid because Cout == 1).
    w1m = w1.reshape(-1, w1.shape[-1]).astype(jnp.bfloat16)
    w2m = w2.reshape(-1, w2.shape[-1]).astype(jnp.bfloat16)
    w3m = w3.reshape(-1, w3.shape[-1]).astype(jnp.bfloat16)
    w4r = w4.reshape(1, -1).astype(jnp.float32)
    b1r = b1.reshape(1, -1).astype(jnp.float32)
    b2r = b2.reshape(1, -1).astype(jnp.float32)
    b3r = b3.reshape(1, -1).astype(jnp.float32)
    b4r = b4.reshape(1, 1).astype(jnp.float32)

    # Single cheap layout change at the boundary (~4 KiB here). The kernel's
    # lane-dense (1, H*W) output maps back to NCHW with a reshape only, so the
    # old output transpose is gone.
    x_nhwc = jnp.transpose(x_nchw, (0, 2, 3, 1))

    kernel = functools.partial(_fused_cnn_kernel, H=H, W=W)

    out_flat = pl.pallas_call(
        kernel,
        out_shape=jax.ShapeDtypeStruct((N, 1, HW), jnp.float32),
        grid_spec=pltpu.PrefetchScalarGridSpec(
            num_scalar_prefetch=0,
            grid=(N,),                 # batch axis; sharded across TCs on v7x
            in_specs=[
                pl.BlockSpec((1, H, W, C0), lambda n: (n, 0, 0, 0)),
                pl.BlockSpec(w1m.shape, lambda n: (0, 0)),
                pl.BlockSpec(b1r.shape, lambda n: (0, 0)),
                pl.BlockSpec(w2m.shape, lambda n: (0, 0)),
                pl.BlockSpec(b2r.shape, lambda n: (0, 0)),
                pl.BlockSpec(w3m.shape, lambda n: (0, 0)),
                pl.BlockSpec(b3r.shape, lambda n: (0, 0)),
                pl.BlockSpec(w4r.shape, lambda n: (0, 0)),
                pl.BlockSpec(b4r.shape, lambda n: (0, 0)),
            ],
            out_specs=pl.BlockSpec((1, 1, HW), lambda n: (n, 0, 0)),
            scratch_shapes=[
                pltpu.VMEM((H + 2, W + 2, C0), jnp.bfloat16),
                pltpu.VMEM((H + 2, W + 2, 32), jnp.bfloat16),
                pltpu.VMEM((H + 2, W + 2, 64), jnp.bfloat16),
            ],
        ),
        # Everything (weights + padded activations + slabs) fits easily in the
        # default scoped VMEM at these shapes, incl. v7x's 64 MiB.
        # TODO(synk): add spatial row tiling + vmem_limit_bytes if this kernel
        # is reused at much larger H/W/C.
        compiler_params=pltpu.CompilerParams(
            dimension_semantics=("parallel",)),
    )(x_nhwc, w1m, b1r, w2m, b2r, w3m, b3r, w4r, b4r)

    return out_flat.reshape(N, 1, H, W)


def init_params(key, in_channels):
    """Deterministic synthetic parameters matching BaselineCNN's shapes.

    Generated directly in HWIO (KH, KW, Cin, Cout) with Conv2d-style uniform
    init; the wrapper converts to the kernel-ready im2col forms.
    """
    specs = [
        (3, 3, in_channels, 32),
        (3, 3, 32, 64),
        (3, 3, 64, 128),
        (1, 1, 128, 1),
    ]
    params = []
    for i, (kh, kw, cin, cout) in enumerate(specs):
        kw_key, kb_key = jax.random.split(jax.random.fold_in(key, i))
        fan_in = kh * kw * cin
        scale = 1.0 / jnp.sqrt(jnp.float32(fan_in))
        w = jax.random.uniform(kw_key, (kh, kw, cin, cout), jnp.float32,
                               minval=-scale, maxval=scale)
        bias = jax.random.uniform(kb_key, (cout,), jnp.float32,
                                  minval=-scale, maxval=scale)
        params.append((w, bias))
    return params


def _conv_ref(x, w, b, *, same_pad, relu, bf16_operands):
    dn = jax.lax.conv_dimension_numbers(x.shape, w.shape,
                                        ("NHWC", "HWIO", "NHWC"))
    if bf16_operands:
        x = x.astype(jnp.bfloat16)
        w = w.astype(jnp.bfloat16)
    y = jax.lax.conv_general_dilated(
        x, w, window_strides=(1, 1),
        padding="SAME" if same_pad else "VALID",
        dimension_numbers=dn,
        preferred_element_type=jnp.float32,
        precision=jax.lax.Precision.HIGHEST)
    y = y + b[None, None, None, :].astype(jnp.float32)
    return jnp.maximum(y, 0.0) if relu else y


def baseline_cnn_reference(x_nchw, params, *, match_kernel_precision=False):
    """Pure-JAX reference (lax conv). With match_kernel_precision=True the 3x3
    convs use bf16 operands + f32 accumulation, mirroring the kernel."""
    x = jnp.transpose(x_nchw, (0, 2, 3, 1)).astype(jnp.float32)
    (w1, b1), (w2, b2), (w3, b3), (w4, b4) = params
    m = match_kernel_precision
    x = _conv_ref(x, w1, b1, same_pad=True, relu=True, bf16_operands=m)
    x = _conv_ref(x, w2, b2, same_pad=True, relu=True, bf16_operands=m)
    x = _conv_ref(x, w3, b3, same_pad=True, relu=True, bf16_operands=m)
    x = _conv_ref(x, w4, b4, same_pad=False, relu=False, bf16_operands=False)
    return jnp.transpose(x, (0, 3, 1, 2))


if __name__ == "__main__":
    key = jax.random.PRNGKey(0)
    x_key, p_key = jax.random.split(key)

    # Small shapes consistent with the module: N=2, C_in=4, H=W=16 (NCHW).
    in_channels = 4
    x = jax.random.normal(x_key, (2, in_channels, 16, 16), jnp.float32)
    params = init_params(p_key, in_channels)

    fwd = jax.jit(baseline_cnn_pallas)
    out = jax.block_until_ready(fwd(x, params))
    assert out.shape == (2, 1, 16, 16), out.shape

    # Tight check against a reference with kernel-matched precision
    # (bf16 MXU operands, f32 accumulation/epilogue).
    ref_bf16 = jax.block_until_ready(
        baseline_cnn_reference(x, params, match_kernel_precision=True))
    assert jnp.allclose(out, ref_bf16, rtol=5e-3, atol=5e-3), (
        float(jnp.max(jnp.abs(out - ref_bf16))))

    # Loose sanity check against the full-f32 reference (covers bf16 rounding).
    ref_f32 = jax.block_until_ready(
        baseline_cnn_reference(x, params, match_kernel_precision=False))
    assert jnp.allclose(out, ref_f32, rtol=5e-2, atol=5e-2), (
        float(jnp.max(jnp.abs(out - ref_f32))))

    print("KERNEL_OK")
</pallas_src>

<mosaic_0001>
module attributes {stable_mosaic.version = 11 : i64} {
  func.func @_fused_cnn_kernel(%arg0: i32, %arg1: memref<1x16x16x4xf32, #tpu.memory_space<vmem>>, %arg2: memref<36x32xbf16, #tpu.memory_space<vmem>>, %arg3: memref<1x32xf32, #tpu.memory_space<vmem>>, %arg4: memref<288x64xbf16, #tpu.memory_space<vmem>>, %arg5: memref<1x64xf32, #tpu.memory_space<vmem>>, %arg6: memref<576x128xbf16, #tpu.memory_space<vmem>>, %arg7: memref<1x128xf32, #tpu.memory_space<vmem>>, %arg8: memref<1x128xf32, #tpu.memory_space<vmem>>, %arg9: memref<1x1xf32, #tpu.memory_space<vmem>>, %arg10: memref<1x1x256xf32, #tpu.memory_space<vmem>>, %arg11: memref<18x18x4xbf16, #tpu.memory_space<vmem>>, %arg12: memref<18x18x32xbf16, #tpu.memory_space<vmem>>, %arg13: memref<18x18x64xbf16, #tpu.memory_space<vmem>>) attributes {dimension_semantics = [#tpu.dimension_semantics<parallel>], iteration_bounds = array<i64: 2>, scalar_prefetch = 0 : i64, scratch_operands = 3 : i64, tpu.core_type = #tpu.core_type<tc>, window_params = [{transform_indices = @transform_0, window_bounds = array<i64: 1, 16, 16, 4>}, {pipeline_mode = #tpu.pipeline_mode<synchronous>, transform_indices = @transform_1, window_bounds = array<i64: 36, 32>}, {pipeline_mode = #tpu.pipeline_mode<synchronous>, transform_indices = @transform_2, window_bounds = array<i64: 1, 32>}, {pipeline_mode = #tpu.pipeline_mode<synchronous>, transform_indices = @transform_3, window_bounds = array<i64: 288, 64>}, {pipeline_mode = #tpu.pipeline_mode<synchronous>, transform_indices = @transform_4, window_bounds = array<i64: 1, 64>}, {pipeline_mode = #tpu.pipeline_mode<synchronous>, transform_indices = @transform_5, window_bounds = array<i64: 576, 128>}, {pipeline_mode = #tpu.pipeline_mode<synchronous>, transform_indices = @transform_6, window_bounds = array<i64: 1, 128>}, {pipeline_mode = #tpu.pipeline_mode<synchronous>, transform_indices = @transform_7, window_bounds = array<i64: 1, 128>}, {pipeline_mode = #tpu.pipeline_mode<synchronous>, transform_indices = @transform_8, window_bounds = array<i64: 1, 1>}, {transform_indices = @transform_9, window_bounds = array<i64: 1, 1, 256>}]} {
    %c0 = arith.constant 0 : index
    %c0_0 = arith.constant 0 : index
    %c0_1 = arith.constant 0 : index
    %c0_2 = arith.constant 0 : index
    %0 = vector.load %arg1[%c0, %c0_0, %c0_1, %c0_2] : memref<1x16x16x4xf32, #tpu.memory_space<vmem>>, vector<1x16x16x4xf32>
    %1 = vector.shape_cast %0 : vector<1x16x16x4xf32> to vector<16x16x4xf32>
    %cst = arith.constant 0.000000e+00 : bf16
    %2 = vector.broadcast %cst : bf16 to vector<18x18x4xbf16>
    %c0_3 = arith.constant 0 : index
    %c0_4 = arith.constant 0 : index
    %c0_5 = arith.constant 0 : index
    %3 = vector.load %arg11[%c0_3, %c0_4, %c0_5] : memref<18x18x4xbf16, #tpu.memory_space<vmem>>, vector<18x18x4xbf16>
    tpu.vector_store %arg11[%c0_3, %c0_4, %c0_5], %2 {strides = array<i32>} : memref<18x18x4xbf16, #tpu.memory_space<vmem>>, vector<18x18x4xbf16>,
    %4 = arith.truncf %1 : vector<16x16x4xf32> to vector<16x16x4xbf16>
    %c1 = arith.constant 1 : index
    %c1_6 = arith.constant 1 : index
    %c0_7 = arith.constant 0 : index
    %5 = vector.load %arg11[%c1, %c1_6, %c0_7] : memref<18x18x4xbf16, #tpu.memory_space<vmem>>, vector<16x16x4xbf16>
    tpu.vector_store %arg11[%c1, %c1_6, %c0_7], %4 {strides = array<i32>} : memref<18x18x4xbf16, #tpu.memory_space<vmem>>, vector<16x16x4xbf16>,
    %c0_8 = arith.constant 0 : index
    %c0_9 = arith.constant 0 : index
    %c0_10 = arith.constant 0 : index
    %6 = vector.load %arg11[%c0_8, %c0_9, %c0_10] : memref<18x18x4xbf16, #tpu.memory_space<vmem>>, vector<16x16x4xbf16>
    %7 = vector.shape_cast %6 : vector<16x16x4xbf16> to vector<256x4xbf16>
    %c0_11 = arith.constant 0 : index
    %c1_12 = arith.constant 1 : index
    %c0_13 = arith.constant 0 : index
    %8 = vector.load %arg11[%c0_11, %c1_12, %c0_13] : memref<18x18x4xbf16, #tpu.memory_space<vmem>>, vector<16x16x4xbf16>
    %9 = vector.shape_cast %8 : vector<16x16x4xbf16> to vector<256x4xbf16>
    %c0_14 = arith.constant 0 : index
    %c2 = arith.constant 2 : index
    %c0_15 = arith.constant 0 : index
    %10 = vector.load %arg11[%c0_14, %c2, %c0_15] : memref<18x18x4xbf16, #tpu.memory_space<vmem>>, vector<16x16x4xbf16>
    %11 = vector.shape_cast %10 : vector<16x16x4xbf16> to vector<256x4xbf16>
    %c1_16 = arith.constant 1 : index
    %c0_17 = arith.constant 0 : index
    %c0_18 = arith.constant 0 : index
    %12 = vector.load %arg11[%c1_16, %c0_17, %c0_18] : memref<18x18x4xbf16, #tpu.memory_space<vmem>>, vector<16x16x4xbf16>
    %13 = vector.shape_cast %12 : vector<16x16x4xbf16> to vector<256x4xbf16>
    %c1_19 = arith.constant 1 : index
    %c1_20 = arith.constant 1 : index
    %c0_21 = arith.constant 0 : index
    %14 = vector.load %arg11[%c1_19, %c1_20, %c0_21] : memref<18x18x4xbf16, #tpu.memory_space<vmem>>, vector<16x16x4xbf16>
    %15 = vector.shape_cast %14 : vector<16x16x4xbf16> to vector<256x4xbf16>
    %c1_22 = arith.constant 1 : index
    %c2_23 = arith.constant 2 : index
    %c0_24 = arith.constant 0 : index
    %16 = vector.load %arg11[%c1_22, %c2_23, %c0_24] : memref<18x18x4xbf16, #tpu.memory_space<vmem>>, vector<16x16x4xbf16>
    %17 = vector.shape_cast %16 : vector<16x16x4xbf16> to vector<256x4xbf16>
    %c2_25 = arith.constant 2 : index
    %c0_26 = arith.constant 0 : index
    %c0_27 = arith.constant 0 : index
    %18 = vector.load %arg11[%c2_25, %c0_26, %c0_27] : memref<18x18x4xbf16, #tpu.memory_space<vmem>>, vector<16x16x4xbf16>
    %19 = vector.shape_cast %18 : vector<16x16x4xbf16> to vector<256x4xbf16>
    %c2_28 = arith.constant 2 : index
    %c1_29 = arith.constant 1 : index
    %c0_30 = arith.constant 0 : index
    %20 = vector.load %arg11[%c2_28, %c1_29, %c0_30] : memref<18x18x4xbf16, #tpu.memory_space<vmem>>, vector<16x16x4xbf16>
    %21 = vector.shape_cast %20 : vector<16x16x4xbf16> to vector<256x4xbf16>
    %c2_31 = arith.constant 2 : index
    %c2_32 = arith.constant 2 : index
    %c0_33 = arith.constant 0 : index
    %22 = vector.load %arg11[%c2_31, %c2_32, %c0_33] : memref<18x18x4xbf16, #tpu.memory_space<vmem>>, vector<16x16x4xbf16>
    %23 = vector.shape_cast %22 : vector<16x16x4xbf16> to vector<256x4xbf16>
    %24 = tpu.concatenate %7, %9, %11, %13, %15, %17, %19, %21, %23 in 1 : vector<256x4xbf16>, vector<256x4xbf16>, vector<256x4xbf16>, vector<256x4xbf16>, vector<256x4xbf16>, vector<256x4xbf16>, vector<256x4xbf16>, vector<256x4xbf16>, vector<256x4xbf16> -> vector<256x36xbf16>
    %c0_34 = arith.constant 0 : index
    %c0_35 = arith.constant 0 : index
    %25 = vector.load %arg2[%c0_34, %c0_35] : memref<36x32xbf16, #tpu.memory_space<vmem>>, vector<36x32xbf16>
    %cst_36 = arith.constant dense<0.000000e+00> : vector<256x32xf32>
    %26 = tpu.matmul %24, %25, %cst_36 {dimension_numbers = #tpu.dot_dimension_numbers<[1], [0], [0], [1], [0, 0, 1, 1], [], []>} : vector<256x36xbf16>, vector<36x32xbf16>, vector<256x32xf32> -> vector<256x32xf32>
    %c0_37 = arith.constant 0 : index
    %c0_38 = arith.constant 0 : index
    %27 = vector.load %arg3[%c0_37, %c0_38] : memref<1x32xf32, #tpu.memory_space<vmem>>, vector<1x32xf32>
    %28 = vector.broadcast %27 : vector<1x32xf32> to vector<256x32xf32>
    %29 = arith.addf %26, %28 : vector<256x32xf32>
    %cst_39 = arith.constant 0.000000e+00 : f32
    %30 = vector.broadcast %cst_39 : f32 to vector<256x32xf32>
    %31 = arith.maximumf %29, %30 : vector<256x32xf32>
    %32 = vector.shape_cast %31 : vector<256x32xf32> to vector<16x16x32xf32>
    %cst_40 = arith.constant 0.000000e+00 : bf16
    %33 = vector.broadcast %cst_40 : bf16 to vector<18x18x32xbf16>
    %c0_41 = arith.constant 0 : index
    %c0_42 = arith.constant 0 : index
    %c0_43 = arith.constant 0 : index
    %34 = vector.load %arg12[%c0_41, %c0_42, %c0_43] : memref<18x18x32xbf16, #tpu.memory_space<vmem>>, vector<18x18x32xbf16>
    tpu.vector_store %arg12[%c0_41, %c0_42, %c0_43], %33 {strides = array<i32>} : memref<18x18x32xbf16, #tpu.memory_space<vmem>>, vector<18x18x32xbf16>,
    %35 = arith.truncf %32 : vector<16x16x32xf32> to vector<16x16x32xbf16>
    %c1_44 = arith.constant 1 : index
    %c1_45 = arith.constant 1 : index
    %c0_46 = arith.constant 0 : index
    %36 = vector.load %arg12[%c1_44, %c1_45, %c0_46] : memref<18x18x32xbf16, #tpu.memory_space<vmem>>, vector<16x16x32xbf16>
    tpu.vector_store %arg12[%c1_44, %c1_45, %c0_46], %35 {strides = array<i32>} : memref<18x18x32xbf16, #tpu.memory_space<vmem>>, vector<16x16x32xbf16>,
    %c0_47 = arith.constant 0 : index
    %c0_48 = arith.constant 0 : index
    %c0_49 = arith.constant 0 : index
    %37 = vector.load %arg12[%c0_47, %c0_48, %c0_49] : memref<18x18x32xbf16, #tpu.memory_space<vmem>>, vector<16x16x32xbf16>
    %38 = vector.shape_cast %37 : vector<16x16x32xbf16> to vector<256x32xbf16>
    %c0_50 = arith.constant 0 : index
    %c1_51 = arith.constant 1 : index
    %c0_52 = arith.constant 0 : index
    %39 = vector.load %arg12[%c0_50, %c1_51, %c0_52] : memref<18x18x32xbf16, #tpu.memory_space<vmem>>, vector<16x16x32xbf16>
    %40 = vector.shape_cast %39 : vector<16x16x32xbf16> to vector<256x32xbf16>
    %c0_53 = arith.constant 0 : index
    %c2_54 = arith.constant 2 : index
    %c0_55 = arith.constant 0 : index
    %41 = vector.load %arg12[%c0_53, %c2_54, %c0_55] : memref<18x18x32xbf16, #tpu.memory_space<vmem>>, vector<16x16x32xbf16>
    %42 = vector.shape_cast %41 : vector<16x16x32xbf16> to vector<256x32xbf16>
    %c1_56 = arith.constant 1 : index
    %c0_57 = arith.constant 0 : index
    %c0_58 = arith.constant 0 : index
    %43 = vector.load %arg12[%c1_56, %c0_57, %c0_58] : memref<18x18x32xbf16, #tpu.memory_space<vmem>>, vector<16x16x32xbf16>
    %44 = vector.shape_cast %43 : vector<16x16x32xbf16> to vector<256x32xbf16>
    %c1_59 = arith.constant 1 : index
    %c1_60 = arith.constant 1 : index
    %c0_61 = arith.constant 0 : index
    %45 = vector.load %arg12[%c1_59, %c1_60, %c0_61] : memref<18x18x32xbf16, #tpu.memory_space<vmem>>, vector<16x16x32xbf16>
    %46 = vector.shape_cast %45 : vector<16x16x32xbf16> to vector<256x32xbf16>
    %c1_62 = arith.constant 1 : index
    %c2_63 = arith.constant 2 : index
    %c0_64 = arith.constant 0 : index
    %47 = vector.load %arg12[%c1_62, %c2_63, %c0_64] : memref<18x18x32xbf16, #tpu.memory_space<vmem>>, vector<16x16x32xbf16>
    %48 = vector.shape_cast %47 : vector<16x16x32xbf16> to vector<256x32xbf16>
    %c2_65 = arith.constant 2 : index
    %c0_66 = arith.constant 0 : index
    %c0_67 = arith.constant 0 : index
    %49 = vector.load %arg12[%c2_65, %c0_66, %c0_67] : memref<18x18x32xbf16, #tpu.memory_space<vmem>>, vector<16x16x32xbf16>
    %50 = vector.shape_cast %49 : vector<16x16x32xbf16> to vector<256x32xbf16>
    %c2_68 = arith.constant 2 : index
    %c1_69 = arith.constant 1 : index
    %c0_70 = arith.constant 0 : index
    %51 = vector.load %arg12[%c2_68, %c1_69, %c0_70] : memref<18x18x32xbf16, #tpu.memory_space<vmem>>, vector<16x16x32xbf16>
    %52 = vector.shape_cast %51 : vector<16x16x32xbf16> to vector<256x32xbf16>
    %c2_71 = arith.constant 2 : index
    %c2_72 = arith.constant 2 : index
    %c0_73 = arith.constant 0 : index
    %53 = vector.load %arg12[%c2_71, %c2_72, %c0_73] : memref<18x18x32xbf16, #tpu.memory_space<vmem>>, vector<16x16x32xbf16>
    %54 = vector.shape_cast %53 : vector<16x16x32xbf16> to vector<256x32xbf16>
    %55 = tpu.concatenate %38, %40, %42, %44, %46, %48, %50, %52, %54 in 1 : vector<256x32xbf16>, vector<256x32xbf16>, vector<256x32xbf16>, vector<256x32xbf16>, vector<256x32xbf16>, vector<256x32xbf16>, vector<256x32xbf16>, vector<256x32xbf16>, vector<256x32xbf16> -> vector<256x288xbf16>
    %c0_74 = arith.constant 0 : index
    %c0_75 = arith.constant 0 : index
    %56 = vector.load %arg4[%c0_74, %c0_75] : memref<288x64xbf16, #tpu.memory_space<vmem>>, vector<288x64xbf16>
    %cst_76 = arith.constant dense<0.000000e+00> : vector<256x64xf32>
    %57 = tpu.matmul %55, %56, %cst_76 {dimension_numbers = #tpu.dot_dimension_numbers<[1], [0], [0], [1], [0, 0, 1, 1], [], []>} : vector<256x288xbf16>, vector<288x64xbf16>, vector<256x64xf32> -> vector<256x64xf32>
    %c0_77 = arith.constant 0 : index
    %c0_78 = arith.constant 0 : index
    %58 = vector.load %arg5[%c0_77, %c0_78] : memref<1x64xf32, #tpu.memory_space<vmem>>, vector<1x64xf32>
    %59 = vector.broadcast %58 : vector<1x64xf32> to vector<256x64xf32>
    %60 = arith.addf %57, %59 : vector<256x64xf32>
    %cst_79 = arith.constant 0.000000e+00 : f32
    %61 = vector.broadcast %cst_79 : f32 to vector<256x64xf32>
    %62 = arith.maximumf %60, %61 : vector<256x64xf32>
    %63 = vector.shape_cast %62 : vector<256x64xf32> to vector<16x16x64xf32>
    %cst_80 = arith.constant 0.000000e+00 : bf16
    %64 = vector.broadcast %cst_80 : bf16 to vector<18x18x64xbf16>
    %c0_81 = arith.constant 0 : index
    %c0_82 = arith.constant 0 : index
    %c0_83 = arith.constant 0 : index
    %65 = vector.load %arg13[%c0_81, %c0_82, %c0_83] : memref<18x18x64xbf16, #tpu.memory_space<vmem>>, vector<18x18x64xbf16>
    tpu.vector_store %arg13[%c0_81, %c0_82, %c0_83], %64 {strides = array<i32>} : memref<18x18x64xbf16, #tpu.memory_space<vmem>>, vector<18x18x64xbf16>,
    %66 = arith.truncf %63 : vector<16x16x64xf32> to vector<16x16x64xbf16>
    %c1_84 = arith.constant 1 : index
    %c1_85 = arith.constant 1 : index
    %c0_86 = arith.constant 0 : index
    %67 = vector.load %arg13[%c1_84, %c1_85, %c0_86] : memref<18x18x64xbf16, #tpu.memory_space<vmem>>, vector<16x16x64xbf16>
    tpu.vector_store %arg13[%c1_84, %c1_85, %c0_86], %66 {strides = array<i32>} : memref<18x18x64xbf16, #tpu.memory_space<vmem>>, vector<16x16x64xbf16>,
    %c0_87 = arith.constant 0 : index
    %c0_88 = arith.constant 0 : index
    %c0_89 = arith.constant 0 : index
    %68 = vector.load %arg13[%c0_87, %c0_88, %c0_89] : memref<18x18x64xbf16, #tpu.memory_space<vmem>>, vector<16x16x64xbf16>
    %69 = vector.shape_cast %68 : vector<16x16x64xbf16> to vector<256x64xbf16>
    %c0_90 = arith.constant 0 : index
    %c1_91 = arith.constant 1 : index
    %c0_92 = arith.constant 0 : index
    %70 = vector.load %arg13[%c0_90, %c1_91, %c0_92] : memref<18x18x64xbf16, #tpu.memory_space<vmem>>, vector<16x16x64xbf16>
    %71 = vector.shape_cast %70 : vector<16x16x64xbf16> to vector<256x64xbf16>
    %c0_93 = arith.constant 0 : index
    %c2_94 = arith.constant 2 : index
    %c0_95 = arith.constant 0 : index
    %72 = vector.load %arg13[%c0_93, %c2_94, %c0_95] : memref<18x18x64xbf16, #tpu.memory_space<vmem>>, vector<16x16x64xbf16>
    %73 = vector.shape_cast %72 : vector<16x16x64xbf16> to vector<256x64xbf16>
    %c1_96 = arith.constant 1 : index
    %c0_97 = arith.constant 0 : index
    %c0_98 = arith.constant 0 : index
    %74 = vector.load %arg13[%c1_96, %c0_97, %c0_98] : memref<18x18x64xbf16, #tpu.memory_space<vmem>>, vector<16x16x64xbf16>
    %75 = vector.shape_cast %74 : vector<16x16x64xbf16> to vector<256x64xbf16>
    %c1_99 = arith.constant 1 : index
    %c1_100 = arith.constant 1 : index
    %c0_101 = arith.constant 0 : index
    %76 = vector.load %arg13[%c1_99, %c1_100, %c0_101] : memref<18x18x64xbf16, #tpu.memory_space<vmem>>, vector<16x16x64xbf16>
    %77 = vector.shape_cast %76 : vector<16x16x64xbf16> to vector<256x64xbf16>
    %c1_102 = arith.constant 1 : index
    %c2_103 = arith.constant 2 : index
    %c0_104 = arith.constant 0 : index
    %78 = vector.load %arg13[%c1_102, %c2_103, %c0_104] : memref<18x18x64xbf16, #tpu.memory_space<vmem>>, vector<16x16x64xbf16>
    %79 = vector.shape_cast %78 : vector<16x16x64xbf16> to vector<256x64xbf16>
    %c2_105 = arith.constant 2 : index
    %c0_106 = arith.constant 0 : index
    %c0_107 = arith.constant 0 : index
    %80 = vector.load %arg13[%c2_105, %c0_106, %c0_107] : memref<18x18x64xbf16, #tpu.memory_space<vmem>>, vector<16x16x64xbf16>
    %81 = vector.shape_cast %80 : vector<16x16x64xbf16> to vector<256x64xbf16>
    %c2_108 = arith.constant 2 : index
    %c1_109 = arith.constant 1 : index
    %c0_110 = arith.constant 0 : index
    %82 = vector.load %arg13[%c2_108, %c1_109, %c0_110] : memref<18x18x64xbf16, #tpu.memory_space<vmem>>, vector<16x16x64xbf16>
    %83 = vector.shape_cast %82 : vector<16x16x64xbf16> to vector<256x64xbf16>
    %c2_111 = arith.constant 2 : index
    %c2_112 = arith.constant 2 : index
    %c0_113 = arith.constant 0 : index
    %84 = vector.load %arg13[%c2_111, %c2_112, %c0_113] : memref<18x18x64xbf16, #tpu.memory_space<vmem>>, vector<16x16x64xbf16>
    %85 = vector.shape_cast %84 : vector<16x16x64xbf16> to vector<256x64xbf16>
    %86 = tpu.concatenate %69, %71, %73, %75, %77, %79, %81, %83, %85 in 1 : vector<256x64xbf16>, vector<256x64xbf16>, vector<256x64xbf16>, vector<256x64xbf16>, vector<256x64xbf16>, vector<256x64xbf16>, vector<256x64xbf16>, vector<256x64xbf16>, vector<256x64xbf16> -> vector<256x576xbf16>
    %c0_114 = arith.constant 0 : index
    %c0_115 = arith.constant 0 : index
    %87 = vector.load %arg6[%c0_114, %c0_115] : memref<576x128xbf16, #tpu.memory_space<vmem>>, vector<576x128xbf16>
    %cst_116 = arith.constant dense<0.000000e+00> : vector<256x128xf32>
    %88 = tpu.matmul %86, %87, %cst_116 {dimension_numbers = #tpu.dot_dimension_numbers<[1], [0], [0], [1], [0, 0, 1, 1], [], []>} : vector<256x576xbf16>, vector<576x128xbf16>, vector<256x128xf32> -> vector<256x128xf32>
    %c0_117 = arith.constant 0 : index
    %c0_118 = arith.constant 0 : index
    %89 = vector.load %arg7[%c0_117, %c0_118] : memref<1x128xf32, #tpu.memory_space<vmem>>, vector<1x128xf32>
    %90 = vector.broadcast %89 : vector<1x128xf32> to vector<256x128xf32>
    %91 = arith.addf %88, %90 : vector<256x128xf32>
    %cst_119 = arith.constant 0.000000e+00 : f32
    %92 = vector.broadcast %cst_119 : f32 to vector<256x128xf32>
    %93 = arith.maximumf %91, %92 : vector<256x128xf32>
    %c0_120 = arith.constant 0 : index
    %c0_121 = arith.constant 0 : index
    %94 = vector.load %arg8[%c0_120, %c0_121] : memref<1x128xf32, #tpu.memory_space<vmem>>, vector<1x128xf32>
    %95 = tpu.transpose %93, [1, 0] : vector<256x128xf32> -> vector<128x256xf32>
    %cst_122 = arith.constant dense<0.000000e+00> : vector<1x256xf32>
    %96 = tpu.matmul %94, %95, %cst_122 {dimension_numbers = #tpu.dot_dimension_numbers<[1], [0], [0], [1], [0, 0, 1, 1], [], []>} : vector<1x128xf32>, vector<128x256xf32>, vector<1x256xf32> -> vector<1x256xf32>
    %c0_123 = arith.constant 0 : index
    %c0_124 = arith.constant 0 : index
    %97 = vector.load %arg9[%c0_123, %c0_124] : memref<1x1xf32, #tpu.memory_space<vmem>>, vector<1x1xf32>
    %98 = vector.broadcast %97 : vector<1x1xf32> to vector<1x256xf32>
    %99 = arith.addf %96, %98 : vector<1x256xf32>
    %c0_125 = arith.constant 0 : index
    %c0_126 = arith.constant 0 : index
    %c0_127 = arith.constant 0 : index
    %100 = vector.load %arg10[%c0_125, %c0_126, %c0_127] : memref<1x1x256xf32, #tpu.memory_space<vmem>>, vector<1x1x256xf32>
    %101 = vector.shape_cast %100 : vector<1x1x256xf32> to vector<1x256xf32>
    %102 = vector.shape_cast %99 : vector<1x256xf32> to vector<1x1x256xf32>
    tpu.vector_store %arg10[%c0_125, %c0_126, %c0_127], %102 {strides = array<i32>} : memref<1x1x256xf32, #tpu.memory_space<vmem>>, vector<1x1x256xf32>,
    return
  }
  func.func @transform_0(%arg0: i32) -> (i32, i32, i32, i32) {
    %c0_i32 = arith.constant 0 : i32
    %c0_i32_0 = arith.constant 0 : i32
    %c0_i32_1 = arith.constant 0 : i32
    %c0_i32_2 = arith.constant 0 : i32
    return %arg0, %c0_i32, %c0_i32_0, %c0_i32_1 : i32, i32, i32, i32
  }
  func.func @transform_1(%arg0: i32) -> (i32, i32) {
    %c0_i32 = arith.constant 0 : i32
    %c0_i32_0 = arith.constant 0 : i32
    %c0_i32_1 = arith.constant 0 : i32
    return %c0_i32, %c0_i32_0 : i32, i32
  }
  func.func @transform_2(%arg0: i32) -> (i32, i32) {
    %c0_i32 = arith.constant 0 : i32
    %c0_i32_0 = arith.constant 0 : i32
    %c0_i32_1 = arith.constant 0 : i32
    return %c0_i32, %c0_i32_0 : i32, i32
  }
  func.func @transform_3(%arg0: i32) -> (i32, i32) {
    %c0_i32 = arith.constant 0 : i32
    %c0_i32_0 = arith.constant 0 : i32
    %c0_i32_1 = arith.constant 0 : i32
    return %c0_i32, %c0_i32_0 : i32, i32
  }
  func.func @transform_4(%arg0: i32) -> (i32, i32) {
    %c0_i32 = arith.constant 0 : i32
    %c0_i32_0 = arith.constant 0 : i32
    %c0_i32_1 = arith.constant 0 : i32
    return %c0_i32, %c0_i32_0 : i32, i32
  }
  func.func @transform_5(%arg0: i32) -> (i32, i32) {
    %c0_i32 = arith.constant 0 : i32
    %c0_i32_0 = arith.constant 0 : i32
    %c0_i32_1 = arith.constant 0 : i32
    return %c0_i32, %c0_i32_0 : i32, i32
  }
  func.func @transform_6(%arg0: i32) -> (i32, i32) {
    %c0_i32 = arith.constant 0 : i32
    %c0_i32_0 = arith.constant 0 : i32
    %c0_i32_1 = arith.constant 0 : i32
    return %c0_i32, %c0_i32_0 : i32, i32
  }
  func.func @transform_7(%arg0: i32) -> (i32, i32) {
    %c0_i32 = arith.constant 0 : i32
    %c0_i32_0 = arith.constant 0 : i32
    %c0_i32_1 = arith.constant 0 : i32
    return %c0_i32, %c0_i32_0 : i32, i32
  }
  func.func @transform_8(%arg0: i32) -> (i32, i32) {
    %c0_i32 = arith.constant 0 : i32
    %c0_i32_0 = arith.constant 0 : i32
    %c0_i32_1 = arith.constant 0 : i32
    return %c0_i32, %c0_i32_0 : i32, i32
  }
  func.func @transform_9(%arg0: i32) -> (i32, i32, i32) {
    %c0_i32 = arith.constant 0 : i32
    %c0_i32_0 = arith.constant 0 : i32
    %c0_i32_1 = arith.constant 0 : i32
    return %arg0, %c0_i32, %c0_i32_0 : i32, i32, i32
  }
}

</mosaic_0001>

<llo_original>
// kernel: baseline_cnn_pallas.1
$region0: #{baseline_cnn_pallas.1}
  #allocation0 [shape = 'u32[]', space=smem, size = 0x4, offset = 0x4, fixed_abs, tag = 'smem constant byte address 0x4 - core index']
  #allocation1 [shape = 'u32[72,128]{1,0:T(1,128)}', space=vmem, size = 0x9000, scoped, tag = 'internal scratch']
  #allocation2 [shape = 'bf16[18,18,4]{2,1,0:T(8,128)(2,1)}', space=vmem, size = 0x1b000, scoped, tag = 'scratch operand']
  #allocation3 [shape = 'bf16[18,18,32]{2,1,0:T(8,128)(2,1)}', space=vmem, size = 0x1b000, scoped, tag = 'scratch operand']
  #allocation4 [shape = 'bf16[18,18,64]{2,1,0:T(8,128)(2,1)}', space=vmem, size = 0x1b000, scoped, tag = 'scratch operand']
  #allocation5 [shape = 'f32[1,1]{1,0:T(1,128)S(1)}', space=vmem, size = 0x200, scoped, tag = 'scoped memory for baseline_cnn_pallas.1']
  %s0 = inlined_call_operand.vmem [shape: f32[2,16,16,4], index: 0, kind: input, shape index: {}]
  %s1 = inlined_call_operand.vmem [shape: bf16[36,32], index: 1, kind: input, shape index: {}]
  %s2 = inlined_call_operand.vmem [shape: f32[1,32], index: 2, kind: input, shape index: {}]
  %s3 = inlined_call_operand.vmem [shape: bf16[288,64], index: 3, kind: input, shape index: {}]
  %s4 = inlined_call_operand.vmem [shape: f32[1,64], index: 4, kind: input, shape index: {}]
  %s5 = inlined_call_operand.vmem [shape: bf16[576,128], index: 5, kind: input, shape index: {}]
  %s6 = inlined_call_operand.vmem [shape: f32[1,128], index: 6, kind: input, shape index: {}]
  %s7 = inlined_call_operand.vmem [shape: f32[1,128], index: 7, kind: input, shape index: {}]
  %s8 = inlined_call_operand.<no memory space> [shape: f32[1,1], index: 8, kind: input, shape index: {}]
  %s9 = inlined_call_operand.vmem [shape: f32[2,1,256], index: 9, kind: output, shape index: {}]
  %s10 = sld [smem:[#allocation0]]
  $region69: #{baseline_cnn_pallas.1} parent=0
    _
  %s12 = ssub.s32 1, %s10
  %s13 = scalar_select 0, %s12, %s10
  %v14 = vstv %s8
  %15 = vst [vmem:[#allocation5] sm:$0x1] %v14
  loop: start=0, step=1, limit=4
  $region2: #{baseline_cnn_pallas.1} parent=0 // loop_pre_header
    _
  $region3: #{baseline_cnn_pallas.1} parent=0 // loop_header
    %s17 = sphi 0, %s21
    %p18 = scmp.ge.s32.totalorder %s17, 4
    %s27 = sphi 0, %s29
    %s30 = sphi 0, %s27
    %s31 = sphi 0, %s30
    %s47 = sphi 0, %s31
    %s51 = sphi 0, %s51
    %s53 = sphi 0, %s51
    %s54 = sphi 0, %s53
    %s68 = sphi 0, %s54
    %s72 = sphi 0, %s72
    %s74 = sphi 0, %s72
    %s75 = sphi 0, %s74
    %s89 = sphi 0, %s75
    %s93 = sphi 0, %s93
    %s95 = sphi 0, %s93
    %s96 = sphi 0, %s95
    %s110 = sphi 0, %s96
    %s114 = sphi 0, %s114
    %s116 = sphi 0, %s114
    %s117 = sphi 0, %s116
    %s131 = sphi 0, %s117
    %s135 = sphi 0, %s135
    %s137 = sphi 0, %s135
    %s138 = sphi 0, %s137
    %s152 = sphi 0, %s138
    %s156 = sphi 0, %s156
    %s158 = sphi 0, %s156
    %s159 = sphi 0, %s158
    %s173 = sphi 0, %s159
    %s177 = sphi 0, %s177
    %s179 = sphi 0, %s177
    %s180 = sphi 0, %s179
    %s194 = sphi 0, %s180
    %s198 = sphi 0, %s198
    %s200 = sphi 0, %s198
    %s201 = sphi 0, %s200
    %s215 = sphi 0, %s201
    %s221 = sphi 0, %s223
    %s224 = sphi 0, %s221
    %s225 = sphi 0, %s224
    %s241 = sphi 0, %s225
  $region4: #{baseline_cnn_pallas.1} parent=0 // loop_header_branch
    %20 = sbr.rel (%p18) target = $region8
  $region5: #{baseline_cnn_pallas.1} parent=0 // loop_body
    %s22 = ssub.s32 %s17, 1
    %s23 = ssub.s32 %s17, 2
    %s24 = sadd.s32 %s17, 1
    %s25 = ssub.s32 %s17, %s24
    %p26 = scmp.eq.s32.totalorder %s25, 0
    %s28 = sadd.s32 %s27, 1
    %s29 = scalar_select %p26, %s27, %s28
    %p32 = pneg %p26
    %p33 = scmp.eq.s32.totalorder %s17, 1
    %p34 = por %p32, %p33
    %p35 = scmp.ne.s32.totalorder %s27, %s30
    %p36 = scmp.eq.s32.totalorder %s17, 0
    %p37 = por %p35, %p36
    %p38 = scmp.ne.s32.totalorder %s27, %s30
    %p39 = scmp.eq.s32.totalorder %s22, 1
    %p40 = por %p38, %p39
    %p41 = scmp.ne.s32.totalorder %s30, %s31
    %p42 = scmp.eq.s32.totalorder %s22, 0
    %p43 = por %p41, %p42
    %p44 = scmp.ne.s32.totalorder %s30, %s31
    %p45 = scmp.eq.s32.totalorder %s23, 1
    %p46 = por %p44, %p45
    %p48 = scmp.ne.s32.totalorder %s31, %s47
    %p49 = scmp.eq.s32.totalorder %s23, 0
    %p50 = por %p48, %p49
    %s52 = sadd.s32 %s51, 1
    %p55 = scmp.eq.s32.totalorder %s17, 1
    %p56 = scmp.ne.s32.totalorder %s51, %s53
    %p57 = scmp.eq.s32.totalorder %s17, 0
    %p58 = por %p56, %p57
    %p59 = scmp.ne.s32.totalorder %s51, %s53
    %p60 = scmp.eq.s32.totalorder %s22, 1
    %p61 = por %p59, %p60
    %p62 = scmp.ne.s32.totalorder %s53, %s54
    %p63 = scmp.eq.s32.totalorder %s22, 0
    %p64 = por %p62, %p63
    %p65 = scmp.ne.s32.totalorder %s53, %s54
    %p66 = scmp.eq.s32.totalorder %s23, 1
    %p67 = por %p65, %p66
    %p69 = scmp.ne.s32.totalorder %s54, %s68
    %p70 = scmp.eq.s32.totalorder %s23, 0
    %p71 = por %p69, %p70
    %s73 = sadd.s32 %s72, 1
    %p76 = scmp.eq.s32.totalorder %s17, 1
    %p77 = scmp.ne.s32.totalorder %s72, %s74
    %p78 = scmp.eq.s32.totalorder %s17, 0
    %p79 = por %p77, %p78
    %p80 = scmp.ne.s32.totalorder %s72, %s74
    %p81 = scmp.eq.s32.totalorder %s22, 1
    %p82 = por %p80, %p81
    %p83 = scmp.ne.s32.totalorder %s74, %s75
    %p84 = scmp.eq.s32.totalorder %s22, 0
    %p85 = por %p83, %p84
    %p86 = scmp.ne.s32.totalorder %s74, %s75
    %p87 = scmp.eq.s32.totalorder %s23, 1
    %p88 = por %p86, %p87
    %p90 = scmp.ne.s32.totalorder %s75, %s89
    %p91 = scmp.eq.s32.totalorder %s23, 0
    %p92 = por %p90, %p91
    %s94 = sadd.s32 %s93, 1
    %p97 = scmp.eq.s32.totalorder %s17, 1
    %p98 = scmp.ne.s32.totalorder %s93, %s95
    %p99 = scmp.eq.s32.totalorder %s17, 0
    %p100 = por %p98, %p99
    %p101 = scmp.ne.s32.totalorder %s93, %s95
    %p102 = scmp.eq.s32.totalorder %s22, 1
    %p103 = por %p101, %p102
    %p104 = scmp.ne.s32.totalorder %s95, %s96
    %p105 = scmp.eq.s32.totalorder %s22, 0
    %p106 = por %p104, %p105
    %p107 = scmp.ne.s32.totalorder %s95, %s96
    %p108 = scmp.eq.s32.totalorder %s23, 1
    %p109 = por %p107, %p108
    %p111 = scmp.ne.s32.totalorder %s96, %s110
    %p112 = scmp.eq.s32.totalorder %s23, 0
    %p113 = por %p111, %p112
    %s115 = sadd.s32 %s114, 1
    %p118 = scmp.eq.s32.totalorder %s17, 1
    %p119 = scmp.ne.s32.totalorder %s114, %s116
    %p120 = scmp.eq.s32.totalorder %s17, 0
    %p121 = por %p119, %p120
    %p122 = scmp.ne.s32.totalorder %s114, %s116
    %p123 = scmp.eq.s32.totalorder %s22, 1
    %p124 = por %p122, %p123
    %p125 = scmp.ne.s32.totalorder %s116, %s117
    %p126 = scmp.eq.s32.totalorder %s22, 0
    %p127 = por %p125, %p126
    %p128 = scmp.ne.s32.totalorder %s116, %s117
    %p129 = scmp.eq.s32.totalorder %s23, 1
    %p130 = por %p128, %p129
    %p132 = scmp.ne.s32.totalorder %s117, %s131
    %p133 = scmp.eq.s32.totalorder %s23, 0
    %p134 = por %p132, %p133
    %s136 = sadd.s32 %s135, 1
    %p139 = scmp.eq.s32.totalorder %s17, 1
    %p140 = scmp.ne.s32.totalorder %s135, %s137
    %p141 = scmp.eq.s32.totalorder %s17, 0
    %p142 = por %p140, %p141
    %p143 = scmp.ne.s32.totalorder %s135, %s137
    %p144 = scmp.eq.s32.totalorder %s22, 1
    %p145 = por %p143, %p144
    %p146 = scmp.ne.s32.totalorder %s137, %s138
    %p147 = scmp.eq.s32.totalorder %s22, 0
    %p148 = por %p146, %p147
    %p149 = scmp.ne.s32.totalorder %s137, %s138
    %p150 = scmp.eq.s32.totalorder %s23, 1
    %p151 = por %p149, %p150
    %p153 = scmp.ne.s32.totalorder %s138, %s152
    %p154 = scmp.eq.s32.totalorder %s23, 0
    %p155 = por %p153, %p154
    %s157 = sadd.s32 %s156, 1
    %p160 = scmp.eq.s32.totalorder %s17, 1
    %p161 = scmp.ne.s32.totalorder %s156, %s158
    %p162 = scmp.eq.s32.totalorder %s17, 0
    %p163 = por %p161, %p162
    %p164 = scmp.ne.s32.totalorder %s156, %s158
    %p165 = scmp.eq.s32.totalorder %s22, 1
    %p166 = por %p164, %p165
    %p167 = scmp.ne.s32.totalorder %s158, %s159
    %p168 = scmp.eq.s32.totalorder %s22, 0
    %p169 = por %p167, %p168
    %p170 = scmp.ne.s32.totalorder %s158, %s159
    %p171 = scmp.eq.s32.totalorder %s23, 1
    %p172 = por %p170, %p171
    %p174 = scmp.ne.s32.totalorder %s159, %s173
    %p175 = scmp.eq.s32.totalorder %s23, 0
    %p176 = por %p174, %p175
    %s178 = sadd.s32 %s177, 1
    %p181 = scmp.eq.s32.totalorder %s17, 1
    %p182 = scmp.ne.s32.totalorder %s177, %s179
    %p183 = scmp.eq.s32.totalorder %s17, 0
    %p184 = por %p182, %p183
    %p185 = scmp.ne.s32.totalorder %s177, %s179
    %p186 = scmp.eq.s32.totalorder %s22, 1
    %p187 = por %p185, %p186
    %p188 = scmp.ne.s32.totalorder %s179, %s180
    %p189 = scmp.eq.s32.totalorder %s22, 0
    %p190 = por %p188, %p189
    %p191 = scmp.ne.s32.totalorder %s179, %s180
    %p192 = scmp.eq.s32.totalorder %s23, 1
    %p193 = por %p191, %p192
    %p195 = scmp.ne.s32.totalorder %s180, %s194
    %p196 = scmp.eq.s32.totalorder %s23, 0
    %p197 = por %p195, %p196
    %s199 = sadd.s32 %s198, 1
    %p202 = scmp.eq.s32.totalorder %s17, 1
    %p203 = scmp.ne.s32.totalorder %s198, %s200
    %p204 = scmp.eq.s32.totalorder %s17, 0
    %p205 = por %p203, %p204
    %p206 = scmp.ne.s32.totalorder %s198, %s200
    %p207 = scmp.eq.s32.totalorder %s22, 1
    %p208 = por %p206, %p207
    %p209 = scmp.ne.s32.totalorder %s200, %s201
    %p210 = scmp.eq.s32.totalorder %s22, 0
    %p211 = por %p209, %p210
    %p212 = scmp.ne.s32.totalorder %s200, %s201
    %p213 = scmp.eq.s32.totalorder %s23, 1
    %p214 = por %p212, %p213
    %p216 = scmp.ne.s32.totalorder %s201, %s215
    %p217 = scmp.eq.s32.totalorder %s23, 0
    %p218 = por %p216, %p217
    %s219 = ssub.s32 %s17, %s24
    %p220 = scmp.eq.s32.totalorder %s219, 0
    %s222 = sadd.s32 %s221, 1
    %s223 = scalar_select %p220, %s221, %s222
    %p226 = pneg %p220
    %p227 = scmp.eq.s32.totalorder %s17, 1
    %p228 = por %p226, %p227
    %p229 = scmp.ne.s32.totalorder %s221, %s224
    %p230 = scmp.eq.s32.totalorder %s17, 0
    %p231 = por %p229, %p230
    %p232 = scmp.ne.s32.totalorder %s221, %s224
    %p233 = scmp.eq.s32.totalorder %s22, 1
    %p234 = por %p232, %p233
    %p235 = scmp.ne.s32.totalorder %s224, %s225
    %p236 = scmp.eq.s32.totalorder %s22, 0
    %p237 = por %p235, %p236
    %p238 = scmp.ne.s32.totalorder %s224, %s225
    %p239 = scmp.eq.s32.totalorder %s23, 1
    %p240 = por %p238, %p239
    %p242 = scmp.ne.s32.totalorder %s225, %s241
    %p243 = scmp.eq.s32.totalorder %s23, 0
    %p244 = por %p242, %p243
    %p245 = scmp.le.s32.totalorder 1, %s17
    %p246 = scmp.lt.s32.totalorder %s17, 3
    %p247 = pnand %p245, %p246
    %p248 = pneg %p247
    // Predicated region
    $region9: #{baseline_cnn_pallas.1} parent=5 // pred_check
      _
    $region10: #{baseline_cnn_pallas.1} parent=5 // pred_check_branch
      %250 = sbr.rel (%p247) target = $region12
    $region11: #{baseline_cnn_pallas.1} parent=5 // pred_region
      %s251 = ssub.s32 %s17, 1
      // Predicated region
      $region13: #{baseline_cnn_pallas.1} parent=11 // pred_check
        %p252 = pneg %p64
      $region14: #{baseline_cnn_pallas.1} parent=11 // pred_check_branch
        %254 = sbr.rel (%p252) target = $region16
      $region15: #{baseline_cnn_pallas.1} parent=11 // pred_region
        _
      $region16: #{baseline_cnn_pallas.1} parent=11 // pred_fallthru
        _
      // Predicated region
      $region17: #{baseline_cnn_pallas.1} parent=11 // pred_check
        %p255 = pneg %p85
      $region18: #{baseline_cnn_pallas.1} parent=11 // pred_check_branch
        %257 = sbr.rel (%p255) target = $region20
      $region19: #{baseline_cnn_pallas.1} parent=11 // pred_region
        _
      $region20: #{baseline_cnn_pallas.1} parent=11 // pred_fallthru
        _
      // Predicated region
      $region21: #{baseline_cnn_pallas.1} parent=11 // pred_check
        %p258 = pneg %p106
      $region22: #{baseline_cnn_pallas.1} parent=11 // pred_check_branch
        %260 = sbr.rel (%p258) target = $region24
      $region23: #{baseline_cnn_pallas.1} parent=11 // pred_region
        _
      $region24: #{baseline_cnn_pallas.1} parent=11 // pred_fallthru
        _
      // Predicated region
      $region25: #{baseline_cnn_pallas.1} parent=11 // pred_check
        %p261 = pneg %p127
      $region26: #{baseline_cnn_pallas.1} parent=11 // pred_check_branch
        %263 = sbr.rel (%p261) target = $region28
      $region27: #{baseline_cnn_pallas.1} parent=11 // pred_region
        _
      $region28: #{baseline_cnn_pallas.1} parent=11 // pred_fallthru
        _
      // Predicated region
      $region29: #{baseline_cnn_pallas.1} parent=11 // pred_check
        %p264 = pneg %p148
      $region30: #{baseline_cnn_pallas.1} parent=11 // pred_check_branch
        %266 = sbr.rel (%p264) target = $region32
      $region31: #{baseline_cnn_pallas.1} parent=11 // pred_region
        _
      $region32: #{baseline_cnn_pallas.1} parent=11 // pred_fallthru
        _
      // Predicated region
      $region33: #{baseline_cnn_pallas.1} parent=11 // pred_check
        %p267 = pneg %p169
      $region34: #{baseline_cnn_pallas.1} parent=11 // pred_check_branch
        %269 = sbr.rel (%p267) target = $region36
      $region35: #{baseline_cnn_pallas.1} parent=11 // pred_region
        _
      $region36: #{baseline_cnn_pallas.1} parent=11 // pred_fallthru
        _
      // Predicated region
      $region37: #{baseline_cnn_pallas.1} parent=11 // pred_check
        %p270 = pneg %p190
      $region38: #{baseline_cnn_pallas.1} parent=11 // pred_check_branch
        %272 = sbr.rel (%p270) target = $region40
      $region39: #{baseline_cnn_pallas.1} parent=11 // pred_region
        _
      $region40: #{baseline_cnn_pallas.1} parent=11 // pred_fallthru
        _
      // Predicated region
      $region41: #{baseline_cnn_pallas.1} parent=11 // pred_check
        %p273 = pneg %p211
      $region42: #{baseline_cnn_pallas.1} parent=11 // pred_check_branch
        %275 = sbr.rel (%p273) target = $region44
      $region43: #{baseline_cnn_pallas.1} parent=11 // pred_region
        _
      $region44: #{baseline_cnn_pallas.1} parent=11 // pred_fallthru
        _
    $region12: #{baseline_cnn_pallas.1} parent=5 // pred_fallthru
      _
    %p276 = scmp.lt.s32.totalorder %s17, 2
    // Predicated region
    $region45: #{baseline_cnn_pallas.1} parent=5 // pred_check
      %p277 = pneg %p276
    $region46: #{baseline_cnn_pallas.1} parent=5 // pred_check_branch
      %279 = sbr.rel (%p277) target = $region48
    $region47: #{baseline_cnn_pallas.1} parent=5 // pred_region
      // Predicated region
      $region49: #{baseline_cnn_pallas.1} parent=47 // pred_check
        %p280 = pneg %p37
      $region50: #{baseline_cnn_pallas.1} parent=47 // pred_check_branch
        %282 = sbr.rel (%p280) target = $region52
      $region51: #{baseline_cnn_pallas.1} parent=47 // pred_region
        %p283 = scmp.lt.s32.totalorder %s17, 1
        %s284 = scalar_select %p283, %s17, 1
        %s285 = smul.addr %s284, 32
        %s286 = smul.addr %s285, 8
        %s287 = scalar_lea.vmem %s0, %s286
      $region52: #{baseline_cnn_pallas.1} parent=47 // pred_fallthru
        _
    $region48: #{baseline_cnn_pallas.1} parent=5 // pred_fallthru
      _
    %p288 = scmp.le.s32.totalorder 1, %s17
    %p289 = scmp.lt.s32.totalorder %s17, 3
    %p290 = pnand %p288, %p289
    %p291 = pneg %p290
    // Predicated region
    $region53: #{baseline_cnn_pallas.1} parent=5 // pred_check
      _
    $region54: #{baseline_cnn_pallas.1} parent=5 // pred_check_branch
      %293 = sbr.rel (%p290) target = $region56
    $region55: #{baseline_cnn_pallas.1} parent=5 // pred_region
      %s294 = ssub.s32 %s17, 1
      %p295 = scmp.lt.s32.totalorder %s22, 1
      %s296 = scalar_select %p295, %s22, 1
      %s297 = smul.addr %s296, 32
      %s298 = smul.addr %s297, 8
      %s299 = scalar_lea.vmem %s0, %s298
      %p300 = pneg %p43
      %p301 = pneg %p40
      %p302 = pneg %p64
      %p303 = pneg %p61
      %p304 = pneg %p85
      %p305 = pneg %p82
      %p306 = pneg %p106
      %p307 = pneg %p103
      %p308 = pneg %p127
      %p309 = pneg %p124
      %p310 = pneg %p148
      %p311 = pneg %p145
      %p312 = pneg %p169
      %p313 = pneg %p166
      %p314 = pneg %p190
      %p315 = pneg %p187
      %p316 = pneg %p211
      %p317 = pneg %p208
      %p318 = pneg %p237
      %p319 = pneg %p234
      %p320 = scmp.lt.s32.totalorder %s22, 1
      %s321 = scalar_select %p320, %s22, 1
      %s322 = smul.addr %s321, 2
      %s323 = scalar_lea.vmem %s9, %s322
      %p324 = scmp.lt.s32.totalorder %s22, 1
      %s325 = scalar_select %p324, %s22, 1
      %s326 = smul.addr %s325, 32
      %s327 = smul.addr %s326, 8
      %s328 = scalar_lea.vmem %s0, %s327
      %p329 = scmp.lt.s32.totalorder %s22, 1
      %s330 = scalar_select %p329, %s22, 1
      %s331 = smul.addr %s330, 2
      %s332 = scalar_lea.vmem %s9, %s331
      %v334 = vld [vmem:[%s328] sm:$0xff]
      %v335 = vld [vmem:[%s328 + $0x8] sm:$0xff]
      %v336 = vld [vmem:[%s328 + $0x10] sm:$0xff]
      %v337 = vld [vmem:[%s328 + $0x18] sm:$0xff]
      %v338 = vld [vmem:[%s328 + $0x20] sm:$0xff]
      %v339 = vld [vmem:[%s328 + $0x28] sm:$0xff]
      %v340 = vld [vmem:[%s328 + $0x30] sm:$0xff]
      %v341 = vld [vmem:[%s328 + $0x38] sm:$0xff]
      %v342 = vld [vmem:[%s328 + $0x40] sm:$0xff]
      %v343 = vld [vmem:[%s328 + $0x48] sm:$0xff]
      %v344 = vld [vmem:[%s328 + $0x50] sm:$0xff]
      %v345 = vld [vmem:[%s328 + $0x58] sm:$0xff]
      %v346 = vld [vmem:[%s328 + $0x60] sm:$0xff]
      %v347 = vld [vmem:[%s328 + $0x68] sm:$0xff]
      %v348 = vld [vmem:[%s328 + $0x70] sm:$0xff]
      %v349 = vld [vmem:[%s328 + $0x78] sm:$0xff]
      %v350 = vld [vmem:[%s328 + $0x80] sm:$0xff]
      %v351 = vld [vmem:[%s328 + $0x88] sm:$0xff]
      %v352 = vld [vmem:[%s328 + $0x90] sm:$0xff]
      %v353 = vld [vmem:[%s328 + $0x98] sm:$0xff]
      %v354 = vld [vmem:[%s328 + $0xa0] sm:$0xff]
      %v355 = vld [vmem:[%s328 + $0xa8] sm:$0xff]
      %v356 = vld [vmem:[%s328 + $0xb0] sm:$0xff]
      %v357 = vld [vmem:[%s328 + $0xb8] sm:$0xff]
      %v358 = vld [vmem:[%s328 + $0xc0] sm:$0xff]
      %v359 = vld [vmem:[%s328 + $0xc8] sm:$0xff]
      %v360 = vld [vmem:[%s328 + $0xd0] sm:$0xff]
      %v361 = vld [vmem:[%s328 + $0xd8] sm:$0xff]
      %v362 = vld [vmem:[%s328 + $0xe0] sm:$0xff]
      %v363 = vld [vmem:[%s328 + $0xe8] sm:$0xff]
      %v364 = vld [vmem:[%s328 + $0xf0] sm:$0xff]
      %v365 = vld [vmem:[%s328 + $0xf8] sm:$0xff]
      %vm366 = vcmask 27648
      %367 = vst.msk [vmem:[#allocation2] sm:$0xf] %vm366, 0
      %368 = vst.msk [vmem:[#allocation2 + $0x4] sm:$0xf] %vm366, 0
      %vm369 = vcmask 24576
      %370 = vst.msk [vmem:[#allocation2 + $0x8] sm:$0x1] %vm369, 0
      %371 = vst.msk [vmem:[#allocation2 + $0xc] sm:$0xf] %vm366, 0
      %372 = vst.msk [vmem:[#allocation2 + $0x10] sm:$0xf] %vm366, 0
      %373 = vst.msk [vmem:[#allocation2 + $0x14] sm:$0x1] %vm369, 0
      %374 = vst.msk [vmem:[#allocation2 + $0x18] sm:$0xf] %vm366, 0
      %375 = vst.msk [vmem:[#allocation2 + $0x1c] sm:$0xf] %vm366, 0
      %376 = vst.msk [vmem:[#allocation2 + $0x20] sm:$0x1] %vm369, 0
      %377 = vst.msk [vmem:[#allocation2 + $0x24] sm:$0xf] %vm366, 0
      %378 = vst.msk [vmem:[#allocation2 + $0x28] sm:$0xf] %vm366, 0
      %379 = vst.msk [vmem:[#allocation2 + $0x2c] sm:$0x1] %vm369, 0
      %380 = vst.msk [vmem:[#allocation2 + $0x30] sm:$0xf] %vm366, 0
      %381 = vst.msk [vmem:[#allocation2 + $0x34] sm:$0xf] %vm366, 0
      %382 = vst.msk [vmem:[#allocation2 + $0x38] sm:$0x1] %vm369, 0
      %383 = vst.msk [vmem:[#allocation2 + $0x3c] sm:$0xf] %vm366, 0
      %384 = vst.msk [vmem:[#allocation2 + $0x40] sm:$0xf] %vm366, 0
      %385 = vst.msk [vmem:[#allocation2 + $0x44] sm:$0x1] %vm369, 0
      %386 = vst.msk [vmem:[#allocation2 + $0x48] sm:$0xf] %vm366, 0
      %387 = vst.msk [vmem:[#allocation2 + $0x4c] sm:$0xf] %vm366, 0
      %388 = vst.msk [vmem:[#allocation2 + $0x50] sm:$0x1] %vm369, 0
      %389 = vst.msk [vmem:[#allocation2 + $0x54] sm:$0xf] %vm366, 0
      %390 = vst.msk [vmem:[#allocation2 + $0x58] sm:$0xf] %vm366, 0
      %391 = vst.msk [vmem:[#allocation2 + $0x5c] sm:$0x1] %vm369, 0
      %392 = vst.msk [vmem:[#allocation2 + $0x60] sm:$0xf] %vm366, 0
      %393 = vst.msk [vmem:[#allocation2 + $0x64] sm:$0xf] %vm366, 0
      %394 = vst.msk [vmem:[#allocation2 + $0x68] sm:$0x1] %vm369, 0
      %395 = vst.msk [vmem:[#allocation2 + $0x6c] sm:$0xf] %vm366, 0
      %396 = vst.msk [vmem:[#allocation2 + $0x70] sm:$0xf] %vm366, 0
      %397 = vst.msk [vmem:[#allocation2 + $0x74] sm:$0x1] %vm369, 0
      %398 = vst.msk [vmem:[#allocation2 + $0x78] sm:$0xf] %vm366, 0
      %399 = vst.msk [vmem:[#allocation2 + $0x7c] sm:$0xf] %vm366, 0
      %400 = vst.msk [vmem:[#allocation2 + $0x80] sm:$0x1] %vm369, 0
      %401 = vst.msk [vmem:[#allocation2 + $0x84] sm:$0xf] %vm366, 0
      %402 = vst.msk [vmem:[#allocation2 + $0x88] sm:$0xf] %vm366, 0
      %403 = vst.msk [vmem:[#allocation2 + $0x8c] sm:$0x1] %vm369, 0
      %404 = vst.msk [vmem:[#allocation2 + $0x90] sm:$0xf] %vm366, 0
      %405 = vst.msk [vmem:[#allocation2 + $0x94] sm:$0xf] %vm366, 0
      %406 = vst.msk [vmem:[#allocation2 + $0x98] sm:$0x1] %vm369, 0
      %407 = vst.msk [vmem:[#allocation2 + $0x9c] sm:$0xf] %vm366, 0
      %408 = vst.msk [vmem:[#allocation2 + $0xa0] sm:$0xf] %vm366, 0
      %409 = vst.msk [vmem:[#allocation2 + $0xa4] sm:$0x1] %vm369, 0
      %410 = vst.msk [vmem:[#allocation2 + $0xa8] sm:$0xf] %vm366, 0
      %411 = vst.msk [vmem:[#allocation2 + $0xac] sm:$0xf] %vm366, 0
      %412 = vst.msk [vmem:[#allocation2 + $0xb0] sm:$0x1] %vm369, 0
      %413 = vst.msk [vmem:[#allocation2 + $0xb4] sm:$0xf] %vm366, 0
      %414 = vst.msk [vmem:[#allocation2 + $0xb8] sm:$0xf] %vm366, 0
      %415 = vst.msk [vmem:[#allocation2 + $0xbc] sm:$0x1] %vm369, 0
      %416 = vst.msk [vmem:[#allocation2 + $0xc0] sm:$0xf] %vm366, 0
      %417 = vst.msk [vmem:[#allocation2 + $0xc4] sm:$0xf] %vm366, 0
      %418 = vst.msk [vmem:[#allocation2 + $0xc8] sm:$0x1] %vm369, 0
      %419 = vst.msk [vmem:[#allocation2 + $0xcc] sm:$0xf] %vm366, 0
      %420 = vst.msk [vmem:[#allocation2 + $0xd0] sm:$0xf] %vm366, 0
      %421 = vst.msk [vmem:[#allocation2 + $0xd4] sm:$0x1] %vm369, 0
      %v422 = vpack.c.bf16 %v334, %v334
      %v423 = vpack.c.bf16 %v335, %v335
      %v424 = vpack.c.bf16 %v336, %v336
      %v425 = vpack.c.bf16 %v337, %v337
      %v426 = vpack.c.bf16 %v338, %v338
      %v427 = vpack.c.bf16 %v339, %v339
      %v428 = vpack.c.bf16 %v340, %v340
      %v429 = vpack.c.bf16 %v341, %v341
      %v430 = vpack.c.bf16 %v342, %v342
      %v431 = vpack.c.bf16 %v343, %v343
      %v432 = vpack.c.bf16 %v344, %v344
      %v433 = vpack.c.bf16 %v345, %v345
      %v434 = vpack.c.bf16 %v346, %v346
      %v435 = vpack.c.bf16 %v347, %v347
      %v436 = vpack.c.bf16 %v348, %v348
      %v437 = vpack.c.bf16 %v349, %v349
      %v438 = vpack.c.bf16 %v350, %v350
      %v439 = vpack.c.bf16 %v351, %v351
      %v440 = vpack.c.bf16 %v352, %v352
      %v441 = vpack.c.bf16 %v353, %v353
      %v442 = vpack.c.bf16 %v354, %v354
      %v443 = vpack.c.bf16 %v355, %v355
      %v444 = vpack.c.bf16 %v356, %v356
      %v445 = vpack.c.bf16 %v357, %v357
      %v446 = vpack.c.bf16 %v358, %v358
      %v447 = vpack.c.bf16 %v359, %v359
      %v448 = vpack.c.bf16 %v360, %v360
      %v449 = vpack.c.bf16 %v361, %v361
      %v450 = vpack.c.bf16 %v362, %v362
      %v451 = vpack.c.bf16 %v363, %v363
      %v452 = vpack.c.bf16 %v364, %v364
      %v453 = vpack.c.bf16 %v365, %v365
      %vm454 = vsmask.f32 256
      %vm455 = vsmask.f32 4368
      %vm456 = vmor %vm454, %vm455
      %v458 = vshrl.u32 %v422, 16
      %v460 = vrot.slane %v458, 7
      %v461 = vshll.u32 %v422, 16
      %v463 = vor.u32 %v460, %v461
      %v464 = vrot.slane %v460, 4
      %v466 = vshrl.u32 %v423, 16
      %v468 = vrot.slane %v466, 7
      %v469 = vshll.u32 %v423, 16
      %v471 = vor.u32 %v468, %v469
      %v472 = vsel %vm456, %v464, %v471
      %v473 = vrot.slane %v468, 4
      %v475 = vshrl.u32 %v424, 16
      %v477 = vrot.slane %v475, 7
      %v478 = vshll.u32 %v424, 16
      %v480 = vor.u32 %v477, %v478
      %v481 = vrot.slane %v477, 4
      %v483 = vshrl.u32 %v425, 16
      %v485 = vrot.slane %v483, 7
      %v486 = vshll.u32 %v425, 16
      %v488 = vor.u32 %v485, %v486
      %v489 = vsel %vm456, %v481, %v488
      %v490 = vrot.slane %v485, 4
      %v492 = vshrl.u32 %v426, 16
      %v494 = vrot.slane %v492, 7
      %v495 = vshll.u32 %v426, 16
      %v497 = vor.u32 %v494, %v495
      %v498 = vrot.slane %v494, 4
      %v500 = vshrl.u32 %v427, 16
      %v502 = vrot.slane %v500, 7
      %v503 = vshll.u32 %v427, 16
      %v505 = vor.u32 %v502, %v503
      %v506 = vsel %vm456, %v498, %v505
      %v507 = vrot.slane %v502, 4
      %v509 = vshrl.u32 %v428, 16
      %v511 = vrot.slane %v509, 7
      %v512 = vshll.u32 %v428, 16
      %v514 = vor.u32 %v511, %v512
      %v515 = vrot.slane %v511, 4
      %v517 = vshrl.u32 %v429, 16
      %v519 = vrot.slane %v517, 7
      %v520 = vshll.u32 %v429, 16
      %v522 = vor.u32 %v519, %v520
      %v523 = vsel %vm456, %v515, %v522
      %v524 = vrot.slane %v519, 4
      %v526 = vshrl.u32 %v430, 16
      %v528 = vrot.slane %v526, 7
      %v529 = vshll.u32 %v430, 16
      %v531 = vor.u32 %v528, %v529
      %v532 = vrot.slane %v528, 4
      %v534 = vshrl.u32 %v431, 16
      %v536 = vrot.slane %v534, 7
      %v537 = vshll.u32 %v431, 16
      %v539 = vor.u32 %v536, %v537
      %v540 = vsel %vm456, %v532, %v539
      %v541 = vrot.slane %v536, 4
      %v543 = vshrl.u32 %v432, 16
      %v545 = vrot.slane %v543, 7
      %v546 = vshll.u32 %v432, 16
      %v548 = vor.u32 %v545, %v546
      %v549 = vrot.slane %v545, 4
      %v551 = vshrl.u32 %v433, 16
      %v553 = vrot.slane %v551, 7
      %v554 = vshll.u32 %v433, 16
      %v556 = vor.u32 %v553, %v554
      %v557 = vsel %vm456, %v549, %v556
      %v558 = vrot.slane %v553, 4
      %v560 = vshrl.u32 %v434, 16
      %v562 = vrot.slane %v560, 7
      %v563 = vshll.u32 %v434, 16
      %v565 = vor.u32 %v562, %v563
      %v566 = vrot.slane %v562, 4
      %v568 = vshrl.u32 %v435, 16
      %v570 = vrot.slane %v568, 7
      %v571 = vshll.u32 %v435, 16
      %v573 = vor.u32 %v570, %v571
      %v574 = vsel %vm456, %v566, %v573
      %v575 = vrot.slane %v570, 4
      %v577 = vshrl.u32 %v436, 16
      %v579 = vrot.slane %v577, 7
      %v580 = vshll.u32 %v436, 16
      %v582 = vor.u32 %v579, %v580
      %v583 = vrot.slane %v579, 4
      %v585 = vshrl.u32 %v437, 16
      %v587 = vrot.slane %v585, 7
      %v588 = vshll.u32 %v437, 16
      %v590 = vor.u32 %v587, %v588
      %v591 = vsel %vm456, %v583, %v590
      %v592 = vrot.slane %v587, 4
      %v594 = vshrl.u32 %v438, 16
      %v596 = vrot.slane %v594, 7
      %v597 = vshll.u32 %v438, 16
      %v599 = vor.u32 %v596, %v597
      %v600 = vrot.slane %v596, 4
      %v602 = vshrl.u32 %v439, 16
      %v604 = vrot.slane %v602, 7
      %v605 = vshll.u32 %v439, 16
      %v607 = vor.u32 %v604, %v605
      %v608 = vsel %vm456, %v600, %v607
      %v609 = vrot.slane %v604, 4
      %v611 = vshrl.u32 %v440, 16
      %v613 = vrot.slane %v611, 7
      %v614 = vshll.u32 %v440, 16
      %v616 = vor.u32 %v613, %v614
      %v617 = vrot.slane %v613, 4
      %v619 = vshrl.u32 %v441, 16
      %v621 = vrot.slane %v619, 7
      %v622 = vshll.u32 %v441, 16
      %v624 = vor.u32 %v621, %v622
      %v625 = vsel %vm456, %v617, %v624
      %v626 = vrot.slane %v621, 4
      %v628 = vshrl.u32 %v442, 16
      %v630 = vrot.slane %v628, 7
      %v631 = vshll.u32 %v442, 16
      %v633 = vor.u32 %v630, %v631
      %v634 = vrot.slane %v630, 4
      %v636 = vshrl.u32 %v443, 16
      %v638 = vrot.slane %v636, 7
      %v639 = vshll.u32 %v443, 16
      %v641 = vor.u32 %v638, %v639
      %v642 = vsel %vm456, %v634, %v641
      %v643 = vrot.slane %v638, 4
      %v645 = vshrl.u32 %v444, 16
      %v647 = vrot.slane %v645, 7
      %v648 = vshll.u32 %v444, 16
      %v650 = vor.u32 %v647, %v648
      %v651 = vrot.slane %v647, 4
      %v653 = vshrl.u32 %v445, 16
      %v655 = vrot.slane %v653, 7
      %v656 = vshll.u32 %v445, 16
      %v658 = vor.u32 %v655, %v656
      %v659 = vsel %vm456, %v651, %v658
      %v660 = vrot.slane %v655, 4
      %v662 = vshrl.u32 %v446, 16
      %v664 = vrot.slane %v662, 7
      %v665 = vshll.u32 %v446, 16
      %v667 = vor.u32 %v664, %v665
      %v668 = vrot.slane %v664, 4
      %v670 = vshrl.u32 %v447, 16
      %v672 = vrot.slane %v670, 7
      %v673 = vshll.u32 %v447, 16
      %v675 = vor.u32 %v672, %v673
      %v676 = vsel %vm456, %v668, %v675
      %v677 = vrot.slane %v672, 4
      %v679 = vshrl.u32 %v448, 16
      %v681 = vrot.slane %v679, 7
      %v682 = vshll.u32 %v448, 16
      %v684 = vor.u32 %v681, %v682
      %v685 = vrot.slane %v681, 4
      %v687 = vshrl.u32 %v449, 16
      %v689 = vrot.slane %v687, 7
      %v690 = vshll.u32 %v449, 16
      %v692 = vor.u32 %v689, %v690
      %v693 = vsel %vm456, %v685, %v692
      %v694 = vrot.slane %v689, 4
      %v696 = vshrl.u32 %v450, 16
      %v698 = vrot.slane %v696, 7
      %v699 = vshll.u32 %v450, 16
      %v701 = vor.u32 %v698, %v699
      %v702 = vrot.slane %v698, 4
      %v704 = vshrl.u32 %v451, 16
      %v706 = vrot.slane %v704, 7
      %v707 = vshll.u32 %v451, 16
      %v709 = vor.u32 %v706, %v707
      %v710 = vsel %vm456, %v702, %v709
      %v711 = vrot.slane %v706, 4
      %v713 = vshrl.u32 %v452, 16
      %v715 = vrot.slane %v713, 7
      %v716 = vshll.u32 %v452, 16
      %v718 = vor.u32 %v715, %v716
      %v719 = vrot.slane %v715, 4
      %v721 = vshrl.u32 %v453, 16
      %v723 = vrot.slane %v721, 7
      %v724 = vshll.u32 %v453, 16
      %v726 = vor.u32 %v723, %v724
      %v727 = vsel %vm456, %v719, %v726
      %v728 = vrot.slane %v723, 4
      %s777 = scalar_lea.vmem [#allocation2], 12
      %vm778 = vcmask 27648
      %vm779 = vsmask.f32 7938
      %vm780 = vmand %vm778, %vm779
      %v781 = vld [vmem:[%s777] sm:$0xf]
      %v782 = vsel %vm780, %v463, %v781
      %783 = vst [vmem:[%s777] sm:$0xf] %v782
      %784 = vst.msk [vmem:[%s777 + $0x4] sm:$0xf] %vm366, %v472
      %vm785 = vcmask 24576
      %vm786 = vmand %vm785, %vm454
      %v787 = vld [vmem:[%s777 + $0x8] sm:$0x1]
      %v788 = vsel %vm786, %v473, %v787
      %789 = vst [vmem:[%s777 + $0x8] sm:$0x1] %v788
      %v790 = vld [vmem:[%s777 + $0xc] sm:$0xf]
      %v791 = vsel %vm780, %v480, %v790
      %792 = vst [vmem:[%s777 + $0xc] sm:$0xf] %v791
      %793 = vst.msk [vmem:[%s777 + $0x10] sm:$0xf] %vm366, %v489
      %v794 = vld [vmem:[%s777 + $0x14] sm:$0x1]
      %v795 = vsel %vm786, %v490, %v794
      %796 = vst [vmem:[%s777 + $0x14] sm:$0x1] %v795
      %v797 = vld [vmem:[%s777 + $0x18] sm:$0xf]
      %v798 = vsel %vm780, %v497, %v797
      %799 = vst [vmem:[%s777 + $0x18] sm:$0xf] %v798
      %800 = vst.msk [vmem:[%s777 + $0x1c] sm:$0xf] %vm366, %v506
      %v801 = vld [vmem:[%s777 + $0x20] sm:$0x1]
      %v802 = vsel %vm786, %v507, %v801
      %803 = vst [vmem:[%s777 + $0x20] sm:$0x1] %v802
      %v804 = vld [vmem:[%s777 + $0x24] sm:$0xf]
      %v805 = vsel %vm780, %v514, %v804
      %806 = vst [vmem:[%s777 + $0x24] sm:$0xf] %v805
      %807 = vst.msk [vmem:[%s777 + $0x28] sm:$0xf] %vm366, %v523
      %v808 = vld [vmem:[%s777 + $0x2c] sm:$0x1]
      %v809 = vsel %vm786, %v524, %v808
      %810 = vst [vmem:[%s777 + $0x2c] sm:$0x1] %v809
      %v811 = vld [vmem:[%s777 + $0x30] sm:$0xf]
      %v812 = vsel %vm780, %v531, %v811
      %813 = vst [vmem:[%s777 + $0x30] sm:$0xf] %v812
      %814 = vst.msk [vmem:[%s777 + $0x34] sm:$0xf] %vm366, %v540
      %v815 = vld [vmem:[%s777 + $0x38] sm:$0x1]
      %v816 = vsel %vm786, %v541, %v815
      %817 = vst [vmem:[%s777 + $0x38] sm:$0x1] %v816
      %v818 = vld [vmem:[%s777 + $0x3c] sm:$0xf]
      %v819 = vsel %vm780, %v548, %v818
      %820 = vst [vmem:[%s777 + $0x3c] sm:$0xf] %v819
      %821 = vst.msk [vmem:[%s777 + $0x40] sm:$0xf] %vm366, %v557
      %v822 = vld [vmem:[%s777 + $0x44] sm:$0x1]
      %v823 = vsel %vm786, %v558, %v822
      %824 = vst [vmem:[%s777 + $0x44] sm:$0x1] %v823
      %v825 = vld [vmem:[%s777 + $0x48] sm:$0xf]
      %v826 = vsel %vm780, %v565, %v825
      %827 = vst [vmem:[%s777 + $0x48] sm:$0xf] %v826
      %828 = vst.msk [vmem:[%s777 + $0x4c] sm:$0xf] %vm366, %v574
      %v829 = vld [vmem:[%s777 + $0x50] sm:$0x1]
      %v830 = vsel %vm786, %v575, %v829
      %831 = vst [vmem:[%s777 + $0x50] sm:$0x1] %v830
      %v832 = vld [vmem:[%s777 + $0x54] sm:$0xf]
      %v833 = vsel %vm780, %v582, %v832
      %834 = vst [vmem:[%s777 + $0x54] sm:$0xf] %v833
      %835 = vst.msk [vmem:[%s777 + $0x58] sm:$0xf] %vm366, %v591
      %v836 = vld [vmem:[%s777 + $0x5c] sm:$0x1]
      %v837 = vsel %vm786, %v592, %v836
      %838 = vst [vmem:[%s777 + $0x5c] sm:$0x1] %v837
      %v839 = vld [vmem:[%s777 + $0x60] sm:$0xf]
      %v840 = vsel %vm780, %v599, %v839
      %841 = vst [vmem:[%s777 + $0x60] sm:$0xf] %v840
      %842 = vst.msk [vmem:[%s777 + $0x64] sm:$0xf] %vm366, %v608
      %v843 = vld [vmem:[%s777 + $0x68] sm:$0x1]
      %v844 = vsel %vm786, %v609, %v843
      %845 = vst [vmem:[%s777 + $0x68] sm:$0x1] %v844
      %v846 = vld [vmem:[%s777 + $0x6c] sm:$0xf]
      %v847 = vsel %vm780, %v616, %v846
      %848 = vst [vmem:[%s777 + $0x6c] sm:$0xf] %v847
      %849 = vst.msk [vmem:[%s777 + $0x70] sm:$0xf] %vm366, %v625
      %v850 = vld [vmem:[%s777 + $0x74] sm:$0x1]
      %v851 = vsel %vm786, %v626, %v850
      %852 = vst [vmem:[%s777 + $0x74] sm:$0x1] %v851
      %v853 = vld [vmem:[%s777 + $0x78] sm:$0xf]
      %v854 = vsel %vm780, %v633, %v853
      %855 = vst [vmem:[%s777 + $0x78] sm:$0xf] %v854
      %856 = vst.msk [vmem:[%s777 + $0x7c] sm:$0xf] %vm366, %v642
      %v857 = vld [vmem:[%s777 + $0x80] sm:$0x1]
      %v858 = vsel %vm786, %v643, %v857
      %859 = vst [vmem:[%s777 + $0x80] sm:$0x1] %v858
      %v860 = vld [vmem:[%s777 + $0x84] sm:$0xf]
      %v861 = vsel %vm780, %v650, %v860
      %862 = vst [vmem:[%s777 + $0x84] sm:$0xf] %v861
      %863 = vst.msk [vmem:[%s777 + $0x88] sm:$0xf] %vm366, %v659
      %v864 = vld [vmem:[%s777 + $0x8c] sm:$0x1]
      %v865 = vsel %vm786, %v660, %v864
      %866 = vst [vmem:[%s777 + $0x8c] sm:$0x1] %v865
      %v867 = vld [vmem:[%s777 + $0x90] sm:$0xf]
      %v868 = vsel %vm780, %v667, %v867
      %869 = vst [vmem:[%s777 + $0x90] sm:$0xf] %v868
      %870 = vst.msk [vmem:[%s777 + $0x94] sm:$0xf] %vm366, %v676
      %v871 = vld [vmem:[%s777 + $0x98] sm:$0x1]
      %v872 = vsel %vm786, %v677, %v871
      %873 = vst [vmem:[%s777 + $0x98] sm:$0x1] %v872
      %v874 = vld [vmem:[%s777 + $0x9c] sm:$0xf]
      %v875 = vsel %vm780, %v684, %v874
      %876 = vst [vmem:[%s777 + $0x9c] sm:$0xf] %v875
      %877 = vst.msk [vmem:[%s777 + $0xa0] sm:$0xf] %vm366, %v693
      %v878 = vld [vmem:[%s777 + $0xa4] sm:$0x1]
      %v879 = vsel %vm786, %v694, %v878
      %880 = vst [vmem:[%s777 + $0xa4] sm:$0x1] %v879
      %v881 = vld [vmem:[%s777 + $0xa8] sm:$0xf]
      %v882 = vsel %vm780, %v701, %v881
      %883 = vst [vmem:[%s777 + $0xa8] sm:$0xf] %v882
      %884 = vst.msk [vmem:[%s777 + $0xac] sm:$0xf] %vm366, %v710
      %v885 = vld [vmem:[%s777 + $0xb0] sm:$0x1]
      %v886 = vsel %vm786, %v711, %v885
      %887 = vst [vmem:[%s777 + $0xb0] sm:$0x1] %v886
      %v888 = vld [vmem:[%s777 + $0xb4] sm:$0xf]
      %v889 = vsel %vm780, %v718, %v888
      %890 = vst [vmem:[%s777 + $0xb4] sm:$0xf] %v889
      %891 = vst.msk [vmem:[%s777 + $0xb8] sm:$0xf] %vm366, %v727
      %v892 = vld [vmem:[%s777 + $0xbc] sm:$0x1]
      %v893 = vsel %vm786, %v728, %v892
      %894 = vst [vmem:[%s777 + $0xbc] sm:$0x1] %v893
      %v895 = vld [vmem:[#allocation2] sm:$0xf]
      %v896 = vld [vmem:[#allocation2 + $0x4] sm:$0xf]
      %v897 = vld [vmem:[#allocation2 + $0xc] sm:$0xf]
      %v898 = vld [vmem:[#allocation2 + $0x10] sm:$0xf]
      %v899 = vld [vmem:[#allocation2 + $0x18] sm:$0xf]
      %v900 = vld [vmem:[#allocation2 + $0x1c] sm:$0xf]
      %v901 = vld [vmem:[#allocation2 + $0x24] sm:$0xf]
      %v902 = vld [vmem:[#allocation2 + $0x28] sm:$0xf]
      %v903 = vld [vmem:[#allocation2 + $0x30] sm:$0xf]
      %v904 = vld [vmem:[#allocation2 + $0x34] sm:$0xf]
      %v905 = vld [vmem:[#allocation2 + $0x3c] sm:$0xf]
      %v906 = vld [vmem:[#allocation2 + $0x40] sm:$0xf]
      %v907 = vld [vmem:[#allocation2 + $0x48] sm:$0xf]
      %v908 = vld [vmem:[#allocation2 + $0x4c] sm:$0xf]
      %v909 = vld [vmem:[#allocation2 + $0x54] sm:$0xf]
      %v910 = vld [vmem:[#allocation2 + $0x58] sm:$0xf]
      %v911 = vld [vmem:[#allocation2 + $0x60] sm:$0xf]
      %v912 = vld [vmem:[#allocation2 + $0x64] sm:$0xf]
      %v913 = vld [vmem:[#allocation2 + $0x6c] sm:$0xf]
      %v914 = vld [vmem:[#allocation2 + $0x70] sm:$0xf]
      %v915 = vld [vmem:[#allocation2 + $0x78] sm:$0xf]
      %v916 = vld [vmem:[#allocation2 + $0x7c] sm:$0xf]
      %v917 = vld [vmem:[#allocation2 + $0x84] sm:$0xf]
      %v918 = vld [vmem:[#allocation2 + $0x88] sm:$0xf]
      %v919 = vld [vmem:[#allocation2 + $0x90] sm:$0xf]
      %v920 = vld [vmem:[#allocation2 + $0x94] sm:$0xf]
      %v921 = vld [vmem:[#allocation2 + $0x9c] sm:$0xf]
      %v922 = vld [vmem:[#allocation2 + $0xa0] sm:$0xf]
      %v923 = vld [vmem:[#allocation2 + $0xa8] sm:$0xf]
      %v924 = vld [vmem:[#allocation2 + $0xac] sm:$0xf]
      %v925 = vld [vmem:[#allocation2 + $0xb4] sm:$0xf]
      %v926 = vld [vmem:[#allocation2 + $0xb8] sm:$0xf]
      %v927 = vld [vmem:[#allocation2 + $0x8] sm:$0x1]
      %v928 = vld [vmem:[#allocation2 + $0x14] sm:$0x1]
      %v929 = vld [vmem:[#allocation2 + $0x20] sm:$0x1]
      %v930 = vld [vmem:[#allocation2 + $0x2c] sm:$0x1]
      %v931 = vld [vmem:[#allocation2 + $0x38] sm:$0x1]
      %v932 = vld [vmem:[#allocation2 + $0x44] sm:$0x1]
      %v933 = vld [vmem:[#allocation2 + $0x50] sm:$0x1]
      %v934 = vld [vmem:[#allocation2 + $0x5c] sm:$0x1]
      %v935 = vld [vmem:[#allocation2 + $0x68] sm:$0x1]
      %v936 = vld [vmem:[#allocation2 + $0x74] sm:$0x1]
      %v937 = vld [vmem:[#allocation2 + $0x80] sm:$0x1]
      %v938 = vld [vmem:[#allocation2 + $0x8c] sm:$0x1]
      %v939 = vld [vmem:[#allocation2 + $0x98] sm:$0x1]
      %v940 = vld [vmem:[#allocation2 + $0xa4] sm:$0x1]
      %v941 = vld [vmem:[#allocation2 + $0xb0] sm:$0x1]
      %v942 = vld [vmem:[#allocation2 + $0xbc] sm:$0x1]
      %vm943 = vsmask.f32 3328
      %vm944 = vsmask.f32 7440
      %vm945 = vmor %vm943, %vm944
      %v947 = vshrl.u32 %v895, 16
      %v949 = vrot.slane %v947, 4
      %v950 = vshll.u32 %v895, 16
      %v952 = vrot.slane %v950, 5
      %v953 = vor.u32 %v949, %v952
      %v954 = vrot.slane %v953, 4
      %v956 = vshll.u32 %v896, 16
      %v958 = vrot.slane %v956, 5
      %v959 = vsel %vm945, %v954, %v958
      %v960 = vshrl.u32 %v896, 16
      %v962 = vrot.slane %v960, 4
      %v963 = vor.u32 %v962, %v958
      %v964 = vrot.slane %v963, 4
      %v966 = vshll.u32 %v927, 16
      %v968 = vrot.slane %v966, 5
      %v969 = vsel %vm945, %v964, %v968
      %v971 = vshrl.u32 %v897, 16
      %v973 = vrot.slane %v971, 4
      %v974 = vshll.u32 %v897, 16
      %v976 = vrot.slane %v974, 5
      %v977 = vor.u32 %v973, %v976
      %v978 = vrot.slane %v977, 4
      %v980 = vshll.u32 %v898, 16
      %v982 = vrot.slane %v980, 5
      %v983 = vsel %vm945, %v978, %v982
      %v984 = vshrl.u32 %v898, 16
      %v986 = vrot.slane %v984, 4
      %v987 = vor.u32 %v986, %v982
      %v988 = vrot.slane %v987, 4
      %v990 = vshll.u32 %v928, 16
      %v992 = vrot.slane %v990, 5
      %v993 = vsel %vm945, %v988, %v992
      %v995 = vshrl.u32 %v899, 16
      %v997 = vrot.slane %v995, 4
      %v998 = vshll.u32 %v899, 16
      %v1000 = vrot.slane %v998, 5
      %v1001 = vor.u32 %v997, %v1000
      %v1002 = vrot.slane %v1001, 4
      %v1004 = vshll.u32 %v900, 16
      %v1006 = vrot.slane %v1004, 5
      %v1007 = vsel %vm945, %v1002, %v1006
      %v1008 = vshrl.u32 %v900, 16
      %v1010 = vrot.slane %v1008, 4
      %v1011 = vor.u32 %v1010, %v1006
      %v1012 = vrot.slane %v1011, 4
      %v1014 = vshll.u32 %v929, 16
      %v1016 = vrot.slane %v1014, 5
      %v1017 = vsel %vm945, %v1012, %v1016
      %v1019 = vshrl.u32 %v901, 16
      %v1021 = vrot.slane %v1019, 4
      %v1022 = vshll.u32 %v901, 16
      %v1024 = vrot.slane %v1022, 5
      %v1025 = vor.u32 %v1021, %v1024
      %v1026 = vrot.slane %v1025, 4
      %v1028 = vshll.u32 %v902, 16
      %v1030 = vrot.slane %v1028, 5
      %v1031 = vsel %vm945, %v1026, %v1030
      %v1032 = vshrl.u32 %v902, 16
      %v1034 = vrot.slane %v1032, 4
      %v1035 = vor.u32 %v1034, %v1030
      %v1036 = vrot.slane %v1035, 4
      %v1038 = vshll.u32 %v930, 16
      %v1040 = vrot.slane %v1038, 5
      %v1041 = vsel %vm945, %v1036, %v1040
      %v1043 = vshrl.u32 %v903, 16
      %v1045 = vrot.slane %v1043, 4
      %v1046 = vshll.u32 %v903, 16
      %v1048 = vrot.slane %v1046, 5
      %v1049 = vor.u32 %v1045, %v1048
      %v1050 = vrot.slane %v1049, 4
      %v1052 = vshll.u32 %v904, 16
      %v1054 = vrot.slane %v1052, 5
      %v1055 = vsel %vm945, %v1050, %v1054
      %v1056 = vshrl.u32 %v904, 16
      %v1058 = vrot.slane %v1056, 4
      %v1059 = vor.u32 %v1058, %v1054
      %v1060 = vrot.slane %v1059, 4
      %v1062 = vshll.u32 %v931, 16
      %v1064 = vrot.slane %v1062, 5
      %v1065 = vsel %vm945, %v1060, %v1064
      %v1067 = vshrl.u32 %v905, 16
      %v1069 = vrot.slane %v1067, 4
      %v1070 = vshll.u32 %v905, 16
      %v1072 = vrot.slane %v1070, 5
      %v1073 = vor.u32 %v1069, %v1072
      %v1074 = vrot.slane %v1073, 4
      %v1076 = vshll.u32 %v906, 16
      %v1078 = vrot.slane %v1076, 5
      %v1079 = vsel %vm945, %v1074, %v1078
      %v1080 = vshrl.u32 %v906, 16
      %v1082 = vrot.slane %v1080, 4
      %v1083 = vor.u32 %v1082, %v1078
      %v1084 = vrot.slane %v1083, 4
      %v1086 = vshll.u32 %v932, 16
      %v1088 = vrot.slane %v1086, 5
      %v1089 = vsel %vm945, %v1084, %v1088
      %v1091 = vshrl.u32 %v907, 16
      %v1093 = vrot.slane %v1091, 4
      %v1094 = vshll.u32 %v907, 16
      %v1096 = vrot.slane %v1094, 5
      %v1097 = vor.u32 %v1093, %v1096
      %v1098 = vrot.slane %v1097, 4
      %v1100 = vshll.u32 %v908, 16
      %v1102 = vrot.slane %v1100, 5
      %v1103 = vsel %vm945, %v1098, %v1102
      %v1104 = vshrl.u32 %v908, 16
      %v1106 = vrot.slane %v1104, 4
      %v1107 = vor.u32 %v1106, %v1102
      %v1108 = vrot.slane %v1107, 4
      %v1110 = vshll.u32 %v933, 16
      %v1112 = vrot.slane %v1110, 5
      %v1113 = vsel %vm945, %v1108, %v1112
      %v1115 = vshrl.u32 %v909, 16
      %v1117 = vrot.slane %v1115, 4
      %v1118 = vshll.u32 %v909, 16
      %v1120 = vrot.slane %v1118, 5
      %v1121 = vor.u32 %v1117, %v1120
      %v1122 = vrot.slane %v1121, 4
      %v1124 = vshll.u32 %v910, 16
      %v1126 = vrot.slane %v1124, 5
      %v1127 = vsel %vm945, %v1122, %v1126
      %v1128 = vshrl.u32 %v910, 16
      %v1130 = vrot.slane %v1128, 4
      %v1131 = vor.u32 %v1130, %v1126
      %v1132 = vrot.slane %v1131, 4
      %v1134 = vshll.u32 %v934, 16
      %v1136 = vrot.slane %v1134, 5
      %v1137 = vsel %vm945, %v1132, %v1136
      %v1139 = vshrl.u32 %v911, 16
      %v1141 = vrot.slane %v1139, 4
      %v1142 = vshll.u32 %v911, 16
      %v1144 = vrot.slane %v1142, 5
      %v1145 = vor.u32 %v1141, %v1144
      %v1146 = vrot.slane %v1145, 4
      %v1148 = vshll.u32 %v912, 16
      %v1150 = vrot.slane %v1148, 5
      %v1151 = vsel %vm945, %v1146, %v1150
      %v1152 = vshrl.u32 %v912, 16
      %v1154 = vrot.slane %v1152, 4
      %v1155 = vor.u32 %v1154, %v1150
      %v1156 = vrot.slane %v1155, 4
      %v1158 = vshll.u32 %v935, 16
      %v1160 = vrot.slane %v1158, 5
      %v1161 = vsel %vm945, %v1156, %v1160
      %v1163 = vshrl.u32 %v913, 16
      %v1165 = vrot.slane %v1163, 4
      %v1166 = vshll.u32 %v913, 16
      %v1168 = vrot.slane %v1166, 5
      %v1169 = vor.u32 %v1165, %v1168
      %v1170 = vrot.slane %v1169, 4
      %v1172 = vshll.u32 %v914, 16
      %v1174 = vrot.slane %v1172, 5
      %v1175 = vsel %vm945, %v1170, %v1174
      %v1176 = vshrl.u32 %v914, 16
      %v1178 = vrot.slane %v1176, 4
      %v1179 = vor.u32 %v1178, %v1174
      %v1180 = vrot.slane %v1179, 4
      %v1182 = vshll.u32 %v936, 16
      %v1184 = vrot.slane %v1182, 5
      %v1185 = vsel %vm945, %v1180, %v1184
      %v1187 = vshrl.u32 %v915, 16
      %v1189 = vrot.slane %v1187, 4
      %v1190 = vshll.u32 %v915, 16
      %v1192 = vrot.slane %v1190, 5
      %v1193 = vor.u32 %v1189, %v1192
      %v1194 = vrot.slane %v1193, 4
      %v1196 = vshll.u32 %v916, 16
      %v1198 = vrot.slane %v1196, 5
      %v1199 = vsel %vm945, %v1194, %v1198
      %v1200 = vshrl.u32 %v916, 16
      %v1202 = vrot.slane %v1200, 4
      %v1203 = vor.u32 %v1202, %v1198
      %v1204 = vrot.slane %v1203, 4
      %v1206 = vshll.u32 %v937, 16
      %v1208 = vrot.slane %v1206, 5
      %v1209 = vsel %vm945, %v1204, %v1208
      %v1211 = vshrl.u32 %v917, 16
      %v1213 = vrot.slane %v1211, 4
      %v1214 = vshll.u32 %v917, 16
      %v1216 = vrot.slane %v1214, 5
      %v1217 = vor.u32 %v1213, %v1216
      %v1218 = vrot.slane %v1217, 4
      %v1220 = vshll.u32 %v918, 16
      %v1222 = vrot.slane %v1220, 5
      %v1223 = vsel %vm945, %v1218, %v1222
      %v1224 = vshrl.u32 %v918, 16
      %v1226 = vrot.slane %v1224, 4
      %v1227 = vor.u32 %v1226, %v1222
      %v1228 = vrot.slane %v1227, 4
      %v1230 = vshll.u32 %v938, 16
      %v1232 = vrot.slane %v1230, 5
      %v1233 = vsel %vm945, %v1228, %v1232
      %v1235 = vshrl.u32 %v919, 16
      %v1237 = vrot.slane %v1235, 4
      %v1238 = vshll.u32 %v919, 16
      %v1240 = vrot.slane %v1238, 5
      %v1241 = vor.u32 %v1237, %v1240
      %v1242 = vrot.slane %v1241, 4
      %v1244 = vshll.u32 %v920, 16
      %v1246 = vrot.slane %v1244, 5
      %v1247 = vsel %vm945, %v1242, %v1246
      %v1248 = vshrl.u32 %v920, 16
      %v1250 = vrot.slane %v1248, 4
      %v1251 = vor.u32 %v1250, %v1246
      %v1252 = vrot.slane %v1251, 4
      %v1254 = vshll.u32 %v939, 16
      %v1256 = vrot.slane %v1254, 5
      %v1257 = vsel %vm945, %v1252, %v1256
      %v1259 = vshrl.u32 %v921, 16
      %v1261 = vrot.slane %v1259, 4
      %v1262 = vshll.u32 %v921, 16
      %v1264 = vrot.slane %v1262, 5
      %v1265 = vor.u32 %v1261, %v1264
      %v1266 = vrot.slane %v1265, 4
      %v1268 = vshll.u32 %v922, 16
      %v1270 = vrot.slane %v1268, 5
      %v1271 = vsel %vm945, %v1266, %v1270
      %v1272 = vshrl.u32 %v922, 16
      %v1274 = vrot.slane %v1272, 4
      %v1275 = vor.u32 %v1274, %v1270
      %v1276 = vrot.slane %v1275, 4
      %v1278 = vshll.u32 %v940, 16
      %v1280 = vrot.slane %v1278, 5
      %v1281 = vsel %vm945, %v1276, %v1280
      %v1283 = vshrl.u32 %v923, 16
      %v1285 = vrot.slane %v1283, 4
      %v1286 = vshll.u32 %v923, 16
      %v1288 = vrot.slane %v1286, 5
      %v1289 = vor.u32 %v1285, %v1288
      %v1290 = vrot.slane %v1289, 4
      %v1292 = vshll.u32 %v924, 16
      %v1294 = vrot.slane %v1292, 5
      %v1295 = vsel %vm945, %v1290, %v1294
      %v1296 = vshrl.u32 %v924, 16
      %v1298 = vrot.slane %v1296, 4
      %v1299 = vor.u32 %v1298, %v1294
      %v1300 = vrot.slane %v1299, 4
      %v1302 = vshll.u32 %v941, 16
      %v1304 = vrot.slane %v1302, 5
      %v1305 = vsel %vm945, %v1300, %v1304
      %v1307 = vshrl.u32 %v925, 16
      %v1309 = vrot.slane %v1307, 4
      %v1310 = vshll.u32 %v925, 16
      %v1312 = vrot.slane %v1310, 5
      %v1313 = vor.u32 %v1309, %v1312
      %v1314 = vrot.slane %v1313, 4
      %v1316 = vshll.u32 %v926, 16
      %v1318 = vrot.slane %v1316, 5
      %v1319 = vsel %vm945, %v1314, %v1318
      %v1320 = vshrl.u32 %v926, 16
      %v1322 = vrot.slane %v1320, 4
      %v1323 = vor.u32 %v1322, %v1318
      %v1324 = vrot.slane %v1323, 4
      %v1326 = vshll.u32 %v942, 16
      %v1328 = vrot.slane %v1326, 5
      %v1329 = vsel %vm945, %v1324, %v1328
      %v1330 = vld [vmem:[#allocation2] sm:$0xe]
      %v1331 = vld [vmem:[#allocation2 + $0xc] sm:$0xe]
      %v1332 = vld [vmem:[#allocation2 + $0x18] sm:$0xe]
      %v1333 = vld [vmem:[#allocation2 + $0x24] sm:$0xe]
      %v1334 = vld [vmem:[#allocation2 + $0x30] sm:$0xe]
      %v1335 = vld [vmem:[#allocation2 + $0x3c] sm:$0xe]
      %v1336 = vld [vmem:[#allocation2 + $0x48] sm:$0xe]
      %v1337 = vld [vmem:[#allocation2 + $0x54] sm:$0xe]
      %v1338 = vld [vmem:[#allocation2 + $0x60] sm:$0xe]
      %v1339 = vld [vmem:[#allocation2 + $0x6c] sm:$0xe]
      %v1340 = vld [vmem:[#allocation2 + $0x78] sm:$0xe]
      %v1341 = vld [vmem:[#allocation2 + $0x84] sm:$0xe]
      %v1342 = vld [vmem:[#allocation2 + $0x90] sm:$0xe]
      %v1343 = vld [vmem:[#allocation2 + $0x9c] sm:$0xe]
      %v1344 = vld [vmem:[#allocation2 + $0xa8] sm:$0xe]
      %v1345 = vld [vmem:[#allocation2 + $0xb4] sm:$0xe]
      %vm1394 = vcmask 1042432
      %vm1395 = vcmask 1046532
      %vm1396 = vmor %vm1394, %vm1395
      %v1397 = vrot.slane %v1330, 5
      %v1398 = vrot.slane %v1397, 4
      %v1399 = vrot.slane %v896, 5
      %v1400 = vsel %vm1396, %v1398, %v1399
      %v1401 = vrot.slane %v1399, 4
      %v1402 = vrot.slane %v927, 5
      %v1403 = vsel %vm1396, %v1401, %v1402
      %v1404 = vrot.slane %v1331, 5
      %v1405 = vrot.slane %v1404, 4
      %v1406 = vrot.slane %v898, 5
      %v1407 = vsel %vm1396, %v1405, %v1406
      %v1408 = vrot.slane %v1406, 4
      %v1409 = vrot.slane %v928, 5
      %v1410 = vsel %vm1396, %v1408, %v1409
      %v1411 = vrot.slane %v1332, 5
      %v1412 = vrot.slane %v1411, 4
      %v1413 = vrot.slane %v900, 5
      %v1414 = vsel %vm1396, %v1412, %v1413
      %v1415 = vrot.slane %v1413, 4
      %v1416 = vrot.slane %v929, 5
      %v1417 = vsel %vm1396, %v1415, %v1416
      %v1418 = vrot.slane %v1333, 5
      %v1419 = vrot.slane %v1418, 4
      %v1420 = vrot.slane %v902, 5
      %v1421 = vsel %vm1396, %v1419, %v1420
      %v1422 = vrot.slane %v1420, 4
      %v1423 = vrot.slane %v930, 5
      %v1424 = vsel %vm1396, %v1422, %v1423
      %v1425 = vrot.slane %v1334, 5
      %v1426 = vrot.slane %v1425, 4
      %v1427 = vrot.slane %v904, 5
      %v1428 = vsel %vm1396, %v1426, %v1427
      %v1429 = vrot.slane %v1427, 4
      %v1430 = vrot.slane %v931, 5
      %v1431 = vsel %vm1396, %v1429, %v1430
      %v1432 = vrot.slane %v1335, 5
      %v1433 = vrot.slane %v1432, 4
      %v1434 = vrot.slane %v906, 5
      %v1435 = vsel %vm1396, %v1433, %v1434
      %v1436 = vrot.slane %v1434, 4
      %v1437 = vrot.slane %v932, 5
      %v1438 = vsel %vm1396, %v1436, %v1437
      %v1439 = vrot.slane %v1336, 5
      %v1440 = vrot.slane %v1439, 4
      %v1441 = vrot.slane %v908, 5
      %v1442 = vsel %vm1396, %v1440, %v1441
      %v1443 = vrot.slane %v1441, 4
      %v1444 = vrot.slane %v933, 5
      %v1445 = vsel %vm1396, %v1443, %v1444
      %v1446 = vrot.slane %v1337, 5
      %v1447 = vrot.slane %v1446, 4
      %v1448 = vrot.slane %v910, 5
      %v1449 = vsel %vm1396, %v1447, %v1448
      %v1450 = vrot.slane %v1448, 4
      %v1451 = vrot.slane %v934, 5
      %v1452 = vsel %vm1396, %v1450, %v1451
      %v1453 = vrot.slane %v1338, 5
      %v1454 = vrot.slane %v1453, 4
      %v1455 = vrot.slane %v912, 5
      %v1456 = vsel %vm1396, %v1454, %v1455
      %v1457 = vrot.slane %v1455, 4
      %v1458 = vrot.slane %v935, 5
      %v1459 = vsel %vm1396, %v1457, %v1458
      %v1460 = vrot.slane %v1339, 5
      %v1461 = vrot.slane %v1460, 4
      %v1462 = vrot.slane %v914, 5
      %v1463 = vsel %vm1396, %v1461, %v1462
      %v1464 = vrot.slane %v1462, 4
      %v1465 = vrot.slane %v936, 5
      %v1466 = vsel %vm1396, %v1464, %v1465
      %v1467 = vrot.slane %v1340, 5
      %v1468 = vrot.slane %v1467, 4
      %v1469 = vrot.slane %v916, 5
      %v1470 = vsel %vm1396, %v1468, %v1469
      %v1471 = vrot.slane %v1469, 4
      %v1472 = vrot.slane %v937, 5
      %v1473 = vsel %vm1396, %v1471, %v1472
      %v1474 = vrot.slane %v1341, 5
      %v1475 = vrot.slane %v1474, 4
      %v1476 = vrot.slane %v918, 5
      %v1477 = vsel %vm1396, %v1475, %v1476
      %v1478 = vrot.slane %v1476, 4
      %v1479 = vrot.slane %v938, 5
      %v1480 = vsel %vm1396, %v1478, %v1479
      %v1481 = vrot.slane %v1342, 5
      %v1482 = vrot.slane %v1481, 4
      %v1483 = vrot.slane %v920, 5
      %v1484 = vsel %vm1396, %v1482, %v1483
      %v1485 = vrot.slane %v1483, 4
      %v1486 = vrot.slane %v939, 5
      %v1487 = vsel %vm1396, %v1485, %v1486
      %v1488 = vrot.slane %v1343, 5
      %v1489 = vrot.slane %v1488, 4
      %v1490 = vrot.slane %v922, 5
      %v1491 = vsel %vm1396, %v1489, %v1490
      %v1492 = vrot.slane %v1490, 4
      %v1493 = vrot.slane %v940, 5
      %v1494 = vsel %vm1396, %v1492, %v1493
      %v1495 = vrot.slane %v1344, 5
      %v1496 = vrot.slane %v1495, 4
      %v1497 = vrot.slane %v924, 5
      %v1498 = vsel %vm1396, %v1496, %v1497
      %v1499 = vrot.slane %v1497, 4
      %v1500 = vrot.slane %v941, 5
      %v1501 = vsel %vm1396, %v1499, %v1500
      %v1502 = vrot.slane %v1345, 5
      %v1503 = vrot.slane %v1502, 4
      %v1504 = vrot.slane %v926, 5
      %v1505 = vsel %vm1396, %v1503, %v1504
      %v1506 = vrot.slane %v1504, 4
      %v1507 = vrot.slane %v942, 5
      %v1508 = vsel %vm1396, %v1506, %v1507
      %v1509 = vld [vmem:[%s777] sm:$0xf]
      %v1510 = vld [vmem:[%s777 + $0x4] sm:$0xf]
      %v1511 = vld [vmem:[%s777 + $0xc] sm:$0xf]
      %v1512 = vld [vmem:[%s777 + $0x10] sm:$0xf]
      %v1513 = vld [vmem:[%s777 + $0x18] sm:$0xf]
      %v1514 = vld [vmem:[%s777 + $0x1c] sm:$0xf]
      %v1515 = vld [vmem:[%s777 + $0x24] sm:$0xf]
      %v1516 = vld [vmem:[%s777 + $0x28] sm:$0xf]
      %v1517 = vld [vmem:[%s777 + $0x30] sm:$0xf]
      %v1518 = vld [vmem:[%s777 + $0x34] sm:$0xf]
      %v1519 = vld [vmem:[%s777 + $0x3c] sm:$0xf]
      %v1520 = vld [vmem:[%s777 + $0x40] sm:$0xf]
      %v1521 = vld [vmem:[%s777 + $0x48] sm:$0xf]
      %v1522 = vld [vmem:[%s777 + $0x4c] sm:$0xf]
      %v1523 = vld [vmem:[%s777 + $0x54] sm:$0xf]
      %v1524 = vld [vmem:[%s777 + $0x58] sm:$0xf]
      %v1525 = vld [vmem:[%s777 + $0x60] sm:$0xf]
      %v1526 = vld [vmem:[%s777 + $0x64] sm:$0xf]
      %v1527 = vld [vmem:[%s777 + $0x6c] sm:$0xf]
      %v1528 = vld [vmem:[%s777 + $0x70] sm:$0xf]
      %v1529 = vld [vmem:[%s777 + $0x78] sm:$0xf]
      %v1530 = vld [vmem:[%s777 + $0x7c] sm:$0xf]
      %v1531 = vld [vmem:[%s777 + $0x84] sm:$0xf]
      %v1532 = vld [vmem:[%s777 + $0x88] sm:$0xf]
      %v1533 = vld [vmem:[%s777 + $0x90] sm:$0xf]
      %v1534 = vld [vmem:[%s777 + $0x94] sm:$0xf]
      %v1535 = vld [vmem:[%s777 + $0x9c] sm:$0xf]
      %v1536 = vld [vmem:[%s777 + $0xa0] sm:$0xf]
      %v1537 = vld [vmem:[%s777 + $0xa8] sm:$0xf]
      %v1538 = vld [vmem:[%s777 + $0xac] sm:$0xf]
      %v1539 = vld [vmem:[%s777 + $0xb4] sm:$0xf]
      %v1540 = vld [vmem:[%s777 + $0xb8] sm:$0xf]
      %v1541 = vld [vmem:[%s777 + $0x8] sm:$0x1]
      %v1542 = vld [vmem:[%s777 + $0x14] sm:$0x1]
      %v1543 = vld [vmem:[%s777 + $0x20] sm:$0x1]
      %v1544 = vld [vmem:[%s777 + $0x2c] sm:$0x1]
      %v1545 = vld [vmem:[%s777 + $0x38] sm:$0x1]
      %v1546 = vld [vmem:[%s777 + $0x44] sm:$0x1]
      %v1547 = vld [vmem:[%s777 + $0x50] sm:$0x1]
      %v1548 = vld [vmem:[%s777 + $0x5c] sm:$0x1]
      %v1549 = vld [vmem:[%s777 + $0x68] sm:$0x1]
      %v1550 = vld [vmem:[%s777 + $0x74] sm:$0x1]
      %v1551 = vld [vmem:[%s777 + $0x80] sm:$0x1]
      %v1552 = vld [vmem:[%s777 + $0x8c] sm:$0x1]
      %v1553 = vld [vmem:[%s777 + $0x98] sm:$0x1]
      %v1554 = vld [vmem:[%s777 + $0xa4] sm:$0x1]
      %v1555 = vld [vmem:[%s777 + $0xb0] sm:$0x1]
      %v1556 = vld [vmem:[%s777 + $0xbc] sm:$0x1]
      %v1558 = vshrl.u32 %v1509, 16
      %v1560 = vrot.slane %v1558, 4
      %v1561 = vshll.u32 %v1509, 16
      %v1563 = vrot.slane %v1561, 5
      %v1564 = vor.u32 %v1560, %v1563
      %v1565 = vrot.slane %v1564, 4
      %v1567 = vshll.u32 %v1510, 16
      %v1569 = vrot.slane %v1567, 5
      %v1570 = vsel %vm945, %v1565, %v1569
      %v1571 = vshrl.u32 %v1510, 16
      %v1573 = vrot.slane %v1571, 4
      %v1574 = vor.u32 %v1573, %v1569
      %v1575 = vrot.slane %v1574, 4
      %v1577 = vshll.u32 %v1541, 16
      %v1579 = vrot.slane %v1577, 5
      %v1580 = vsel %vm945, %v1575, %v1579
      %v1582 = vshrl.u32 %v1511, 16
      %v1584 = vrot.slane %v1582, 4
      %v1585 = vshll.u32 %v1511, 16
      %v1587 = vrot.slane %v1585, 5
      %v1588 = vor.u32 %v1584, %v1587
      %v1589 = vrot.slane %v1588, 4
      %v1591 = vshll.u32 %v1512, 16
      %v1593 = vrot.slane %v1591, 5
      %v1594 = vsel %vm945, %v1589, %v1593
      %v1595 = vshrl.u32 %v1512, 16
      %v1597 = vrot.slane %v1595, 4
      %v1598 = vor.u32 %v1597, %v1593
      %v1599 = vrot.slane %v1598, 4
      %v1601 = vshll.u32 %v1542, 16
      %v1603 = vrot.slane %v1601, 5
      %v1604 = vsel %vm945, %v1599, %v1603
      %v1606 = vshrl.u32 %v1513, 16
      %v1608 = vrot.slane %v1606, 4
      %v1609 = vshll.u32 %v1513, 16
      %v1611 = vrot.slane %v1609, 5
      %v1612 = vor.u32 %v1608, %v1611
      %v1613 = vrot.slane %v1612, 4
      %v1615 = vshll.u32 %v1514, 16
      %v1617 = vrot.slane %v1615, 5
      %v1618 = vsel %vm945, %v1613, %v1617
      %v1619 = vshrl.u32 %v1514, 16
      %v1621 = vrot.slane %v1619, 4
      %v1622 = vor.u32 %v1621, %v1617
      %v1623 = vrot.slane %v1622, 4
      %v1625 = vshll.u32 %v1543, 16
      %v1627 = vrot.slane %v1625, 5
      %v1628 = vsel %vm945, %v1623, %v1627
      %v1630 = vshrl.u32 %v1515, 16
      %v1632 = vrot.slane %v1630, 4
      %v1633 = vshll.u32 %v1515, 16
      %v1635 = vrot.slane %v1633, 5
      %v1636 = vor.u32 %v1632, %v1635
      %v1637 = vrot.slane %v1636, 4
      %v1639 = vshll.u32 %v1516, 16
      %v1641 = vrot.slane %v1639, 5
      %v1642 = vsel %vm945, %v1637, %v1641
      %v1643 = vshrl.u32 %v1516, 16
      %v1645 = vrot.slane %v1643, 4
      %v1646 = vor.u32 %v1645, %v1641
      %v1647 = vrot.slane %v1646, 4
      %v1649 = vshll.u32 %v1544, 16
      %v1651 = vrot.slane %v1649, 5
      %v1652 = vsel %vm945, %v1647, %v1651
      %v1654 = vshrl.u32 %v1517, 16
      %v1656 = vrot.slane %v1654, 4
      %v1657 = vshll.u32 %v1517, 16
      %v1659 = vrot.slane %v1657, 5
      %v1660 = vor.u32 %v1656, %v1659
      %v1661 = vrot.slane %v1660, 4
      %v1663 = vshll.u32 %v1518, 16
      %v1665 = vrot.slane %v1663, 5
      %v1666 = vsel %vm945, %v1661, %v1665
      %v1667 = vshrl.u32 %v1518, 16
      %v1669 = vrot.slane %v1667, 4
      %v1670 = vor.u32 %v1669, %v1665
      %v1671 = vrot.slane %v1670, 4
      %v1673 = vshll.u32 %v1545, 16
      %v1675 = vrot.slane %v1673, 5
      %v1676 = vsel %vm945, %v1671, %v1675
      %v1678 = vshrl.u32 %v1519, 16
      %v1680 = vrot.slane %v1678, 4
      %v1681 = vshll.u32 %v1519, 16
      %v1683 = vrot.slane %v1681, 5
      %v1684 = vor.u32 %v1680, %v1683
      %v1685 = vrot.slane %v1684, 4
      %v1687 = vshll.u32 %v1520, 16
      %v1689 = vrot.slane %v1687, 5
      %v1690 = vsel %vm945, %v1685, %v1689
      %v1691 = vshrl.u32 %v1520, 16
      %v1693 = vrot.slane %v1691, 4
      %v1694 = vor.u32 %v1693, %v1689
      %v1695 = vrot.slane %v1694, 4
      %v1697 = vshll.u32 %v1546, 16
      %v1699 = vrot.slane %v1697, 5
      %v1700 = vsel %vm945, %v1695, %v1699
      %v1702 = vshrl.u32 %v1521, 16
      %v1704 = vrot.slane %v1702, 4
      %v1705 = vshll.u32 %v1521, 16
      %v1707 = vrot.slane %v1705, 5
      %v1708 = vor.u32 %v1704, %v1707
      %v1709 = vrot.slane %v1708, 4
      %v1711 = vshll.u32 %v1522, 16
      %v1713 = vrot.slane %v1711, 5
      %v1714 = vsel %vm945, %v1709, %v1713
      %v1715 = vshrl.u32 %v1522, 16
      %v1717 = vrot.slane %v1715, 4
      %v1718 = vor.u32 %v1717, %v1713
      %v1719 = vrot.slane %v1718, 4
      %v1721 = vshll.u32 %v1547, 16
      %v1723 = vrot.slane %v1721, 5
      %v1724 = vsel %vm945, %v1719, %v1723
      %v1726 = vshrl.u32 %v1523, 16
      %v1728 = vrot.slane %v1726, 4
      %v1729 = vshll.u32 %v1523, 16
      %v1731 = vrot.slane %v1729, 5
      %v1732 = vor.u32 %v1728, %v1731
      %v1733 = vrot.slane %v1732, 4
      %v1735 = vshll.u32 %v1524, 16
      %v1737 = vrot.slane %v1735, 5
      %v1738 = vsel %vm945, %v1733, %v1737
      %v1739 = vshrl.u32 %v1524, 16
      %v1741 = vrot.slane %v1739, 4
      %v1742 = vor.u32 %v1741, %v1737
      %v1743 = vrot.slane %v1742, 4
      %v1745 = vshll.u32 %v1548, 16
      %v1747 = vrot.slane %v1745, 5
      %v1748 = vsel %vm945, %v1743, %v1747
      %v1750 = vshrl.u32 %v1525, 16
      %v1752 = vrot.slane %v1750, 4
      %v1753 = vshll.u32 %v1525, 16
      %v1755 = vrot.slane %v1753, 5
      %v1756 = vor.u32 %v1752, %v1755
      %v1757 = vrot.slane %v1756, 4
      %v1759 = vshll.u32 %v1526, 16
      %v1761 = vrot.slane %v1759, 5
      %v1762 = vsel %vm945, %v1757, %v1761
      %v1763 = vshrl.u32 %v1526, 16
      %v1765 = vrot.slane %v1763, 4
      %v1766 = vor.u32 %v1765, %v1761
      %v1767 = vrot.slane %v1766, 4
      %v1769 = vshll.u32 %v1549, 16
      %v1771 = vrot.slane %v1769, 5
      %v1772 = vsel %vm945, %v1767, %v1771
      %v1774 = vshrl.u32 %v1527, 16
      %v1776 = vrot.slane %v1774, 4
      %v1777 = vshll.u32 %v1527, 16
      %v1779 = vrot.slane %v1777, 5
      %v1780 = vor.u32 %v1776, %v1779
      %v1781 = vrot.slane %v1780, 4
      %v1783 = vshll.u32 %v1528, 16
      %v1785 = vrot.slane %v1783, 5
      %v1786 = vsel %vm945, %v1781, %v1785
      %v1787 = vshrl.u32 %v1528, 16
      %v1789 = vrot.slane %v1787, 4
      %v1790 = vor.u32 %v1789, %v1785
      %v1791 = vrot.slane %v1790, 4
      %v1793 = vshll.u32 %v1550, 16
      %v1795 = vrot.slane %v1793, 5
      %v1796 = vsel %vm945, %v1791, %v1795
      %v1798 = vshrl.u32 %v1529, 16
      %v1800 = vrot.slane %v1798, 4
      %v1801 = vshll.u32 %v1529, 16
      %v1803 = vrot.slane %v1801, 5
      %v1804 = vor.u32 %v1800, %v1803
      %v1805 = vrot.slane %v1804, 4
      %v1807 = vshll.u32 %v1530, 16
      %v1809 = vrot.slane %v1807, 5
      %v1810 = vsel %vm945, %v1805, %v1809
      %v1811 = vshrl.u32 %v1530, 16
      %v1813 = vrot.slane %v1811, 4
      %v1814 = vor.u32 %v1813, %v1809
      %v1815 = vrot.slane %v1814, 4
      %v1817 = vshll.u32 %v1551, 16
      %v1819 = vrot.slane %v1817, 5
      %v1820 = vsel %vm945, %v1815, %v1819
      %v1822 = vshrl.u32 %v1531, 16
      %v1824 = vrot.slane %v1822, 4
      %v1825 = vshll.u32 %v1531, 16
      %v1827 = vrot.slane %v1825, 5
      %v1828 = vor.u32 %v1824, %v1827
      %v1829 = vrot.slane %v1828, 4
      %v1831 = vshll.u32 %v1532, 16
      %v1833 = vrot.slane %v1831, 5
      %v1834 = vsel %vm945, %v1829, %v1833
      %v1835 = vshrl.u32 %v1532, 16
      %v1837 = vrot.slane %v1835, 4
      %v1838 = vor.u32 %v1837, %v1833
      %v1839 = vrot.slane %v1838, 4
      %v1841 = vshll.u32 %v1552, 16
      %v1843 = vrot.slane %v1841, 5
      %v1844 = vsel %vm945, %v1839, %v1843
      %v1846 = vshrl.u32 %v1533, 16
      %v1848 = vrot.slane %v1846, 4
      %v1849 = vshll.u32 %v1533, 16
      %v1851 = vrot.slane %v1849, 5
      %v1852 = vor.u32 %v1848, %v1851
      %v1853 = vrot.slane %v1852, 4
      %v1855 = vshll.u32 %v1534, 16
      %v1857 = vrot.slane %v1855, 5
      %v1858 = vsel %vm945, %v1853, %v1857
      %v1859 = vshrl.u32 %v1534, 16
      %v1861 = vrot.slane %v1859, 4
      %v1862 = vor.u32 %v1861, %v1857
      %v1863 = vrot.slane %v1862, 4
      %v1865 = vshll.u32 %v1553, 16
      %v1867 = vrot.slane %v1865, 5
      %v1868 = vsel %vm945, %v1863, %v1867
      %v1870 = vshrl.u32 %v1535, 16
      %v1872 = vrot.slane %v1870, 4
      %v1873 = vshll.u32 %v1535, 16
      %v1875 = vrot.slane %v1873, 5
      %v1876 = vor.u32 %v1872, %v1875
      %v1877 = vrot.slane %v1876, 4
      %v1879 = vshll.u32 %v1536, 16
      %v1881 = vrot.slane %v1879, 5
      %v1882 = vsel %vm945, %v1877, %v1881
      %v1883 = vshrl.u32 %v1536, 16
      %v1885 = vrot.slane %v1883, 4
      %v1886 = vor.u32 %v1885, %v1881
      %v1887 = vrot.slane %v1886, 4
      %v1889 = vshll.u32 %v1554, 16
      %v1891 = vrot.slane %v1889, 5
      %v1892 = vsel %vm945, %v1887, %v1891
      %v1894 = vshrl.u32 %v1537, 16
      %v1896 = vrot.slane %v1894, 4
      %v1897 = vshll.u32 %v1537, 16
      %v1899 = vrot.slane %v1897, 5
      %v1900 = vor.u32 %v1896, %v1899
      %v1901 = vrot.slane %v1900, 4
      %v1903 = vshll.u32 %v1538, 16
      %v1905 = vrot.slane %v1903, 5
      %v1906 = vsel %vm945, %v1901, %v1905
      %v1907 = vshrl.u32 %v1538, 16
      %v1909 = vrot.slane %v1907, 4
      %v1910 = vor.u32 %v1909, %v1905
      %v1911 = vrot.slane %v1910, 4
      %v1913 = vshll.u32 %v1555, 16
      %v1915 = vrot.slane %v1913, 5
      %v1916 = vsel %vm945, %v1911, %v1915
      %v1918 = vshrl.u32 %v1539, 16
      %v1920 = vrot.slane %v1918, 4
      %v1921 = vshll.u32 %v1539, 16
      %v1923 = vrot.slane %v1921, 5
      %v1924 = vor.u32 %v1920, %v1923
      %v1925 = vrot.slane %v1924, 4
      %v1927 = vshll.u32 %v1540, 16
      %v1929 = vrot.slane %v1927, 5
      %v1930 = vsel %vm945, %v1925, %v1929
      %v1931 = vshrl.u32 %v1540, 16
      %v1933 = vrot.slane %v1931, 4
      %v1934 = vor.u32 %v1933, %v1929
      %v1935 = vrot.slane %v1934, 4
      %v1937 = vshll.u32 %v1556, 16
      %v1939 = vrot.slane %v1937, 5
      %v1940 = vsel %vm945, %v1935, %v1939
      %v1941 = vld [vmem:[%s777] sm:$0xe]
      %v1942 = vld [vmem:[%s777 + $0xc] sm:$0xe]
      %v1943 = vld [vmem:[%s777 + $0x18] sm:$0xe]
      %v1944 = vld [vmem:[%s777 + $0x24] sm:$0xe]
      %v1945 = vld [vmem:[%s777 + $0x30] sm:$0xe]
      %v1946 = vld [vmem:[%s777 + $0x3c] sm:$0xe]
      %v1947 = vld [vmem:[%s777 + $0x48] sm:$0xe]
      %v1948 = vld [vmem:[%s777 + $0x54] sm:$0xe]
      %v1949 = vld [vmem:[%s777 + $0x60] sm:$0xe]
      %v1950 = vld [vmem:[%s777 + $0x6c] sm:$0xe]
      %v1951 = vld [vmem:[%s777 + $0x78] sm:$0xe]
      %v1952 = vld [vmem:[%s777 + $0x84] sm:$0xe]
      %v1953 = vld [vmem:[%s777 + $0x90] sm:$0xe]
      %v1954 = vld [vmem:[%s777 + $0x9c] sm:$0xe]
      %v1955 = vld [vmem:[%s777 + $0xa8] sm:$0xe]
      %v1956 = vld [vmem:[%s777 + $0xb4] sm:$0xe]
      %v2005 = vrot.slane %v1941, 5
      %v2006 = vrot.slane %v2005, 4
      %v2007 = vrot.slane %v1510, 5
      %v2008 = vsel %vm1396, %v2006, %v2007
      %v2009 = vrot.slane %v2007, 4
      %v2010 = vrot.slane %v1541, 5
      %v2011 = vsel %vm1396, %v2009, %v2010
      %v2012 = vrot.slane %v1942, 5
      %v2013 = vrot.slane %v2012, 4
      %v2014 = vrot.slane %v1512, 5
      %v2015 = vsel %vm1396, %v2013, %v2014
      %v2016 = vrot.slane %v2014, 4
      %v2017 = vrot.slane %v1542, 5
      %v2018 = vsel %vm1396, %v2016, %v2017
      %v2019 = vrot.slane %v1943, 5
      %v2020 = vrot.slane %v2019, 4
      %v2021 = vrot.slane %v1514, 5
      %v2022 = vsel %vm1396, %v2020, %v2021
      %v2023 = vrot.slane %v2021, 4
      %v2024 = vrot.slane %v1543, 5
      %v2025 = vsel %vm1396, %v2023, %v2024
      %v2026 = vrot.slane %v1944, 5
      %v2027 = vrot.slane %v2026, 4
      %v2028 = vrot.slane %v1516, 5
      %v2029 = vsel %vm1396, %v2027, %v2028
      %v2030 = vrot.slane %v2028, 4
      %v2031 = vrot.slane %v1544, 5
      %v2032 = vsel %vm1396, %v2030, %v2031
      %v2033 = vrot.slane %v1945, 5
      %v2034 = vrot.slane %v2033, 4
      %v2035 = vrot.slane %v1518, 5
      %v2036 = vsel %vm1396, %v2034, %v2035
      %v2037 = vrot.slane %v2035, 4
      %v2038 = vrot.slane %v1545, 5
      %v2039 = vsel %vm1396, %v2037, %v2038
      %v2040 = vrot.slane %v1946, 5
      %v2041 = vrot.slane %v2040, 4
      %v2042 = vrot.slane %v1520, 5
      %v2043 = vsel %vm1396, %v2041, %v2042
      %v2044 = vrot.slane %v2042, 4
      %v2045 = vrot.slane %v1546, 5
      %v2046 = vsel %vm1396, %v2044, %v2045
      %v2047 = vrot.slane %v1947, 5
      %v2048 = vrot.slane %v2047, 4
      %v2049 = vrot.slane %v1522, 5
      %v2050 = vsel %vm1396, %v2048, %v2049
      %v2051 = vrot.slane %v2049, 4
      %v2052 = vrot.slane %v1547, 5
      %v2053 = vsel %vm1396, %v2051, %v2052
      %v2054 = vrot.slane %v1948, 5
      %v2055 = vrot.slane %v2054, 4
      %v2056 = vrot.slane %v1524, 5
      %v2057 = vsel %vm1396, %v2055, %v2056
      %v2058 = vrot.slane %v2056, 4
      %v2059 = vrot.slane %v1548, 5
      %v2060 = vsel %vm1396, %v2058, %v2059
      %v2061 = vrot.slane %v1949, 5
      %v2062 = vrot.slane %v2061, 4
      %v2063 = vrot.slane %v1526, 5
      %v2064 = vsel %vm1396, %v2062, %v2063
      %v2065 = vrot.slane %v2063, 4
      %v2066 = vrot.slane %v1549, 5
      %v2067 = vsel %vm1396, %v2065, %v2066
      %v2068 = vrot.slane %v1950, 5
      %v2069 = vrot.slane %v2068, 4
      %v2070 = vrot.slane %v1528, 5
      %v2071 = vsel %vm1396, %v2069, %v2070
      %v2072 = vrot.slane %v2070, 4
      %v2073 = vrot.slane %v1550, 5
      %v2074 = vsel %vm1396, %v2072, %v2073
      %v2075 = vrot.slane %v1951, 5
      %v2076 = vrot.slane %v2075, 4
      %v2077 = vrot.slane %v1530, 5
      %v2078 = vsel %vm1396, %v2076, %v2077
      %v2079 = vrot.slane %v2077, 4
      %v2080 = vrot.slane %v1551, 5
      %v2081 = vsel %vm1396, %v2079, %v2080
      %v2082 = vrot.slane %v1952, 5
      %v2083 = vrot.slane %v2082, 4
      %v2084 = vrot.slane %v1532, 5
      %v2085 = vsel %vm1396, %v2083, %v2084
      %v2086 = vrot.slane %v2084, 4
      %v2087 = vrot.slane %v1552, 5
      %v2088 = vsel %vm1396, %v2086, %v2087
      %v2089 = vrot.slane %v1953, 5
      %v2090 = vrot.slane %v2089, 4
      %v2091 = vrot.slane %v1534, 5
      %v2092 = vsel %vm1396, %v2090, %v2091
      %v2093 = vrot.slane %v2091, 4
      %v2094 = vrot.slane %v1553, 5
      %v2095 = vsel %vm1396, %v2093, %v2094
      %v2096 = vrot.slane %v1954, 5
      %v2097 = vrot.slane %v2096, 4
      %v2098 = vrot.slane %v1536, 5
      %v2099 = vsel %vm1396, %v2097, %v2098
      %v2100 = vrot.slane %v2098, 4
      %v2101 = vrot.slane %v1554, 5
      %v2102 = vsel %vm1396, %v2100, %v2101
      %v2103 = vrot.slane %v1955, 5
      %v2104 = vrot.slane %v2103, 4
      %v2105 = vrot.slane %v1538, 5
      %v2106 = vsel %vm1396, %v2104, %v2105
      %v2107 = vrot.slane %v2105, 4
      %v2108 = vrot.slane %v1555, 5
      %v2109 = vsel %vm1396, %v2107, %v2108
      %v2110 = vrot.slane %v1956, 5
      %v2111 = vrot.slane %v2110, 4
      %v2112 = vrot.slane %v1540, 5
      %v2113 = vsel %vm1396, %v2111, %v2112
      %v2114 = vrot.slane %v2112, 4
      %v2115 = vrot.slane %v1556, 5
      %v2116 = vsel %vm1396, %v2114, %v2115
      %s2117 = scalar_lea.vmem [#allocation2], 24
      %v2118 = vld [vmem:[%s2117] sm:$0xf]
      %v2119 = vld [vmem:[%s2117 + $0x4] sm:$0xf]
      %v2120 = vld [vmem:[%s2117 + $0xc] sm:$0xf]
      %v2121 = vld [vmem:[%s2117 + $0x10] sm:$0xf]
      %v2122 = vld [vmem:[%s2117 + $0x18] sm:$0xf]
      %v2123 = vld [vmem:[%s2117 + $0x1c] sm:$0xf]
      %v2124 = vld [vmem:[%s2117 + $0x24] sm:$0xf]
      %v2125 = vld [vmem:[%s2117 + $0x28] sm:$0xf]
      %v2126 = vld [vmem:[%s2117 + $0x30] sm:$0xf]
      %v2127 = vld [vmem:[%s2117 + $0x34] sm:$0xf]
      %v2128 = vld [vmem:[%s2117 + $0x3c] sm:$0xf]
      %v2129 = vld [vmem:[%s2117 + $0x40] sm:$0xf]
      %v2130 = vld [vmem:[%s2117 + $0x48] sm:$0xf]
      %v2131 = vld [vmem:[%s2117 + $0x4c] sm:$0xf]
      %v2132 = vld [vmem:[%s2117 + $0x54] sm:$0xf]
      %v2133 = vld [vmem:[%s2117 + $0x58] sm:$0xf]
      %v2134 = vld [vmem:[%s2117 + $0x60] sm:$0xf]
      %v2135 = vld [vmem:[%s2117 + $0x64] sm:$0xf]
      %v2136 = vld [vmem:[%s2117 + $0x6c] sm:$0xf]
      %v2137 = vld [vmem:[%s2117 + $0x70] sm:$0xf]
      %v2138 = vld [vmem:[%s2117 + $0x78] sm:$0xf]
      %v2139 = vld [vmem:[%s2117 + $0x7c] sm:$0xf]
      %v2140 = vld [vmem:[%s2117 + $0x84] sm:$0xf]
      %v2141 = vld [vmem:[%s2117 + $0x88] sm:$0xf]
      %v2142 = vld [vmem:[%s2117 + $0x90] sm:$0xf]
      %v2143 = vld [vmem:[%s2117 + $0x94] sm:$0xf]
      %v2144 = vld [vmem:[%s2117 + $0x9c] sm:$0xf]
      %v2145 = vld [vmem:[%s2117 + $0xa0] sm:$0xf]
      %v2146 = vld [vmem:[%s2117 + $0xa8] sm:$0xf]
      %v2147 = vld [vmem:[%s2117 + $0xac] sm:$0xf]
      %v2148 = vld [vmem:[%s2117 + $0xb4] sm:$0xf]
      %v2149 = vld [vmem:[%s2117 + $0xb8] sm:$0xf]
      %v2150 = vld [vmem:[%s2117 + $0x8] sm:$0x1]
      %v2151 = vld [vmem:[%s2117 + $0x14] sm:$0x1]
      %v2152 = vld [vmem:[%s2117 + $0x20] sm:$0x1]
      %v2153 = vld [vmem:[%s2117 + $0x2c] sm:$0x1]
      %v2154 = vld [vmem:[%s2117 + $0x38] sm:$0x1]
      %v2155 = vld [vmem:[%s2117 + $0x44] sm:$0x1]
      %v2156 = vld [vmem:[%s2117 + $0x50] sm:$0x1]
      %v2157 = vld [vmem:[%s2117 + $0x5c] sm:$0x1]
      %v2158 = vld [vmem:[%s2117 + $0x68] sm:$0x1]
      %v2159 = vld [vmem:[%s2117 + $0x74] sm:$0x1]
      %v2160 = vld [vmem:[%s2117 + $0x80] sm:$0x1]
      %v2161 = vld [vmem:[%s2117 + $0x8c] sm:$0x1]
      %v2162 = vld [vmem:[%s2117 + $0x98] sm:$0x1]
      %v2163 = vld [vmem:[%s2117 + $0xa4] sm:$0x1]
      %v2164 = vld [vmem:[%s2117 + $0xb0] sm:$0x1]
      %v2165 = vld [vmem:[%s2117 + $0xbc] sm:$0x1]
      %v2167 = vshrl.u32 %v2118, 16
      %v2169 = vrot.slane %v2167, 4
      %v2170 = vshll.u32 %v2118, 16
      %v2172 = vrot.slane %v2170, 5
      %v2173 = vor.u32 %v2169, %v2172
      %v2174 = vrot.slane %v2173, 4
      %v2176 = vshll.u32 %v2119, 16
      %v2178 = vrot.slane %v2176, 5
      %v2179 = vsel %vm945, %v2174, %v2178
      %v2180 = vshrl.u32 %v2119, 16
      %v2182 = vrot.slane %v2180, 4
      %v2183 = vor.u32 %v2182, %v2178
      %v2184 = vrot.slane %v2183, 4
      %v2186 = vshll.u32 %v2150, 16
      %v2188 = vrot.slane %v2186, 5
      %v2189 = vsel %vm945, %v2184, %v2188
      %v2191 = vshrl.u32 %v2120, 16
      %v2193 = vrot.slane %v2191, 4
      %v2194 = vshll.u32 %v2120, 16
      %v2196 = vrot.slane %v2194, 5
      %v2197 = vor.u32 %v2193, %v2196
      %v2198 = vrot.slane %v2197, 4
      %v2200 = vshll.u32 %v2121, 16
      %v2202 = vrot.slane %v2200, 5
      %v2203 = vsel %vm945, %v2198, %v2202
      %v2204 = vshrl.u32 %v2121, 16
      %v2206 = vrot.slane %v2204, 4
      %v2207 = vor.u32 %v2206, %v2202
      %v2208 = vrot.slane %v2207, 4
      %v2210 = vshll.u32 %v2151, 16
      %v2212 = vrot.slane %v2210, 5
      %v2213 = vsel %vm945, %v2208, %v2212
      %v2215 = vshrl.u32 %v2122, 16
      %v2217 = vrot.slane %v2215, 4
      %v2218 = vshll.u32 %v2122, 16
      %v2220 = vrot.slane %v2218, 5
      %v2221 = vor.u32 %v2217, %v2220
      %v2222 = vrot.slane %v2221, 4
      %v2224 = vshll.u32 %v2123, 16
      %v2226 = vrot.slane %v2224, 5
      %v2227 = vsel %vm945, %v2222, %v2226
      %v2228 = vshrl.u32 %v2123, 16
      %v2230 = vrot.slane %v2228, 4
      %v2231 = vor.u32 %v2230, %v2226
      %v2232 = vrot.slane %v2231, 4
      %v2234 = vshll.u32 %v2152, 16
      %v2236 = vrot.slane %v2234, 5
      %v2237 = vsel %vm945, %v2232, %v2236
      %v2239 = vshrl.u32 %v2124, 16
      %v2241 = vrot.slane %v2239, 4
      %v2242 = vshll.u32 %v2124, 16
      %v2244 = vrot.slane %v2242, 5
      %v2245 = vor.u32 %v2241, %v2244
      %v2246 = vrot.slane %v2245, 4
      %v2248 = vshll.u32 %v2125, 16
      %v2250 = vrot.slane %v2248, 5
      %v2251 = vsel %vm945, %v2246, %v2250
      %v2252 = vshrl.u32 %v2125, 16
      %v2254 = vrot.slane %v2252, 4
      %v2255 = vor.u32 %v2254, %v2250
      %v2256 = vrot.slane %v2255, 4
      %v2258 = vshll.u32 %v2153, 16
      %v2260 = vrot.slane %v2258, 5
      %v2261 = vsel %vm945, %v2256, %v2260
      %v2263 = vshrl.u32 %v2126, 16
      %v2265 = vrot.slane %v2263, 4
      %v2266 = vshll.u32 %v2126, 16
      %v2268 = vrot.slane %v2266, 5
      %v2269 = vor.u32 %v2265, %v2268
      %v2270 = vrot.slane %v2269, 4
      %v2272 = vshll.u32 %v2127, 16
      %v2274 = vrot.slane %v2272, 5
      %v2275 = vsel %vm945, %v2270, %v2274
      %v2276 = vshrl.u32 %v2127, 16
      %v2278 = vrot.slane %v2276, 4
      %v2279 = vor.u32 %v2278, %v2274
      %v2280 = vrot.slane %v2279, 4
      %v2282 = vshll.u32 %v2154, 16
      %v2284 = vrot.slane %v2282, 5
      %v2285 = vsel %vm945, %v2280, %v2284
      %v2287 = vshrl.u32 %v2128, 16
      %v2289 = vrot.slane %v2287, 4
      %v2290 = vshll.u32 %v2128, 16
      %v2292 = vrot.slane %v2290, 5
      %v2293 = vor.u32 %v2289, %v2292
      %v2294 = vrot.slane %v2293, 4
      %v2296 = vshll.u32 %v2129, 16
      %v2298 = vrot.slane %v2296, 5
      %v2299 = vsel %vm945, %v2294, %v2298
      %v2300 = vshrl.u32 %v2129, 16
      %v2302 = vrot.slane %v2300, 4
      %v2303 = vor.u32 %v2302, %v2298
      %v2304 = vrot.slane %v2303, 4
      %v2306 = vshll.u32 %v2155, 16
      %v2308 = vrot.slane %v2306, 5
      %v2309 = vsel %vm945, %v2304, %v2308
      %v2311 = vshrl.u32 %v2130, 16
      %v2313 = vrot.slane %v2311, 4
      %v2314 = vshll.u32 %v2130, 16
      %v2316 = vrot.slane %v2314, 5
      %v2317 = vor.u32 %v2313, %v2316
      %v2318 = vrot.slane %v2317, 4
      %v2320 = vshll.u32 %v2131, 16
      %v2322 = vrot.slane %v2320, 5
      %v2323 = vsel %vm945, %v2318, %v2322
      %v2324 = vshrl.u32 %v2131, 16
      %v2326 = vrot.slane %v2324, 4
      %v2327 = vor.u32 %v2326, %v2322
      %v2328 = vrot.slane %v2327, 4
      %v2330 = vshll.u32 %v2156, 16
      %v2332 = vrot.slane %v2330, 5
      %v2333 = vsel %vm945, %v2328, %v2332
      %v2335 = vshrl.u32 %v2132, 16
      %v2337 = vrot.slane %v2335, 4
      %v2338 = vshll.u32 %v2132, 16
      %v2340 = vrot.slane %v2338, 5
      %v2341 = vor.u32 %v2337, %v2340
      %v2342 = vrot.slane %v2341, 4
      %v2344 = vshll.u32 %v2133, 16
      %v2346 = vrot.slane %v2344, 5
      %v2347 = vsel %vm945, %v2342, %v2346
      %v2348 = vshrl.u32 %v2133, 16
      %v2350 = vrot.slane %v2348, 4
      %v2351 = vor.u32 %v2350, %v2346
      %v2352 = vrot.slane %v2351, 4
      %v2354 = vshll.u32 %v2157, 16
      %v2356 = vrot.slane %v2354, 5
      %v2357 = vsel %vm945, %v2352, %v2356
      %v2359 = vshrl.u32 %v2134, 16
      %v2361 = vrot.slane %v2359, 4
      %v2362 = vshll.u32 %v2134, 16
      %v2364 = vrot.slane %v2362, 5
      %v2365 = vor.u32 %v2361, %v2364
      %v2366 = vrot.slane %v2365, 4
      %v2368 = vshll.u32 %v2135, 16
      %v2370 = vrot.slane %v2368, 5
      %v2371 = vsel %vm945, %v2366, %v2370
      %v2372 = vshrl.u32 %v2135, 16
      %v2374 = vrot.slane %v2372, 4
      %v2375 = vor.u32 %v2374, %v2370
      %v2376 = vrot.slane %v2375, 4
      %v2378 = vshll.u32 %v2158, 16
      %v2380 = vrot.slane %v2378, 5
      %v2381 = vsel %vm945, %v2376, %v2380
      %v2383 = vshrl.u32 %v2136, 16
      %v2385 = vrot.slane %v2383, 4
      %v2386 = vshll.u32 %v2136, 16
      %v2388 = vrot.slane %v2386, 5
      %v2389 = vor.u32 %v2385, %v2388
      %v2390 = vrot.slane %v2389, 4
      %v2392 = vshll.u32 %v2137, 16
      %v2394 = vrot.slane %v2392, 5
      %v2395 = vsel %vm945, %v2390, %v2394
      %v2396 = vshrl.u32 %v2137, 16
      %v2398 = vrot.slane %v2396, 4
      %v2399 = vor.u32 %v2398, %v2394
      %v2400 = vrot.slane %v2399, 4
      %v2402 = vshll.u32 %v2159, 16
      %v2404 = vrot.slane %v2402, 5
      %v2405 = vsel %vm945, %v2400, %v2404
      %v2407 = vshrl.u32 %v2138, 16
      %v2409 = vrot.slane %v2407, 4
      %v2410 = vshll.u32 %v2138, 16
      %v2412 = vrot.slane %v2410, 5
      %v2413 = vor.u32 %v2409, %v2412
      %v2414 = vrot.slane %v2413, 4
      %v2416 = vshll.u32 %v2139, 16
      %v2418 = vrot.slane %v2416, 5
      %v2419 = vsel %vm945, %v2414, %v2418
      %v2420 = vshrl.u32 %v2139, 16
      %v2422 = vrot.slane %v2420, 4
      %v2423 = vor.u32 %v2422, %v2418
      %v2424 = vrot.slane %v2423, 4
      %v2426 = vshll.u32 %v2160, 16
      %v2428 = vrot.slane %v2426, 5
      %v2429 = vsel %vm945, %v2424, %v2428
      %v2431 = vshrl.u32 %v2140, 16
      %v2433 = vrot.slane %v2431, 4
      %v2434 = vshll.u32 %v2140, 16
      %v2436 = vrot.slane %v2434, 5
      %v2437 = vor.u32 %v2433, %v2436
      %v2438 = vrot.slane %v2437, 4
      %v2440 = vshll.u32 %v2141, 16
      %v2442 = vrot.slane %v2440, 5
      %v2443 = vsel %vm945, %v2438, %v2442
      %v2444 = vshrl.u32 %v2141, 16
      %v2446 = vrot.slane %v2444, 4
      %v2447 = vor.u32 %v2446, %v2442
      %v2448 = vrot.slane %v2447, 4
      %v2450 = vshll.u32 %v2161, 16
      %v2452 = vrot.slane %v2450, 5
      %v2453 = vsel %vm945, %v2448, %v2452
      %v2455 = vshrl.u32 %v2142, 16
      %v2457 = vrot.slane %v2455, 4
      %v2458 = vshll.u32 %v2142, 16
      %v2460 = vrot.slane %v2458, 5
      %v2461 = vor.u32 %v2457, %v2460
      %v2462 = vrot.slane %v2461, 4
      %v2464 = vshll.u32 %v2143, 16
      %v2466 = vrot.slane %v2464, 5
      %v2467 = vsel %vm945, %v2462, %v2466
      %v2468 = vshrl.u32 %v2143, 16
      %v2470 = vrot.slane %v2468, 4
      %v2471 = vor.u32 %v2470, %v2466
      %v2472 = vrot.slane %v2471, 4
      %v2474 = vshll.u32 %v2162, 16
      %v2476 = vrot.slane %v2474, 5
      %v2477 = vsel %vm945, %v2472, %v2476
      %v2479 = vshrl.u32 %v2144, 16
      %v2481 = vrot.slane %v2479, 4
      %v2482 = vshll.u32 %v2144, 16
      %v2484 = vrot.slane %v2482, 5
      %v2485 = vor.u32 %v2481, %v2484
      %v2486 = vrot.slane %v2485, 4
      %v2488 = vshll.u32 %v2145, 16
      %v2490 = vrot.slane %v2488, 5
      %v2491 = vsel %vm945, %v2486, %v2490
      %v2492 = vshrl.u32 %v2145, 16
      %v2494 = vrot.slane %v2492, 4
      %v2495 = vor.u32 %v2494, %v2490
      %v2496 = vrot.slane %v2495, 4
      %v2498 = vshll.u32 %v2163, 16
      %v2500 = vrot.slane %v2498, 5
      %v2501 = vsel %vm945, %v2496, %v2500
      %v2503 = vshrl.u32 %v2146, 16
      %v2505 = vrot.slane %v2503, 4
      %v2506 = vshll.u32 %v2146, 16
      %v2508 = vrot.slane %v2506, 5
      %v2509 = vor.u32 %v2505, %v2508
      %v2510 = vrot.slane %v2509, 4
      %v2512 = vshll.u32 %v2147, 16
      %v2514 = vrot.slane %v2512, 5
      %v2515 = vsel %vm945, %v2510, %v2514
      %v2516 = vshrl.u32 %v2147, 16
      %v2518 = vrot.slane %v2516, 4
      %v2519 = vor.u32 %v2518, %v2514
      %v2520 = vrot.slane %v2519, 4
      %v2522 = vshll.u32 %v2164, 16
      %v2524 = vrot.slane %v2522, 5
      %v2525 = vsel %vm945, %v2520, %v2524
      %v2527 = vshrl.u32 %v2148, 16
      %v2529 = vrot.slane %v2527, 4
      %v2530 = vshll.u32 %v2148, 16
      %v2532 = vrot.slane %v2530, 5
      %v2533 = vor.u32 %v2529, %v2532
      %v2534 = vrot.slane %v2533, 4
      %v2536 = vshll.u32 %v2149, 16
      %v2538 = vrot.slane %v2536, 5
      %v2539 = vsel %vm945, %v2534, %v2538
      %v2540 = vshrl.u32 %v2149, 16
      %v2542 = vrot.slane %v2540, 4
      %v2543 = vor.u32 %v2542, %v2538
      %v2544 = vrot.slane %v2543, 4
      %v2546 = vshll.u32 %v2165, 16
      %v2548 = vrot.slane %v2546, 5
      %v2549 = vsel %vm945, %v2544, %v2548
      %v2550 = vld [vmem:[%s2117] sm:$0xe]
      %v2551 = vld [vmem:[%s2117 + $0xc] sm:$0xe]
      %v2552 = vld [vmem:[%s2117 + $0x18] sm:$0xe]
      %v2553 = vld [vmem:[%s2117 + $0x24] sm:$0xe]
      %v2554 = vld [vmem:[%s2117 + $0x30] sm:$0xe]
      %v2555 = vld [vmem:[%s2117 + $0x3c] sm:$0xe]
      %v2556 = vld [vmem:[%s2117 + $0x48] sm:$0xe]
      %v2557 = vld [vmem:[%s2117 + $0x54] sm:$0xe]
      %v2558 = vld [vmem:[%s2117 + $0x60] sm:$0xe]
      %v2559 = vld [vmem:[%s2117 + $0x6c] sm:$0xe]
      %v2560 = vld [vmem:[%s2117 + $0x78] sm:$0xe]
      %v2561 = vld [vmem:[%s2117 + $0x84] sm:$0xe]
      %v2562 = vld [vmem:[%s2117 + $0x90] sm:$0xe]
      %v2563 = vld [vmem:[%s2117 + $0x9c] sm:$0xe]
      %v2564 = vld [vmem:[%s2117 + $0xa8] sm:$0xe]
      %v2565 = vld [vmem:[%s2117 + $0xb4] sm:$0xe]
      %v2614 = vrot.slane %v2550, 5
      %v2615 = vrot.slane %v2614, 4
      %v2616 = vrot.slane %v2119, 5
      %v2617 = vsel %vm1396, %v2615, %v2616
      %v2618 = vrot.slane %v2616, 4
      %v2619 = vrot.slane %v2150, 5
      %v2620 = vsel %vm1396, %v2618, %v2619
      %v2621 = vrot.slane %v2551, 5
      %v2622 = vrot.slane %v2621, 4
      %v2623 = vrot.slane %v2121, 5
      %v2624 = vsel %vm1396, %v2622, %v2623
      %v2625 = vrot.slane %v2623, 4
      %v2626 = vrot.slane %v2151, 5
      %v2627 = vsel %vm1396, %v2625, %v2626
      %v2628 = vrot.slane %v2552, 5
      %v2629 = vrot.slane %v2628, 4
      %v2630 = vrot.slane %v2123, 5
      %v2631 = vsel %vm1396, %v2629, %v2630
      %v2632 = vrot.slane %v2630, 4
      %v2633 = vrot.slane %v2152, 5
      %v2634 = vsel %vm1396, %v2632, %v2633
      %v2635 = vrot.slane %v2553, 5
      %v2636 = vrot.slane %v2635, 4
      %v2637 = vrot.slane %v2125, 5
      %v2638 = vsel %vm1396, %v2636, %v2637
      %v2639 = vrot.slane %v2637, 4
      %v2640 = vrot.slane %v2153, 5
      %v2641 = vsel %vm1396, %v2639, %v2640
      %v2642 = vrot.slane %v2554, 5
      %v2643 = vrot.slane %v2642, 4
      %v2644 = vrot.slane %v2127, 5
      %v2645 = vsel %vm1396, %v2643, %v2644
      %v2646 = vrot.slane %v2644, 4
      %v2647 = vrot.slane %v2154, 5
      %v2648 = vsel %vm1396, %v2646, %v2647
      %v2649 = vrot.slane %v2555, 5
      %v2650 = vrot.slane %v2649, 4
      %v2651 = vrot.slane %v2129, 5
      %v2652 = vsel %vm1396, %v2650, %v2651
      %v2653 = vrot.slane %v2651, 4
      %v2654 = vrot.slane %v2155, 5
      %v2655 = vsel %vm1396, %v2653, %v2654
      %v2656 = vrot.slane %v2556, 5
      %v2657 = vrot.slane %v2656, 4
      %v2658 = vrot.slane %v2131, 5
      %v2659 = vsel %vm1396, %v2657, %v2658
      %v2660 = vrot.slane %v2658, 4
      %v2661 = vrot.slane %v2156, 5
      %v2662 = vsel %vm1396, %v2660, %v2661
      %v2663 = vrot.slane %v2557, 5
      %v2664 = vrot.slane %v2663, 4
      %v2665 = vrot.slane %v2133, 5
      %v2666 = vsel %vm1396, %v2664, %v2665
      %v2667 = vrot.slane %v2665, 4
      %v2668 = vrot.slane %v2157, 5
      %v2669 = vsel %vm1396, %v2667, %v2668
      %v2670 = vrot.slane %v2558, 5
      %v2671 = vrot.slane %v2670, 4
      %v2672 = vrot.slane %v2135, 5
      %v2673 = vsel %vm1396, %v2671, %v2672
      %v2674 = vrot.slane %v2672, 4
      %v2675 = vrot.slane %v2158, 5
      %v2676 = vsel %vm1396, %v2674, %v2675
      %v2677 = vrot.slane %v2559, 5
      %v2678 = vrot.slane %v2677, 4
      %v2679 = vrot.slane %v2137, 5
      %v2680 = vsel %vm1396, %v2678, %v2679
      %v2681 = vrot.slane %v2679, 4
      %v2682 = vrot.slane %v2159, 5
      %v2683 = vsel %vm1396, %v2681, %v2682
      %v2684 = vrot.slane %v2560, 5
      %v2685 = vrot.slane %v2684, 4
      %v2686 = vrot.slane %v2139, 5
      %v2687 = vsel %vm1396, %v2685, %v2686
      %v2688 = vrot.slane %v2686, 4
      %v2689 = vrot.slane %v2160, 5
      %v2690 = vsel %vm1396, %v2688, %v2689
      %v2691 = vrot.slane %v2561, 5
      %v2692 = vrot.slane %v2691, 4
      %v2693 = vrot.slane %v2141, 5
      %v2694 = vsel %vm1396, %v2692, %v2693
      %v2695 = vrot.slane %v2693, 4
      %v2696 = vrot.slane %v2161, 5
      %v2697 = vsel %vm1396, %v2695, %v2696
      %v2698 = vrot.slane %v2562, 5
      %v2699 = vrot.slane %v2698, 4
      %v2700 = vrot.slane %v2143, 5
      %v2701 = vsel %vm1396, %v2699, %v2700
      %v2702 = vrot.slane %v2700, 4
      %v2703 = vrot.slane %v2162, 5
      %v2704 = vsel %vm1396, %v2702, %v2703
      %v2705 = vrot.slane %v2563, 5
      %v2706 = vrot.slane %v2705, 4
      %v2707 = vrot.slane %v2145, 5
      %v2708 = vsel %vm1396, %v2706, %v2707
      %v2709 = vrot.slane %v2707, 4
      %v2710 = vrot.slane %v2163, 5
      %v2711 = vsel %vm1396, %v2709, %v2710
      %v2712 = vrot.slane %v2564, 5
      %v2713 = vrot.slane %v2712, 4
      %v2714 = vrot.slane %v2147, 5
      %v2715 = vsel %vm1396, %v2713, %v2714
      %v2716 = vrot.slane %v2714, 4
      %v2717 = vrot.slane %v2164, 5
      %v2718 = vsel %vm1396, %v2716, %v2717
      %v2719 = vrot.slane %v2565, 5
      %v2720 = vrot.slane %v2719, 4
      %v2721 = vrot.slane %v2149, 5
      %v2722 = vsel %vm1396, %v2720, %v2721
      %v2723 = vrot.slane %v2721, 4
      %v2724 = vrot.slane %v2165, 5
      %v2725 = vsel %vm1396, %v2723, %v2724
      %v2742 = vunpack.c.l.b16 %v895
      %v2743 = vunpack.c.l.b16 %v896
      %v2744 = vunpack.c.l.b16 %v897
      %v2745 = vunpack.c.l.b16 %v898
      %v2746 = vunpack.c.l.b16 %v899
      %v2747 = vunpack.c.l.b16 %v900
      %v2748 = vunpack.c.l.b16 %v901
      %v2749 = vunpack.c.l.b16 %v902
      %v2750 = vunpack.c.l.b16 %v903
      %v2751 = vunpack.c.l.b16 %v904
      %v2752 = vunpack.c.l.b16 %v905
      %v2753 = vunpack.c.l.b16 %v906
      %v2754 = vunpack.c.l.b16 %v907
      %v2755 = vunpack.c.l.b16 %v908
      %v2756 = vunpack.c.l.b16 %v909
      %v2757 = vunpack.c.l.b16 %v910
      %v2758 = vunpack.c.l.b16 %v911
      %v2759 = vunpack.c.l.b16 %v912
      %v2760 = vunpack.c.l.b16 %v913
      %v2761 = vunpack.c.l.b16 %v914
      %v2762 = vunpack.c.l.b16 %v915
      %v2763 = vunpack.c.l.b16 %v916
      %v2764 = vunpack.c.l.b16 %v917
      %v2765 = vunpack.c.l.b16 %v918
      %v2766 = vunpack.c.l.b16 %v919
      %v2767 = vunpack.c.l.b16 %v920
      %v2768 = vunpack.c.l.b16 %v921
      %v2769 = vunpack.c.l.b16 %v922
      %v2770 = vunpack.c.l.b16 %v923
      %v2771 = vunpack.c.l.b16 %v924
      %v2772 = vunpack.c.l.b16 %v925
      %v2773 = vunpack.c.l.b16 %v926
      %v2774 = vpack.c.b16 %v2743, %v2742
      %v2775 = vpack.c.b16 %v2745, %v2744
      %v2776 = vpack.c.b16 %v2747, %v2746
      %v2777 = vpack.c.b16 %v2749, %v2748
      %v2778 = vpack.c.b16 %v2751, %v2750
      %v2779 = vpack.c.b16 %v2753, %v2752
      %v2780 = vpack.c.b16 %v2755, %v2754
      %v2781 = vpack.c.b16 %v2757, %v2756
      %v2782 = vpack.c.b16 %v2759, %v2758
      %v2783 = vpack.c.b16 %v2761, %v2760
      %v2784 = vpack.c.b16 %v2763, %v2762
      %v2785 = vpack.c.b16 %v2765, %v2764
      %v2786 = vpack.c.b16 %v2767, %v2766
      %v2787 = vpack.c.b16 %v2769, %v2768
      %v2788 = vpack.c.b16 %v2771, %v2770
      %v2789 = vpack.c.b16 %v2773, %v2772
      %v2790 = vunpack.c.l.b16 %v959
      %v2791 = vunpack.c.l.b16 %v969
      %v2792 = vunpack.c.l.b16 %v983
      %v2793 = vunpack.c.l.b16 %v993
      %v2794 = vunpack.c.l.b16 %v1007
      %v2795 = vunpack.c.l.b16 %v1017
      %v2796 = vunpack.c.l.b16 %v1031
      %v2797 = vunpack.c.l.b16 %v1041
      %v2798 = vunpack.c.l.b16 %v1055
      %v2799 = vunpack.c.l.b16 %v1065
      %v2800 = vunpack.c.l.b16 %v1079
      %v2801 = vunpack.c.l.b16 %v1089
      %v2802 = vunpack.c.l.b16 %v1103
      %v2803 = vunpack.c.l.b16 %v1113
      %v2804 = vunpack.c.l.b16 %v1127
      %v2805 = vunpack.c.l.b16 %v1137
      %v2806 = vunpack.c.l.b16 %v1151
      %v2807 = vunpack.c.l.b16 %v1161
      %v2808 = vunpack.c.l.b16 %v1175
      %v2809 = vunpack.c.l.b16 %v1185
      %v2810 = vunpack.c.l.b16 %v1199
      %v2811 = vunpack.c.l.b16 %v1209
      %v2812 = vunpack.c.l.b16 %v1223
      %v2813 = vunpack.c.l.b16 %v1233
      %v2814 = vunpack.c.l.b16 %v1247
      %v2815 = vunpack.c.l.b16 %v1257
      %v2816 = vunpack.c.l.b16 %v1271
      %v2817 = vunpack.c.l.b16 %v1281
      %v2818 = vunpack.c.l.b16 %v1295
      %v2819 = vunpack.c.l.b16 %v1305
      %v2820 = vunpack.c.l.b16 %v1319
      %v2821 = vunpack.c.l.b16 %v1329
      %v2822 = vpack.c.b16 %v2791, %v2790
      %v2823 = vpack.c.b16 %v2793, %v2792
      %v2824 = vpack.c.b16 %v2795, %v2794
      %v2825 = vpack.c.b16 %v2797, %v2796
      %v2826 = vpack.c.b16 %v2799, %v2798
      %v2827 = vpack.c.b16 %v2801, %v2800
      %v2828 = vpack.c.b16 %v2803, %v2802
      %v2829 = vpack.c.b16 %v2805, %v2804
      %v2830 = vpack.c.b16 %v2807, %v2806
      %v2831 = vpack.c.b16 %v2809, %v2808
      %v2832 = vpack.c.b16 %v2811, %v2810
      %v2833 = vpack.c.b16 %v2813, %v2812
      %v2834 = vpack.c.b16 %v2815, %v2814
      %v2835 = vpack.c.b16 %v2817, %v2816
      %v2836 = vpack.c.b16 %v2819, %v2818
      %v2837 = vpack.c.b16 %v2821, %v2820
      %2838 = vrot.lane.b32.xlu0 %v2822, 4
      %v2839 = vpop.permute.xlu0 %2838
      %2840 = vrot.lane.b32.xlu0 %v2823, 4
      %v2841 = vpop.permute.xlu0 %2840
      %2842 = vrot.lane.b32.xlu0 %v2824, 4
      %v2843 = vpop.permute.xlu0 %2842
      %2844 = vrot.lane.b32.xlu0 %v2825, 4
      %v2845 = vpop.permute.xlu0 %2844
      %2846 = vrot.lane.b32.xlu0 %v2826, 4
      %v2847 = vpop.permute.xlu0 %2846
      %2848 = vrot.lane.b32.xlu0 %v2827, 4
      %v2849 = vpop.permute.xlu0 %2848
      %2850 = vrot.lane.b32.xlu0 %v2828, 4
      %v2851 = vpop.permute.xlu0 %2850
      %2852 = vrot.lane.b32.xlu0 %v2829, 4
      %v2853 = vpop.permute.xlu0 %2852
      %2854 = vrot.lane.b32.xlu0 %v2830, 4
      %v2855 = vpop.permute.xlu0 %2854
      %2856 = vrot.lane.b32.xlu0 %v2831, 4
      %v2857 = vpop.permute.xlu0 %2856
      %2858 = vrot.lane.b32.xlu0 %v2832, 4
      %v2859 = vpop.permute.xlu0 %2858
      %2860 = vrot.lane.b32.xlu0 %v2833, 4
      %v2861 = vpop.permute.xlu0 %2860
      %2862 = vrot.lane.b32.xlu0 %v2834, 4
      %v2863 = vpop.permute.xlu0 %2862
      %2864 = vrot.lane.b32.xlu0 %v2835, 4
      %v2865 = vpop.permute.xlu0 %2864
      %2866 = vrot.lane.b32.xlu0 %v2836, 4
      %v2867 = vpop.permute.xlu0 %2866
      %2868 = vrot.lane.b32.xlu0 %v2837, 4
      %v2869 = vpop.permute.xlu0 %2868
      %v2870 = vunpack.c.l.b16 %v1400
      %v2871 = vunpack.c.l.b16 %v1403
      %v2872 = vunpack.c.l.b16 %v1407
      %v2873 = vunpack.c.l.b16 %v1410
      %v2874 = vunpack.c.l.b16 %v1414
      %v2875 = vunpack.c.l.b16 %v1417
      %v2876 = vunpack.c.l.b16 %v1421
      %v2877 = vunpack.c.l.b16 %v1424
      %v2878 = vunpack.c.l.b16 %v1428
      %v2879 = vunpack.c.l.b16 %v1431
      %v2880 = vunpack.c.l.b16 %v1435
      %v2881 = vunpack.c.l.b16 %v1438
      %v2882 = vunpack.c.l.b16 %v1442
      %v2883 = vunpack.c.l.b16 %v1445
      %v2884 = vunpack.c.l.b16 %v1449
      %v2885 = vunpack.c.l.b16 %v1452
      %v2886 = vunpack.c.l.b16 %v1456
      %v2887 = vunpack.c.l.b16 %v1459
      %v2888 = vunpack.c.l.b16 %v1463
      %v2889 = vunpack.c.l.b16 %v1466
      %v2890 = vunpack.c.l.b16 %v1470
      %v2891 = vunpack.c.l.b16 %v1473
      %v2892 = vunpack.c.l.b16 %v1477
      %v2893 = vunpack.c.l.b16 %v1480
      %v2894 = vunpack.c.l.b16 %v1484
      %v2895 = vunpack.c.l.b16 %v1487
      %v2896 = vunpack.c.l.b16 %v1491
      %v2897 = vunpack.c.l.b16 %v1494
      %v2898 = vunpack.c.l.b16 %v1498
      %v2899 = vunpack.c.l.b16 %v1501
      %v2900 = vunpack.c.l.b16 %v1505
      %v2901 = vunpack.c.l.b16 %v1508
      %v2902 = vpack.c.b16 %v2871, %v2870
      %v2903 = vpack.c.b16 %v2873, %v2872
      %v2904 = vpack.c.b16 %v2875, %v2874
      %v2905 = vpack.c.b16 %v2877, %v2876
      %v2906 = vpack.c.b16 %v2879, %v2878
      %v2907 = vpack.c.b16 %v2881, %v2880
      %v2908 = vpack.c.b16 %v2883, %v2882
      %v2909 = vpack.c.b16 %v2885, %v2884
      %v2910 = vpack.c.b16 %v2887, %v2886
      %v2911 = vpack.c.b16 %v2889, %v2888
      %v2912 = vpack.c.b16 %v2891, %v2890
      %v2913 = vpack.c.b16 %v2893, %v2892
      %v2914 = vpack.c.b16 %v2895, %v2894
      %v2915 = vpack.c.b16 %v2897, %v2896
      %v2916 = vpack.c.b16 %v2899, %v2898
      %v2917 = vpack.c.b16 %v2901, %v2900
      %2918 = vrot.lane.b32.xlu0 %v2902, 8
      %v2919 = vpop.permute.xlu0 %2918
      %2920 = vrot.lane.b32.xlu0 %v2903, 8
      %v2921 = vpop.permute.xlu0 %2920
      %2922 = vrot.lane.b32.xlu0 %v2904, 8
      %v2923 = vpop.permute.xlu0 %2922
      %2924 = vrot.lane.b32.xlu0 %v2905, 8
      %v2925 = vpop.permute.xlu0 %2924
      %2926 = vrot.lane.b32.xlu0 %v2906, 8
      %v2927 = vpop.permute.xlu0 %2926
      %2928 = vrot.lane.b32.xlu0 %v2907, 8
      %v2929 = vpop.permute.xlu0 %2928
      %2930 = vrot.lane.b32.xlu0 %v2908, 8
      %v2931 = vpop.permute.xlu0 %2930
      %2932 = vrot.lane.b32.xlu0 %v2909, 8
      %v2933 = vpop.permute.xlu0 %2932
      %2934 = vrot.lane.b32.xlu0 %v2910, 8
      %v2935 = vpop.permute.xlu0 %2934
      %2936 = vrot.lane.b32.xlu0 %v2911, 8
      %v2937 = vpop.permute.xlu0 %2936
      %2938 = vrot.lane.b32.xlu0 %v2912, 8
      %v2939 = vpop.permute.xlu0 %2938
      %2940 = vrot.lane.b32.xlu0 %v2913, 8
      %v2941 = vpop.permute.xlu0 %2940
      %2942 = vrot.lane.b32.xlu0 %v2914, 8
      %v2943 = vpop.permute.xlu0 %2942
      %2944 = vrot.lane.b32.xlu0 %v2915, 8
      %v2945 = vpop.permute.xlu0 %2944
      %2946 = vrot.lane.b32.xlu0 %v2916, 8
      %v2947 = vpop.permute.xlu0 %2946
      %2948 = vrot.lane.b32.xlu0 %v2917, 8
      %v2949 = vpop.permute.xlu0 %2948
      %v2966 = vunpack.c.l.b16 %v1509
      %v2967 = vunpack.c.l.b16 %v1510
      %v2968 = vunpack.c.l.b16 %v1511
      %v2969 = vunpack.c.l.b16 %v1512
      %v2970 = vunpack.c.l.b16 %v1513
      %v2971 = vunpack.c.l.b16 %v1514
      %v2972 = vunpack.c.l.b16 %v1515
      %v2973 = vunpack.c.l.b16 %v1516
      %v2974 = vunpack.c.l.b16 %v1517
      %v2975 = vunpack.c.l.b16 %v1518
      %v2976 = vunpack.c.l.b16 %v1519
      %v2977 = vunpack.c.l.b16 %v1520
      %v2978 = vunpack.c.l.b16 %v1521
      %v2979 = vunpack.c.l.b16 %v1522
      %v2980 = vunpack.c.l.b16 %v1523
      %v2981 = vunpack.c.l.b16 %v1524
      %v2982 = vunpack.c.l.b16 %v1525
      %v2983 = vunpack.c.l.b16 %v1526
      %v2984 = vunpack.c.l.b16 %v1527
      %v2985 = vunpack.c.l.b16 %v1528
      %v2986 = vunpack.c.l.b16 %v1529
      %v2987 = vunpack.c.l.b16 %v1530
      %v2988 = vunpack.c.l.b16 %v1531
      %v2989 = vunpack.c.l.b16 %v1532
      %v2990 = vunpack.c.l.b16 %v1533
      %v2991 = vunpack.c.l.b16 %v1534
      %v2992 = vunpack.c.l.b16 %v1535
      %v2993 = vunpack.c.l.b16 %v1536
      %v2994 = vunpack.c.l.b16 %v1537
      %v2995 = vunpack.c.l.b16 %v1538
      %v2996 = vunpack.c.l.b16 %v1539
      %v2997 = vunpack.c.l.b16 %v1540
      %v2998 = vpack.c.b16 %v2967, %v2966
      %v2999 = vpack.c.b16 %v2969, %v2968
      %v3000 = vpack.c.b16 %v2971, %v2970
      %v3001 = vpack.c.b16 %v2973, %v2972
      %v3002 = vpack.c.b16 %v2975, %v2974
      %v3003 = vpack.c.b16 %v2977, %v2976
      %v3004 = vpack.c.b16 %v2979, %v2978
      %v3005 = vpack.c.b16 %v2981, %v2980
      %v3006 = vpack.c.b16 %v2983, %v2982
      %v3007 = vpack.c.b16 %v2985, %v2984
      %v3008 = vpack.c.b16 %v2987, %v2986
      %v3009 = vpack.c.b16 %v2989, %v2988
      %v3010 = vpack.c.b16 %v2991, %v2990
      %v3011 = vpack.c.b16 %v2993, %v2992
      %v3012 = vpack.c.b16 %v2995, %v2994
      %v3013 = vpack.c.b16 %v2997, %v2996
      %3014 = vrot.lane.b32.xlu0 %v2998, 12
      %v3015 = vpop.permute.xlu0 %3014
      %3016 = vrot.lane.b32.xlu0 %v2999, 12
      %v3017 = vpop.permute.xlu0 %3016
      %3018 = vrot.lane.b32.xlu0 %v3000, 12
      %v3019 = vpop.permute.xlu0 %3018
      %3020 = vrot.lane.b32.xlu0 %v3001, 12
      %v3021 = vpop.permute.xlu0 %3020
      %3022 = vrot.lane.b32.xlu0 %v3002, 12
      %v3023 = vpop.permute.xlu0 %3022
      %3024 = vrot.lane.b32.xlu0 %v3003, 12
      %v3025 = vpop.permute.xlu0 %3024
      %3026 = vrot.lane.b32.xlu0 %v3004, 12
      %v3027 = vpop.permute.xlu0 %3026
      %3028 = vrot.lane.b32.xlu0 %v3005, 12
      %v3029 = vpop.permute.xlu0 %3028
      %3030 = vrot.lane.b32.xlu0 %v3006, 12
      %v3031 = vpop.permute.xlu0 %3030
      %3032 = vrot.lane.b32.xlu0 %v3007, 12
      %v3033 = vpop.permute.xlu0 %3032
      %3034 = vrot.lane.b32.xlu0 %v3008, 12
      %v3035 = vpop.permute.xlu0 %3034
      %3036 = vrot.lane.b32.xlu0 %v3009, 12
      %v3037 = vpop.permute.xlu0 %3036
      %3038 = vrot.lane.b32.xlu0 %v3010, 12
      %v3039 = vpop.permute.xlu0 %3038
      %3040 = vrot.lane.b32.xlu0 %v3011, 12
      %v3041 = vpop.permute.xlu0 %3040
      %3042 = vrot.lane.b32.xlu0 %v3012, 12
      %v3043 = vpop.permute.xlu0 %3042
      %3044 = vrot.lane.b32.xlu0 %v3013, 12
      %v3045 = vpop.permute.xlu0 %3044
      %v3046 = vunpack.c.l.b16 %v1570
      %v3047 = vunpack.c.l.b16 %v1580
      %v3048 = vunpack.c.l.b16 %v1594
      %v3049 = vunpack.c.l.b16 %v1604
      %v3050 = vunpack.c.l.b16 %v1618
      %v3051 = vunpack.c.l.b16 %v1628
      %v3052 = vunpack.c.l.b16 %v1642
      %v3053 = vunpack.c.l.b16 %v1652
      %v3054 = vunpack.c.l.b16 %v1666
      %v3055 = vunpack.c.l.b16 %v1676
      %v3056 = vunpack.c.l.b16 %v1690
      %v3057 = vunpack.c.l.b16 %v1700
      %v3058 = vunpack.c.l.b16 %v1714
      %v3059 = vunpack.c.l.b16 %v1724
      %v3060 = vunpack.c.l.b16 %v1738
      %v3061 = vunpack.c.l.b16 %v1748
      %v3062 = vunpack.c.l.b16 %v1762
      %v3063 = vunpack.c.l.b16 %v1772
      %v3064 = vunpack.c.l.b16 %v1786
      %v3065 = vunpack.c.l.b16 %v1796
      %v3066 = vunpack.c.l.b16 %v1810
      %v3067 = vunpack.c.l.b16 %v1820
      %v3068 = vunpack.c.l.b16 %v1834
      %v3069 = vunpack.c.l.b16 %v1844
      %v3070 = vunpack.c.l.b16 %v1858
      %v3071 = vunpack.c.l.b16 %v1868
      %v3072 = vunpack.c.l.b16 %v1882
      %v3073 = vunpack.c.l.b16 %v1892
      %v3074 = vunpack.c.l.b16 %v1906
      %v3075 = vunpack.c.l.b16 %v1916
      %v3076 = vunpack.c.l.b16 %v1930
      %v3077 = vunpack.c.l.b16 %v1940
      %v3078 = vpack.c.b16 %v3047, %v3046
      %v3079 = vpack.c.b16 %v3049, %v3048
      %v3080 = vpack.c.b16 %v3051, %v3050
      %v3081 = vpack.c.b16 %v3053, %v3052
      %v3082 = vpack.c.b16 %v3055, %v3054
      %v3083 = vpack.c.b16 %v3057, %v3056
      %v3084 = vpack.c.b16 %v3059, %v3058
      %v3085 = vpack.c.b16 %v3061, %v3060
      %v3086 = vpack.c.b16 %v3063, %v3062
      %v3087 = vpack.c.b16 %v3065, %v3064
      %v3088 = vpack.c.b16 %v3067, %v3066
      %v3089 = vpack.c.b16 %v3069, %v3068
      %v3090 = vpack.c.b16 %v3071, %v3070
      %v3091 = vpack.c.b16 %v3073, %v3072
      %v3092 = vpack.c.b16 %v3075, %v3074
      %v3093 = vpack.c.b16 %v3077, %v3076
      %3094 = vrot.lane.b32.xlu0 %v3078, 16
      %v3095 = vpop.permute.xlu0 %3094
      %3096 = vrot.lane.b32.xlu0 %v3079, 16
      %v3097 = vpop.permute.xlu0 %3096
      %3098 = vrot.lane.b32.xlu0 %v3080, 16
      %v3099 = vpop.permute.xlu0 %3098
      %3100 = vrot.lane.b32.xlu0 %v3081, 16
      %v3101 = vpop.permute.xlu0 %3100
      %3102 = vrot.lane.b32.xlu0 %v3082, 16
      %v3103 = vpop.permute.xlu0 %3102
      %3104 = vrot.lane.b32.xlu0 %v3083, 16
      %v3105 = vpop.permute.xlu0 %3104
      %3106 = vrot.lane.b32.xlu0 %v3084, 16
      %v3107 = vpop.permute.xlu0 %3106
      %3108 = vrot.lane.b32.xlu0 %v3085, 16
      %v3109 = vpop.permute.xlu0 %3108
      %3110 = vrot.lane.b32.xlu0 %v3086, 16
      %v3111 = vpop.permute.xlu0 %3110
      %3112 = vrot.lane.b32.xlu0 %v3087, 16
      %v3113 = vpop.permute.xlu0 %3112
      %3114 = vrot.lane.b32.xlu0 %v3088, 16
      %v3115 = vpop.permute.xlu0 %3114
      %3116 = vrot.lane.b32.xlu0 %v3089, 16
      %v3117 = vpop.permute.xlu0 %3116
      %3118 = vrot.lane.b32.xlu0 %v3090, 16
      %v3119 = vpop.permute.xlu0 %3118
      %3120 = vrot.lane.b32.xlu0 %v3091, 16
      %v3121 = vpop.permute.xlu0 %3120
      %3122 = vrot.lane.b32.xlu0 %v3092, 16
      %v3123 = vpop.permute.xlu0 %3122
      %3124 = vrot.lane.b32.xlu0 %v3093, 16
      %v3125 = vpop.permute.xlu0 %3124
      %v3126 = vunpack.c.l.b16 %v2008
      %v3127 = vunpack.c.l.b16 %v2011
      %v3128 = vunpack.c.l.b16 %v2015
      %v3129 = vunpack.c.l.b16 %v2018
      %v3130 = vunpack.c.l.b16 %v2022
      %v3131 = vunpack.c.l.b16 %v2025
      %v3132 = vunpack.c.l.b16 %v2029
      %v3133 = vunpack.c.l.b16 %v2032
      %v3134 = vunpack.c.l.b16 %v2036
      %v3135 = vunpack.c.l.b16 %v2039
      %v3136 = vunpack.c.l.b16 %v2043
      %v3137 = vunpack.c.l.b16 %v2046
      %v3138 = vunpack.c.l.b16 %v2050
      %v3139 = vunpack.c.l.b16 %v2053
      %v3140 = vunpack.c.l.b16 %v2057
      %v3141 = vunpack.c.l.b16 %v2060
      %v3142 = vunpack.c.l.b16 %v2064
      %v3143 = vunpack.c.l.b16 %v2067
      %v3144 = vunpack.c.l.b16 %v2071
      %v3145 = vunpack.c.l.b16 %v2074
      %v3146 = vunpack.c.l.b16 %v2078
      %v3147 = vunpack.c.l.b16 %v2081
      %v3148 = vunpack.c.l.b16 %v2085
      %v3149 = vunpack.c.l.b16 %v2088
      %v3150 = vunpack.c.l.b16 %v2092
      %v3151 = vunpack.c.l.b16 %v2095
      %v3152 = vunpack.c.l.b16 %v2099
      %v3153 = vunpack.c.l.b16 %v2102
      %v3154 = vunpack.c.l.b16 %v2106
      %v3155 = vunpack.c.l.b16 %v2109
      %v3156 = vunpack.c.l.b16 %v2113
      %v3157 = vunpack.c.l.b16 %v2116
      %v3158 = vpack.c.b16 %v3127, %v3126
      %v3159 = vpack.c.b16 %v3129, %v3128
      %v3160 = vpack.c.b16 %v3131, %v3130
      %v3161 = vpack.c.b16 %v3133, %v3132
      %v3162 = vpack.c.b16 %v3135, %v3134
      %v3163 = vpack.c.b16 %v3137, %v3136
      %v3164 = vpack.c.b16 %v3139, %v3138
      %v3165 = vpack.c.b16 %v3141, %v3140
      %v3166 = vpack.c.b16 %v3143, %v3142
      %v3167 = vpack.c.b16 %v3145, %v3144
      %v3168 = vpack.c.b16 %v3147, %v3146
      %v3169 = vpack.c.b16 %v3149, %v3148
      %v3170 = vpack.c.b16 %v3151, %v3150
      %v3171 = vpack.c.b16 %v3153, %v3152
      %v3172 = vpack.c.b16 %v3155, %v3154
      %v3173 = vpack.c.b16 %v3157, %v3156
      %3174 = vrot.lane.b32.xlu0 %v3158, 20
      %v3175 = vpop.permute.xlu0 %3174
      %3176 = vrot.lane.b32.xlu0 %v3159, 20
      %v3177 = vpop.permute.xlu0 %3176
      %3178 = vrot.lane.b32.xlu0 %v3160, 20
      %v3179 = vpop.permute.xlu0 %3178
      %3180 = vrot.lane.b32.xlu0 %v3161, 20
      %v3181 = vpop.permute.xlu0 %3180
      %3182 = vrot.lane.b32.xlu0 %v3162, 20
      %v3183 = vpop.permute.xlu0 %3182
      %3184 = vrot.lane.b32.xlu0 %v3163, 20
      %v3185 = vpop.permute.xlu0 %3184
      %3186 = vrot.lane.b32.xlu0 %v3164, 20
      %v3187 = vpop.permute.xlu0 %3186
      %3188 = vrot.lane.b32.xlu0 %v3165, 20
      %v3189 = vpop.permute.xlu0 %3188
      %3190 = vrot.lane.b32.xlu0 %v3166, 20
      %v3191 = vpop.permute.xlu0 %3190
      %3192 = vrot.lane.b32.xlu0 %v3167, 20
      %v3193 = vpop.permute.xlu0 %3192
      %3194 = vrot.lane.b32.xlu0 %v3168, 20
      %v3195 = vpop.permute.xlu0 %3194
      %3196 = vrot.lane.b32.xlu0 %v3169, 20
      %v3197 = vpop.permute.xlu0 %3196
      %3198 = vrot.lane.b32.xlu0 %v3170, 20
      %v3199 = vpop.permute.xlu0 %3198
      %3200 = vrot.lane.b32.xlu0 %v3171, 20
      %v3201 = vpop.permute.xlu0 %3200
      %3202 = vrot.lane.b32.xlu0 %v3172, 20
      %v3203 = vpop.permute.xlu0 %3202
      %3204 = vrot.lane.b32.xlu0 %v3173, 20
      %v3205 = vpop.permute.xlu0 %3204
      %v3222 = vunpack.c.l.b16 %v2118
      %v3223 = vunpack.c.l.b16 %v2119
      %v3224 = vunpack.c.l.b16 %v2120
      %v3225 = vunpack.c.l.b16 %v2121
      %v3226 = vunpack.c.l.b16 %v2122
      %v3227 = vunpack.c.l.b16 %v2123
      %v3228 = vunpack.c.l.b16 %v2124
      %v3229 = vunpack.c.l.b16 %v2125
      %v3230 = vunpack.c.l.b16 %v2126
      %v3231 = vunpack.c.l.b16 %v2127
      %v3232 = vunpack.c.l.b16 %v2128
      %v3233 = vunpack.c.l.b16 %v2129
      %v3234 = vunpack.c.l.b16 %v2130
      %v3235 = vunpack.c.l.b16 %v2131
      %v3236 = vunpack.c.l.b16 %v2132
      %v3237 = vunpack.c.l.b16 %v2133
      %v3238 = vunpack.c.l.b16 %v2134
      %v3239 = vunpack.c.l.b16 %v2135
      %v3240 = vunpack.c.l.b16 %v2136
      %v3241 = vunpack.c.l.b16 %v2137
      %v3242 = vunpack.c.l.b16 %v2138
      %v3243 = vunpack.c.l.b16 %v2139
      %v3244 = vunpack.c.l.b16 %v2140
      %v3245 = vunpack.c.l.b16 %v2141
      %v3246 = vunpack.c.l.b16 %v2142
      %v3247 = vunpack.c.l.b16 %v2143
      %v3248 = vunpack.c.l.b16 %v2144
      %v3249 = vunpack.c.l.b16 %v2145
      %v3250 = vunpack.c.l.b16 %v2146
      %v3251 = vunpack.c.l.b16 %v2147
      %v3252 = vunpack.c.l.b16 %v2148
      %v3253 = vunpack.c.l.b16 %v2149
      %v3254 = vpack.c.b16 %v3223, %v3222
      %v3255 = vpack.c.b16 %v3225, %v3224
      %v3256 = vpack.c.b16 %v3227, %v3226
      %v3257 = vpack.c.b16 %v3229, %v3228
      %v3258 = vpack.c.b16 %v3231, %v3230
      %v3259 = vpack.c.b16 %v3233, %v3232
      %v3260 = vpack.c.b16 %v3235, %v3234
      %v3261 = vpack.c.b16 %v3237, %v3236
      %v3262 = vpack.c.b16 %v3239, %v3238
      %v3263 = vpack.c.b16 %v3241, %v3240
      %v3264 = vpack.c.b16 %v3243, %v3242
      %v3265 = vpack.c.b16 %v3245, %v3244
      %v3266 = vpack.c.b16 %v3247, %v3246
      %v3267 = vpack.c.b16 %v3249, %v3248
      %v3268 = vpack.c.b16 %v3251, %v3250
      %v3269 = vpack.c.b16 %v3253, %v3252
      %3270 = vrot.lane.b32.xlu0 %v3254, 24
      %v3271 = vpop.permute.xlu0 %3270
      %3272 = vrot.lane.b32.xlu0 %v3255, 24
      %v3273 = vpop.permute.xlu0 %3272
      %3274 = vrot.lane.b32.xlu0 %v3256, 24
      %v3275 = vpop.permute.xlu0 %3274
      %3276 = vrot.lane.b32.xlu0 %v3257, 24
      %v3277 = vpop.permute.xlu0 %3276
      %3278 = vrot.lane.b32.xlu0 %v3258, 24
      %v3279 = vpop.permute.xlu0 %3278
      %3280 = vrot.lane.b32.xlu0 %v3259, 24
      %v3281 = vpop.permute.xlu0 %3280
      %3282 = vrot.lane.b32.xlu0 %v3260, 24
      %v3283 = vpop.permute.xlu0 %3282
      %3284 = vrot.lane.b32.xlu0 %v3261, 24
      %v3285 = vpop.permute.xlu0 %3284
      %3286 = vrot.lane.b32.xlu0 %v3262, 24
      %v3287 = vpop.permute.xlu0 %3286
      %3288 = vrot.lane.b32.xlu0 %v3263, 24
      %v3289 = vpop.permute.xlu0 %3288
      %3290 = vrot.lane.b32.xlu0 %v3264, 24
      %v3291 = vpop.permute.xlu0 %3290
      %3292 = vrot.lane.b32.xlu0 %v3265, 24
      %v3293 = vpop.permute.xlu0 %3292
      %3294 = vrot.lane.b32.xlu0 %v3266, 24
      %v3295 = vpop.permute.xlu0 %3294
      %3296 = vrot.lane.b32.xlu0 %v3267, 24
      %v3297 = vpop.permute.xlu0 %3296
      %3298 = vrot.lane.b32.xlu0 %v3268, 24
      %v3299 = vpop.permute.xlu0 %3298
      %3300 = vrot.lane.b32.xlu0 %v3269, 24
      %v3301 = vpop.permute.xlu0 %3300
      %v3302 = vunpack.c.l.b16 %v2179
      %v3303 = vunpack.c.l.b16 %v2189
      %v3304 = vunpack.c.l.b16 %v2203
      %v3305 = vunpack.c.l.b16 %v2213
      %v3306 = vunpack.c.l.b16 %v2227
      %v3307 = vunpack.c.l.b16 %v2237
      %v3308 = vunpack.c.l.b16 %v2251
      %v3309 = vunpack.c.l.b16 %v2261
      %v3310 = vunpack.c.l.b16 %v2275
      %v3311 = vunpack.c.l.b16 %v2285
      %v3312 = vunpack.c.l.b16 %v2299
      %v3313 = vunpack.c.l.b16 %v2309
      %v3314 = vunpack.c.l.b16 %v2323
      %v3315 = vunpack.c.l.b16 %v2333
      %v3316 = vunpack.c.l.b16 %v2347
      %v3317 = vunpack.c.l.b16 %v2357
      %v3318 = vunpack.c.l.b16 %v2371
      %v3319 = vunpack.c.l.b16 %v2381
      %v3320 = vunpack.c.l.b16 %v2395
      %v3321 = vunpack.c.l.b16 %v2405
      %v3322 = vunpack.c.l.b16 %v2419
      %v3323 = vunpack.c.l.b16 %v2429
      %v3324 = vunpack.c.l.b16 %v2443
      %v3325 = vunpack.c.l.b16 %v2453
      %v3326 = vunpack.c.l.b16 %v2467
      %v3327 = vunpack.c.l.b16 %v2477
      %v3328 = vunpack.c.l.b16 %v2491
      %v3329 = vunpack.c.l.b16 %v2501
      %v3330 = vunpack.c.l.b16 %v2515
      %v3331 = vunpack.c.l.b16 %v2525
      %v3332 = vunpack.c.l.b16 %v2539
      %v3333 = vunpack.c.l.b16 %v2549
      %v3334 = vpack.c.b16 %v3303, %v3302
      %v3335 = vpack.c.b16 %v3305, %v3304
      %v3336 = vpack.c.b16 %v3307, %v3306
      %v3337 = vpack.c.b16 %v3309, %v3308
      %v3338 = vpack.c.b16 %v3311, %v3310
      %v3339 = vpack.c.b16 %v3313, %v3312
      %v3340 = vpack.c.b16 %v3315, %v3314
      %v3341 = vpack.c.b16 %v3317, %v3316
      %v3342 = vpack.c.b16 %v3319, %v3318
      %v3343 = vpack.c.b16 %v3321, %v3320
      %v3344 = vpack.c.b16 %v3323, %v3322
      %v3345 = vpack.c.b16 %v3325, %v3324
      %v3346 = vpack.c.b16 %v3327, %v3326
      %v3347 = vpack.c.b16 %v3329, %v3328
      %v3348 = vpack.c.b16 %v3331, %v3330
      %v3349 = vpack.c.b16 %v3333, %v3332
      %3350 = vrot.lane.b32.xlu0 %v3334, 28
      %v3351 = vpop.permute.xlu0 %3350
      %3352 = vrot.lane.b32.xlu0 %v3335, 28
      %v3353 = vpop.permute.xlu0 %3352
      %3354 = vrot.lane.b32.xlu0 %v3336, 28
      %v3355 = vpop.permute.xlu0 %3354
      %3356 = vrot.lane.b32.xlu0 %v3337, 28
      %v3357 = vpop.permute.xlu0 %3356
      %3358 = vrot.lane.b32.xlu0 %v3338, 28
      %v3359 = vpop.permute.xlu0 %3358
      %3360 = vrot.lane.b32.xlu0 %v3339, 28
      %v3361 = vpop.permute.xlu0 %3360
      %3362 = vrot.lane.b32.xlu0 %v3340, 28
      %v3363 = vpop.permute.xlu0 %3362
      %3364 = vrot.lane.b32.xlu0 %v3341, 28
      %v3365 = vpop.permute.xlu0 %3364
      %3366 = vrot.lane.b32.xlu0 %v3342, 28
      %v3367 = vpop.permute.xlu0 %3366
      %3368 = vrot.lane.b32.xlu0 %v3343, 28
      %v3369 = vpop.permute.xlu0 %3368
      %3370 = vrot.lane.b32.xlu0 %v3344, 28
      %v3371 = vpop.permute.xlu0 %3370
      %3372 = vrot.lane.b32.xlu0 %v3345, 28
      %v3373 = vpop.permute.xlu0 %3372
      %3374 = vrot.lane.b32.xlu0 %v3346, 28
      %v3375 = vpop.permute.xlu0 %3374
      %3376 = vrot.lane.b32.xlu0 %v3347, 28
      %v3377 = vpop.permute.xlu0 %3376
      %3378 = vrot.lane.b32.xlu0 %v3348, 28
      %v3379 = vpop.permute.xlu0 %3378
      %3380 = vrot.lane.b32.xlu0 %v3349, 28
      %v3381 = vpop.permute.xlu0 %3380
      %v3382 = vunpack.c.l.b16 %v2617
      %v3383 = vunpack.c.l.b16 %v2620
      %v3384 = vunpack.c.l.b16 %v2624
      %v3385 = vunpack.c.l.b16 %v2627
      %v3386 = vunpack.c.l.b16 %v2631
      %v3387 = vunpack.c.l.b16 %v2634
      %v3388 = vunpack.c.l.b16 %v2638
      %v3389 = vunpack.c.l.b16 %v2641
      %v3390 = vunpack.c.l.b16 %v2645
      %v3391 = vunpack.c.l.b16 %v2648
      %v3392 = vunpack.c.l.b16 %v2652
      %v3393 = vunpack.c.l.b16 %v2655
      %v3394 = vunpack.c.l.b16 %v2659
      %v3395 = vunpack.c.l.b16 %v2662
      %v3396 = vunpack.c.l.b16 %v2666
      %v3397 = vunpack.c.l.b16 %v2669
      %v3398 = vunpack.c.l.b16 %v2673
      %v3399 = vunpack.c.l.b16 %v2676
      %v3400 = vunpack.c.l.b16 %v2680
      %v3401 = vunpack.c.l.b16 %v2683
      %v3402 = vunpack.c.l.b16 %v2687
      %v3403 = vunpack.c.l.b16 %v2690
      %v3404 = vunpack.c.l.b16 %v2694
      %v3405 = vunpack.c.l.b16 %v2697
      %v3406 = vunpack.c.l.b16 %v2701
      %v3407 = vunpack.c.l.b16 %v2704
      %v3408 = vunpack.c.l.b16 %v2708
      %v3409 = vunpack.c.l.b16 %v2711
      %v3410 = vunpack.c.l.b16 %v2715
      %v3411 = vunpack.c.l.b16 %v2718
      %v3412 = vunpack.c.l.b16 %v2722
      %v3413 = vunpack.c.l.b16 %v2725
      %v3414 = vpack.c.b16 %v3383, %v3382
      %v3415 = vpack.c.b16 %v3385, %v3384
      %v3416 = vpack.c.b16 %v3387, %v3386
      %v3417 = vpack.c.b16 %v3389, %v3388
      %v3418 = vpack.c.b16 %v3391, %v3390
      %v3419 = vpack.c.b16 %v3393, %v3392
      %v3420 = vpack.c.b16 %v3395, %v3394
      %v3421 = vpack.c.b16 %v3397, %v3396
      %v3422 = vpack.c.b16 %v3399, %v3398
      %v3423 = vpack.c.b16 %v3401, %v3400
      %v3424 = vpack.c.b16 %v3403, %v3402
      %v3425 = vpack.c.b16 %v3405, %v3404
      %v3426 = vpack.c.b16 %v3407, %v3406
      %v3427 = vpack.c.b16 %v3409, %v3408
      %v3428 = vpack.c.b16 %v3411, %v3410
      %v3429 = vpack.c.b16 %v3413, %v3412
      %3430 = vrot.lane.b32.xlu0 %v3414, 32
      %v3431 = vpop.permute.xlu0 %3430
      %3432 = vrot.lane.b32.xlu0 %v3415, 32
      %v3433 = vpop.permute.xlu0 %3432
      %3434 = vrot.lane.b32.xlu0 %v3416, 32
      %v3435 = vpop.permute.xlu0 %3434
      %3436 = vrot.lane.b32.xlu0 %v3417, 32
      %v3437 = vpop.permute.xlu0 %3436
      %3438 = vrot.lane.b32.xlu0 %v3418, 32
      %v3439 = vpop.permute.xlu0 %3438
      %3440 = vrot.lane.b32.xlu0 %v3419, 32
      %v3441 = vpop.permute.xlu0 %3440
      %3442 = vrot.lane.b32.xlu0 %v3420, 32
      %v3443 = vpop.permute.xlu0 %3442
      %3444 = vrot.lane.b32.xlu0 %v3421, 32
      %v3445 = vpop.permute.xlu0 %3444
      %3446 = vrot.lane.b32.xlu0 %v3422, 32
      %v3447 = vpop.permute.xlu0 %3446
      %3448 = vrot.lane.b32.xlu0 %v3423, 32
      %v3449 = vpop.permute.xlu0 %3448
      %3450 = vrot.lane.b32.xlu0 %v3424, 32
      %v3451 = vpop.permute.xlu0 %3450
      %3452 = vrot.lane.b32.xlu0 %v3425, 32
      %v3453 = vpop.permute.xlu0 %3452
      %3454 = vrot.lane.b32.xlu0 %v3426, 32
      %v3455 = vpop.permute.xlu0 %3454
      %3456 = vrot.lane.b32.xlu0 %v3427, 32
      %v3457 = vpop.permute.xlu0 %3456
      %3458 = vrot.lane.b32.xlu0 %v3428, 32
      %v3459 = vpop.permute.xlu0 %3458
      %3460 = vrot.lane.b32.xlu0 %v3429, 32
      %v3461 = vpop.permute.xlu0 %3460
      %vm3462 = vcmask 31744
      %v3465 = vsel %vm3462, %v2774, %v2839
      %v3468 = vsel %vm3462, %v2775, %v2841
      %v3471 = vsel %vm3462, %v2776, %v2843
      %v3474 = vsel %vm3462, %v2777, %v2845
      %v3477 = vsel %vm3462, %v2778, %v2847
      %v3480 = vsel %vm3462, %v2779, %v2849
      %v3483 = vsel %vm3462, %v2780, %v2851
      %v3486 = vsel %vm3462, %v2781, %v2853
      %v3489 = vsel %vm3462, %v2782, %v2855
      %v3492 = vsel %vm3462, %v2783, %v2857
      %v3495 = vsel %vm3462, %v2784, %v2859
      %v3498 = vsel %vm3462, %v2785, %v2861
      %v3501 = vsel %vm3462, %v2786, %v2863
      %v3504 = vsel %vm3462, %v2787, %v2865
      %v3507 = vsel %vm3462, %v2788, %v2867
      %v3510 = vsel %vm3462, %v2789, %v2869
      %vm3511 = vcmask 64512
      %v3513 = vsel %vm3511, %v3465, %v2919
      %v3515 = vsel %vm3511, %v3468, %v2921
      %v3517 = vsel %vm3511, %v3471, %v2923
      %v3519 = vsel %vm3511, %v3474, %v2925
      %v3521 = vsel %vm3511, %v3477, %v2927
      %v3523 = vsel %vm3511, %v3480, %v2929
      %v3525 = vsel %vm3511, %v3483, %v2931
      %v3527 = vsel %vm3511, %v3486, %v2933
      %v3529 = vsel %vm3511, %v3489, %v2935
      %v3531 = vsel %vm3511, %v3492, %v2937
      %v3533 = vsel %vm3511, %v3495, %v2939
      %v3535 = vsel %vm3511, %v3498, %v2941
      %v3537 = vsel %vm3511, %v3501, %v2943
      %v3539 = vsel %vm3511, %v3504, %v2945
      %v3541 = vsel %vm3511, %v3507, %v2947
      %v3543 = vsel %vm3511, %v3510, %v2949
      %vm3544 = vcmask 97280
      %v3546 = vsel %vm3544, %v3513, %v3015
      %v3548 = vsel %vm3544, %v3515, %v3017
      %v3550 = vsel %vm3544, %v3517, %v3019
      %v3552 = vsel %vm3544, %v3519, %v3021
      %v3554 = vsel %vm3544, %v3521, %v3023
      %v3556 = vsel %vm3544, %v3523, %v3025
      %v3558 = vsel %vm3544, %v3525, %v3027
      %v3560 = vsel %vm3544, %v3527, %v3029
      %v3562 = vsel %vm3544, %v3529, %v3031
      %v3564 = vsel %vm3544, %v3531, %v3033
      %v3566 = vsel %vm3544, %v3533, %v3035
      %v3568 = vsel %vm3544, %v3535, %v3037
      %v3570 = vsel %vm3544, %v3537, %v3039
      %v3572 = vsel %vm3544, %v3539, %v3041
      %v3574 = vsel %vm3544, %v3541, %v3043
      %v3576 = vsel %vm3544, %v3543, %v3045
      %vm3577 = vcmask 130048
      %v3579 = vsel %vm3577, %v3546, %v3095
      %v3581 = vsel %vm3577, %v3548, %v3097
      %v3583 = vsel %vm3577, %v3550, %v3099
      %v3585 = vsel %vm3577, %v3552, %v3101
      %v3587 = vsel %vm3577, %v3554, %v3103
      %v3589 = vsel %vm3577, %v3556, %v3105
      %v3591 = vsel %vm3577, %v3558, %v3107
      %v3593 = vsel %vm3577, %v3560, %v3109
      %v3595 = vsel %vm3577, %v3562, %v3111
      %v3597 = vsel %vm3577, %v3564, %v3113
      %v3599 = vsel %vm3577, %v3566, %v3115
      %v3601 = vsel %vm3577, %v3568, %v3117
      %v3603 = vsel %vm3577, %v3570, %v3119
      %v3605 = vsel %vm3577, %v3572, %v3121
      %v3607 = vsel %vm3577, %v3574, %v3123
      %v3609 = vsel %vm3577, %v3576, %v3125
      %vm3610 = vcmask 162816
      %v3612 = vsel %vm3610, %v3579, %v3175
      %v3614 = vsel %vm3610, %v3581, %v3177
      %v3616 = vsel %vm3610, %v3583, %v3179
      %v3618 = vsel %vm3610, %v3585, %v3181
      %v3620 = vsel %vm3610, %v3587, %v3183
      %v3622 = vsel %vm3610, %v3589, %v3185
      %v3624 = vsel %vm3610, %v3591, %v3187
      %v3626 = vsel %vm3610, %v3593, %v3189
      %v3628 = vsel %vm3610, %v3595, %v3191
      %v3630 = vsel %vm3610, %v3597, %v3193
      %v3632 = vsel %vm3610, %v3599, %v3195
      %v3634 = vsel %vm3610, %v3601, %v3197
      %v3636 = vsel %vm3610, %v3603, %v3199
      %v3638 = vsel %vm3610, %v3605, %v3201
      %v3640 = vsel %vm3610, %v3607, %v3203
      %v3642 = vsel %vm3610, %v3609, %v3205
      %vm3643 = vcmask 195584
      %v3645 = vsel %vm3643, %v3612, %v3271
      %v3647 = vsel %vm3643, %v3614, %v3273
      %v3649 = vsel %vm3643, %v3616, %v3275
      %v3651 = vsel %vm3643, %v3618, %v3277
      %v3653 = vsel %vm3643, %v3620, %v3279
      %v3655 = vsel %vm3643, %v3622, %v3281
      %v3657 = vsel %vm3643, %v3624, %v3283
      %v3659 = vsel %vm3643, %v3626, %v3285
      %v3661 = vsel %vm3643, %v3628, %v3287
      %v3663 = vsel %vm3643, %v3630, %v3289
      %v3665 = vsel %vm3643, %v3632, %v3291
      %v3667 = vsel %vm3643, %v3634, %v3293
      %v3669 = vsel %vm3643, %v3636, %v3295
      %v3671 = vsel %vm3643, %v3638, %v3297
      %v3673 = vsel %vm3643, %v3640, %v3299
      %v3675 = vsel %vm3643, %v3642, %v3301
      %vm3676 = vcmask 228352
      %v3678 = vsel %vm3676, %v3645, %v3351
      %v3680 = vsel %vm3676, %v3647, %v3353
      %v3682 = vsel %vm3676, %v3649, %v3355
      %v3684 = vsel %vm3676, %v3651, %v3357
      %v3686 = vsel %vm3676, %v3653, %v3359
      %v3688 = vsel %vm3676, %v3655, %v3361
      %v3690 = vsel %vm3676, %v3657, %v3363
      %v3692 = vsel %vm3676, %v3659, %v3365
      %v3694 = vsel %vm3676, %v3661, %v3367
      %v3696 = vsel %vm3676, %v3663, %v3369
      %v3698 = vsel %vm3676, %v3665, %v3371
      %v3700 = vsel %vm3676, %v3667, %v3373
      %v3702 = vsel %vm3676, %v3669, %v3375
      %v3704 = vsel %vm3676, %v3671, %v3377
      %v3706 = vsel %vm3676, %v3673, %v3379
      %v3708 = vsel %vm3676, %v3675, %v3381
      %vm3709 = vcmask 261120
      %v3711 = vsel %vm3709, %v3678, %v3431
      %v3713 = vsel %vm3709, %v3680, %v3433
      %v3715 = vsel %vm3709, %v3682, %v3435
      %v3717 = vsel %vm3709, %v3684, %v3437
      %v3719 = vsel %vm3709, %v3686, %v3439
      %v3721 = vsel %vm3709, %v3688, %v3441
      %v3723 = vsel %vm3709, %v3690, %v3443
      %v3725 = vsel %vm3709, %v3692, %v3445
      %v3727 = vsel %vm3709, %v3694, %v3447
      %v3729 = vsel %vm3709, %v3696, %v3449
      %v3731 = vsel %vm3709, %v3698, %v3451
      %v3733 = vsel %vm3709, %v3700, %v3453
      %v3735 = vsel %vm3709, %v3702, %v3455
      %v3737 = vsel %vm3709, %v3704, %v3457
      %v3739 = vsel %vm3709, %v3706, %v3459
      %v3741 = vsel %vm3709, %v3708, %v3461
      %v3742 = vld [vmem:[%s1] sm:$0xf]
      %v3743 = vld [vmem:[%s1 + $0x4] sm:$0xf]
      %v3744 = vld [vmem:[%s1 + $0x8] sm:$0xf]
      %v3745 = vld [vmem:[%s1 + $0xc] sm:$0xf]
      %v3746 = vld [vmem:[%s1 + $0x10] sm:$0x3]
      %v3747 = vld [vmem:[%s2] sm:$0x1]
      %v3749 = vperm.slane %v3747, 0
      %v3756 = vunpack.c.l.b16 %v3742
      %v3757 = vunpack.c.l.b16 %v3743
      %v3758 = vunpack.c.l.b16 %v3744
      %v3759 = vunpack.c.l.b16 %v3745
      %v3760 = vunpack.c.l.b16 %v3746
      %v3761 = vpack.c.b16 %v3757, %v3756
      %v3762 = vpack.c.b16 %v3759, %v3758
      %v3763 = vpack.c.b16 %v3760, %v3760
      %vm3766 = vcmask 293888
      %v3767 = vsel %vm3766, %v3711, 0
      %v3769 = vsel %vm3766, %v3713, 0
      %v3771 = vsel %vm3766, %v3715, 0
      %v3773 = vsel %vm3766, %v3717, 0
      %v3775 = vsel %vm3766, %v3719, 0
      %v3777 = vsel %vm3766, %v3721, 0
      %v3779 = vsel %vm3766, %v3723, 0
      %v3781 = vsel %vm3766, %v3725, 0
      %v3783 = vsel %vm3766, %v3727, 0
      %v3785 = vsel %vm3766, %v3729, 0
      %v3787 = vsel %vm3766, %v3731, 0
      %v3789 = vsel %vm3766, %v3733, 0
      %v3791 = vsel %vm3766, %v3735, 0
      %v3793 = vsel %vm3766, %v3737, 0
      %v3795 = vsel %vm3766, %v3739, 0
      %v3797 = vsel %vm3766, %v3741, 0
      %vm3799 = vcmask 1041408
      %v3801 = vsel %vm3799, %v3763, 0
      %3803 = vmatpush.bf16.msra.mxu0 0
      %3804 = vmatpush.bf16.msra.mxu0 0
      %3805 = vmatpush.bf16.msra.mxu0 0
      %3806 = vmatpush.bf16.msra.mxu0 0
      %3807 = vmatpush.bf16.msra.mxu0 0
      %3808 = vmatpush.bf16.msra.mxu0 %v3801
      %3809 = vmatpush.bf16.msra.mxu0 %v3762
      %3810 = vmatpush.bf16.msra.mxu0 %v3761
      %3811 = vmatmul.bf16.gmra.mxu0 %v3767
      %v3812 = vpop.f32.mrf.mxu0
      %v3813 = vadd.f32 %v3749, %v3812
      %v3814 = vpop.f32.mrf.mxu0
      %v3815 = vadd.f32 %v3749, %v3814
      %3816 = vmatmul.bf16.gmra.mxu0 %v3769
      %v3817 = vpop.f32.mrf.mxu0
      %v3818 = vadd.f32 %v3749, %v3817
      %v3819 = vpop.f32.mrf.mxu0
      %v3820 = vadd.f32 %v3749, %v3819
      %3821 = vmatmul.bf16.gmra.mxu0 %v3771
      %v3822 = vpop.f32.mrf.mxu0
      %v3823 = vadd.f32 %v3749, %v3822
      %v3824 = vpop.f32.mrf.mxu0
      %v3825 = vadd.f32 %v3749, %v3824
      %3826 = vmatmul.bf16.gmra.mxu0 %v3773
      %v3827 = vpop.f32.mrf.mxu0
      %v3828 = vadd.f32 %v3749, %v3827
      %v3829 = vpop.f32.mrf.mxu0
      %v3830 = vadd.f32 %v3749, %v3829
      %3831 = vmatmul.bf16.gmra.mxu0 %v3775
      %v3832 = vpop.f32.mrf.mxu0
      %v3833 = vadd.f32 %v3749, %v3832
      %v3834 = vpop.f32.mrf.mxu0
      %v3835 = vadd.f32 %v3749, %v3834
      %3836 = vmatmul.bf16.gmra.mxu0 %v3777
      %v3837 = vpop.f32.mrf.mxu0
      %v3838 = vadd.f32 %v3749, %v3837
      %v3839 = vpop.f32.mrf.mxu0
      %v3840 = vadd.f32 %v3749, %v3839
      %3841 = vmatmul.bf16.gmra.mxu0 %v3779
      %v3842 = vpop.f32.mrf.mxu0
      %v3843 = vadd.f32 %v3749, %v3842
      %v3844 = vpop.f32.mrf.mxu0
      %v3845 = vadd.f32 %v3749, %v3844
      %3846 = vmatmul.bf16.gmra.mxu0 %v3781
      %v3847 = vpop.f32.mrf.mxu0
      %v3848 = vadd.f32 %v3749, %v3847
      %v3849 = vpop.f32.mrf.mxu0
      %v3850 = vadd.f32 %v3749, %v3849
      %3851 = vmatmul.bf16.gmra.mxu0 %v3783
      %v3852 = vpop.f32.mrf.mxu0
      %v3853 = vadd.f32 %v3749, %v3852
      %v3854 = vpop.f32.mrf.mxu0
      %v3855 = vadd.f32 %v3749, %v3854
      %3856 = vmatmul.bf16.gmra.mxu0 %v3785
      %v3857 = vpop.f32.mrf.mxu0
      %v3858 = vadd.f32 %v3749, %v3857
      %v3859 = vpop.f32.mrf.mxu0
      %v3860 = vadd.f32 %v3749, %v3859
      %3861 = vmatmul.bf16.gmra.mxu0 %v3787
      %v3862 = vpop.f32.mrf.mxu0
      %v3863 = vadd.f32 %v3749, %v3862
      %v3864 = vpop.f32.mrf.mxu0
      %v3865 = vadd.f32 %v3749, %v3864
      %3866 = vmatmul.bf16.gmra.mxu0 %v3789
      %v3867 = vpop.f32.mrf.mxu0
      %v3868 = vadd.f32 %v3749, %v3867
      %v3869 = vpop.f32.mrf.mxu0
      %v3870 = vadd.f32 %v3749, %v3869
      %3871 = vmatmul.bf16.gmra.mxu0 %v3791
      %v3872 = vpop.f32.mrf.mxu0
      %v3873 = vadd.f32 %v3749, %v3872
      %v3874 = vpop.f32.mrf.mxu0
      %v3875 = vadd.f32 %v3749, %v3874
      %3876 = vmatmul.bf16.gmra.mxu0 %v3793
      %v3877 = vpop.f32.mrf.mxu0
      %v3878 = vadd.f32 %v3749, %v3877
      %v3879 = vpop.f32.mrf.mxu0
      %v3880 = vadd.f32 %v3749, %v3879
      %3881 = vmatmul.bf16.gmra.mxu0 %v3795
      %v3882 = vpop.f32.mrf.mxu0
      %v3883 = vadd.f32 %v3749, %v3882
      %v3884 = vpop.f32.mrf.mxu0
      %v3885 = vadd.f32 %v3749, %v3884
      %3886 = vmatmul.bf16.gmra.mxu0 %v3797
      %v3887 = vpop.f32.mrf.mxu0
      %v3888 = vadd.f32 %v3749, %v3887
      %v3889 = vpop.f32.mrf.mxu0
      %v3890 = vadd.f32 %v3749, %v3889
      %3891 = vdwg.mxu0
      %v3892 = vmax.f32 %v3813, 0.0
      %v3893 = vmax.f32 %v3815, 0.0
      %v3894 = vmax.f32 %v3818, 0.0
      %v3895 = vmax.f32 %v3820, 0.0
      %v3896 = vmax.f32 %v3823, 0.0
      %v3897 = vmax.f32 %v3825, 0.0
      %v3898 = vmax.f32 %v3828, 0.0
      %v3899 = vmax.f32 %v3830, 0.0
      %v3900 = vmax.f32 %v3833, 0.0
      %v3901 = vmax.f32 %v3835, 0.0
      %v3902 = vmax.f32 %v3838, 0.0
      %v3903 = vmax.f32 %v3840, 0.0
      %v3904 = vmax.f32 %v3843, 0.0
      %v3905 = vmax.f32 %v3845, 0.0
      %v3906 = vmax.f32 %v3848, 0.0
      %v3907 = vmax.f32 %v3850, 0.0
      %v3908 = vmax.f32 %v3853, 0.0
      %v3909 = vmax.f32 %v3855, 0.0
      %v3910 = vmax.f32 %v3858, 0.0
      %v3911 = vmax.f32 %v3860, 0.0
      %v3912 = vmax.f32 %v3863, 0.0
      %v3913 = vmax.f32 %v3865, 0.0
      %v3914 = vmax.f32 %v3868, 0.0
      %v3915 = vmax.f32 %v3870, 0.0
      %v3916 = vmax.f32 %v3873, 0.0
      %v3917 = vmax.f32 %v3875, 0.0
      %v3918 = vmax.f32 %v3878, 0.0
      %v3919 = vmax.f32 %v3880, 0.0
      %v3920 = vmax.f32 %v3883, 0.0
      %v3921 = vmax.f32 %v3885, 0.0
      %v3922 = vmax.f32 %v3888, 0.0
      %v3923 = vmax.f32 %v3890, 0.0
      %vm3924 = vcmask 257024
      %3925 = vst.msk [vmem:[#allocation3] sm:$0xf] %vm3924, 0
      %3926 = vst.msk [vmem:[#allocation3 + $0x4] sm:$0xf] %vm3924, 0
      %vm3927 = vcmask 253952
      %3928 = vst.msk [vmem:[#allocation3 + $0x8] sm:$0x1] %vm3927, 0
      %3929 = vst.msk [vmem:[#allocation3 + $0xc] sm:$0xf] %vm3924, 0
      %3930 = vst.msk [vmem:[#allocation3 + $0x10] sm:$0xf] %vm3924, 0
      %3931 = vst.msk [vmem:[#allocation3 + $0x14] sm:$0x1] %vm3927, 0
      %3932 = vst.msk [vmem:[#allocation3 + $0x18] sm:$0xf] %vm3924, 0
      %3933 = vst.msk [vmem:[#allocation3 + $0x1c] sm:$0xf] %vm3924, 0
      %3934 = vst.msk [vmem:[#allocation3 + $0x20] sm:$0x1] %vm3927, 0
      %3935 = vst.msk [vmem:[#allocation3 + $0x24] sm:$0xf] %vm3924, 0
      %3936 = vst.msk [vmem:[#allocation3 + $0x28] sm:$0xf] %vm3924, 0
      %3937 = vst.msk [vmem:[#allocation3 + $0x2c] sm:$0x1] %vm3927, 0
      %3938 = vst.msk [vmem:[#allocation3 + $0x30] sm:$0xf] %vm3924, 0
      %3939 = vst.msk [vmem:[#allocation3 + $0x34] sm:$0xf] %vm3924, 0
      %3940 = vst.msk [vmem:[#allocation3 + $0x38] sm:$0x1] %vm3927, 0
      %3941 = vst.msk [vmem:[#allocation3 + $0x3c] sm:$0xf] %vm3924, 0
      %3942 = vst.msk [vmem:[#allocation3 + $0x40] sm:$0xf] %vm3924, 0
      %3943 = vst.msk [vmem:[#allocation3 + $0x44] sm:$0x1] %vm3927, 0
      %3944 = vst.msk [vmem:[#allocation3 + $0x48] sm:$0xf] %vm3924, 0
      %3945 = vst.msk [vmem:[#allocation3 + $0x4c] sm:$0xf] %vm3924, 0
      %3946 = vst.msk [vmem:[#allocation3 + $0x50] sm:$0x1] %vm3927, 0
      %3947 = vst.msk [vmem:[#allocation3 + $0x54] sm:$0xf] %vm3924, 0
      %3948 = vst.msk [vmem:[#allocation3 + $0x58] sm:$0xf] %vm3924, 0
      %3949 = vst.msk [vmem:[#allocation3 + $0x5c] sm:$0x1] %vm3927, 0
      %3950 = vst.msk [vmem:[#allocation3 + $0x60] sm:$0xf] %vm3924, 0
      %3951 = vst.msk [vmem:[#allocation3 + $0x64] sm:$0xf] %vm3924, 0
      %3952 = vst.msk [vmem:[#allocation3 + $0x68] sm:$0x1] %vm3927, 0
      %3953 = vst.msk [vmem:[#allocation3 + $0x6c] sm:$0xf] %vm3924, 0
      %3954 = vst.msk [vmem:[#allocation3 + $0x70] sm:$0xf] %vm3924, 0
      %3955 = vst.msk [vmem:[#allocation3 + $0x74] sm:$0x1] %vm3927, 0
      %3956 = vst.msk [vmem:[#allocation3 + $0x78] sm:$0xf] %vm3924, 0
      %3957 = vst.msk [vmem:[#allocation3 + $0x7c] sm:$0xf] %vm3924, 0
      %3958 = vst.msk [vmem:[#allocation3 + $0x80] sm:$0x1] %vm3927, 0
      %3959 = vst.msk [vmem:[#allocation3 + $0x84] sm:$0xf] %vm3924, 0
      %3960 = vst.msk [vmem:[#allocation3 + $0x88] sm:$0xf] %vm3924, 0
      %3961 = vst.msk [vmem:[#allocation3 + $0x8c] sm:$0x1] %vm3927, 0
      %3962 = vst.msk [vmem:[#allocation3 + $0x90] sm:$0xf] %vm3924, 0
      %3963 = vst.msk [vmem:[#allocation3 + $0x94] sm:$0xf] %vm3924, 0
      %3964 = vst.msk [vmem:[#allocation3 + $0x98] sm:$0x1] %vm3927, 0
      %3965 = vst.msk [vmem:[#allocation3 + $0x9c] sm:$0xf] %vm3924, 0
      %3966 = vst.msk [vmem:[#allocation3 + $0xa0] sm:$0xf] %vm3924, 0
      %3967 = vst.msk [vmem:[#allocation3 + $0xa4] sm:$0x1] %vm3927, 0
      %3968 = vst.msk [vmem:[#allocation3 + $0xa8] sm:$0xf] %vm3924, 0
      %3969 = vst.msk [vmem:[#allocation3 + $0xac] sm:$0xf] %vm3924, 0
      %3970 = vst.msk [vmem:[#allocation3 + $0xb0] sm:$0x1] %vm3927, 0
      %3971 = vst.msk [vmem:[#allocation3 + $0xb4] sm:$0xf] %vm3924, 0
      %3972 = vst.msk [vmem:[#allocation3 + $0xb8] sm:$0xf] %vm3924, 0
      %3973 = vst.msk [vmem:[#allocation3 + $0xbc] sm:$0x1] %vm3927, 0
      %3974 = vst.msk [vmem:[#allocation3 + $0xc0] sm:$0xf] %vm3924, 0
      %3975 = vst.msk [vmem:[#allocation3 + $0xc4] sm:$0xf] %vm3924, 0
      %3976 = vst.msk [vmem:[#allocation3 + $0xc8] sm:$0x1] %vm3927, 0
      %3977 = vst.msk [vmem:[#allocation3 + $0xcc] sm:$0xf] %vm3924, 0
      %3978 = vst.msk [vmem:[#allocation3 + $0xd0] sm:$0xf] %vm3924, 0
      %3979 = vst.msk [vmem:[#allocation3 + $0xd4] sm:$0x1] %vm3927, 0
      %v3980 = vpack.c.bf16 %v3892, %v3892
      %v3981 = vpack.c.bf16 %v3893, %v3893
      %v3982 = vpack.c.bf16 %v3894, %v3894
      %v3983 = vpack.c.bf16 %v3895, %v3895
      %v3984 = vpack.c.bf16 %v3896, %v3896
      %v3985 = vpack.c.bf16 %v3897, %v3897
      %v3986 = vpack.c.bf16 %v3898, %v3898
      %v3987 = vpack.c.bf16 %v3899, %v3899
      %v3988 = vpack.c.bf16 %v3900, %v3900
      %v3989 = vpack.c.bf16 %v3901, %v3901
      %v3990 = vpack.c.bf16 %v3902, %v3902
      %v3991 = vpack.c.bf16 %v3903, %v3903
      %v3992 = vpack.c.bf16 %v3904, %v3904
      %v3993 = vpack.c.bf16 %v3905, %v3905
      %v3994 = vpack.c.bf16 %v3906, %v3906
      %v3995 = vpack.c.bf16 %v3907, %v3907
      %v3996 = vpack.c.bf16 %v3908, %v3908
      %v3997 = vpack.c.bf16 %v3909, %v3909
      %v3998 = vpack.c.bf16 %v3910, %v3910
      %v3999 = vpack.c.bf16 %v3911, %v3911
      %v4000 = vpack.c.bf16 %v3912, %v3912
      %v4001 = vpack.c.bf16 %v3913, %v3913
      %v4002 = vpack.c.bf16 %v3914, %v3914
      %v4003 = vpack.c.bf16 %v3915, %v3915
      %v4004 = vpack.c.bf16 %v3916, %v3916
      %v4005 = vpack.c.bf16 %v3917, %v3917
      %v4006 = vpack.c.bf16 %v3918, %v3918
      %v4007 = vpack.c.bf16 %v3919, %v3919
      %v4008 = vpack.c.bf16 %v3920, %v3920
      %v4009 = vpack.c.bf16 %v3921, %v3921
      %v4010 = vpack.c.bf16 %v3922, %v3922
      %v4011 = vpack.c.bf16 %v3923, %v3923
      %v4013 = vshrl.u32 %v3980, 16
      %v4015 = vrot.slane %v4013, 7
      %v4016 = vshll.u32 %v3980, 16
      %v4018 = vor.u32 %v4015, %v4016
      %v4019 = vrot.slane %v4015, 4
      %v4021 = vshrl.u32 %v3981, 16
      %v4023 = vrot.slane %v4021, 7
      %v4024 = vshll.u32 %v3981, 16
      %v4026 = vor.u32 %v4023, %v4024
      %v4027 = vsel %vm456, %v4019, %v4026
      %v4028 = vrot.slane %v4023, 4
      %v4030 = vshrl.u32 %v3982, 16
      %v4032 = vrot.slane %v4030, 7
      %v4033 = vshll.u32 %v3982, 16
      %v4035 = vor.u32 %v4032, %v4033
      %v4036 = vrot.slane %v4032, 4
      %v4038 = vshrl.u32 %v3983, 16
      %v4040 = vrot.slane %v4038, 7
      %v4041 = vshll.u32 %v3983, 16
      %v4043 = vor.u32 %v4040, %v4041
      %v4044 = vsel %vm456, %v4036, %v4043
      %v4045 = vrot.slane %v4040, 4
      %v4047 = vshrl.u32 %v3984, 16
      %v4049 = vrot.slane %v4047, 7
      %v4050 = vshll.u32 %v3984, 16
      %v4052 = vor.u32 %v4049, %v4050
      %v4053 = vrot.slane %v4049, 4
      %v4055 = vshrl.u32 %v3985, 16
      %v4057 = vrot.slane %v4055, 7
      %v4058 = vshll.u32 %v3985, 16
      %v4060 = vor.u32 %v4057, %v4058
      %v4061 = vsel %vm456, %v4053, %v4060
      %v4062 = vrot.slane %v4057, 4
      %v4064 = vshrl.u32 %v3986, 16
      %v4066 = vrot.slane %v4064, 7
      %v4067 = vshll.u32 %v3986, 16
      %v4069 = vor.u32 %v4066, %v4067
      %v4070 = vrot.slane %v4066, 4
      %v4072 = vshrl.u32 %v3987, 16
      %v4074 = vrot.slane %v4072, 7
      %v4075 = vshll.u32 %v3987, 16
      %v4077 = vor.u32 %v4074, %v4075
      %v4078 = vsel %vm456, %v4070, %v4077
      %v4079 = vrot.slane %v4074, 4
      %v4081 = vshrl.u32 %v3988, 16
      %v4083 = vrot.slane %v4081, 7
      %v4084 = vshll.u32 %v3988, 16
      %v4086 = vor.u32 %v4083, %v4084
      %v4087 = vrot.slane %v4083, 4
      %v4089 = vshrl.u32 %v3989, 16
      %v4091 = vrot.slane %v4089, 7
      %v4092 = vshll.u32 %v3989, 16
      %v4094 = vor.u32 %v4091, %v4092
      %v4095 = vsel %vm456, %v4087, %v4094
      %v4096 = vrot.slane %v4091, 4
      %v4098 = vshrl.u32 %v3990, 16
      %v4100 = vrot.slane %v4098, 7
      %v4101 = vshll.u32 %v3990, 16
      %v4103 = vor.u32 %v4100, %v4101
      %v4104 = vrot.slane %v4100, 4
      %v4106 = vshrl.u32 %v3991, 16
      %v4108 = vrot.slane %v4106, 7
      %v4109 = vshll.u32 %v3991, 16
      %v4111 = vor.u32 %v4108, %v4109
      %v4112 = vsel %vm456, %v4104, %v4111
      %v4113 = vrot.slane %v4108, 4
      %v4115 = vshrl.u32 %v3992, 16
      %v4117 = vrot.slane %v4115, 7
      %v4118 = vshll.u32 %v3992, 16
      %v4120 = vor.u32 %v4117, %v4118
      %v4121 = vrot.slane %v4117, 4
      %v4123 = vshrl.u32 %v3993, 16
      %v4125 = vrot.slane %v4123, 7
      %v4126 = vshll.u32 %v3993, 16
      %v4128 = vor.u32 %v4125, %v4126
      %v4129 = vsel %vm456, %v4121, %v4128
      %v4130 = vrot.slane %v4125, 4
      %v4132 = vshrl.u32 %v3994, 16
      %v4134 = vrot.slane %v4132, 7
      %v4135 = vshll.u32 %v3994, 16
      %v4137 = vor.u32 %v4134, %v4135
      %v4138 = vrot.slane %v4134, 4
      %v4140 = vshrl.u32 %v3995, 16
      %v4142 = vrot.slane %v4140, 7
      %v4143 = vshll.u32 %v3995, 16
      %v4145 = vor.u32 %v4142, %v4143
      %v4146 = vsel %vm456, %v4138, %v4145
      %v4147 = vrot.slane %v4142, 4
      %v4149 = vshrl.u32 %v3996, 16
      %v4151 = vrot.slane %v4149, 7
      %v4152 = vshll.u32 %v3996, 16
      %v4154 = vor.u32 %v4151, %v4152
      %v4155 = vrot.slane %v4151, 4
      %v4157 = vshrl.u32 %v3997, 16
      %v4159 = vrot.slane %v4157, 7
      %v4160 = vshll.u32 %v3997, 16
      %v4162 = vor.u32 %v4159, %v4160
      %v4163 = vsel %vm456, %v4155, %v4162
      %v4164 = vrot.slane %v4159, 4
      %v4166 = vshrl.u32 %v3998, 16
      %v4168 = vrot.slane %v4166, 7
      %v4169 = vshll.u32 %v3998, 16
      %v4171 = vor.u32 %v4168, %v4169
      %v4172 = vrot.slane %v4168, 4
      %v4174 = vshrl.u32 %v3999, 16
      %v4176 = vrot.slane %v4174, 7
      %v4177 = vshll.u32 %v3999, 16
      %v4179 = vor.u32 %v4176, %v4177
      %v4180 = vsel %vm456, %v4172, %v4179
      %v4181 = vrot.slane %v4176, 4
      %v4183 = vshrl.u32 %v4000, 16
      %v4185 = vrot.slane %v4183, 7
      %v4186 = vshll.u32 %v4000, 16
      %v4188 = vor.u32 %v4185, %v4186
      %v4189 = vrot.slane %v4185, 4
      %v4191 = vshrl.u32 %v4001, 16
      %v4193 = vrot.slane %v4191, 7
      %v4194 = vshll.u32 %v4001, 16
      %v4196 = vor.u32 %v4193, %v4194
      %v4197 = vsel %vm456, %v4189, %v4196
      %v4198 = vrot.slane %v4193, 4
      %v4200 = vshrl.u32 %v4002, 16
      %v4202 = vrot.slane %v4200, 7
      %v4203 = vshll.u32 %v4002, 16
      %v4205 = vor.u32 %v4202, %v4203
      %v4206 = vrot.slane %v4202, 4
      %v4208 = vshrl.u32 %v4003, 16
      %v4210 = vrot.slane %v4208, 7
      %v4211 = vshll.u32 %v4003, 16
      %v4213 = vor.u32 %v4210, %v4211
      %v4214 = vsel %vm456, %v4206, %v4213
      %v4215 = vrot.slane %v4210, 4
      %v4217 = vshrl.u32 %v4004, 16
      %v4219 = vrot.slane %v4217, 7
      %v4220 = vshll.u32 %v4004, 16
      %v4222 = vor.u32 %v4219, %v4220
      %v4223 = vrot.slane %v4219, 4
      %v4225 = vshrl.u32 %v4005, 16
      %v4227 = vrot.slane %v4225, 7
      %v4228 = vshll.u32 %v4005, 16
      %v4230 = vor.u32 %v4227, %v4228
      %v4231 = vsel %vm456, %v4223, %v4230
      %v4232 = vrot.slane %v4227, 4
      %v4234 = vshrl.u32 %v4006, 16
      %v4236 = vrot.slane %v4234, 7
      %v4237 = vshll.u32 %v4006, 16
      %v4239 = vor.u32 %v4236, %v4237
      %v4240 = vrot.slane %v4236, 4
      %v4242 = vshrl.u32 %v4007, 16
      %v4244 = vrot.slane %v4242, 7
      %v4245 = vshll.u32 %v4007, 16
      %v4247 = vor.u32 %v4244, %v4245
      %v4248 = vsel %vm456, %v4240, %v4247
      %v4249 = vrot.slane %v4244, 4
      %v4251 = vshrl.u32 %v4008, 16
      %v4253 = vrot.slane %v4251, 7
      %v4254 = vshll.u32 %v4008, 16
      %v4256 = vor.u32 %v4253, %v4254
      %v4257 = vrot.slane %v4253, 4
      %v4259 = vshrl.u32 %v4009, 16
      %v4261 = vrot.slane %v4259, 7
      %v4262 = vshll.u32 %v4009, 16
      %v4264 = vor.u32 %v4261, %v4262
      %v4265 = vsel %vm456, %v4257, %v4264
      %v4266 = vrot.slane %v4261, 4
      %v4268 = vshrl.u32 %v4010, 16
      %v4270 = vrot.slane %v4268, 7
      %v4271 = vshll.u32 %v4010, 16
      %v4273 = vor.u32 %v4270, %v4271
      %v4274 = vrot.slane %v4270, 4
      %v4276 = vshrl.u32 %v4011, 16
      %v4278 = vrot.slane %v4276, 7
      %v4279 = vshll.u32 %v4011, 16
      %v4281 = vor.u32 %v4278, %v4279
      %v4282 = vsel %vm456, %v4274, %v4281
      %v4283 = vrot.slane %v4278, 4
      %s4332 = scalar_lea.vmem [#allocation3], 12
      %vm4333 = vcmask 257024
      %vm4334 = vmand %vm4333, %vm779
      %v4335 = vld [vmem:[%s4332] sm:$0xf]
      %v4336 = vsel %vm4334, %v4018, %v4335
      %4337 = vst [vmem:[%s4332] sm:$0xf] %v4336
      %4338 = vst.msk [vmem:[%s4332 + $0x4] sm:$0xf] %vm3924, %v4027
      %vm4339 = vcmask 253952
      %vm4340 = vmand %vm4339, %vm454
      %v4341 = vld [vmem:[%s4332 + $0x8] sm:$0x1]
      %v4342 = vsel %vm4340, %v4028, %v4341
      %4343 = vst [vmem:[%s4332 + $0x8] sm:$0x1] %v4342
      %v4344 = vld [vmem:[%s4332 + $0xc] sm:$0xf]
      %v4345 = vsel %vm4334, %v4035, %v4344
      %4346 = vst [vmem:[%s4332 + $0xc] sm:$0xf] %v4345
      %4347 = vst.msk [vmem:[%s4332 + $0x10] sm:$0xf] %vm3924, %v4044
      %v4348 = vld [vmem:[%s4332 + $0x14] sm:$0x1]
      %v4349 = vsel %vm4340, %v4045, %v4348
      %4350 = vst [vmem:[%s4332 + $0x14] sm:$0x1] %v4349
      %v4351 = vld [vmem:[%s4332 + $0x18] sm:$0xf]
      %v4352 = vsel %vm4334, %v4052, %v4351
      %4353 = vst [vmem:[%s4332 + $0x18] sm:$0xf] %v4352
      %4354 = vst.msk [vmem:[%s4332 + $0x1c] sm:$0xf] %vm3924, %v4061
      %v4355 = vld [vmem:[%s4332 + $0x20] sm:$0x1]
      %v4356 = vsel %vm4340, %v4062, %v4355
      %4357 = vst [vmem:[%s4332 + $0x20] sm:$0x1] %v4356
      %v4358 = vld [vmem:[%s4332 + $0x24] sm:$0xf]
      %v4359 = vsel %vm4334, %v4069, %v4358
      %4360 = vst [vmem:[%s4332 + $0x24] sm:$0xf] %v4359
      %4361 = vst.msk [vmem:[%s4332 + $0x28] sm:$0xf] %vm3924, %v4078
      %v4362 = vld [vmem:[%s4332 + $0x2c] sm:$0x1]
      %v4363 = vsel %vm4340, %v4079, %v4362
      %4364 = vst [vmem:[%s4332 + $0x2c] sm:$0x1] %v4363
      %v4365 = vld [vmem:[%s4332 + $0x30] sm:$0xf]
      %v4366 = vsel %vm4334, %v4086, %v4365
      %4367 = vst [vmem:[%s4332 + $0x30] sm:$0xf] %v4366
      %4368 = vst.msk [vmem:[%s4332 + $0x34] sm:$0xf] %vm3924, %v4095
      %v4369 = vld [vmem:[%s4332 + $0x38] sm:$0x1]
      %v4370 = vsel %vm4340, %v4096, %v4369
      %4371 = vst [vmem:[%s4332 + $0x38] sm:$0x1] %v4370
      %v4372 = vld [vmem:[%s4332 + $0x3c] sm:$0xf]
      %v4373 = vsel %vm4334, %v4103, %v4372
      %4374 = vst [vmem:[%s4332 + $0x3c] sm:$0xf] %v4373
      %4375 = vst.msk [vmem:[%s4332 + $0x40] sm:$0xf] %vm3924, %v4112
      %v4376 = vld [vmem:[%s4332 + $0x44] sm:$0x1]
      %v4377 = vsel %vm4340, %v4113, %v4376
      %4378 = vst [vmem:[%s4332 + $0x44] sm:$0x1] %v4377
      %v4379 = vld [vmem:[%s4332 + $0x48] sm:$0xf]
      %v4380 = vsel %vm4334, %v4120, %v4379
      %4381 = vst [vmem:[%s4332 + $0x48] sm:$0xf] %v4380
      %4382 = vst.msk [vmem:[%s4332 + $0x4c] sm:$0xf] %vm3924, %v4129
      %v4383 = vld [vmem:[%s4332 + $0x50] sm:$0x1]
      %v4384 = vsel %vm4340, %v4130, %v4383
      %4385 = vst [vmem:[%s4332 + $0x50] sm:$0x1] %v4384
      %v4386 = vld [vmem:[%s4332 + $0x54] sm:$0xf]
      %v4387 = vsel %vm4334, %v4137, %v4386
      %4388 = vst [vmem:[%s4332 + $0x54] sm:$0xf] %v4387
      %4389 = vst.msk [vmem:[%s4332 + $0x58] sm:$0xf] %vm3924, %v4146
      %v4390 = vld [vmem:[%s4332 + $0x5c] sm:$0x1]
      %v4391 = vsel %vm4340, %v4147, %v4390
      %4392 = vst [vmem:[%s4332 + $0x5c] sm:$0x1] %v4391
      %v4393 = vld [vmem:[%s4332 + $0x60] sm:$0xf]
      %v4394 = vsel %vm4334, %v4154, %v4393
      %4395 = vst [vmem:[%s4332 + $0x60] sm:$0xf] %v4394
      %4396 = vst.msk [vmem:[%s4332 + $0x64] sm:$0xf] %vm3924, %v4163
      %v4397 = vld [vmem:[%s4332 + $0x68] sm:$0x1]
      %v4398 = vsel %vm4340, %v4164, %v4397
      %4399 = vst [vmem:[%s4332 + $0x68] sm:$0x1] %v4398
      %v4400 = vld [vmem:[%s4332 + $0x6c] sm:$0xf]
      %v4401 = vsel %vm4334, %v4171, %v4400
      %4402 = vst [vmem:[%s4332 + $0x6c] sm:$0xf] %v4401
      %4403 = vst.msk [vmem:[%s4332 + $0x70] sm:$0xf] %vm3924, %v4180
      %v4404 = vld [vmem:[%s4332 + $0x74] sm:$0x1]
      %v4405 = vsel %vm4340, %v4181, %v4404
      %4406 = vst [vmem:[%s4332 + $0x74] sm:$0x1] %v4405
      %v4407 = vld [vmem:[%s4332 + $0x78] sm:$0xf]
      %v4408 = vsel %vm4334, %v4188, %v4407
      %4409 = vst [vmem:[%s4332 + $0x78] sm:$0xf] %v4408
      %4410 = vst.msk [vmem:[%s4332 + $0x7c] sm:$0xf] %vm3924, %v4197
      %v4411 = vld [vmem:[%s4332 + $0x80] sm:$0x1]
      %v4412 = vsel %vm4340, %v4198, %v4411
      %4413 = vst [vmem:[%s4332 + $0x80] sm:$0x1] %v4412
      %v4414 = vld [vmem:[%s4332 + $0x84] sm:$0xf]
      %v4415 = vsel %vm4334, %v4205, %v4414
      %4416 = vst [vmem:[%s4332 + $0x84] sm:$0xf] %v4415
      %4417 = vst.msk [vmem:[%s4332 + $0x88] sm:$0xf] %vm3924, %v4214
      %v4418 = vld [vmem:[%s4332 + $0x8c] sm:$0x1]
      %v4419 = vsel %vm4340, %v4215, %v4418
      %4420 = vst [vmem:[%s4332 + $0x8c] sm:$0x1] %v4419
      %v4421 = vld [vmem:[%s4332 + $0x90] sm:$0xf]
      %v4422 = vsel %vm4334, %v4222, %v4421
      %4423 = vst [vmem:[%s4332 + $0x90] sm:$0xf] %v4422
      %4424 = vst.msk [vmem:[%s4332 + $0x94] sm:$0xf] %vm3924, %v4231
      %v4425 = vld [vmem:[%s4332 + $0x98] sm:$0x1]
      %v4426 = vsel %vm4340, %v4232, %v4425
      %4427 = vst [vmem:[%s4332 + $0x98] sm:$0x1] %v4426
      %v4428 = vld [vmem:[%s4332 + $0x9c] sm:$0xf]
      %v4429 = vsel %vm4334, %v4239, %v4428
      %4430 = vst [vmem:[%s4332 + $0x9c] sm:$0xf] %v4429
      %4431 = vst.msk [vmem:[%s4332 + $0xa0] sm:$0xf] %vm3924, %v4248
      %v4432 = vld [vmem:[%s4332 + $0xa4] sm:$0x1]
      %v4433 = vsel %vm4340, %v4249, %v4432
      %4434 = vst [vmem:[%s4332 + $0xa4] sm:$0x1] %v4433
      %v4435 = vld [vmem:[%s4332 + $0xa8] sm:$0xf]
      %v4436 = vsel %vm4334, %v4256, %v4435
      %4437 = vst [vmem:[%s4332 + $0xa8] sm:$0xf] %v4436
      %4438 = vst.msk [vmem:[%s4332 + $0xac] sm:$0xf] %vm3924, %v4265
      %v4439 = vld [vmem:[%s4332 + $0xb0] sm:$0x1]
      %v4440 = vsel %vm4340, %v4266, %v4439
      %4441 = vst [vmem:[%s4332 + $0xb0] sm:$0x1] %v4440
      %v4442 = vld [vmem:[%s4332 + $0xb4] sm:$0xf]
      %v4443 = vsel %vm4334, %v4273, %v4442
      %4444 = vst [vmem:[%s4332 + $0xb4] sm:$0xf] %v4443
      %4445 = vst.msk [vmem:[%s4332 + $0xb8] sm:$0xf] %vm3924, %v4282
      %v4446 = vld [vmem:[%s4332 + $0xbc] sm:$0x1]
      %v4447 = vsel %vm4340, %v4283, %v4446
      %4448 = vst [vmem:[%s4332 + $0xbc] sm:$0x1] %v4447
      %v4449 = vld [vmem:[#allocation3] sm:$0xf]
      %v4450 = vld [vmem:[#allocation3 + $0x4] sm:$0xf]
      %v4451 = vld [vmem:[#allocation3 + $0xc] sm:$0xf]
      %v4452 = vld [vmem:[#allocation3 + $0x10] sm:$0xf]
      %v4453 = vld [vmem:[#allocation3 + $0x18] sm:$0xf]
      %v4454 = vld [vmem:[#allocation3 + $0x1c] sm:$0xf]
      %v4455 = vld [vmem:[#allocation3 + $0x24] sm:$0xf]
      %v4456 = vld [vmem:[#allocation3 + $0x28] sm:$0xf]
      %v4457 = vld [vmem:[#allocation3 + $0x30] sm:$0xf]
      %v4458 = vld [vmem:[#allocation3 + $0x34] sm:$0xf]
      %v4459 = vld [vmem:[#allocation3 + $0x3c] sm:$0xf]
      %v4460 = vld [vmem:[#allocation3 + $0x40] sm:$0xf]
      %v4461 = vld [vmem:[#allocation3 + $0x48] sm:$0xf]
      %v4462 = vld [vmem:[#allocation3 + $0x4c] sm:$0xf]
      %v4463 = vld [vmem:[#allocation3 + $0x54] sm:$0xf]
      %v4464 = vld [vmem:[#allocation3 + $0x58] sm:$0xf]
      %v4465 = vld [vmem:[#allocation3 + $0x60] sm:$0xf]
      %v4466 = vld [vmem:[#allocation3 + $0x64] sm:$0xf]
      %v4467 = vld [vmem:[#allocation3 + $0x6c] sm:$0xf]
      %v4468 = vld [vmem:[#allocation3 + $0x70] sm:$0xf]
      %v4469 = vld [vmem:[#allocation3 + $0x78] sm:$0xf]
      %v4470 = vld [vmem:[#allocation3 + $0x7c] sm:$0xf]
      %v4471 = vld [vmem:[#allocation3 + $0x84] sm:$0xf]
      %v4472 = vld [vmem:[#allocation3 + $0x88] sm:$0xf]
      %v4473 = vld [vmem:[#allocation3 + $0x90] sm:$0xf]
      %v4474 = vld [vmem:[#allocation3 + $0x94] sm:$0xf]
      %v4475 = vld [vmem:[#allocation3 + $0x9c] sm:$0xf]
      %v4476 = vld [vmem:[#allocation3 + $0xa0] sm:$0xf]
      %v4477 = vld [vmem:[#allocation3 + $0xa8] sm:$0xf]
      %v4478 = vld [vmem:[#allocation3 + $0xac] sm:$0xf]
      %v4479 = vld [vmem:[#allocation3 + $0xb4] sm:$0xf]
      %v4480 = vld [vmem:[#allocation3 + $0xb8] sm:$0xf]
      %v4481 = vld [vmem:[#allocation3 + $0x8] sm:$0x1]
      %v4482 = vld [vmem:[#allocation3 + $0x14] sm:$0x1]
      %v4483 = vld [vmem:[#allocation3 + $0x20] sm:$0x1]
      %v4484 = vld [vmem:[#allocation3 + $0x2c] sm:$0x1]
      %v4485 = vld [vmem:[#allocation3 + $0x38] sm:$0x1]
      %v4486 = vld [vmem:[#allocation3 + $0x44] sm:$0x1]
      %v4487 = vld [vmem:[#allocation3 + $0x50] sm:$0x1]
      %v4488 = vld [vmem:[#allocation3 + $0x5c] sm:$0x1]
      %v4489 = vld [vmem:[#allocation3 + $0x68] sm:$0x1]
      %v4490 = vld [vmem:[#allocation3 + $0x74] sm:$0x1]
      %v4491 = vld [vmem:[#allocation3 + $0x80] sm:$0x1]
      %v4492 = vld [vmem:[#allocation3 + $0x8c] sm:$0x1]
      %v4493 = vld [vmem:[#allocation3 + $0x98] sm:$0x1]
      %v4494 = vld [vmem:[#allocation3 + $0xa4] sm:$0x1]
      %v4495 = vld [vmem:[#allocation3 + $0xb0] sm:$0x1]
      %v4496 = vld [vmem:[#allocation3 + $0xbc] sm:$0x1]
      %v4498 = vshrl.u32 %v4449, 16
      %v4500 = vrot.slane %v4498, 4
      %v4501 = vshll.u32 %v4449, 16
      %v4503 = vrot.slane %v4501, 5
      %v4504 = vor.u32 %v4500, %v4503
      %v4505 = vrot.slane %v4504, 4
      %v4507 = vshll.u32 %v4450, 16
      %v4509 = vrot.slane %v4507, 5
      %v4510 = vsel %vm945, %v4505, %v4509
      %v4511 = vshrl.u32 %v4450, 16
      %v4513 = vrot.slane %v4511, 4
      %v4514 = vor.u32 %v4513, %v4509
      %v4515 = vrot.slane %v4514, 4
      %v4517 = vshll.u32 %v4481, 16
      %v4519 = vrot.slane %v4517, 5
      %v4520 = vsel %vm945, %v4515, %v4519
      %v4522 = vshrl.u32 %v4451, 16
      %v4524 = vrot.slane %v4522, 4
      %v4525 = vshll.u32 %v4451, 16
      %v4527 = vrot.slane %v4525, 5
      %v4528 = vor.u32 %v4524, %v4527
      %v4529 = vrot.slane %v4528, 4
      %v4531 = vshll.u32 %v4452, 16
      %v4533 = vrot.slane %v4531, 5
      %v4534 = vsel %vm945, %v4529, %v4533
      %v4535 = vshrl.u32 %v4452, 16
      %v4537 = vrot.slane %v4535, 4
      %v4538 = vor.u32 %v4537, %v4533
      %v4539 = vrot.slane %v4538, 4
      %v4541 = vshll.u32 %v4482, 16
      %v4543 = vrot.slane %v4541, 5
      %v4544 = vsel %vm945, %v4539, %v4543
      %v4546 = vshrl.u32 %v4453, 16
      %v4548 = vrot.slane %v4546, 4
      %v4549 = vshll.u32 %v4453, 16
      %v4551 = vrot.slane %v4549, 5
      %v4552 = vor.u32 %v4548, %v4551
      %v4553 = vrot.slane %v4552, 4
      %v4555 = vshll.u32 %v4454, 16
      %v4557 = vrot.slane %v4555, 5
      %v4558 = vsel %vm945, %v4553, %v4557
      %v4559 = vshrl.u32 %v4454, 16
      %v4561 = vrot.slane %v4559, 4
      %v4562 = vor.u32 %v4561, %v4557
      %v4563 = vrot.slane %v4562, 4
      %v4565 = vshll.u32 %v4483, 16
      %v4567 = vrot.slane %v4565, 5
      %v4568 = vsel %vm945, %v4563, %v4567
      %v4570 = vshrl.u32 %v4455, 16
      %v4572 = vrot.slane %v4570, 4
      %v4573 = vshll.u32 %v4455, 16
      %v4575 = vrot.slane %v4573, 5
      %v4576 = vor.u32 %v4572, %v4575
      %v4577 = vrot.slane %v4576, 4
      %v4579 = vshll.u32 %v4456, 16
      %v4581 = vrot.slane %v4579, 5
      %v4582 = vsel %vm945, %v4577, %v4581
      %v4583 = vshrl.u32 %v4456, 16
      %v4585 = vrot.slane %v4583, 4
      %v4586 = vor.u32 %v4585, %v4581
      %v4587 = vrot.slane %v4586, 4
      %v4589 = vshll.u32 %v4484, 16
      %v4591 = vrot.slane %v4589, 5
      %v4592 = vsel %vm945, %v4587, %v4591
      %v4594 = vshrl.u32 %v4457, 16
      %v4596 = vrot.slane %v4594, 4
      %v4597 = vshll.u32 %v4457, 16
      %v4599 = vrot.slane %v4597, 5
      %v4600 = vor.u32 %v4596, %v4599
      %v4601 = vrot.slane %v4600, 4
      %v4603 = vshll.u32 %v4458, 16
      %v4605 = vrot.slane %v4603, 5
      %v4606 = vsel %vm945, %v4601, %v4605
      %v4607 = vshrl.u32 %v4458, 16
      %v4609 = vrot.slane %v4607, 4
      %v4610 = vor.u32 %v4609, %v4605
      %v4611 = vrot.slane %v4610, 4
      %v4613 = vshll.u32 %v4485, 16
      %v4615 = vrot.slane %v4613, 5
      %v4616 = vsel %vm945, %v4611, %v4615
      %v4618 = vshrl.u32 %v4459, 16
      %v4620 = vrot.slane %v4618, 4
      %v4621 = vshll.u32 %v4459, 16
      %v4623 = vrot.slane %v4621, 5
      %v4624 = vor.u32 %v4620, %v4623
      %v4625 = vrot.slane %v4624, 4
      %v4627 = vshll.u32 %v4460, 16
      %v4629 = vrot.slane %v4627, 5
      %v4630 = vsel %vm945, %v4625, %v4629
      %v4631 = vshrl.u32 %v4460, 16
      %v4633 = vrot.slane %v4631, 4
      %v4634 = vor.u32 %v4633, %v4629
      %v4635 = vrot.slane %v4634, 4
      %v4637 = vshll.u32 %v4486, 16
      %v4639 = vrot.slane %v4637, 5
      %v4640 = vsel %vm945, %v4635, %v4639
      %v4642 = vshrl.u32 %v4461, 16
      %v4644 = vrot.slane %v4642, 4
      %v4645 = vshll.u32 %v4461, 16
      %v4647 = vrot.slane %v4645, 5
      %v4648 = vor.u32 %v4644, %v4647
      %v4649 = vrot.slane %v4648, 4
      %v4651 = vshll.u32 %v4462, 16
      %v4653 = vrot.slane %v4651, 5
      %v4654 = vsel %vm945, %v4649, %v4653
      %v4655 = vshrl.u32 %v4462, 16
      %v4657 = vrot.slane %v4655, 4
      %v4658 = vor.u32 %v4657, %v4653
      %v4659 = vrot.slane %v4658, 4
      %v4661 = vshll.u32 %v4487, 16
      %v4663 = vrot.slane %v4661, 5
      %v4664 = vsel %vm945, %v4659, %v4663
      %v4666 = vshrl.u32 %v4463, 16
      %v4668 = vrot.slane %v4666, 4
      %v4669 = vshll.u32 %v4463, 16
      %v4671 = vrot.slane %v4669, 5
      %v4672 = vor.u32 %v4668, %v4671
      %v4673 = vrot.slane %v4672, 4
      %v4675 = vshll.u32 %v4464, 16
      %v4677 = vrot.slane %v4675, 5
      %v4678 = vsel %vm945, %v4673, %v4677
      %v4679 = vshrl.u32 %v4464, 16
      %v4681 = vrot.slane %v4679, 4
      %v4682 = vor.u32 %v4681, %v4677
      %v4683 = vrot.slane %v4682, 4
      %v4685 = vshll.u32 %v4488, 16
      %v4687 = vrot.slane %v4685, 5
      %v4688 = vsel %vm945, %v4683, %v4687
      %v4690 = vshrl.u32 %v4465, 16
      %v4692 = vrot.slane %v4690, 4
      %v4693 = vshll.u32 %v4465, 16
      %v4695 = vrot.slane %v4693, 5
      %v4696 = vor.u32 %v4692, %v4695
      %v4697 = vrot.slane %v4696, 4
      %v4699 = vshll.u32 %v4466, 16
      %v4701 = vrot.slane %v4699, 5
      %v4702 = vsel %vm945, %v4697, %v4701
      %v4703 = vshrl.u32 %v4466, 16
      %v4705 = vrot.slane %v4703, 4
      %v4706 = vor.u32 %v4705, %v4701
      %v4707 = vrot.slane %v4706, 4
      %v4709 = vshll.u32 %v4489, 16
      %v4711 = vrot.slane %v4709, 5
      %v4712 = vsel %vm945, %v4707, %v4711
      %v4714 = vshrl.u32 %v4467, 16
      %v4716 = vrot.slane %v4714, 4
      %v4717 = vshll.u32 %v4467, 16
      %v4719 = vrot.slane %v4717, 5
      %v4720 = vor.u32 %v4716, %v4719
      %v4721 = vrot.slane %v4720, 4
      %v4723 = vshll.u32 %v4468, 16
      %v4725 = vrot.slane %v4723, 5
      %v4726 = vsel %vm945, %v4721, %v4725
      %v4727 = vshrl.u32 %v4468, 16
      %v4729 = vrot.slane %v4727, 4
      %v4730 = vor.u32 %v4729, %v4725
      %v4731 = vrot.slane %v4730, 4
      %v4733 = vshll.u32 %v4490, 16
      %v4735 = vrot.slane %v4733, 5
      %v4736 = vsel %vm945, %v4731, %v4735
      %v4738 = vshrl.u32 %v4469, 16
      %v4740 = vrot.slane %v4738, 4
      %v4741 = vshll.u32 %v4469, 16
      %v4743 = vrot.slane %v4741, 5
      %v4744 = vor.u32 %v4740, %v4743
      %v4745 = vrot.slane %v4744, 4
      %v4747 = vshll.u32 %v4470, 16
      %v4749 = vrot.slane %v4747, 5
      %v4750 = vsel %vm945, %v4745, %v4749
      %v4751 = vshrl.u32 %v4470, 16
      %v4753 = vrot.slane %v4751, 4
      %v4754 = vor.u32 %v4753, %v4749
      %v4755 = vrot.slane %v4754, 4
      %v4757 = vshll.u32 %v4491, 16
      %v4759 = vrot.slane %v4757, 5
      %v4760 = vsel %vm945, %v4755, %v4759
      %v4762 = vshrl.u32 %v4471, 16
      %v4764 = vrot.slane %v4762, 4
      %v4765 = vshll.u32 %v4471, 16
      %v4767 = vrot.slane %v4765, 5
      %v4768 = vor.u32 %v4764, %v4767
      %v4769 = vrot.slane %v4768, 4
      %v4771 = vshll.u32 %v4472, 16
      %v4773 = vrot.slane %v4771, 5
      %v4774 = vsel %vm945, %v4769, %v4773
      %v4775 = vshrl.u32 %v4472, 16
      %v4777 = vrot.slane %v4775, 4
      %v4778 = vor.u32 %v4777, %v4773
      %v4779 = vrot.slane %v4778, 4
      %v4781 = vshll.u32 %v4492, 16
      %v4783 = vrot.slane %v4781, 5
      %v4784 = vsel %vm945, %v4779, %v4783
      %v4786 = vshrl.u32 %v4473, 16
      %v4788 = vrot.slane %v4786, 4
      %v4789 = vshll.u32 %v4473, 16
      %v4791 = vrot.slane %v4789, 5
      %v4792 = vor.u32 %v4788, %v4791
      %v4793 = vrot.slane %v4792, 4
      %v4795 = vshll.u32 %v4474, 16
      %v4797 = vrot.slane %v4795, 5
      %v4798 = vsel %vm945, %v4793, %v4797
      %v4799 = vshrl.u32 %v4474, 16
      %v4801 = vrot.slane %v4799, 4
      %v4802 = vor.u32 %v4801, %v4797
      %v4803 = vrot.slane %v4802, 4
      %v4805 = vshll.u32 %v4493, 16
      %v4807 = vrot.slane %v4805, 5
      %v4808 = vsel %vm945, %v4803, %v4807
      %v4810 = vshrl.u32 %v4475, 16
      %v4812 = vrot.slane %v4810, 4
      %v4813 = vshll.u32 %v4475, 16
      %v4815 = vrot.slane %v4813, 5
      %v4816 = vor.u32 %v4812, %v4815
      %v4817 = vrot.slane %v4816, 4
      %v4819 = vshll.u32 %v4476, 16
      %v4821 = vrot.slane %v4819, 5
      %v4822 = vsel %vm945, %v4817, %v4821
      %v4823 = vshrl.u32 %v4476, 16
      %v4825 = vrot.slane %v4823, 4
      %v4826 = vor.u32 %v4825, %v4821
      %v4827 = vrot.slane %v4826, 4
      %v4829 = vshll.u32 %v4494, 16
      %v4831 = vrot.slane %v4829, 5
      %v4832 = vsel %vm945, %v4827, %v4831
      %v4834 = vshrl.u32 %v4477, 16
      %v4836 = vrot.slane %v4834, 4
      %v4837 = vshll.u32 %v4477, 16
      %v4839 = vrot.slane %v4837, 5
      %v4840 = vor.u32 %v4836, %v4839
      %v4841 = vrot.slane %v4840, 4
      %v4843 = vshll.u32 %v4478, 16
      %v4845 = vrot.slane %v4843, 5
      %v4846 = vsel %vm945, %v4841, %v4845
      %v4847 = vshrl.u32 %v4478, 16
      %v4849 = vrot.slane %v4847, 4
      %v4850 = vor.u32 %v4849, %v4845
      %v4851 = vrot.slane %v4850, 4
      %v4853 = vshll.u32 %v4495, 16
      %v4855 = vrot.slane %v4853, 5
      %v4856 = vsel %vm945, %v4851, %v4855
      %v4858 = vshrl.u32 %v4479, 16
      %v4860 = vrot.slane %v4858, 4
      %v4861 = vshll.u32 %v4479, 16
      %v4863 = vrot.slane %v4861, 5
      %v4864 = vor.u32 %v4860, %v4863
      %v4865 = vrot.slane %v4864, 4
      %v4867 = vshll.u32 %v4480, 16
      %v4869 = vrot.slane %v4867, 5
      %v4870 = vsel %vm945, %v4865, %v4869
      %v4871 = vshrl.u32 %v4480, 16
      %v4873 = vrot.slane %v4871, 4
      %v4874 = vor.u32 %v4873, %v4869
      %v4875 = vrot.slane %v4874, 4
      %v4877 = vshll.u32 %v4496, 16
      %v4879 = vrot.slane %v4877, 5
      %v4880 = vsel %vm945, %v4875, %v4879
      %v4881 = vld [vmem:[#allocation3] sm:$0xe]
      %v4882 = vld [vmem:[#allocation3 + $0xc] sm:$0xe]
      %v4883 = vld [vmem:[#allocation3 + $0x18] sm:$0xe]
      %v4884 = vld [vmem:[#allocation3 + $0x24] sm:$0xe]
      %v4885 = vld [vmem:[#allocation3 + $0x30] sm:$0xe]
      %v4886 = vld [vmem:[#allocation3 + $0x3c] sm:$0xe]
      %v4887 = vld [vmem:[#allocation3 + $0x48] sm:$0xe]
      %v4888 = vld [vmem:[#allocation3 + $0x54] sm:$0xe]
      %v4889 = vld [vmem:[#allocation3 + $0x60] sm:$0xe]
      %v4890 = vld [vmem:[#allocation3 + $0x6c] sm:$0xe]
      %v4891 = vld [vmem:[#allocation3 + $0x78] sm:$0xe]
      %v4892 = vld [vmem:[#allocation3 + $0x84] sm:$0xe]
      %v4893 = vld [vmem:[#allocation3 + $0x90] sm:$0xe]
      %v4894 = vld [vmem:[#allocation3 + $0x9c] sm:$0xe]
      %v4895 = vld [vmem:[#allocation3 + $0xa8] sm:$0xe]
      %v4896 = vld [vmem:[#allocation3 + $0xb4] sm:$0xe]
      %v4945 = vrot.slane %v4881, 5
      %v4946 = vrot.slane %v4945, 4
      %v4947 = vrot.slane %v4450, 5
      %v4948 = vsel %vm1396, %v4946, %v4947
      %v4949 = vrot.slane %v4947, 4
      %v4950 = vrot.slane %v4481, 5
      %v4951 = vsel %vm1396, %v4949, %v4950
      %v4952 = vrot.slane %v4882, 5
      %v4953 = vrot.slane %v4952, 4
      %v4954 = vrot.slane %v4452, 5
      %v4955 = vsel %vm1396, %v4953, %v4954
      %v4956 = vrot.slane %v4954, 4
      %v4957 = vrot.slane %v4482, 5
      %v4958 = vsel %vm1396, %v4956, %v4957
      %v4959 = vrot.slane %v4883, 5
      %v4960 = vrot.slane %v4959, 4
      %v4961 = vrot.slane %v4454, 5
      %v4962 = vsel %vm1396, %v4960, %v4961
      %v4963 = vrot.slane %v4961, 4
      %v4964 = vrot.slane %v4483, 5
      %v4965 = vsel %vm1396, %v4963, %v4964
      %v4966 = vrot.slane %v4884, 5
      %v4967 = vrot.slane %v4966, 4
      %v4968 = vrot.slane %v4456, 5
      %v4969 = vsel %vm1396, %v4967, %v4968
      %v4970 = vrot.slane %v4968, 4
      %v4971 = vrot.slane %v4484, 5
      %v4972 = vsel %vm1396, %v4970, %v4971
      %v4973 = vrot.slane %v4885, 5
      %v4974 = vrot.slane %v4973, 4
      %v4975 = vrot.slane %v4458, 5
      %v4976 = vsel %vm1396, %v4974, %v4975
      %v4977 = vrot.slane %v4975, 4
      %v4978 = vrot.slane %v4485, 5
      %v4979 = vsel %vm1396, %v4977, %v4978
      %v4980 = vrot.slane %v4886, 5
      %v4981 = vrot.slane %v4980, 4
      %v4982 = vrot.slane %v4460, 5
      %v4983 = vsel %vm1396, %v4981, %v4982
      %v4984 = vrot.slane %v4982, 4
      %v4985 = vrot.slane %v4486, 5
      %v4986 = vsel %vm1396, %v4984, %v4985
      %v4987 = vrot.slane %v4887, 5
      %v4988 = vrot.slane %v4987, 4
      %v4989 = vrot.slane %v4462, 5
      %v4990 = vsel %vm1396, %v4988, %v4989
      %v4991 = vrot.slane %v4989, 4
      %v4992 = vrot.slane %v4487, 5
      %v4993 = vsel %vm1396, %v4991, %v4992
      %v4994 = vrot.slane %v4888, 5
      %v4995 = vrot.slane %v4994, 4
      %v4996 = vrot.slane %v4464, 5
      %v4997 = vsel %vm1396, %v4995, %v4996
      %v4998 = vrot.slane %v4996, 4
      %v4999 = vrot.slane %v4488, 5
      %v5000 = vsel %vm1396, %v4998, %v4999
      %v5001 = vrot.slane %v4889, 5
      %v5002 = vrot.slane %v5001, 4
      %v5003 = vrot.slane %v4466, 5
      %v5004 = vsel %vm1396, %v5002, %v5003
      %v5005 = vrot.slane %v5003, 4
      %v5006 = vrot.slane %v4489, 5
      %v5007 = vsel %vm1396, %v5005, %v5006
      %v5008 = vrot.slane %v4890, 5
      %v5009 = vrot.slane %v5008, 4
      %v5010 = vrot.slane %v4468, 5
      %v5011 = vsel %vm1396, %v5009, %v5010
      %v5012 = vrot.slane %v5010, 4
      %v5013 = vrot.slane %v4490, 5
      %v5014 = vsel %vm1396, %v5012, %v5013
      %v5015 = vrot.slane %v4891, 5
      %v5016 = vrot.slane %v5015, 4
      %v5017 = vrot.slane %v4470, 5
      %v5018 = vsel %vm1396, %v5016, %v5017
      %v5019 = vrot.slane %v5017, 4
      %v5020 = vrot.slane %v4491, 5
      %v5021 = vsel %vm1396, %v5019, %v5020
      %v5022 = vrot.slane %v4892, 5
      %v5023 = vrot.slane %v5022, 4
      %v5024 = vrot.slane %v4472, 5
      %v5025 = vsel %vm1396, %v5023, %v5024
      %v5026 = vrot.slane %v5024, 4
      %v5027 = vrot.slane %v4492, 5
      %v5028 = vsel %vm1396, %v5026, %v5027
      %v5029 = vrot.slane %v4893, 5
      %v5030 = vrot.slane %v5029, 4
      %v5031 = vrot.slane %v4474, 5
      %v5032 = vsel %vm1396, %v5030, %v5031
      %v5033 = vrot.slane %v5031, 4
      %v5034 = vrot.slane %v4493, 5
      %v5035 = vsel %vm1396, %v5033, %v5034
      %v5036 = vrot.slane %v4894, 5
      %v5037 = vrot.slane %v5036, 4
      %v5038 = vrot.slane %v4476, 5
      %v5039 = vsel %vm1396, %v5037, %v5038
      %v5040 = vrot.slane %v5038, 4
      %v5041 = vrot.slane %v4494, 5
      %v5042 = vsel %vm1396, %v5040, %v5041
      %v5043 = vrot.slane %v4895, 5
      %v5044 = vrot.slane %v5043, 4
      %v5045 = vrot.slane %v4478, 5
      %v5046 = vsel %vm1396, %v5044, %v5045
      %v5047 = vrot.slane %v5045, 4
      %v5048 = vrot.slane %v4495, 5
      %v5049 = vsel %vm1396, %v5047, %v5048
      %v5050 = vrot.slane %v4896, 5
      %v5051 = vrot.slane %v5050, 4
      %v5052 = vrot.slane %v4480, 5
      %v5053 = vsel %vm1396, %v5051, %v5052
      %v5054 = vrot.slane %v5052, 4
      %v5055 = vrot.slane %v4496, 5
      %v5056 = vsel %vm1396, %v5054, %v5055
      %v5057 = vld [vmem:[%s4332] sm:$0xf]
      %v5058 = vld [vmem:[%s4332 + $0x4] sm:$0xf]
      %v5059 = vld [vmem:[%s4332 + $0xc] sm:$0xf]
      %v5060 = vld [vmem:[%s4332 + $0x10] sm:$0xf]
      %v5061 = vld [vmem:[%s4332 + $0x18] sm:$0xf]
      %v5062 = vld [vmem:[%s4332 + $0x1c] sm:$0xf]
      %v5063 = vld [vmem:[%s4332 + $0x24] sm:$0xf]
      %v5064 = vld [vmem:[%s4332 + $0x28] sm:$0xf]
      %v5065 = vld [vmem:[%s4332 + $0x30] sm:$0xf]
      %v5066 = vld [vmem:[%s4332 + $0x34] sm:$0xf]
      %v5067 = vld [vmem:[%s4332 + $0x3c] sm:$0xf]
      %v5068 = vld [vmem:[%s4332 + $0x40] sm:$0xf]
      %v5069 = vld [vmem:[%s4332 + $0x48] sm:$0xf]
      %v5070 = vld [vmem:[%s4332 + $0x4c] sm:$0xf]
      %v5071 = vld [vmem:[%s4332 + $0x54] sm:$0xf]
      %v5072 = vld [vmem:[%s4332 + $0x58] sm:$0xf]
      %v5073 = vld [vmem:[%s4332 + $0x60] sm:$0xf]
      %v5074 = vld [vmem:[%s4332 + $0x64] sm:$0xf]
      %v5075 = vld [vmem:[%s4332 + $0x6c] sm:$0xf]
      %v5076 = vld [vmem:[%s4332 + $0x70] sm:$0xf]
      %v5077 = vld [vmem:[%s4332 + $0x78] sm:$0xf]
      %v5078 = vld [vmem:[%s4332 + $0x7c] sm:$0xf]
      %v5079 = vld [vmem:[%s4332 + $0x84] sm:$0xf]
      %v5080 = vld [vmem:[%s4332 + $0x88] sm:$0xf]
      %v5081 = vld [vmem:[%s4332 + $0x90] sm:$0xf]
      %v5082 = vld [vmem:[%s4332 + $0x94] sm:$0xf]
      %v5083 = vld [vmem:[%s4332 + $0x9c] sm:$0xf]
      %v5084 = vld [vmem:[%s4332 + $0xa0] sm:$0xf]
      %v5085 = vld [vmem:[%s4332 + $0xa8] sm:$0xf]
      %v5086 = vld [vmem:[%s4332 + $0xac] sm:$0xf]
      %v5087 = vld [vmem:[%s4332 + $0xb4] sm:$0xf]
      %v5088 = vld [vmem:[%s4332 + $0xb8] sm:$0xf]
      %v5089 = vld [vmem:[%s4332 + $0x8] sm:$0x1]
      %v5090 = vld [vmem:[%s4332 + $0x14] sm:$0x1]
      %v5091 = vld [vmem:[%s4332 + $0x20] sm:$0x1]
      %v5092 = vld [vmem:[%s4332 + $0x2c] sm:$0x1]
      %v5093 = vld [vmem:[%s4332 + $0x38] sm:$0x1]
      %v5094 = vld [vmem:[%s4332 + $0x44] sm:$0x1]
      %v5095 = vld [vmem:[%s4332 + $0x50] sm:$0x1]
      %v5096 = vld [vmem:[%s4332 + $0x5c] sm:$0x1]
      %v5097 = vld [vmem:[%s4332 + $0x68] sm:$0x1]
      %v5098 = vld [vmem:[%s4332 + $0x74] sm:$0x1]
      %v5099 = vld [vmem:[%s4332 + $0x80] sm:$0x1]
      %v5100 = vld [vmem:[%s4332 + $0x8c] sm:$0x1]
      %v5101 = vld [vmem:[%s4332 + $0x98] sm:$0x1]
      %v5102 = vld [vmem:[%s4332 + $0xa4] sm:$0x1]
      %v5103 = vld [vmem:[%s4332 + $0xb0] sm:$0x1]
      %v5104 = vld [vmem:[%s4332 + $0xbc] sm:$0x1]
      %v5106 = vshrl.u32 %v5057, 16
      %v5108 = vrot.slane %v5106, 4
      %v5109 = vshll.u32 %v5057, 16
      %v5111 = vrot.slane %v5109, 5
      %v5112 = vor.u32 %v5108, %v5111
      %v5113 = vrot.slane %v5112, 4
      %v5115 = vshll.u32 %v5058, 16
      %v5117 = vrot.slane %v5115, 5
      %v5118 = vsel %vm945, %v5113, %v5117
      %v5119 = vshrl.u32 %v5058, 16
      %v5121 = vrot.slane %v5119, 4
      %v5122 = vor.u32 %v5121, %v5117
      %v5123 = vrot.slane %v5122, 4
      %v5125 = vshll.u32 %v5089, 16
      %v5127 = vrot.slane %v5125, 5
      %v5128 = vsel %vm945, %v5123, %v5127
      %v5130 = vshrl.u32 %v5059, 16
      %v5132 = vrot.slane %v5130, 4
      %v5133 = vshll.u32 %v5059, 16
      %v5135 = vrot.slane %v5133, 5
      %v5136 = vor.u32 %v5132, %v5135
      %v5137 = vrot.slane %v5136, 4
      %v5139 = vshll.u32 %v5060, 16
      %v5141 = vrot.slane %v5139, 5
      %v5142 = vsel %vm945, %v5137, %v5141
      %v5143 = vshrl.u32 %v5060, 16
      %v5145 = vrot.slane %v5143, 4
      %v5146 = vor.u32 %v5145, %v5141
      %v5147 = vrot.slane %v5146, 4
      %v5149 = vshll.u32 %v5090, 16
      %v5151 = vrot.slane %v5149, 5
      %v5152 = vsel %vm945, %v5147, %v5151
      %v5154 = vshrl.u32 %v5061, 16
      %v5156 = vrot.slane %v5154, 4
      %v5157 = vshll.u32 %v5061, 16
      %v5159 = vrot.slane %v5157, 5
      %v5160 = vor.u32 %v5156, %v5159
      %v5161 = vrot.slane %v5160, 4
      %v5163 = vshll.u32 %v5062, 16
      %v5165 = vrot.slane %v5163, 5
      %v5166 = vsel %vm945, %v5161, %v5165
      %v5167 = vshrl.u32 %v5062, 16
      %v5169 = vrot.slane %v5167, 4
      %v5170 = vor.u32 %v5169, %v5165
      %v5171 = vrot.slane %v5170, 4
      %v5173 = vshll.u32 %v5091, 16
      %v5175 = vrot.slane %v5173, 5
      %v5176 = vsel %vm945, %v5171, %v5175
      %v5178 = vshrl.u32 %v5063, 16
      %v5180 = vrot.slane %v5178, 4
      %v5181 = vshll.u32 %v5063, 16
      %v5183 = vrot.slane %v5181, 5
      %v5184 = vor.u32 %v5180, %v5183
      %v5185 = vrot.slane %v5184, 4
      %v5187 = vshll.u32 %v5064, 16
      %v5189 = vrot.slane %v5187, 5
      %v5190 = vsel %vm945, %v5185, %v5189
      %v5191 = vshrl.u32 %v5064, 16
      %v5193 = vrot.slane %v5191, 4
      %v5194 = vor.u32 %v5193, %v5189
      %v5195 = vrot.slane %v5194, 4
      %v5197 = vshll.u32 %v5092, 16
      %v5199 = vrot.slane %v5197, 5
      %v5200 = vsel %vm945, %v5195, %v5199
      %v5202 = vshrl.u32 %v5065, 16
      %v5204 = vrot.slane %v5202, 4
      %v5205 = vshll.u32 %v5065, 16
      %v5207 = vrot.slane %v5205, 5
      %v5208 = vor.u32 %v5204, %v5207
      %v5209 = vrot.slane %v5208, 4
      %v5211 = vshll.u32 %v5066, 16
      %v5213 = vrot.slane %v5211, 5
      %v5214 = vsel %vm945, %v5209, %v5213
      %v5215 = vshrl.u32 %v5066, 16
      %v5217 = vrot.slane %v5215, 4
      %v5218 = vor.u32 %v5217, %v5213
      %v5219 = vrot.slane %v5218, 4
      %v5221 = vshll.u32 %v5093, 16
      %v5223 = vrot.slane %v5221, 5
      %v5224 = vsel %vm945, %v5219, %v5223
      %v5226 = vshrl.u32 %v5067, 16
      %v5228 = vrot.slane %v5226, 4
      %v5229 = vshll.u32 %v5067, 16
      %v5231 = vrot.slane %v5229, 5
      %v5232 = vor.u32 %v5228, %v5231
      %v5233 = vrot.slane %v5232, 4
      %v5235 = vshll.u32 %v5068, 16
      %v5237 = vrot.slane %v5235, 5
      %v5238 = vsel %vm945, %v5233, %v5237
      %v5239 = vshrl.u32 %v5068, 16
      %v5241 = vrot.slane %v5239, 4
      %v5242 = vor.u32 %v5241, %v5237
      %v5243 = vrot.slane %v5242, 4
      %v5245 = vshll.u32 %v5094, 16
      %v5247 = vrot.slane %v5245, 5
      %v5248 = vsel %vm945, %v5243, %v5247
      %v5250 = vshrl.u32 %v5069, 16
      %v5252 = vrot.slane %v5250, 4
      %v5253 = vshll.u32 %v5069, 16
      %v5255 = vrot.slane %v5253, 5
      %v5256 = vor.u32 %v5252, %v5255
      %v5257 = vrot.slane %v5256, 4
      %v5259 = vshll.u32 %v5070, 16
      %v5261 = vrot.slane %v5259, 5
      %v5262 = vsel %vm945, %v5257, %v5261
      %v5263 = vshrl.u32 %v5070, 16
      %v5265 = vrot.slane %v5263, 4
      %v5266 = vor.u32 %v5265, %v5261
      %v5267 = vrot.slane %v5266, 4
      %v5269 = vshll.u32 %v5095, 16
      %v5271 = vrot.slane %v5269, 5
      %v5272 = vsel %vm945, %v5267, %v5271
      %v5274 = vshrl.u32 %v5071, 16
      %v5276 = vrot.slane %v5274, 4
      %v5277 = vshll.u32 %v5071, 16
      %v5279 = vrot.slane %v5277, 5
      %v5280 = vor.u32 %v5276, %v5279
      %v5281 = vrot.slane %v5280, 4
      %v5283 = vshll.u32 %v5072, 16
      %v5285 = vrot.slane %v5283, 5
      %v5286 = vsel %vm945, %v5281, %v5285
      %v5287 = vshrl.u32 %v5072, 16
      %v5289 = vrot.slane %v5287, 4
      %v5290 = vor.u32 %v5289, %v5285
      %v5291 = vrot.slane %v5290, 4
      %v5293 = vshll.u32 %v5096, 16
      %v5295 = vrot.slane %v5293, 5
      %v5296 = vsel %vm945, %v5291, %v5295
      %v5298 = vshrl.u32 %v5073, 16
      %v5300 = vrot.slane %v5298, 4
      %v5301 = vshll.u32 %v5073, 16
      %v5303 = vrot.slane %v5301, 5
      %v5304 = vor.u32 %v5300, %v5303
      %v5305 = vrot.slane %v5304, 4
      %v5307 = vshll.u32 %v5074, 16
      %v5309 = vrot.slane %v5307, 5
      %v5310 = vsel %vm945, %v5305, %v5309
      %v5311 = vshrl.u32 %v5074, 16
      %v5313 = vrot.slane %v5311, 4
      %v5314 = vor.u32 %v5313, %v5309
      %v5315 = vrot.slane %v5314, 4
      %v5317 = vshll.u32 %v5097, 16
      %v5319 = vrot.slane %v5317, 5
      %v5320 = vsel %vm945, %v5315, %v5319
      %v5322 = vshrl.u32 %v5075, 16
      %v5324 = vrot.slane %v5322, 4
      %v5325 = vshll.u32 %v5075, 16
      %v5327 = vrot.slane %v5325, 5
      %v5328 = vor.u32 %v5324, %v5327
      %v5329 = vrot.slane %v5328, 4
      %v5331 = vshll.u32 %v5076, 16
      %v5333 = vrot.slane %v5331, 5
      %v5334 = vsel %vm945, %v5329, %v5333
      %v5335 = vshrl.u32 %v5076, 16
      %v5337 = vrot.slane %v5335, 4
      %v5338 = vor.u32 %v5337, %v5333
      %v5339 = vrot.slane %v5338, 4
      %v5341 = vshll.u32 %v5098, 16
      %v5343 = vrot.slane %v5341, 5
      %v5344 = vsel %vm945, %v5339, %v5343
      %v5346 = vshrl.u32 %v5077, 16
      %v5348 = vrot.slane %v5346, 4
      %v5349 = vshll.u32 %v5077, 16
      %v5351 = vrot.slane %v5349, 5
      %v5352 = vor.u32 %v5348, %v5351
      %v5353 = vrot.slane %v5352, 4
      %v5355 = vshll.u32 %v5078, 16
      %v5357 = vrot.slane %v5355, 5
      %v5358 = vsel %vm945, %v5353, %v5357
      %v5359 = vshrl.u32 %v5078, 16
      %v5361 = vrot.slane %v5359, 4
      %v5362 = vor.u32 %v5361, %v5357
      %v5363 = vrot.slane %v5362, 4
      %v5365 = vshll.u32 %v5099, 16
      %v5367 = vrot.slane %v5365, 5
      %v5368 = vsel %vm945, %v5363, %v5367
      %v5370 = vshrl.u32 %v5079, 16
      %v5372 = vrot.slane %v5370, 4
      %v5373 = vshll.u32 %v5079, 16
      %v5375 = vrot.slane %v5373, 5
      %v5376 = vor.u32 %v5372, %v5375
      %v5377 = vrot.slane %v5376, 4
      %v5379 = vshll.u32 %v5080, 16
      %v5381 = vrot.slane %v5379, 5
      %v5382 = vsel %vm945, %v5377, %v5381
      %v5383 = vshrl.u32 %v5080, 16
      %v5385 = vrot.slane %v5383, 4
      %v5386 = vor.u32 %v5385, %v5381
      %v5387 = vrot.slane %v5386, 4
      %v5389 = vshll.u32 %v5100, 16
      %v5391 = vrot.slane %v5389, 5
      %v5392 = vsel %vm945, %v5387, %v5391
      %v5394 = vshrl.u32 %v5081, 16
      %v5396 = vrot.slane %v5394, 4
      %v5397 = vshll.u32 %v5081, 16
      %v5399 = vrot.slane %v5397, 5
      %v5400 = vor.u32 %v5396, %v5399
      %v5401 = vrot.slane %v5400, 4
      %v5403 = vshll.u32 %v5082, 16
      %v5405 = vrot.slane %v5403, 5
      %v5406 = vsel %vm945, %v5401, %v5405
      %v5407 = vshrl.u32 %v5082, 16
      %v5409 = vrot.slane %v5407, 4
      %v5410 = vor.u32 %v5409, %v5405
      %v5411 = vrot.slane %v5410, 4
      %v5413 = vshll.u32 %v5101, 16
      %v5415 = vrot.slane %v5413, 5
      %v5416 = vsel %vm945, %v5411, %v5415
      %v5418 = vshrl.u32 %v5083, 16
      %v5420 = vrot.slane %v5418, 4
      %v5421 = vshll.u32 %v5083, 16
      %v5423 = vrot.slane %v5421, 5
      %v5424 = vor.u32 %v5420, %v5423
      %v5425 = vrot.slane %v5424, 4
      %v5427 = vshll.u32 %v5084, 16
      %v5429 = vrot.slane %v5427, 5
      %v5430 = vsel %vm945, %v5425, %v5429
      %v5431 = vshrl.u32 %v5084, 16
      %v5433 = vrot.slane %v5431, 4
      %v5434 = vor.u32 %v5433, %v5429
      %v5435 = vrot.slane %v5434, 4
      %v5437 = vshll.u32 %v5102, 16
      %v5439 = vrot.slane %v5437, 5
      %v5440 = vsel %vm945, %v5435, %v5439
      %v5442 = vshrl.u32 %v5085, 16
      %v5444 = vrot.slane %v5442, 4
      %v5445 = vshll.u32 %v5085, 16
      %v5447 = vrot.slane %v5445, 5
      %v5448 = vor.u32 %v5444, %v5447
      %v5449 = vrot.slane %v5448, 4
      %v5451 = vshll.u32 %v5086, 16
      %v5453 = vrot.slane %v5451, 5
      %v5454 = vsel %vm945, %v5449, %v5453
      %v5455 = vshrl.u32 %v5086, 16
      %v5457 = vrot.slane %v5455, 4
      %v5458 = vor.u32 %v5457, %v5453
      %v5459 = vrot.slane %v5458, 4
      %v5461 = vshll.u32 %v5103, 16
      %v5463 = vrot.slane %v5461, 5
      %v5464 = vsel %vm945, %v5459, %v5463
      %v5466 = vshrl.u32 %v5087, 16
      %v5468 = vrot.slane %v5466, 4
      %v5469 = vshll.u32 %v5087, 16
      %v5471 = vrot.slane %v5469, 5
      %v5472 = vor.u32 %v5468, %v5471
      %v5473 = vrot.slane %v5472, 4
      %v5475 = vshll.u32 %v5088, 16
      %v5477 = vrot.slane %v5475, 5
      %v5478 = vsel %vm945, %v5473, %v5477
      %v5479 = vshrl.u32 %v5088, 16
      %v5481 = vrot.slane %v5479, 4
      %v5482 = vor.u32 %v5481, %v5477
      %v5483 = vrot.slane %v5482, 4
      %v5485 = vshll.u32 %v5104, 16
      %v5487 = vrot.slane %v5485, 5
      %v5488 = vsel %vm945, %v5483, %v5487
      %v5489 = vld [vmem:[%s4332] sm:$0xe]
      %v5490 = vld [vmem:[%s4332 + $0xc] sm:$0xe]
      %v5491 = vld [vmem:[%s4332 + $0x18] sm:$0xe]
      %v5492 = vld [vmem:[%s4332 + $0x24] sm:$0xe]
      %v5493 = vld [vmem:[%s4332 + $0x30] sm:$0xe]
      %v5494 = vld [vmem:[%s4332 + $0x3c] sm:$0xe]
      %v5495 = vld [vmem:[%s4332 + $0x48] sm:$0xe]
      %v5496 = vld [vmem:[%s4332 + $0x54] sm:$0xe]
      %v5497 = vld [vmem:[%s4332 + $0x60] sm:$0xe]
      %v5498 = vld [vmem:[%s4332 + $0x6c] sm:$0xe]
      %v5499 = vld [vmem:[%s4332 + $0x78] sm:$0xe]
      %v5500 = vld [vmem:[%s4332 + $0x84] sm:$0xe]
      %v5501 = vld [vmem:[%s4332 + $0x90] sm:$0xe]
      %v5502 = vld [vmem:[%s4332 + $0x9c] sm:$0xe]
      %v5503 = vld [vmem:[%s4332 + $0xa8] sm:$0xe]
      %v5504 = vld [vmem:[%s4332 + $0xb4] sm:$0xe]
      %v5553 = vrot.slane %v5489, 5
      %v5554 = vrot.slane %v5553, 4
      %v5555 = vrot.slane %v5058, 5
      %v5556 = vsel %vm1396, %v5554, %v5555
      %v5557 = vrot.slane %v5555, 4
      %v5558 = vrot.slane %v5089, 5
      %v5559 = vsel %vm1396, %v5557, %v5558
      %v5560 = vrot.slane %v5490, 5
      %v5561 = vrot.slane %v5560, 4
      %v5562 = vrot.slane %v5060, 5
      %v5563 = vsel %vm1396, %v5561, %v5562
      %v5564 = vrot.slane %v5562, 4
      %v5565 = vrot.slane %v5090, 5
      %v5566 = vsel %vm1396, %v5564, %v5565
      %v5567 = vrot.slane %v5491, 5
      %v5568 = vrot.slane %v5567, 4
      %v5569 = vrot.slane %v5062, 5
      %v5570 = vsel %vm1396, %v5568, %v5569
      %v5571 = vrot.slane %v5569, 4
      %v5572 = vrot.slane %v5091, 5
      %v5573 = vsel %vm1396, %v5571, %v5572
      %v5574 = vrot.slane %v5492, 5
      %v5575 = vrot.slane %v5574, 4
      %v5576 = vrot.slane %v5064, 5
      %v5577 = vsel %vm1396, %v5575, %v5576
      %v5578 = vrot.slane %v5576, 4
      %v5579 = vrot.slane %v5092, 5
      %v5580 = vsel %vm1396, %v5578, %v5579
      %v5581 = vrot.slane %v5493, 5
      %v5582 = vrot.slane %v5581, 4
      %v5583 = vrot.slane %v5066, 5
      %v5584 = vsel %vm1396, %v5582, %v5583
      %v5585 = vrot.slane %v5583, 4
      %v5586 = vrot.slane %v5093, 5
      %v5587 = vsel %vm1396, %v5585, %v5586
      %v5588 = vrot.slane %v5494, 5
      %v5589 = vrot.slane %v5588, 4
      %v5590 = vrot.slane %v5068, 5
      %v5591 = vsel %vm1396, %v5589, %v5590
      %v5592 = vrot.slane %v5590, 4
      %v5593 = vrot.slane %v5094, 5
      %v5594 = vsel %vm1396, %v5592, %v5593
      %v5595 = vrot.slane %v5495, 5
      %v5596 = vrot.slane %v5595, 4
      %v5597 = vrot.slane %v5070, 5
      %v5598 = vsel %vm1396, %v5596, %v5597
      %v5599 = vrot.slane %v5597, 4
      %v5600 = vrot.slane %v5095, 5
      %v5601 = vsel %vm1396, %v5599, %v5600
      %v5602 = vrot.slane %v5496, 5
      %v5603 = vrot.slane %v5602, 4
      %v5604 = vrot.slane %v5072, 5
      %v5605 = vsel %vm1396, %v5603, %v5604
      %v5606 = vrot.slane %v5604, 4
      %v5607 = vrot.slane %v5096, 5
      %v5608 = vsel %vm1396, %v5606, %v5607
      %v5609 = vrot.slane %v5497, 5
      %v5610 = vrot.slane %v5609, 4
      %v5611 = vrot.slane %v5074, 5
      %v5612 = vsel %vm1396, %v5610, %v5611
      %v5613 = vrot.slane %v5611, 4
      %v5614 = vrot.slane %v5097, 5
      %v5615 = vsel %vm1396, %v5613, %v5614
      %v5616 = vrot.slane %v5498, 5
      %v5617 = vrot.slane %v5616, 4
      %v5618 = vrot.slane %v5076, 5
      %v5619 = vsel %vm1396, %v5617, %v5618
      %v5620 = vrot.slane %v5618, 4
      %v5621 = vrot.slane %v5098, 5
      %v5622 = vsel %vm1396, %v5620, %v5621
      %v5623 = vrot.slane %v5499, 5
      %v5624 = vrot.slane %v5623, 4
      %v5625 = vrot.slane %v5078, 5
      %v5626 = vsel %vm1396, %v5624, %v5625
      %v5627 = vrot.slane %v5625, 4
      %v5628 = vrot.slane %v5099, 5
      %v5629 = vsel %vm1396, %v5627, %v5628
      %v5630 = vrot.slane %v5500, 5
      %v5631 = vrot.slane %v5630, 4
      %v5632 = vrot.slane %v5080, 5
      %v5633 = vsel %vm1396, %v5631, %v5632
      %v5634 = vrot.slane %v5632, 4
      %v5635 = vrot.slane %v5100, 5
      %v5636 = vsel %vm1396, %v5634, %v5635
      %v5637 = vrot.slane %v5501, 5
      %v5638 = vrot.slane %v5637, 4
      %v5639 = vrot.slane %v5082, 5
      %v5640 = vsel %vm1396, %v5638, %v5639
      %v5641 = vrot.slane %v5639, 4
      %v5642 = vrot.slane %v5101, 5
      %v5643 = vsel %vm1396, %v5641, %v5642
      %v5644 = vrot.slane %v5502, 5
      %v5645 = vrot.slane %v5644, 4
      %v5646 = vrot.slane %v5084, 5
      %v5647 = vsel %vm1396, %v5645, %v5646
      %v5648 = vrot.slane %v5646, 4
      %v5649 = vrot.slane %v5102, 5
      %v5650 = vsel %vm1396, %v5648, %v5649
      %v5651 = vrot.slane %v5503, 5
      %v5652 = vrot.slane %v5651, 4
      %v5653 = vrot.slane %v5086, 5
      %v5654 = vsel %vm1396, %v5652, %v5653
      %v5655 = vrot.slane %v5653, 4
      %v5656 = vrot.slane %v5103, 5
      %v5657 = vsel %vm1396, %v5655, %v5656
      %v5658 = vrot.slane %v5504, 5
      %v5659 = vrot.slane %v5658, 4
      %v5660 = vrot.slane %v5088, 5
      %v5661 = vsel %vm1396, %v5659, %v5660
      %v5662 = vrot.slane %v5660, 4
      %v5663 = vrot.slane %v5104, 5
      %v5664 = vsel %vm1396, %v5662, %v5663
      %s5665 = scalar_lea.vmem [#allocation3], 24
      %v5666 = vld [vmem:[%s5665] sm:$0xf]
      %v5667 = vld [vmem:[%s5665 + $0x4] sm:$0xf]
      %v5668 = vld [vmem:[%s5665 + $0xc] sm:$0xf]
      %v5669 = vld [vmem:[%s5665 + $0x10] sm:$0xf]
      %v5670 = vld [vmem:[%s5665 + $0x18] sm:$0xf]
      %v5671 = vld [vmem:[%s5665 + $0x1c] sm:$0xf]
      %v5672 = vld [vmem:[%s5665 + $0x24] sm:$0xf]
      %v5673 = vld [vmem:[%s5665 + $0x28] sm:$0xf]
      %v5674 = vld [vmem:[%s5665 + $0x30] sm:$0xf]
      %v5675 = vld [vmem:[%s5665 + $0x34] sm:$0xf]
      %v5676 = vld [vmem:[%s5665 + $0x3c] sm:$0xf]
      %v5677 = vld [vmem:[%s5665 + $0x40] sm:$0xf]
      %v5678 = vld [vmem:[%s5665 + $0x48] sm:$0xf]
      %v5679 = vld [vmem:[%s5665 + $0x4c] sm:$0xf]
      %v5680 = vld [vmem:[%s5665 + $0x54] sm:$0xf]
      %v5681 = vld [vmem:[%s5665 + $0x58] sm:$0xf]
      %v5682 = vld [vmem:[%s5665 + $0x60] sm:$0xf]
      %v5683 = vld [vmem:[%s5665 + $0x64] sm:$0xf]
      %v5684 = vld [vmem:[%s5665 + $0x6c] sm:$0xf]
      %v5685 = vld [vmem:[%s5665 + $0x70] sm:$0xf]
      %v5686 = vld [vmem:[%s5665 + $0x78] sm:$0xf]
      %v5687 = vld [vmem:[%s5665 + $0x7c] sm:$0xf]
      %v5688 = vld [vmem:[%s5665 + $0x84] sm:$0xf]
      %v5689 = vld [vmem:[%s5665 + $0x88] sm:$0xf]
      %v5690 = vld [vmem:[%s5665 + $0x90] sm:$0xf]
      %v5691 = vld [vmem:[%s5665 + $0x94] sm:$0xf]
      %v5692 = vld [vmem:[%s5665 + $0x9c] sm:$0xf]
      %v5693 = vld [vmem:[%s5665 + $0xa0] sm:$0xf]
      %v5694 = vld [vmem:[%s5665 + $0xa8] sm:$0xf]
      %v5695 = vld [vmem:[%s5665 + $0xac] sm:$0xf]
      %v5696 = vld [vmem:[%s5665 + $0xb4] sm:$0xf]
      %v5697 = vld [vmem:[%s5665 + $0xb8] sm:$0xf]
      %v5698 = vld [vmem:[%s5665 + $0x8] sm:$0x1]
      %v5699 = vld [vmem:[%s5665 + $0x14] sm:$0x1]
      %v5700 = vld [vmem:[%s5665 + $0x20] sm:$0x1]
      %v5701 = vld [vmem:[%s5665 + $0x2c] sm:$0x1]
      %v5702 = vld [vmem:[%s5665 + $0x38] sm:$0x1]
      %v5703 = vld [vmem:[%s5665 + $0x44] sm:$0x1]
      %v5704 = vld [vmem:[%s5665 + $0x50] sm:$0x1]
      %v5705 = vld [vmem:[%s5665 + $0x5c] sm:$0x1]
      %v5706 = vld [vmem:[%s5665 + $0x68] sm:$0x1]
      %v5707 = vld [vmem:[%s5665 + $0x74] sm:$0x1]
      %v5708 = vld [vmem:[%s5665 + $0x80] sm:$0x1]
      %v5709 = vld [vmem:[%s5665 + $0x8c] sm:$0x1]
      %v5710 = vld [vmem:[%s5665 + $0x98] sm:$0x1]
      %v5711 = vld [vmem:[%s5665 + $0xa4] sm:$0x1]
      %v5712 = vld [vmem:[%s5665 + $0xb0] sm:$0x1]
      %v5713 = vld [vmem:[%s5665 + $0xbc] sm:$0x1]
      %v5715 = vshrl.u32 %v5666, 16
      %v5717 = vrot.slane %v5715, 4
      %v5718 = vshll.u32 %v5666, 16
      %v5720 = vrot.slane %v5718, 5
      %v5721 = vor.u32 %v5717, %v5720
      %v5722 = vrot.slane %v5721, 4
      %v5724 = vshll.u32 %v5667, 16
      %v5726 = vrot.slane %v5724, 5
      %v5727 = vsel %vm945, %v5722, %v5726
      %v5728 = vshrl.u32 %v5667, 16
      %v5730 = vrot.slane %v5728, 4
      %v5731 = vor.u32 %v5730, %v5726
      %v5732 = vrot.slane %v5731, 4
      %v5734 = vshll.u32 %v5698, 16
      %v5736 = vrot.slane %v5734, 5
      %v5737 = vsel %vm945, %v5732, %v5736
      %v5739 = vshrl.u32 %v5668, 16
      %v5741 = vrot.slane %v5739, 4
      %v5742 = vshll.u32 %v5668, 16
      %v5744 = vrot.slane %v5742, 5
      %v5745 = vor.u32 %v5741, %v5744
      %v5746 = vrot.slane %v5745, 4
      %v5748 = vshll.u32 %v5669, 16
      %v5750 = vrot.slane %v5748, 5
      %v5751 = vsel %vm945, %v5746, %v5750
      %v5752 = vshrl.u32 %v5669, 16
      %v5754 = vrot.slane %v5752, 4
      %v5755 = vor.u32 %v5754, %v5750
      %v5756 = vrot.slane %v5755, 4
      %v5758 = vshll.u32 %v5699, 16
      %v5760 = vrot.slane %v5758, 5
      %v5761 = vsel %vm945, %v5756, %v5760
      %v5763 = vshrl.u32 %v5670, 16
      %v5765 = vrot.slane %v5763, 4
      %v5766 = vshll.u32 %v5670, 16
      %v5768 = vrot.slane %v5766, 5
      %v5769 = vor.u32 %v5765, %v5768
      %v5770 = vrot.slane %v5769, 4
      %v5772 = vshll.u32 %v5671, 16
      %v5774 = vrot.slane %v5772, 5
      %v5775 = vsel %vm945, %v5770, %v5774
      %v5776 = vshrl.u32 %v5671, 16
      %v5778 = vrot.slane %v5776, 4
      %v5779 = vor.u32 %v5778, %v5774
      %v5780 = vrot.slane %v5779, 4
      %v5782 = vshll.u32 %v5700, 16
      %v5784 = vrot.slane %v5782, 5
      %v5785 = vsel %vm945, %v5780, %v5784
      %v5787 = vshrl.u32 %v5672, 16
      %v5789 = vrot.slane %v5787, 4
      %v5790 = vshll.u32 %v5672, 16
      %v5792 = vrot.slane %v5790, 5
      %v5793 = vor.u32 %v5789, %v5792
      %v5794 = vrot.slane %v5793, 4
      %v5796 = vshll.u32 %v5673, 16
      %v5798 = vrot.slane %v5796, 5
      %v5799 = vsel %vm945, %v5794, %v5798
      %v5800 = vshrl.u32 %v5673, 16
      %v5802 = vrot.slane %v5800, 4
      %v5803 = vor.u32 %v5802, %v5798
      %v5804 = vrot.slane %v5803, 4
      %v5806 = vshll.u32 %v5701, 16
      %v5808 = vrot.slane %v5806, 5
      %v5809 = vsel %vm945, %v5804, %v5808
      %v5811 = vshrl.u32 %v5674, 16
      %v5813 = vrot.slane %v5811, 4
      %v5814 = vshll.u32 %v5674, 16
      %v5816 = vrot.slane %v5814, 5
      %v5817 = vor.u32 %v5813, %v5816
      %v5818 = vrot.slane %v5817, 4
      %v5820 = vshll.u32 %v5675, 16
      %v5822 = vrot.slane %v5820, 5
      %v5823 = vsel %vm945, %v5818, %v5822
      %v5824 = vshrl.u32 %v5675, 16
      %v5826 = vrot.slane %v5824, 4
      %v5827 = vor.u32 %v5826, %v5822
      %v5828 = vrot.slane %v5827, 4
      %v5830 = vshll.u32 %v5702, 16
      %v5832 = vrot.slane %v5830, 5
      %v5833 = vsel %vm945, %v5828, %v5832
      %v5835 = vshrl.u32 %v5676, 16
      %v5837 = vrot.slane %v5835, 4
      %v5838 = vshll.u32 %v5676, 16
      %v5840 = vrot.slane %v5838, 5
      %v5841 = vor.u32 %v5837, %v5840
      %v5842 = vrot.slane %v5841, 4
      %v5844 = vshll.u32 %v5677, 16
      %v5846 = vrot.slane %v5844, 5
      %v5847 = vsel %vm945, %v5842, %v5846
      %v5848 = vshrl.u32 %v5677, 16
      %v5850 = vrot.slane %v5848, 4
      %v5851 = vor.u32 %v5850, %v5846
      %v5852 = vrot.slane %v5851, 4
      %v5854 = vshll.u32 %v5703, 16
      %v5856 = vrot.slane %v5854, 5
      %v5857 = vsel %vm945, %v5852, %v5856
      %v5859 = vshrl.u32 %v5678, 16
      %v5861 = vrot.slane %v5859, 4
      %v5862 = vshll.u32 %v5678, 16
      %v5864 = vrot.slane %v5862, 5
      %v5865 = vor.u32 %v5861, %v5864
      %v5866 = vrot.slane %v5865, 4
      %v5868 = vshll.u32 %v5679, 16
      %v5870 = vrot.slane %v5868, 5
      %v5871 = vsel %vm945, %v5866, %v5870
      %v5872 = vshrl.u32 %v5679, 16
      %v5874 = vrot.slane %v5872, 4
      %v5875 = vor.u32 %v5874, %v5870
      %v5876 = vrot.slane %v5875, 4
      %v5878 = vshll.u32 %v5704, 16
      %v5880 = vrot.slane %v5878, 5
      %v5881 = vsel %vm945, %v5876, %v5880
      %v5883 = vshrl.u32 %v5680, 16
      %v5885 = vrot.slane %v5883, 4
      %v5886 = vshll.u32 %v5680, 16
      %v5888 = vrot.slane %v5886, 5
      %v5889 = vor.u32 %v5885, %v5888
      %v5890 = vrot.slane %v5889, 4
      %v5892 = vshll.u32 %v5681, 16
      %v5894 = vrot.slane %v5892, 5
      %v5895 = vsel %vm945, %v5890, %v5894
      %v5896 = vshrl.u32 %v5681, 16
      %v5898 = vrot.slane %v5896, 4
      %v5899 = vor.u32 %v5898, %v5894
      %v5900 = vrot.slane %v5899, 4
      %v5902 = vshll.u32 %v5705, 16
      %v5904 = vrot.slane %v5902, 5
      %v5905 = vsel %vm945, %v5900, %v5904
      %v5907 = vshrl.u32 %v5682, 16
      %v5909 = vrot.slane %v5907, 4
      %v5910 = vshll.u32 %v5682, 16
      %v5912 = vrot.slane %v5910, 5
      %v5913 = vor.u32 %v5909, %v5912
      %v5914 = vrot.slane %v5913, 4
      %v5916 = vshll.u32 %v5683, 16
      %v5918 = vrot.slane %v5916, 5
      %v5919 = vsel %vm945, %v5914, %v5918
      %v5920 = vshrl.u32 %v5683, 16
      %v5922 = vrot.slane %v5920, 4
      %v5923 = vor.u32 %v5922, %v5918
      %v5924 = vrot.slane %v5923, 4
      %v5926 = vshll.u32 %v5706, 16
      %v5928 = vrot.slane %v5926, 5
      %v5929 = vsel %vm945, %v5924, %v5928
      %v5931 = vshrl.u32 %v5684, 16
      %v5933 = vrot.slane %v5931, 4
      %v5934 = vshll.u32 %v5684, 16
      %v5936 = vrot.slane %v5934, 5
      %v5937 = vor.u32 %v5933, %v5936
      %v5938 = vrot.slane %v5937, 4
      %v5940 = vshll.u32 %v5685, 16
      %v5942 = vrot.slane %v5940, 5
      %v5943 = vsel %vm945, %v5938, %v5942
      %v5944 = vshrl.u32 %v5685, 16
      %v5946 = vrot.slane %v5944, 4
      %v5947 = vor.u32 %v5946, %v5942
      %v5948 = vrot.slane %v5947, 4
      %v5950 = vshll.u32 %v5707, 16
      %v5952 = vrot.slane %v5950, 5
      %v5953 = vsel %vm945, %v5948, %v5952
      %v5955 = vshrl.u32 %v5686, 16
      %v5957 = vrot.slane %v5955, 4
      %v5958 = vshll.u32 %v5686, 16
      %v5960 = vrot.slane %v5958, 5
      %v5961 = vor.u32 %v5957, %v5960
      %v5962 = vrot.slane %v5961, 4
      %v5964 = vshll.u32 %v5687, 16
      %v5966 = vrot.slane %v5964, 5
      %v5967 = vsel %vm945, %v5962, %v5966
      %v5968 = vshrl.u32 %v5687, 16
      %v5970 = vrot.slane %v5968, 4
      %v5971 = vor.u32 %v5970, %v5966
      %v5972 = vrot.slane %v5971, 4
      %v5974 = vshll.u32 %v5708, 16
      %v5976 = vrot.slane %v5974, 5
      %v5977 = vsel %vm945, %v5972, %v5976
      %v5979 = vshrl.u32 %v5688, 16
      %v5981 = vrot.slane %v5979, 4
      %v5982 = vshll.u32 %v5688, 16
      %v5984 = vrot.slane %v5982, 5
      %v5985 = vor.u32 %v5981, %v5984
      %v5986 = vrot.slane %v5985, 4
      %v5988 = vshll.u32 %v5689, 16
      %v5990 = vrot.slane %v5988, 5
      %v5991 = vsel %vm945, %v5986, %v5990
      %v5992 = vshrl.u32 %v5689, 16
      %v5994 = vrot.slane %v5992, 4
      %v5995 = vor.u32 %v5994, %v5990
      %v5996 = vrot.slane %v5995, 4
      %v5998 = vshll.u32 %v5709, 16
      %v6000 = vrot.slane %v5998, 5
      %v6001 = vsel %vm945, %v5996, %v6000
      %v6003 = vshrl.u32 %v5690, 16
      %v6005 = vrot.slane %v6003, 4
      %v6006 = vshll.u32 %v5690, 16
      %v6008 = vrot.slane %v6006, 5
      %v6009 = vor.u32 %v6005, %v6008
      %v6010 = vrot.slane %v6009, 4
      %v6012 = vshll.u32 %v5691, 16
      %v6014 = vrot.slane %v6012, 5
      %v6015 = vsel %vm945, %v6010, %v6014
      %v6016 = vshrl.u32 %v5691, 16
      %v6018 = vrot.slane %v6016, 4
      %v6019 = vor.u32 %v6018, %v6014
      %v6020 = vrot.slane %v6019, 4
      %v6022 = vshll.u32 %v5710, 16
      %v6024 = vrot.slane %v6022, 5
      %v6025 = vsel %vm945, %v6020, %v6024
      %v6027 = vshrl.u32 %v5692, 16
      %v6029 = vrot.slane %v6027, 4
      %v6030 = vshll.u32 %v5692, 16
      %v6032 = vrot.slane %v6030, 5
      %v6033 = vor.u32 %v6029, %v6032
      %v6034 = vrot.slane %v6033, 4
      %v6036 = vshll.u32 %v5693, 16
      %v6038 = vrot.slane %v6036, 5
      %v6039 = vsel %vm945, %v6034, %v6038
      %v6040 = vshrl.u32 %v5693, 16
      %v6042 = vrot.slane %v6040, 4
      %v6043 = vor.u32 %v6042, %v6038
      %v6044 = vrot.slane %v6043, 4
      %v6046 = vshll.u32 %v5711, 16
      %v6048 = vrot.slane %v6046, 5
      %v6049 = vsel %vm945, %v6044, %v6048
      %v6051 = vshrl.u32 %v5694, 16
      %v6053 = vrot.slane %v6051, 4
      %v6054 = vshll.u32 %v5694, 16
      %v6056 = vrot.slane %v6054, 5
      %v6057 = vor.u32 %v6053, %v6056
      %v6058 = vrot.slane %v6057, 4
      %v6060 = vshll.u32 %v5695, 16
      %v6062 = vrot.slane %v6060, 5
      %v6063 = vsel %vm945, %v6058, %v6062
      %v6064 = vshrl.u32 %v5695, 16
      %v6066 = vrot.slane %v6064, 4
      %v6067 = vor.u32 %v6066, %v6062
      %v6068 = vrot.slane %v6067, 4
      %v6070 = vshll.u32 %v5712, 16
      %v6072 = vrot.slane %v6070, 5
      %v6073 = vsel %vm945, %v6068, %v6072
      %v6075 = vshrl.u32 %v5696, 16
      %v6077 = vrot.slane %v6075, 4
      %v6078 = vshll.u32 %v5696, 16
      %v6080 = vrot.slane %v6078, 5
      %v6081 = vor.u32 %v6077, %v6080
      %v6082 = vrot.slane %v6081, 4
      %v6084 = vshll.u32 %v5697, 16
      %v6086 = vrot.slane %v6084, 5
      %v6087 = vsel %vm945, %v6082, %v6086
      %v6088 = vshrl.u32 %v5697, 16
      %v6090 = vrot.slane %v6088, 4
      %v6091 = vor.u32 %v6090, %v6086
      %v6092 = vrot.slane %v6091, 4
      %v6094 = vshll.u32 %v5713, 16
      %v6096 = vrot.slane %v6094, 5
      %v6097 = vsel %vm945, %v6092, %v6096
      %v6098 = vld [vmem:[%s5665] sm:$0xe]
      %v6099 = vld [vmem:[%s5665 + $0xc] sm:$0xe]
      %v6100 = vld [vmem:[%s5665 + $0x18] sm:$0xe]
      %v6101 = vld [vmem:[%s5665 + $0x24] sm:$0xe]
      %v6102 = vld [vmem:[%s5665 + $0x30] sm:$0xe]
      %v6103 = vld [vmem:[%s5665 + $0x3c] sm:$0xe]
      %v6104 = vld [vmem:[%s5665 + $0x48] sm:$0xe]
      %v6105 = vld [vmem:[%s5665 + $0x54] sm:$0xe]
      %v6106 = vld [vmem:[%s5665 + $0x60] sm:$0xe]
      %v6107 = vld [vmem:[%s5665 + $0x6c] sm:$0xe]
      %v6108 = vld [vmem:[%s5665 + $0x78] sm:$0xe]
      %v6109 = vld [vmem:[%s5665 + $0x84] sm:$0xe]
      %v6110 = vld [vmem:[%s5665 + $0x90] sm:$0xe]
      %v6111 = vld [vmem:[%s5665 + $0x9c] sm:$0xe]
      %v6112 = vld [vmem:[%s5665 + $0xa8] sm:$0xe]
      %v6113 = vld [vmem:[%s5665 + $0xb4] sm:$0xe]
      %v6162 = vrot.slane %v6098, 5
      %v6163 = vrot.slane %v6162, 4
      %v6164 = vrot.slane %v5667, 5
      %v6165 = vsel %vm1396, %v6163, %v6164
      %v6166 = vrot.slane %v6164, 4
      %v6167 = vrot.slane %v5698, 5
      %v6168 = vsel %vm1396, %v6166, %v6167
      %v6169 = vrot.slane %v6099, 5
      %v6170 = vrot.slane %v6169, 4
      %v6171 = vrot.slane %v5669, 5
      %v6172 = vsel %vm1396, %v6170, %v6171
      %v6173 = vrot.slane %v6171, 4
      %v6174 = vrot.slane %v5699, 5
      %v6175 = vsel %vm1396, %v6173, %v6174
      %v6176 = vrot.slane %v6100, 5
      %v6177 = vrot.slane %v6176, 4
      %v6178 = vrot.slane %v5671, 5
      %v6179 = vsel %vm1396, %v6177, %v6178
      %v6180 = vrot.slane %v6178, 4
      %v6181 = vrot.slane %v5700, 5
      %v6182 = vsel %vm1396, %v6180, %v6181
      %v6183 = vrot.slane %v6101, 5
      %v6184 = vrot.slane %v6183, 4
      %v6185 = vrot.slane %v5673, 5
      %v6186 = vsel %vm1396, %v6184, %v6185
      %v6187 = vrot.slane %v6185, 4
      %v6188 = vrot.slane %v5701, 5
      %v6189 = vsel %vm1396, %v6187, %v6188
      %v6190 = vrot.slane %v6102, 5
      %v6191 = vrot.slane %v6190, 4
      %v6192 = vrot.slane %v5675, 5
      %v6193 = vsel %vm1396, %v6191, %v6192
      %v6194 = vrot.slane %v6192, 4
      %v6195 = vrot.slane %v5702, 5
      %v6196 = vsel %vm1396, %v6194, %v6195
      %v6197 = vrot.slane %v6103, 5
      %v6198 = vrot.slane %v6197, 4
      %v6199 = vrot.slane %v5677, 5
      %v6200 = vsel %vm1396, %v6198, %v6199
      %v6201 = vrot.slane %v6199, 4
      %v6202 = vrot.slane %v5703, 5
      %v6203 = vsel %vm1396, %v6201, %v6202
      %v6204 = vrot.slane %v6104, 5
      %v6205 = vrot.slane %v6204, 4
      %v6206 = vrot.slane %v5679, 5
      %v6207 = vsel %vm1396, %v6205, %v6206
      %v6208 = vrot.slane %v6206, 4
      %v6209 = vrot.slane %v5704, 5
      %v6210 = vsel %vm1396, %v6208, %v6209
      %v6211 = vrot.slane %v6105, 5
      %v6212 = vrot.slane %v6211, 4
      %v6213 = vrot.slane %v5681, 5
      %v6214 = vsel %vm1396, %v6212, %v6213
      %v6215 = vrot.slane %v6213, 4
      %v6216 = vrot.slane %v5705, 5
      %v6217 = vsel %vm1396, %v6215, %v6216
      %v6218 = vrot.slane %v6106, 5
      %v6219 = vrot.slane %v6218, 4
      %v6220 = vrot.slane %v5683, 5
      %v6221 = vsel %vm1396, %v6219, %v6220
      %v6222 = vrot.slane %v6220, 4
      %v6223 = vrot.slane %v5706, 5
      %v6224 = vsel %vm1396, %v6222, %v6223
      %v6225 = vrot.slane %v6107, 5
      %v6226 = vrot.slane %v6225, 4
      %v6227 = vrot.slane %v5685, 5
      %v6228 = vsel %vm1396, %v6226, %v6227
      %v6229 = vrot.slane %v6227, 4
      %v6230 = vrot.slane %v5707, 5
      %v6231 = vsel %vm1396, %v6229, %v6230
      %v6232 = vrot.slane %v6108, 5
      %v6233 = vrot.slane %v6232, 4
      %v6234 = vrot.slane %v5687, 5
      %v6235 = vsel %vm1396, %v6233, %v6234
      %v6236 = vrot.slane %v6234, 4
      %v6237 = vrot.slane %v5708, 5
      %v6238 = vsel %vm1396, %v6236, %v6237
      %v6239 = vrot.slane %v6109, 5
      %v6240 = vrot.slane %v6239, 4
      %v6241 = vrot.slane %v5689, 5
      %v6242 = vsel %vm1396, %v6240, %v6241
      %v6243 = vrot.slane %v6241, 4
      %v6244 = vrot.slane %v5709, 5
      %v6245 = vsel %vm1396, %v6243, %v6244
      %v6246 = vrot.slane %v6110, 5
      %v6247 = vrot.slane %v6246, 4
      %v6248 = vrot.slane %v5691, 5
      %v6249 = vsel %vm1396, %v6247, %v6248
      %v6250 = vrot.slane %v6248, 4
      %v6251 = vrot.slane %v5710, 5
      %v6252 = vsel %vm1396, %v6250, %v6251
      %v6253 = vrot.slane %v6111, 5
      %v6254 = vrot.slane %v6253, 4
      %v6255 = vrot.slane %v5693, 5
      %v6256 = vsel %vm1396, %v6254, %v6255
      %v6257 = vrot.slane %v6255, 4
      %v6258 = vrot.slane %v5711, 5
      %v6259 = vsel %vm1396, %v6257, %v6258
      %v6260 = vrot.slane %v6112, 5
      %v6261 = vrot.slane %v6260, 4
      %v6262 = vrot.slane %v5695, 5
      %v6263 = vsel %vm1396, %v6261, %v6262
      %v6264 = vrot.slane %v6262, 4
      %v6265 = vrot.slane %v5712, 5
      %v6266 = vsel %vm1396, %v6264, %v6265
      %v6267 = vrot.slane %v6113, 5
      %v6268 = vrot.slane %v6267, 4
      %v6269 = vrot.slane %v5697, 5
      %v6270 = vsel %vm1396, %v6268, %v6269
      %v6271 = vrot.slane %v6269, 4
      %v6272 = vrot.slane %v5713, 5
      %v6273 = vsel %vm1396, %v6271, %v6272
      %v6290 = vunpack.c.l.b16 %v4449
      %v6291 = vunpack.c.l.b16 %v4450
      %v6292 = vunpack.c.l.b16 %v4451
      %v6293 = vunpack.c.l.b16 %v4452
      %v6294 = vunpack.c.l.b16 %v4453
      %v6295 = vunpack.c.l.b16 %v4454
      %v6296 = vunpack.c.l.b16 %v4455
      %v6297 = vunpack.c.l.b16 %v4456
      %v6298 = vunpack.c.l.b16 %v4457
      %v6299 = vunpack.c.l.b16 %v4458
      %v6300 = vunpack.c.l.b16 %v4459
      %v6301 = vunpack.c.l.b16 %v4460
      %v6302 = vunpack.c.l.b16 %v4461
      %v6303 = vunpack.c.l.b16 %v4462
      %v6304 = vunpack.c.l.b16 %v4463
      %v6305 = vunpack.c.l.b16 %v4464
      %v6306 = vunpack.c.l.b16 %v4465
      %v6307 = vunpack.c.l.b16 %v4466
      %v6308 = vunpack.c.l.b16 %v4467
      %v6309 = vunpack.c.l.b16 %v4468
      %v6310 = vunpack.c.l.b16 %v4469
      %v6311 = vunpack.c.l.b16 %v4470
      %v6312 = vunpack.c.l.b16 %v4471
      %v6313 = vunpack.c.l.b16 %v4472
      %v6314 = vunpack.c.l.b16 %v4473
      %v6315 = vunpack.c.l.b16 %v4474
      %v6316 = vunpack.c.l.b16 %v4475
      %v6317 = vunpack.c.l.b16 %v4476
      %v6318 = vunpack.c.l.b16 %v4477
      %v6319 = vunpack.c.l.b16 %v4478
      %v6320 = vunpack.c.l.b16 %v4479
      %v6321 = vunpack.c.l.b16 %v4480
      %v6322 = vpack.c.b16 %v6291, %v6290
      %v6323 = vpack.c.b16 %v6293, %v6292
      %v6324 = vpack.c.b16 %v6295, %v6294
      %v6325 = vpack.c.b16 %v6297, %v6296
      %v6326 = vpack.c.b16 %v6299, %v6298
      %v6327 = vpack.c.b16 %v6301, %v6300
      %v6328 = vpack.c.b16 %v6303, %v6302
      %v6329 = vpack.c.b16 %v6305, %v6304
      %v6330 = vpack.c.b16 %v6307, %v6306
      %v6331 = vpack.c.b16 %v6309, %v6308
      %v6332 = vpack.c.b16 %v6311, %v6310
      %v6333 = vpack.c.b16 %v6313, %v6312
      %v6334 = vpack.c.b16 %v6315, %v6314
      %v6335 = vpack.c.b16 %v6317, %v6316
      %v6336 = vpack.c.b16 %v6319, %v6318
      %v6337 = vpack.c.b16 %v6321, %v6320
      %v6338 = vunpack.c.l.b16 %v4510
      %v6339 = vunpack.c.l.b16 %v4520
      %v6340 = vunpack.c.l.b16 %v4534
      %v6341 = vunpack.c.l.b16 %v4544
      %v6342 = vunpack.c.l.b16 %v4558
      %v6343 = vunpack.c.l.b16 %v4568
      %v6344 = vunpack.c.l.b16 %v4582
      %v6345 = vunpack.c.l.b16 %v4592
      %v6346 = vunpack.c.l.b16 %v4606
      %v6347 = vunpack.c.l.b16 %v4616
      %v6348 = vunpack.c.l.b16 %v4630
      %v6349 = vunpack.c.l.b16 %v4640
      %v6350 = vunpack.c.l.b16 %v4654
      %v6351 = vunpack.c.l.b16 %v4664
      %v6352 = vunpack.c.l.b16 %v4678
      %v6353 = vunpack.c.l.b16 %v4688
      %v6354 = vunpack.c.l.b16 %v4702
      %v6355 = vunpack.c.l.b16 %v4712
      %v6356 = vunpack.c.l.b16 %v4726
      %v6357 = vunpack.c.l.b16 %v4736
      %v6358 = vunpack.c.l.b16 %v4750
      %v6359 = vunpack.c.l.b16 %v4760
      %v6360 = vunpack.c.l.b16 %v4774
      %v6361 = vunpack.c.l.b16 %v4784
      %v6362 = vunpack.c.l.b16 %v4798
      %v6363 = vunpack.c.l.b16 %v4808
      %v6364 = vunpack.c.l.b16 %v4822
      %v6365 = vunpack.c.l.b16 %v4832
      %v6366 = vunpack.c.l.b16 %v4846
      %v6367 = vunpack.c.l.b16 %v4856
      %v6368 = vunpack.c.l.b16 %v4870
      %v6369 = vunpack.c.l.b16 %v4880
      %v6370 = vpack.c.b16 %v6339, %v6338
      %v6371 = vpack.c.b16 %v6341, %v6340
      %v6372 = vpack.c.b16 %v6343, %v6342
      %v6373 = vpack.c.b16 %v6345, %v6344
      %v6374 = vpack.c.b16 %v6347, %v6346
      %v6375 = vpack.c.b16 %v6349, %v6348
      %v6376 = vpack.c.b16 %v6351, %v6350
      %v6377 = vpack.c.b16 %v6353, %v6352
      %v6378 = vpack.c.b16 %v6355, %v6354
      %v6379 = vpack.c.b16 %v6357, %v6356
      %v6380 = vpack.c.b16 %v6359, %v6358
      %v6381 = vpack.c.b16 %v6361, %v6360
      %v6382 = vpack.c.b16 %v6363, %v6362
      %v6383 = vpack.c.b16 %v6365, %v6364
      %v6384 = vpack.c.b16 %v6367, %v6366
      %v6385 = vpack.c.b16 %v6369, %v6368
      %6386 = vrot.lane.b32.xlu0 %v6370, 32
      %v6387 = vpop.permute.xlu0 %6386
      %6388 = vrot.lane.b32.xlu0 %v6371, 32
      %v6389 = vpop.permute.xlu0 %6388
      %6390 = vrot.lane.b32.xlu0 %v6372, 32
      %v6391 = vpop.permute.xlu0 %6390
      %6392 = vrot.lane.b32.xlu0 %v6373, 32
      %v6393 = vpop.permute.xlu0 %6392
      %6394 = vrot.lane.b32.xlu0 %v6374, 32
      %v6395 = vpop.permute.xlu0 %6394
      %6396 = vrot.lane.b32.xlu0 %v6375, 32
      %v6397 = vpop.permute.xlu0 %6396
      %6398 = vrot.lane.b32.xlu0 %v6376, 32
      %v6399 = vpop.permute.xlu0 %6398
      %6400 = vrot.lane.b32.xlu0 %v6377, 32
      %v6401 = vpop.permute.xlu0 %6400
      %6402 = vrot.lane.b32.xlu0 %v6378, 32
      %v6403 = vpop.permute.xlu0 %6402
      %6404 = vrot.lane.b32.xlu0 %v6379, 32
      %v6405 = vpop.permute.xlu0 %6404
      %6406 = vrot.lane.b32.xlu0 %v6380, 32
      %v6407 = vpop.permute.xlu0 %6406
      %6408 = vrot.lane.b32.xlu0 %v6381, 32
      %v6409 = vpop.permute.xlu0 %6408
      %6410 = vrot.lane.b32.xlu0 %v6382, 32
      %v6411 = vpop.permute.xlu0 %6410
      %6412 = vrot.lane.b32.xlu0 %v6383, 32
      %v6413 = vpop.permute.xlu0 %6412
      %6414 = vrot.lane.b32.xlu0 %v6384, 32
      %v6415 = vpop.permute.xlu0 %6414
      %6416 = vrot.lane.b32.xlu0 %v6385, 32
      %v6417 = vpop.permute.xlu0 %6416
      %v6418 = vunpack.c.l.b16 %v4948
      %v6419 = vunpack.c.l.b16 %v4951
      %v6420 = vunpack.c.l.b16 %v4955
      %v6421 = vunpack.c.l.b16 %v4958
      %v6422 = vunpack.c.l.b16 %v4962
      %v6423 = vunpack.c.l.b16 %v4965
      %v6424 = vunpack.c.l.b16 %v4969
      %v6425 = vunpack.c.l.b16 %v4972
      %v6426 = vunpack.c.l.b16 %v4976
      %v6427 = vunpack.c.l.b16 %v4979
      %v6428 = vunpack.c.l.b16 %v4983
      %v6429 = vunpack.c.l.b16 %v4986
      %v6430 = vunpack.c.l.b16 %v4990
      %v6431 = vunpack.c.l.b16 %v4993
      %v6432 = vunpack.c.l.b16 %v4997
      %v6433 = vunpack.c.l.b16 %v5000
      %v6434 = vunpack.c.l.b16 %v5004
      %v6435 = vunpack.c.l.b16 %v5007
      %v6436 = vunpack.c.l.b16 %v5011
      %v6437 = vunpack.c.l.b16 %v5014
      %v6438 = vunpack.c.l.b16 %v5018
      %v6439 = vunpack.c.l.b16 %v5021
      %v6440 = vunpack.c.l.b16 %v5025
      %v6441 = vunpack.c.l.b16 %v5028
      %v6442 = vunpack.c.l.b16 %v5032
      %v6443 = vunpack.c.l.b16 %v5035
      %v6444 = vunpack.c.l.b16 %v5039
      %v6445 = vunpack.c.l.b16 %v5042
      %v6446 = vunpack.c.l.b16 %v5046
      %v6447 = vunpack.c.l.b16 %v5049
      %v6448 = vunpack.c.l.b16 %v5053
      %v6449 = vunpack.c.l.b16 %v5056
      %v6450 = vpack.c.b16 %v6419, %v6418
      %v6451 = vpack.c.b16 %v6421, %v6420
      %v6452 = vpack.c.b16 %v6423, %v6422
      %v6453 = vpack.c.b16 %v6425, %v6424
      %v6454 = vpack.c.b16 %v6427, %v6426
      %v6455 = vpack.c.b16 %v6429, %v6428
      %v6456 = vpack.c.b16 %v6431, %v6430
      %v6457 = vpack.c.b16 %v6433, %v6432
      %v6458 = vpack.c.b16 %v6435, %v6434
      %v6459 = vpack.c.b16 %v6437, %v6436
      %v6460 = vpack.c.b16 %v6439, %v6438
      %v6461 = vpack.c.b16 %v6441, %v6440
      %v6462 = vpack.c.b16 %v6443, %v6442
      %v6463 = vpack.c.b16 %v6445, %v6444
      %v6464 = vpack.c.b16 %v6447, %v6446
      %v6465 = vpack.c.b16 %v6449, %v6448
      %6466 = vrot.lane.b32.xlu0 %v6450, 64
      %v6467 = vpop.permute.xlu0 %6466
      %6468 = vrot.lane.b32.xlu0 %v6451, 64
      %v6469 = vpop.permute.xlu0 %6468
      %6470 = vrot.lane.b32.xlu0 %v6452, 64
      %v6471 = vpop.permute.xlu0 %6470
      %6472 = vrot.lane.b32.xlu0 %v6453, 64
      %v6473 = vpop.permute.xlu0 %6472
      %6474 = vrot.lane.b32.xlu0 %v6454, 64
      %v6475 = vpop.permute.xlu0 %6474
      %6476 = vrot.lane.b32.xlu0 %v6455, 64
      %v6477 = vpop.permute.xlu0 %6476
      %6478 = vrot.lane.b32.xlu0 %v6456, 64
      %v6479 = vpop.permute.xlu0 %6478
      %6480 = vrot.lane.b32.xlu0 %v6457, 64
      %v6481 = vpop.permute.xlu0 %6480
      %6482 = vrot.lane.b32.xlu0 %v6458, 64
      %v6483 = vpop.permute.xlu0 %6482
      %6484 = vrot.lane.b32.xlu0 %v6459, 64
      %v6485 = vpop.permute.xlu0 %6484
      %6486 = vrot.lane.b32.xlu0 %v6460, 64
      %v6487 = vpop.permute.xlu0 %6486
      %6488 = vrot.lane.b32.xlu0 %v6461, 64
      %v6489 = vpop.permute.xlu0 %6488
      %6490 = vrot.lane.b32.xlu0 %v6462, 64
      %v6491 = vpop.permute.xlu0 %6490
      %6492 = vrot.lane.b32.xlu0 %v6463, 64
      %v6493 = vpop.permute.xlu0 %6492
      %6494 = vrot.lane.b32.xlu0 %v6464, 64
      %v6495 = vpop.permute.xlu0 %6494
      %6496 = vrot.lane.b32.xlu0 %v6465, 64
      %v6497 = vpop.permute.xlu0 %6496
      %v6514 = vunpack.c.l.b16 %v5057
      %v6515 = vunpack.c.l.b16 %v5058
      %v6516 = vunpack.c.l.b16 %v5059
      %v6517 = vunpack.c.l.b16 %v5060
      %v6518 = vunpack.c.l.b16 %v5061
      %v6519 = vunpack.c.l.b16 %v5062
      %v6520 = vunpack.c.l.b16 %v5063
      %v6521 = vunpack.c.l.b16 %v5064
      %v6522 = vunpack.c.l.b16 %v5065
      %v6523 = vunpack.c.l.b16 %v5066
      %v6524 = vunpack.c.l.b16 %v5067
      %v6525 = vunpack.c.l.b16 %v5068
      %v6526 = vunpack.c.l.b16 %v5069
      %v6527 = vunpack.c.l.b16 %v5070
      %v6528 = vunpack.c.l.b16 %v5071
      %v6529 = vunpack.c.l.b16 %v5072
      %v6530 = vunpack.c.l.b16 %v5073
      %v6531 = vunpack.c.l.b16 %v5074
      %v6532 = vunpack.c.l.b16 %v5075
      %v6533 = vunpack.c.l.b16 %v5076
      %v6534 = vunpack.c.l.b16 %v5077
      %v6535 = vunpack.c.l.b16 %v5078
      %v6536 = vunpack.c.l.b16 %v5079
      %v6537 = vunpack.c.l.b16 %v5080
      %v6538 = vunpack.c.l.b16 %v5081
      %v6539 = vunpack.c.l.b16 %v5082
      %v6540 = vunpack.c.l.b16 %v5083
      %v6541 = vunpack.c.l.b16 %v5084
      %v6542 = vunpack.c.l.b16 %v5085
      %v6543 = vunpack.c.l.b16 %v5086
      %v6544 = vunpack.c.l.b16 %v5087
      %v6545 = vunpack.c.l.b16 %v5088
      %v6546 = vpack.c.b16 %v6515, %v6514
      %v6547 = vpack.c.b16 %v6517, %v6516
      %v6548 = vpack.c.b16 %v6519, %v6518
      %v6549 = vpack.c.b16 %v6521, %v6520
      %v6550 = vpack.c.b16 %v6523, %v6522
      %v6551 = vpack.c.b16 %v6525, %v6524
      %v6552 = vpack.c.b16 %v6527, %v6526
      %v6553 = vpack.c.b16 %v6529, %v6528
      %v6554 = vpack.c.b16 %v6531, %v6530
      %v6555 = vpack.c.b16 %v6533, %v6532
      %v6556 = vpack.c.b16 %v6535, %v6534
      %v6557 = vpack.c.b16 %v6537, %v6536
      %v6558 = vpack.c.b16 %v6539, %v6538
      %v6559 = vpack.c.b16 %v6541, %v6540
      %v6560 = vpack.c.b16 %v6543, %v6542
      %v6561 = vpack.c.b16 %v6545, %v6544
      %6562 = vrot.lane.b32.xlu0 %v6546, 96
      %v6563 = vpop.permute.xlu0 %6562
      %6564 = vrot.lane.b32.xlu0 %v6547, 96
      %v6565 = vpop.permute.xlu0 %6564
      %6566 = vrot.lane.b32.xlu0 %v6548, 96
      %v6567 = vpop.permute.xlu0 %6566
      %6568 = vrot.lane.b32.xlu0 %v6549, 96
      %v6569 = vpop.permute.xlu0 %6568
      %6570 = vrot.lane.b32.xlu0 %v6550, 96
      %v6571 = vpop.permute.xlu0 %6570
      %6572 = vrot.lane.b32.xlu0 %v6551, 96
      %v6573 = vpop.permute.xlu0 %6572
      %6574 = vrot.lane.b32.xlu0 %v6552, 96
      %v6575 = vpop.permute.xlu0 %6574
      %6576 = vrot.lane.b32.xlu0 %v6553, 96
      %v6577 = vpop.permute.xlu0 %6576
      %6578 = vrot.lane.b32.xlu0 %v6554, 96
      %v6579 = vpop.permute.xlu0 %6578
      %6580 = vrot.lane.b32.xlu0 %v6555, 96
      %v6581 = vpop.permute.xlu0 %6580
      %6582 = vrot.lane.b32.xlu0 %v6556, 96
      %v6583 = vpop.permute.xlu0 %6582
      %6584 = vrot.lane.b32.xlu0 %v6557, 96
      %v6585 = vpop.permute.xlu0 %6584
      %6586 = vrot.lane.b32.xlu0 %v6558, 96
      %v6587 = vpop.permute.xlu0 %6586
      %6588 = vrot.lane.b32.xlu0 %v6559, 96
      %v6589 = vpop.permute.xlu0 %6588
      %6590 = vrot.lane.b32.xlu0 %v6560, 96
      %v6591 = vpop.permute.xlu0 %6590
      %6592 = vrot.lane.b32.xlu0 %v6561, 96
      %v6593 = vpop.permute.xlu0 %6592
      %v6594 = vunpack.c.l.b16 %v5118
      %v6595 = vunpack.c.l.b16 %v5128
      %v6596 = vunpack.c.l.b16 %v5142
      %v6597 = vunpack.c.l.b16 %v5152
      %v6598 = vunpack.c.l.b16 %v5166
      %v6599 = vunpack.c.l.b16 %v5176
      %v6600 = vunpack.c.l.b16 %v5190
      %v6601 = vunpack.c.l.b16 %v5200
      %v6602 = vunpack.c.l.b16 %v5214
      %v6603 = vunpack.c.l.b16 %v5224
      %v6604 = vunpack.c.l.b16 %v5238
      %v6605 = vunpack.c.l.b16 %v5248
      %v6606 = vunpack.c.l.b16 %v5262
      %v6607 = vunpack.c.l.b16 %v5272
      %v6608 = vunpack.c.l.b16 %v5286
      %v6609 = vunpack.c.l.b16 %v5296
      %v6610 = vunpack.c.l.b16 %v5310
      %v6611 = vunpack.c.l.b16 %v5320
      %v6612 = vunpack.c.l.b16 %v5334
      %v6613 = vunpack.c.l.b16 %v5344
      %v6614 = vunpack.c.l.b16 %v5358
      %v6615 = vunpack.c.l.b16 %v5368
      %v6616 = vunpack.c.l.b16 %v5382
      %v6617 = vunpack.c.l.b16 %v5392
      %v6618 = vunpack.c.l.b16 %v5406
      %v6619 = vunpack.c.l.b16 %v5416
      %v6620 = vunpack.c.l.b16 %v5430
      %v6621 = vunpack.c.l.b16 %v5440
      %v6622 = vunpack.c.l.b16 %v5454
      %v6623 = vunpack.c.l.b16 %v5464
      %v6624 = vunpack.c.l.b16 %v5478
      %v6625 = vunpack.c.l.b16 %v5488
      %v6626 = vpack.c.b16 %v6595, %v6594
      %v6627 = vpack.c.b16 %v6597, %v6596
      %v6628 = vpack.c.b16 %v6599, %v6598
      %v6629 = vpack.c.b16 %v6601, %v6600
      %v6630 = vpack.c.b16 %v6603, %v6602
      %v6631 = vpack.c.b16 %v6605, %v6604
      %v6632 = vpack.c.b16 %v6607, %v6606
      %v6633 = vpack.c.b16 %v6609, %v6608
      %v6634 = vpack.c.b16 %v6611, %v6610
      %v6635 = vpack.c.b16 %v6613, %v6612
      %v6636 = vpack.c.b16 %v6615, %v6614
      %v6637 = vpack.c.b16 %v6617, %v6616
      %v6638 = vpack.c.b16 %v6619, %v6618
      %v6639 = vpack.c.b16 %v6621, %v6620
      %v6640 = vpack.c.b16 %v6623, %v6622
      %v6641 = vpack.c.b16 %v6625, %v6624
      %v6642 = vunpack.c.l.b16 %v5556
      %v6643 = vunpack.c.l.b16 %v5559
      %v6644 = vunpack.c.l.b16 %v5563
      %v6645 = vunpack.c.l.b16 %v5566
      %v6646 = vunpack.c.l.b16 %v5570
      %v6647 = vunpack.c.l.b16 %v5573
      %v6648 = vunpack.c.l.b16 %v5577
      %v6649 = vunpack.c.l.b16 %v5580
      %v6650 = vunpack.c.l.b16 %v5584
      %v6651 = vunpack.c.l.b16 %v5587
      %v6652 = vunpack.c.l.b16 %v5591
      %v6653 = vunpack.c.l.b16 %v5594
      %v6654 = vunpack.c.l.b16 %v5598
      %v6655 = vunpack.c.l.b16 %v5601
      %v6656 = vunpack.c.l.b16 %v5605
      %v6657 = vunpack.c.l.b16 %v5608
      %v6658 = vunpack.c.l.b16 %v5612
      %v6659 = vunpack.c.l.b16 %v5615
      %v6660 = vunpack.c.l.b16 %v5619
      %v6661 = vunpack.c.l.b16 %v5622
      %v6662 = vunpack.c.l.b16 %v5626
      %v6663 = vunpack.c.l.b16 %v5629
      %v6664 = vunpack.c.l.b16 %v5633
      %v6665 = vunpack.c.l.b16 %v5636
      %v6666 = vunpack.c.l.b16 %v5640
      %v6667 = vunpack.c.l.b16 %v5643
      %v6668 = vunpack.c.l.b16 %v5647
      %v6669 = vunpack.c.l.b16 %v5650
      %v6670 = vunpack.c.l.b16 %v5654
      %v6671 = vunpack.c.l.b16 %v5657
      %v6672 = vunpack.c.l.b16 %v5661
      %v6673 = vunpack.c.l.b16 %v5664
      %v6674 = vpack.c.b16 %v6643, %v6642
      %v6675 = vpack.c.b16 %v6645, %v6644
      %v6676 = vpack.c.b16 %v6647, %v6646
      %v6677 = vpack.c.b16 %v6649, %v6648
      %v6678 = vpack.c.b16 %v6651, %v6650
      %v6679 = vpack.c.b16 %v6653, %v6652
      %v6680 = vpack.c.b16 %v6655, %v6654
      %v6681 = vpack.c.b16 %v6657, %v6656
      %v6682 = vpack.c.b16 %v6659, %v6658
      %v6683 = vpack.c.b16 %v6661, %v6660
      %v6684 = vpack.c.b16 %v6663, %v6662
      %v6685 = vpack.c.b16 %v6665, %v6664
      %v6686 = vpack.c.b16 %v6667, %v6666
      %v6687 = vpack.c.b16 %v6669, %v6668
      %v6688 = vpack.c.b16 %v6671, %v6670
      %v6689 = vpack.c.b16 %v6673, %v6672
      %6690 = vrot.lane.b32.xlu0 %v6674, 32
      %v6691 = vpop.permute.xlu0 %6690
      %6692 = vrot.lane.b32.xlu0 %v6675, 32
      %v6693 = vpop.permute.xlu0 %6692
      %6694 = vrot.lane.b32.xlu0 %v6676, 32
      %v6695 = vpop.permute.xlu0 %6694
      %6696 = vrot.lane.b32.xlu0 %v6677, 32
      %v6697 = vpop.permute.xlu0 %6696
      %6698 = vrot.lane.b32.xlu0 %v6678, 32
      %v6699 = vpop.permute.xlu0 %6698
      %6700 = vrot.lane.b32.xlu0 %v6679, 32
      %v6701 = vpop.permute.xlu0 %6700
      %6702 = vrot.lane.b32.xlu0 %v6680, 32
      %v6703 = vpop.permute.xlu0 %6702
      %6704 = vrot.lane.b32.xlu0 %v6681, 32
      %v6705 = vpop.permute.xlu0 %6704
      %6706 = vrot.lane.b32.xlu0 %v6682, 32
      %v6707 = vpop.permute.xlu0 %6706
      %6708 = vrot.lane.b32.xlu0 %v6683, 32
      %v6709 = vpop.permute.xlu0 %6708
      %6710 = vrot.lane.b32.xlu0 %v6684, 32
      %v6711 = vpop.permute.xlu0 %6710
      %6712 = vrot.lane.b32.xlu0 %v6685, 32
      %v6713 = vpop.permute.xlu0 %6712
      %6714 = vrot.lane.b32.xlu0 %v6686, 32
      %v6715 = vpop.permute.xlu0 %6714
      %6716 = vrot.lane.b32.xlu0 %v6687, 32
      %v6717 = vpop.permute.xlu0 %6716
      %6718 = vrot.lane.b32.xlu0 %v6688, 32
      %v6719 = vpop.permute.xlu0 %6718
      %6720 = vrot.lane.b32.xlu0 %v6689, 32
      %v6721 = vpop.permute.xlu0 %6720
      %v6738 = vunpack.c.l.b16 %v5666
      %v6739 = vunpack.c.l.b16 %v5667
      %v6740 = vunpack.c.l.b16 %v5668
      %v6741 = vunpack.c.l.b16 %v5669
      %v6742 = vunpack.c.l.b16 %v5670
      %v6743 = vunpack.c.l.b16 %v5671
      %v6744 = vunpack.c.l.b16 %v5672
      %v6745 = vunpack.c.l.b16 %v5673
      %v6746 = vunpack.c.l.b16 %v5674
      %v6747 = vunpack.c.l.b16 %v5675
      %v6748 = vunpack.c.l.b16 %v5676
      %v6749 = vunpack.c.l.b16 %v5677
      %v6750 = vunpack.c.l.b16 %v5678
      %v6751 = vunpack.c.l.b16 %v5679
      %v6752 = vunpack.c.l.b16 %v5680
      %v6753 = vunpack.c.l.b16 %v5681
      %v6754 = vunpack.c.l.b16 %v5682
      %v6755 = vunpack.c.l.b16 %v5683
      %v6756 = vunpack.c.l.b16 %v5684
      %v6757 = vunpack.c.l.b16 %v5685
      %v6758 = vunpack.c.l.b16 %v5686
      %v6759 = vunpack.c.l.b16 %v5687
      %v6760 = vunpack.c.l.b16 %v5688
      %v6761 = vunpack.c.l.b16 %v5689
      %v6762 = vunpack.c.l.b16 %v5690
      %v6763 = vunpack.c.l.b16 %v5691
      %v6764 = vunpack.c.l.b16 %v5692
      %v6765 = vunpack.c.l.b16 %v5693
      %v6766 = vunpack.c.l.b16 %v5694
      %v6767 = vunpack.c.l.b16 %v5695
      %v6768 = vunpack.c.l.b16 %v5696
      %v6769 = vunpack.c.l.b16 %v5697
      %v6770 = vpack.c.b16 %v6739, %v6738
      %v6771 = vpack.c.b16 %v6741, %v6740
      %v6772 = vpack.c.b16 %v6743, %v6742
      %v6773 = vpack.c.b16 %v6745, %v6744
      %v6774 = vpack.c.b16 %v6747, %v6746
      %v6775 = vpack.c.b16 %v6749, %v6748
      %v6776 = vpack.c.b16 %v6751, %v6750
      %v6777 = vpack.c.b16 %v6753, %v6752
      %v6778 = vpack.c.b16 %v6755, %v6754
      %v6779 = vpack.c.b16 %v6757, %v6756
      %v6780 = vpack.c.b16 %v6759, %v6758
      %v6781 = vpack.c.b16 %v6761, %v6760
      %v6782 = vpack.c.b16 %v6763, %v6762
      %v6783 = vpack.c.b16 %v6765, %v6764
      %v6784 = vpack.c.b16 %v6767, %v6766
      %v6785 = vpack.c.b16 %v6769, %v6768
      %6786 = vrot.lane.b32.xlu0 %v6770, 64
      %v6787 = vpop.permute.xlu0 %6786
      %6788 = vrot.lane.b32.xlu0 %v6771, 64
      %v6789 = vpop.permute.xlu0 %6788
      %6790 = vrot.lane.b32.xlu0 %v6772, 64
      %v6791 = vpop.permute.xlu0 %6790
      %6792 = vrot.lane.b32.xlu0 %v6773, 64
      %v6793 = vpop.permute.xlu0 %6792
      %6794 = vrot.lane.b32.xlu0 %v6774, 64
      %v6795 = vpop.permute.xlu0 %6794
      %6796 = vrot.lane.b32.xlu0 %v6775, 64
      %v6797 = vpop.permute.xlu0 %6796
      %6798 = vrot.lane.b32.xlu0 %v6776, 64
      %v6799 = vpop.permute.xlu0 %6798
      %6800 = vrot.lane.b32.xlu0 %v6777, 64
      %v6801 = vpop.permute.xlu0 %6800
      %6802 = vrot.lane.b32.xlu0 %v6778, 64
      %v6803 = vpop.permute.xlu0 %6802
      %6804 = vrot.lane.b32.xlu0 %v6779, 64
      %v6805 = vpop.permute.xlu0 %6804
      %6806 = vrot.lane.b32.xlu0 %v6780, 64
      %v6807 = vpop.permute.xlu0 %6806
      %6808 = vrot.lane.b32.xlu0 %v6781, 64
      %v6809 = vpop.permute.xlu0 %6808
      %6810 = vrot.lane.b32.xlu0 %v6782, 64
      %v6811 = vpop.permute.xlu0 %6810
      %6812 = vrot.lane.b32.xlu0 %v6783, 64
      %v6813 = vpop.permute.xlu0 %6812
      %6814 = vrot.lane.b32.xlu0 %v6784, 64
      %v6815 = vpop.permute.xlu0 %6814
      %6816 = vrot.lane.b32.xlu0 %v6785, 64
      %v6817 = vpop.permute.xlu0 %6816
      %v6818 = vunpack.c.l.b16 %v5727
      %v6819 = vunpack.c.l.b16 %v5737
      %v6820 = vunpack.c.l.b16 %v5751
      %v6821 = vunpack.c.l.b16 %v5761
      %v6822 = vunpack.c.l.b16 %v5775
      %v6823 = vunpack.c.l.b16 %v5785
      %v6824 = vunpack.c.l.b16 %v5799
      %v6825 = vunpack.c.l.b16 %v5809
      %v6826 = vunpack.c.l.b16 %v5823
      %v6827 = vunpack.c.l.b16 %v5833
      %v6828 = vunpack.c.l.b16 %v5847
      %v6829 = vunpack.c.l.b16 %v5857
      %v6830 = vunpack.c.l.b16 %v5871
      %v6831 = vunpack.c.l.b16 %v5881
      %v6832 = vunpack.c.l.b16 %v5895
      %v6833 = vunpack.c.l.b16 %v5905
      %v6834 = vunpack.c.l.b16 %v5919
      %v6835 = vunpack.c.l.b16 %v5929
      %v6836 = vunpack.c.l.b16 %v5943
      %v6837 = vunpack.c.l.b16 %v5953
      %v6838 = vunpack.c.l.b16 %v5967
      %v6839 = vunpack.c.l.b16 %v5977
      %v6840 = vunpack.c.l.b16 %v5991
      %v6841 = vunpack.c.l.b16 %v6001
      %v6842 = vunpack.c.l.b16 %v6015
      %v6843 = vunpack.c.l.b16 %v6025
      %v6844 = vunpack.c.l.b16 %v6039
      %v6845 = vunpack.c.l.b16 %v6049
      %v6846 = vunpack.c.l.b16 %v6063
      %v6847 = vunpack.c.l.b16 %v6073
      %v6848 = vunpack.c.l.b16 %v6087
      %v6849 = vunpack.c.l.b16 %v6097
      %v6850 = vpack.c.b16 %v6819, %v6818
      %v6851 = vpack.c.b16 %v6821, %v6820
      %v6852 = vpack.c.b16 %v6823, %v6822
      %v6853 = vpack.c.b16 %v6825, %v6824
      %v6854 = vpack.c.b16 %v6827, %v6826
      %v6855 = vpack.c.b16 %v6829, %v6828
      %v6856 = vpack.c.b16 %v6831, %v6830
      %v6857 = vpack.c.b16 %v6833, %v6832
      %v6858 = vpack.c.b16 %v6835, %v6834
      %v6859 = vpack.c.b16 %v6837, %v6836
      %v6860 = vpack.c.b16 %v6839, %v6838
      %v6861 = vpack.c.b16 %v6841, %v6840
      %v6862 = vpack.c.b16 %v6843, %v6842
      %v6863 = vpack.c.b16 %v6845, %v6844
      %v6864 = vpack.c.b16 %v6847, %v6846
      %v6865 = vpack.c.b16 %v6849, %v6848
      %6866 = vrot.lane.b32.xlu0 %v6850, 96
      %v6867 = vpop.permute.xlu0 %6866
      %6868 = vrot.lane.b32.xlu0 %v6851, 96
      %v6869 = vpop.permute.xlu0 %6868
      %6870 = vrot.lane.b32.xlu0 %v6852, 96
      %v6871 = vpop.permute.xlu0 %6870
      %6872 = vrot.lane.b32.xlu0 %v6853, 96
      %v6873 = vpop.permute.xlu0 %6872
      %6874 = vrot.lane.b32.xlu0 %v6854, 96
      %v6875 = vpop.permute.xlu0 %6874
      %6876 = vrot.lane.b32.xlu0 %v6855, 96
      %v6877 = vpop.permute.xlu0 %6876
      %6878 = vrot.lane.b32.xlu0 %v6856, 96
      %v6879 = vpop.permute.xlu0 %6878
      %6880 = vrot.lane.b32.xlu0 %v6857, 96
      %v6881 = vpop.permute.xlu0 %6880
      %6882 = vrot.lane.b32.xlu0 %v6858, 96
      %v6883 = vpop.permute.xlu0 %6882
      %6884 = vrot.lane.b32.xlu0 %v6859, 96
      %v6885 = vpop.permute.xlu0 %6884
      %6886 = vrot.lane.b32.xlu0 %v6860, 96
      %v6887 = vpop.permute.xlu0 %6886
      %6888 = vrot.lane.b32.xlu0 %v6861, 96
      %v6889 = vpop.permute.xlu0 %6888
      %6890 = vrot.lane.b32.xlu0 %v6862, 96
      %v6891 = vpop.permute.xlu0 %6890
      %6892 = vrot.lane.b32.xlu0 %v6863, 96
      %v6893 = vpop.permute.xlu0 %6892
      %6894 = vrot.lane.b32.xlu0 %v6864, 96
      %v6895 = vpop.permute.xlu0 %6894
      %6896 = vrot.lane.b32.xlu0 %v6865, 96
      %v6897 = vpop.permute.xlu0 %6896
      %v6898 = vunpack.c.l.b16 %v6165
      %v6899 = vunpack.c.l.b16 %v6168
      %v6900 = vunpack.c.l.b16 %v6172
      %v6901 = vunpack.c.l.b16 %v6175
      %v6902 = vunpack.c.l.b16 %v6179
      %v6903 = vunpack.c.l.b16 %v6182
      %v6904 = vunpack.c.l.b16 %v6186
      %v6905 = vunpack.c.l.b16 %v6189
      %v6906 = vunpack.c.l.b16 %v6193
      %v6907 = vunpack.c.l.b16 %v6196
      %v6908 = vunpack.c.l.b16 %v6200
      %v6909 = vunpack.c.l.b16 %v6203
      %v6910 = vunpack.c.l.b16 %v6207
      %v6911 = vunpack.c.l.b16 %v6210
      %v6912 = vunpack.c.l.b16 %v6214
      %v6913 = vunpack.c.l.b16 %v6217
      %v6914 = vunpack.c.l.b16 %v6221
      %v6915 = vunpack.c.l.b16 %v6224
      %v6916 = vunpack.c.l.b16 %v6228
      %v6917 = vunpack.c.l.b16 %v6231
      %v6918 = vunpack.c.l.b16 %v6235
      %v6919 = vunpack.c.l.b16 %v6238
      %v6920 = vunpack.c.l.b16 %v6242
      %v6921 = vunpack.c.l.b16 %v6245
      %v6922 = vunpack.c.l.b16 %v6249
      %v6923 = vunpack.c.l.b16 %v6252
      %v6924 = vunpack.c.l.b16 %v6256
      %v6925 = vunpack.c.l.b16 %v6259
      %v6926 = vunpack.c.l.b16 %v6263
      %v6927 = vunpack.c.l.b16 %v6266
      %v6928 = vunpack.c.l.b16 %v6270
      %v6929 = vunpack.c.l.b16 %v6273
      %v6930 = vpack.c.b16 %v6899, %v6898
      %v6931 = vpack.c.b16 %v6901, %v6900
      %v6932 = vpack.c.b16 %v6903, %v6902
      %v6933 = vpack.c.b16 %v6905, %v6904
      %v6934 = vpack.c.b16 %v6907, %v6906
      %v6935 = vpack.c.b16 %v6909, %v6908
      %v6936 = vpack.c.b16 %v6911, %v6910
      %v6937 = vpack.c.b16 %v6913, %v6912
      %v6938 = vpack.c.b16 %v6915, %v6914
      %v6939 = vpack.c.b16 %v6917, %v6916
      %v6940 = vpack.c.b16 %v6919, %v6918
      %v6941 = vpack.c.b16 %v6921, %v6920
      %v6942 = vpack.c.b16 %v6923, %v6922
      %v6943 = vpack.c.b16 %v6925, %v6924
      %v6944 = vpack.c.b16 %v6927, %v6926
      %v6945 = vpack.c.b16 %v6929, %v6928
      %v6948 = vsel %vm3709, %v6322, %v6387
      %v6951 = vsel %vm3709, %v6323, %v6389
      %v6954 = vsel %vm3709, %v6324, %v6391
      %v6957 = vsel %vm3709, %v6325, %v6393
      %v6960 = vsel %vm3709, %v6326, %v6395
      %v6963 = vsel %vm3709, %v6327, %v6397
      %v6966 = vsel %vm3709, %v6328, %v6399
      %v6969 = vsel %vm3709, %v6329, %v6401
      %v6972 = vsel %vm3709, %v6330, %v6403
      %v6975 = vsel %vm3709, %v6331, %v6405
      %v6978 = vsel %vm3709, %v6332, %v6407
      %v6981 = vsel %vm3709, %v6333, %v6409
      %v6984 = vsel %vm3709, %v6334, %v6411
      %v6987 = vsel %vm3709, %v6335, %v6413
      %v6990 = vsel %vm3709, %v6336, %v6415
      %v6993 = vsel %vm3709, %v6337, %v6417
      %vm6994 = vcmask 523264
      %v6996 = vsel %vm6994, %v6948, %v6467
      %v6998 = vsel %vm6994, %v6951, %v6469
      %v7000 = vsel %vm6994, %v6954, %v6471
      %v7002 = vsel %vm6994, %v6957, %v6473
      %v7004 = vsel %vm6994, %v6960, %v6475
      %v7006 = vsel %vm6994, %v6963, %v6477
      %v7008 = vsel %vm6994, %v6966, %v6479
      %v7010 = vsel %vm6994, %v6969, %v6481
      %v7012 = vsel %vm6994, %v6972, %v6483
      %v7014 = vsel %vm6994, %v6975, %v6485
      %v7016 = vsel %vm6994, %v6978, %v6487
      %v7018 = vsel %vm6994, %v6981, %v6489
      %v7020 = vsel %vm6994, %v6984, %v6491
      %v7022 = vsel %vm6994, %v6987, %v6493
      %v7024 = vsel %vm6994, %v6990, %v6495
      %v7026 = vsel %vm6994, %v6993, %v6497
      %vm7027 = vcmask 785408
      %v7029 = vsel %vm7027, %v6996, %v6563
      %v7032 = vsel %vm7027, %v6998, %v6565
      %v7035 = vsel %vm7027, %v7000, %v6567
      %v7038 = vsel %vm7027, %v7002, %v6569
      %v7041 = vsel %vm7027, %v7004, %v6571
      %v7044 = vsel %vm7027, %v7006, %v6573
      %v7047 = vsel %vm7027, %v7008, %v6575
      %v7050 = vsel %vm7027, %v7010, %v6577
      %v7053 = vsel %vm7027, %v7012, %v6579
      %v7056 = vsel %vm7027, %v7014, %v6581
      %v7059 = vsel %vm7027, %v7016, %v6583
      %v7062 = vsel %vm7027, %v7018, %v6585
      %v7065 = vsel %vm7027, %v7020, %v6587
      %v7068 = vsel %vm7027, %v7022, %v6589
      %v7071 = vsel %vm7027, %v7024, %v6591
      %v7074 = vsel %vm7027, %v7026, %v6593
      %v7078 = vsel %vm3709, %v6626, %v6691
      %v7081 = vsel %vm3709, %v6627, %v6693
      %v7084 = vsel %vm3709, %v6628, %v6695
      %v7087 = vsel %vm3709, %v6629, %v6697
      %v7090 = vsel %vm3709, %v6630, %v6699
      %v7093 = vsel %vm3709, %v6631, %v6701
      %v7096 = vsel %vm3709, %v6632, %v6703
      %v7099 = vsel %vm3709, %v6633, %v6705
      %v7102 = vsel %vm3709, %v6634, %v6707
      %v7105 = vsel %vm3709, %v6635, %v6709
      %v7108 = vsel %vm3709, %v6636, %v6711
      %v7111 = vsel %vm3709, %v6637, %v6713
      %v7114 = vsel %vm3709, %v6638, %v6715
      %v7117 = vsel %vm3709, %v6639, %v6717
      %v7120 = vsel %vm3709, %v6640, %v6719
      %v7123 = vsel %vm3709, %v6641, %v6721
      %v7125 = vsel %vm6994, %v7078, %v6787
      %v7127 = vsel %vm6994, %v7081, %v6789
      %v7129 = vsel %vm6994, %v7084, %v6791
      %v7131 = vsel %vm6994, %v7087, %v6793
      %v7133 = vsel %vm6994, %v7090, %v6795
      %v7135 = vsel %vm6994, %v7093, %v6797
      %v7137 = vsel %vm6994, %v7096, %v6799
      %v7139 = vsel %vm6994, %v7099, %v6801
      %v7141 = vsel %vm6994, %v7102, %v6803
      %v7143 = vsel %vm6994, %v7105, %v6805
      %v7145 = vsel %vm6994, %v7108, %v6807
      %v7147 = vsel %vm6994, %v7111, %v6809
      %v7149 = vsel %vm6994, %v7114, %v6811
      %v7151 = vsel %vm6994, %v7117, %v6813
      %v7153 = vsel %vm6994, %v7120, %v6815
      %v7155 = vsel %vm6994, %v7123, %v6817
      %v7157 = vsel %vm7027, %v7125, %v6867
      %v7160 = vsel %vm7027, %v7127, %v6869
      %v7163 = vsel %vm7027, %v7129, %v6871
      %v7166 = vsel %vm7027, %v7131, %v6873
      %v7169 = vsel %vm7027, %v7133, %v6875
      %v7172 = vsel %vm7027, %v7135, %v6877
      %v7175 = vsel %vm7027, %v7137, %v6879
      %v7178 = vsel %vm7027, %v7139, %v6881
      %v7181 = vsel %vm7027, %v7141, %v6883
      %v7184 = vsel %vm7027, %v7143, %v6885
      %v7187 = vsel %vm7027, %v7145, %v6887
      %v7190 = vsel %vm7027, %v7147, %v6889
      %v7193 = vsel %vm7027, %v7149, %v6891
      %v7196 = vsel %vm7027, %v7151, %v6893
      %v7199 = vsel %vm7027, %v7153, %v6895
      %v7202 = vsel %vm7027, %v7155, %v6897
      %v7204 = vld [vmem:[%s3] sm:$0xf]
      %v7205 = vld [vmem:[%s3 + $0x4] sm:$0xf]
      %v7206 = vld [vmem:[%s3 + $0x8] sm:$0xf]
      %v7207 = vld [vmem:[%s3 + $0xc] sm:$0xf]
      %v7208 = vld [vmem:[%s3 + $0x10] sm:$0xf]
      %v7209 = vld [vmem:[%s3 + $0x14] sm:$0xf]
      %v7210 = vld [vmem:[%s3 + $0x18] sm:$0xf]
      %v7211 = vld [vmem:[%s3 + $0x1c] sm:$0xf]
      %v7212 = vld [vmem:[%s3 + $0x20] sm:$0xf]
      %v7213 = vld [vmem:[%s3 + $0x24] sm:$0xf]
      %v7214 = vld [vmem:[%s3 + $0x28] sm:$0xf]
      %v7215 = vld [vmem:[%s3 + $0x2c] sm:$0xf]
      %v7216 = vld [vmem:[%s3 + $0x30] sm:$0xf]
      %v7217 = vld [vmem:[%s3 + $0x34] sm:$0xf]
      %v7218 = vld [vmem:[%s3 + $0x38] sm:$0xf]
      %v7219 = vld [vmem:[%s3 + $0x3c] sm:$0xf]
      %v7220 = vld [vmem:[%s3 + $0x40] sm:$0xf]
      %v7221 = vld [vmem:[%s3 + $0x44] sm:$0xf]
      %v7222 = vld [vmem:[%s3 + $0x48] sm:$0xf]
      %v7223 = vld [vmem:[%s3 + $0x4c] sm:$0xf]
      %v7224 = vld [vmem:[%s3 + $0x50] sm:$0xf]
      %v7225 = vld [vmem:[%s3 + $0x54] sm:$0xf]
      %v7226 = vld [vmem:[%s3 + $0x58] sm:$0xf]
      %v7227 = vld [vmem:[%s3 + $0x5c] sm:$0xf]
      %v7228 = vld [vmem:[%s3 + $0x60] sm:$0xf]
      %v7229 = vld [vmem:[%s3 + $0x64] sm:$0xf]
      %v7230 = vld [vmem:[%s3 + $0x68] sm:$0xf]
      %v7231 = vld [vmem:[%s3 + $0x6c] sm:$0xf]
      %v7232 = vld [vmem:[%s3 + $0x70] sm:$0xf]
      %v7233 = vld [vmem:[%s3 + $0x74] sm:$0xf]
      %v7234 = vld [vmem:[%s3 + $0x78] sm:$0xf]
      %v7235 = vld [vmem:[%s3 + $0x7c] sm:$0xf]
      %v7236 = vld [vmem:[%s3 + $0x80] sm:$0xf]
      %v7237 = vld [vmem:[%s3 + $0x84] sm:$0xf]
      %v7238 = vld [vmem:[%s3 + $0x88] sm:$0xf]
      %v7239 = vld [vmem:[%s3 + $0x8c] sm:$0xf]
      %v7240 = vld [vmem:[%s4] sm:$0x1]
      %v7242 = vperm.slane %v7240, 0
      %v7280 = vunpack.c.l.b16 %v7204
      %v7281 = vunpack.c.l.b16 %v7205
      %v7282 = vunpack.c.l.b16 %v7206
      %v7283 = vunpack.c.l.b16 %v7207
      %v7284 = vunpack.c.l.b16 %v7208
      %v7285 = vunpack.c.l.b16 %v7209
      %v7286 = vunpack.c.l.b16 %v7210
      %v7287 = vunpack.c.l.b16 %v7211
      %v7288 = vunpack.c.l.b16 %v7212
      %v7289 = vunpack.c.l.b16 %v7213
      %v7290 = vunpack.c.l.b16 %v7214
      %v7291 = vunpack.c.l.b16 %v7215
      %v7292 = vunpack.c.l.b16 %v7216
      %v7293 = vunpack.c.l.b16 %v7217
      %v7294 = vunpack.c.l.b16 %v7218
      %v7295 = vunpack.c.l.b16 %v7219
      %v7296 = vunpack.c.l.b16 %v7220
      %v7297 = vunpack.c.l.b16 %v7221
      %v7298 = vunpack.c.l.b16 %v7222
      %v7299 = vunpack.c.l.b16 %v7223
      %v7300 = vunpack.c.l.b16 %v7224
      %v7301 = vunpack.c.l.b16 %v7225
      %v7302 = vunpack.c.l.b16 %v7226
      %v7303 = vunpack.c.l.b16 %v7227
      %v7304 = vunpack.c.l.b16 %v7228
      %v7305 = vunpack.c.l.b16 %v7229
      %v7306 = vunpack.c.l.b16 %v7230
      %v7307 = vunpack.c.l.b16 %v7231
      %v7308 = vunpack.c.l.b16 %v7232
      %v7309 = vunpack.c.l.b16 %v7233
      %v7310 = vunpack.c.l.b16 %v7234
      %v7311 = vunpack.c.l.b16 %v7235
      %v7312 = vunpack.c.l.b16 %v7236
      %v7313 = vunpack.c.l.b16 %v7237
      %v7314 = vunpack.c.l.b16 %v7238
      %v7315 = vunpack.c.l.b16 %v7239
      %v7316 = vpack.c.b16 %v7281, %v7280
      %v7317 = vpack.c.b16 %v7283, %v7282
      %v7318 = vpack.c.b16 %v7285, %v7284
      %v7319 = vpack.c.b16 %v7287, %v7286
      %v7320 = vpack.c.b16 %v7289, %v7288
      %v7321 = vpack.c.b16 %v7291, %v7290
      %v7322 = vpack.c.b16 %v7293, %v7292
      %v7323 = vpack.c.b16 %v7295, %v7294
      %v7324 = vpack.c.b16 %v7297, %v7296
      %v7325 = vpack.c.b16 %v7299, %v7298
      %v7326 = vpack.c.b16 %v7301, %v7300
      %v7327 = vpack.c.b16 %v7303, %v7302
      %v7328 = vpack.c.b16 %v7305, %v7304
      %v7329 = vpack.c.b16 %v7307, %v7306
      %v7330 = vpack.c.b16 %v7309, %v7308
      %v7331 = vpack.c.b16 %v7311, %v7310
      %v7332 = vpack.c.b16 %v7313, %v7312
      %v7333 = vpack.c.b16 %v7315, %v7314
      %v7353 = vsel %vm3709, %v6930, 0
      %v7356 = vsel %vm3709, %v6931, 0
      %v7359 = vsel %vm3709, %v6932, 0
      %v7362 = vsel %vm3709, %v6933, 0
      %v7365 = vsel %vm3709, %v6934, 0
      %v7368 = vsel %vm3709, %v6935, 0
      %v7371 = vsel %vm3709, %v6936, 0
      %v7374 = vsel %vm3709, %v6937, 0
      %v7377 = vsel %vm3709, %v6938, 0
      %v7380 = vsel %vm3709, %v6939, 0
      %v7383 = vsel %vm3709, %v6940, 0
      %v7386 = vsel %vm3709, %v6941, 0
      %v7389 = vsel %vm3709, %v6942, 0
      %v7392 = vsel %vm3709, %v6943, 0
      %v7395 = vsel %vm3709, %v6944, 0
      %v7398 = vsel %vm3709, %v6945, 0
      %7400 = vmatpush.bf16.msra.mxu0 %v7323
      %7401 = vmatpush.bf16.msra.mxu0 %v7322
      %7402 = vmatpush.bf16.msra.mxu0 %v7321
      %7403 = vmatpush.bf16.msra.mxu0 %v7320
      %7404 = vmatpush.bf16.msra.mxu0 %v7319
      %7405 = vmatpush.bf16.msra.mxu0 %v7318
      %7406 = vmatpush.bf16.msra.mxu0 %v7317
      %7407 = vmatpush.bf16.msra.mxu0 %v7316
      %7408 = vmatmul.bf16.gmra.mxu0 %v7029
      %v7409 = vpop.f32.mrf.mxu0
      %v7410 = vadd.f32 %v7242, %v7409
      %v7411 = vpop.f32.mrf.mxu0
      %v7412 = vadd.f32 %v7242, %v7411
      %7413 = vmatmul.bf16.gmra.mxu0 %v7032
      %v7414 = vpop.f32.mrf.mxu0
      %v7415 = vadd.f32 %v7242, %v7414
      %v7416 = vpop.f32.mrf.mxu0
      %v7417 = vadd.f32 %v7242, %v7416
      %7418 = vmatmul.bf16.gmra.mxu0 %v7035
      %v7419 = vpop.f32.mrf.mxu0
      %v7420 = vadd.f32 %v7242, %v7419
      %v7421 = vpop.f32.mrf.mxu0
      %v7422 = vadd.f32 %v7242, %v7421
      %7423 = vmatmul.bf16.gmra.mxu0 %v7038
      %v7424 = vpop.f32.mrf.mxu0
      %v7425 = vadd.f32 %v7242, %v7424
      %v7426 = vpop.f32.mrf.mxu0
      %v7427 = vadd.f32 %v7242, %v7426
      %7428 = vmatmul.bf16.gmra.mxu0 %v7041
      %v7429 = vpop.f32.mrf.mxu0
      %v7430 = vadd.f32 %v7242, %v7429
      %v7431 = vpop.f32.mrf.mxu0
      %v7432 = vadd.f32 %v7242, %v7431
      %7433 = vmatmul.bf16.gmra.mxu0 %v7044
      %v7434 = vpop.f32.mrf.mxu0
      %v7435 = vadd.f32 %v7242, %v7434
      %v7436 = vpop.f32.mrf.mxu0
      %v7437 = vadd.f32 %v7242, %v7436
      %7438 = vmatmul.bf16.gmra.mxu0 %v7047
      %v7439 = vpop.f32.mrf.mxu0
      %v7440 = vadd.f32 %v7242, %v7439
      %v7441 = vpop.f32.mrf.mxu0
      %v7442 = vadd.f32 %v7242, %v7441
      %7443 = vmatmul.bf16.gmra.mxu0 %v7050
      %v7444 = vpop.f32.mrf.mxu0
      %v7445 = vadd.f32 %v7242, %v7444
      %v7446 = vpop.f32.mrf.mxu0
      %v7447 = vadd.f32 %v7242, %v7446
      %7448 = vmatmul.bf16.gmra.mxu0 %v7053
      %v7449 = vpop.f32.mrf.mxu0
      %v7450 = vadd.f32 %v7242, %v7449
      %v7451 = vpop.f32.mrf.mxu0
      %v7452 = vadd.f32 %v7242, %v7451
      %7453 = vmatmul.bf16.gmra.mxu0 %v7056
      %v7454 = vpop.f32.mrf.mxu0
      %v7455 = vadd.f32 %v7242, %v7454
      %v7456 = vpop.f32.mrf.mxu0
      %v7457 = vadd.f32 %v7242, %v7456
      %7458 = vmatmul.bf16.gmra.mxu0 %v7059
      %v7459 = vpop.f32.mrf.mxu0
      %v7460 = vadd.f32 %v7242, %v7459
      %v7461 = vpop.f32.mrf.mxu0
      %v7462 = vadd.f32 %v7242, %v7461
      %7463 = vmatmul.bf16.gmra.mxu0 %v7062
      %v7464 = vpop.f32.mrf.mxu0
      %v7465 = vadd.f32 %v7242, %v7464
      %v7466 = vpop.f32.mrf.mxu0
      %v7467 = vadd.f32 %v7242, %v7466
      %7468 = vmatmul.bf16.gmra.mxu0 %v7065
      %v7469 = vpop.f32.mrf.mxu0
      %v7470 = vadd.f32 %v7242, %v7469
      %v7471 = vpop.f32.mrf.mxu0
      %v7472 = vadd.f32 %v7242, %v7471
      %7473 = vmatmul.bf16.gmra.mxu0 %v7068
      %v7474 = vpop.f32.mrf.mxu0
      %v7475 = vadd.f32 %v7242, %v7474
      %v7476 = vpop.f32.mrf.mxu0
      %v7477 = vadd.f32 %v7242, %v7476
      %7478 = vmatmul.bf16.gmra.mxu0 %v7071
      %v7479 = vpop.f32.mrf.mxu0
      %v7480 = vadd.f32 %v7242, %v7479
      %v7481 = vpop.f32.mrf.mxu0
      %v7482 = vadd.f32 %v7242, %v7481
      %7483 = vmatmul.bf16.gmra.mxu0 %v7074
      %v7484 = vpop.f32.mrf.mxu0
      %v7485 = vadd.f32 %v7242, %v7484
      %v7486 = vpop.f32.mrf.mxu0
      %v7487 = vadd.f32 %v7242, %v7486
      %7488 = vdwg.mxu0
      %7489 = vmatpush.bf16.msra.mxu0 %v7331
      %7490 = vmatpush.bf16.msra.mxu0 %v7330
      %7491 = vmatpush.bf16.msra.mxu0 %v7329
      %7492 = vmatpush.bf16.msra.mxu0 %v7328
      %7493 = vmatpush.bf16.msra.mxu0 %v7327
      %7494 = vmatpush.bf16.msra.mxu0 %v7326
      %7495 = vmatpush.bf16.msra.mxu0 %v7325
      %7496 = vmatpush.bf16.msra.mxu0 %v7324
      %7497 = vmatmul.bf16.gmra.mxu0 %v7157
      %v7498 = vpop.f32.mrf.mxu0
      %v7499 = vadd.f32 %v7410, %v7498
      %v7500 = vpop.f32.mrf.mxu0
      %v7501 = vadd.f32 %v7412, %v7500
      %7502 = vmatmul.bf16.gmra.mxu0 %v7160
      %v7503 = vpop.f32.mrf.mxu0
      %v7504 = vadd.f32 %v7415, %v7503
      %v7505 = vpop.f32.mrf.mxu0
      %v7506 = vadd.f32 %v7417, %v7505
      %7507 = vmatmul.bf16.gmra.mxu0 %v7163
      %v7508 = vpop.f32.mrf.mxu0
      %v7509 = vadd.f32 %v7420, %v7508
      %v7510 = vpop.f32.mrf.mxu0
      %v7511 = vadd.f32 %v7422, %v7510
      %7512 = vmatmul.bf16.gmra.mxu0 %v7166
      %v7513 = vpop.f32.mrf.mxu0
      %v7514 = vadd.f32 %v7425, %v7513
      %v7515 = vpop.f32.mrf.mxu0
      %v7516 = vadd.f32 %v7427, %v7515
      %7517 = vmatmul.bf16.gmra.mxu0 %v7169
      %v7518 = vpop.f32.mrf.mxu0
      %v7519 = vadd.f32 %v7430, %v7518
      %v7520 = vpop.f32.mrf.mxu0
      %v7521 = vadd.f32 %v7432, %v7520
      %7522 = vmatmul.bf16.gmra.mxu0 %v7172
      %v7523 = vpop.f32.mrf.mxu0
      %v7524 = vadd.f32 %v7435, %v7523
      %v7525 = vpop.f32.mrf.mxu0
      %v7526 = vadd.f32 %v7437, %v7525
      %7527 = vmatmul.bf16.gmra.mxu0 %v7175
      %v7528 = vpop.f32.mrf.mxu0
      %v7529 = vadd.f32 %v7440, %v7528
      %v7530 = vpop.f32.mrf.mxu0
      %v7531 = vadd.f32 %v7442, %v7530
      %7532 = vmatmul.bf16.gmra.mxu0 %v7178
      %v7533 = vpop.f32.mrf.mxu0
      %v7534 = vadd.f32 %v7445, %v7533
      %v7535 = vpop.f32.mrf.mxu0
      %v7536 = vadd.f32 %v7447, %v7535
      %7537 = vmatmul.bf16.gmra.mxu0 %v7181
      %v7538 = vpop.f32.mrf.mxu0
      %v7539 = vadd.f32 %v7450, %v7538
      %v7540 = vpop.f32.mrf.mxu0
      %v7541 = vadd.f32 %v7452, %v7540
      %7542 = vmatmul.bf16.gmra.mxu0 %v7184
      %v7543 = vpop.f32.mrf.mxu0
      %v7544 = vadd.f32 %v7455, %v7543
      %v7545 = vpop.f32.mrf.mxu0
      %v7546 = vadd.f32 %v7457, %v7545
      %7547 = vmatmul.bf16.gmra.mxu0 %v7187
      %v7548 = vpop.f32.mrf.mxu0
      %v7549 = vadd.f32 %v7460, %v7548
      %v7550 = vpop.f32.mrf.mxu0
      %v7551 = vadd.f32 %v7462, %v7550
      %7552 = vmatmul.bf16.gmra.mxu0 %v7190
      %v7553 = vpop.f32.mrf.mxu0
      %v7554 = vadd.f32 %v7465, %v7553
      %v7555 = vpop.f32.mrf.mxu0
      %v7556 = vadd.f32 %v7467, %v7555
      %7557 = vmatmul.bf16.gmra.mxu0 %v7193
      %v7558 = vpop.f32.mrf.mxu0
      %v7559 = vadd.f32 %v7470, %v7558
      %v7560 = vpop.f32.mrf.mxu0
      %v7561 = vadd.f32 %v7472, %v7560
      %7562 = vmatmul.bf16.gmra.mxu0 %v7196
      %v7563 = vpop.f32.mrf.mxu0
      %v7564 = vadd.f32 %v7475, %v7563
      %v7565 = vpop.f32.mrf.mxu0
      %v7566 = vadd.f32 %v7477, %v7565
      %7567 = vmatmul.bf16.gmra.mxu0 %v7199
      %v7568 = vpop.f32.mrf.mxu0
      %v7569 = vadd.f32 %v7480, %v7568
      %v7570 = vpop.f32.mrf.mxu0
      %v7571 = vadd.f32 %v7482, %v7570
      %7572 = vmatmul.bf16.gmra.mxu0 %v7202
      %v7573 = vpop.f32.mrf.mxu0
      %v7574 = vadd.f32 %v7485, %v7573
      %v7575 = vpop.f32.mrf.mxu0
      %v7576 = vadd.f32 %v7487, %v7575
      %7577 = vdwg.mxu0
      %7578 = vmatpush.bf16.msra.mxu0 0
      %7579 = vmatpush.bf16.msra.mxu0 0
      %7580 = vmatpush.bf16.msra.mxu0 0
      %7581 = vmatpush.bf16.msra.mxu0 0
      %7582 = vmatpush.bf16.msra.mxu0 0
      %7583 = vmatpush.bf16.msra.mxu0 0
      %7584 = vmatpush.bf16.msra.mxu0 %v7333
      %7585 = vmatpush.bf16.msra.mxu0 %v7332
      %7586 = vmatmul.bf16.gmra.mxu0 %v7353
      %v7587 = vpop.f32.mrf.mxu0
      %v7588 = vadd.f32 %v7499, %v7587
      %v7589 = vpop.f32.mrf.mxu0
      %v7590 = vadd.f32 %v7501, %v7589
      %7591 = vmatmul.bf16.gmra.mxu0 %v7356
      %v7592 = vpop.f32.mrf.mxu0
      %v7593 = vadd.f32 %v7504, %v7592
      %v7594 = vpop.f32.mrf.mxu0
      %v7595 = vadd.f32 %v7506, %v7594
      %7596 = vmatmul.bf16.gmra.mxu0 %v7359
      %v7597 = vpop.f32.mrf.mxu0
      %v7598 = vadd.f32 %v7509, %v7597
      %v7599 = vpop.f32.mrf.mxu0
      %v7600 = vadd.f32 %v7511, %v7599
      %7601 = vmatmul.bf16.gmra.mxu0 %v7362
      %v7602 = vpop.f32.mrf.mxu0
      %v7603 = vadd.f32 %v7514, %v7602
      %v7604 = vpop.f32.mrf.mxu0
      %v7605 = vadd.f32 %v7516, %v7604
      %7606 = vmatmul.bf16.gmra.mxu0 %v7365
      %v7607 = vpop.f32.mrf.mxu0
      %v7608 = vadd.f32 %v7519, %v7607
      %v7609 = vpop.f32.mrf.mxu0
      %v7610 = vadd.f32 %v7521, %v7609
      %7611 = vmatmul.bf16.gmra.mxu0 %v7368
      %v7612 = vpop.f32.mrf.mxu0
      %v7613 = vadd.f32 %v7524, %v7612
      %v7614 = vpop.f32.mrf.mxu0
      %v7615 = vadd.f32 %v7526, %v7614
      %7616 = vmatmul.bf16.gmra.mxu0 %v7371
      %v7617 = vpop.f32.mrf.mxu0
      %v7618 = vadd.f32 %v7529, %v7617
      %v7619 = vpop.f32.mrf.mxu0
      %v7620 = vadd.f32 %v7531, %v7619
      %7621 = vmatmul.bf16.gmra.mxu0 %v7374
      %v7622 = vpop.f32.mrf.mxu0
      %v7623 = vadd.f32 %v7534, %v7622
      %v7624 = vpop.f32.mrf.mxu0
      %v7625 = vadd.f32 %v7536, %v7624
      %7626 = vmatmul.bf16.gmra.mxu0 %v7377
      %v7627 = vpop.f32.mrf.mxu0
      %v7628 = vadd.f32 %v7539, %v7627
      %v7629 = vpop.f32.mrf.mxu0
      %v7630 = vadd.f32 %v7541, %v7629
      %7631 = vmatmul.bf16.gmra.mxu0 %v7380
      %v7632 = vpop.f32.mrf.mxu0
      %v7633 = vadd.f32 %v7544, %v7632
      %v7634 = vpop.f32.mrf.mxu0
      %v7635 = vadd.f32 %v7546, %v7634
      %7636 = vmatmul.bf16.gmra.mxu0 %v7383
      %v7637 = vpop.f32.mrf.mxu0
      %v7638 = vadd.f32 %v7549, %v7637
      %v7639 = vpop.f32.mrf.mxu0
      %v7640 = vadd.f32 %v7551, %v7639
      %7641 = vmatmul.bf16.gmra.mxu0 %v7386
      %v7642 = vpop.f32.mrf.mxu0
      %v7643 = vadd.f32 %v7554, %v7642
      %v7644 = vpop.f32.mrf.mxu0
      %v7645 = vadd.f32 %v7556, %v7644
      %7646 = vmatmul.bf16.gmra.mxu0 %v7389
      %v7647 = vpop.f32.mrf.mxu0
      %v7648 = vadd.f32 %v7559, %v7647
      %v7649 = vpop.f32.mrf.mxu0
      %v7650 = vadd.f32 %v7561, %v7649
      %7651 = vmatmul.bf16.gmra.mxu0 %v7392
      %v7652 = vpop.f32.mrf.mxu0
      %v7653 = vadd.f32 %v7564, %v7652
      %v7654 = vpop.f32.mrf.mxu0
      %v7655 = vadd.f32 %v7566, %v7654
      %7656 = vmatmul.bf16.gmra.mxu0 %v7395
      %v7657 = vpop.f32.mrf.mxu0
      %v7658 = vadd.f32 %v7569, %v7657
      %v7659 = vpop.f32.mrf.mxu0
      %v7660 = vadd.f32 %v7571, %v7659
      %7661 = vmatmul.bf16.gmra.mxu0 %v7398
      %v7662 = vpop.f32.mrf.mxu0
      %v7663 = vadd.f32 %v7574, %v7662
      %v7664 = vpop.f32.mrf.mxu0
      %v7665 = vadd.f32 %v7576, %v7664
      %7666 = vdwg.mxu0
      %v7667 = vmax.f32 %v7588, 0.0
      %v7668 = vmax.f32 %v7590, 0.0
      %v7669 = vmax.f32 %v7593, 0.0
      %v7670 = vmax.f32 %v7595, 0.0
      %v7671 = vmax.f32 %v7598, 0.0
      %v7672 = vmax.f32 %v7600, 0.0
      %v7673 = vmax.f32 %v7603, 0.0
      %v7674 = vmax.f32 %v7605, 0.0
      %v7675 = vmax.f32 %v7608, 0.0
      %v7676 = vmax.f32 %v7610, 0.0
      %v7677 = vmax.f32 %v7613, 0.0
      %v7678 = vmax.f32 %v7615, 0.0
      %v7679 = vmax.f32 %v7618, 0.0
      %v7680 = vmax.f32 %v7620, 0.0
      %v7681 = vmax.f32 %v7623, 0.0
      %v7682 = vmax.f32 %v7625, 0.0
      %v7683 = vmax.f32 %v7628, 0.0
      %v7684 = vmax.f32 %v7630, 0.0
      %v7685 = vmax.f32 %v7633, 0.0
      %v7686 = vmax.f32 %v7635, 0.0
      %v7687 = vmax.f32 %v7638, 0.0
      %v7688 = vmax.f32 %v7640, 0.0
      %v7689 = vmax.f32 %v7643, 0.0
      %v7690 = vmax.f32 %v7645, 0.0
      %v7691 = vmax.f32 %v7648, 0.0
      %v7692 = vmax.f32 %v7650, 0.0
      %v7693 = vmax.f32 %v7653, 0.0
      %v7694 = vmax.f32 %v7655, 0.0
      %v7695 = vmax.f32 %v7658, 0.0
      %v7696 = vmax.f32 %v7660, 0.0
      %v7697 = vmax.f32 %v7663, 0.0
      %v7698 = vmax.f32 %v7665, 0.0
      %vm7699 = vcmask 519168
      %7700 = vst.msk [vmem:[#allocation4] sm:$0xf] %vm7699, 0
      %7701 = vst.msk [vmem:[#allocation4 + $0x4] sm:$0xf] %vm7699, 0
      %vm7702 = vcmask 516096
      %7703 = vst.msk [vmem:[#allocation4 + $0x8] sm:$0x1] %vm7702, 0
      %7704 = vst.msk [vmem:[#allocation4 + $0xc] sm:$0xf] %vm7699, 0
      %7705 = vst.msk [vmem:[#allocation4 + $0x10] sm:$0xf] %vm7699, 0
      %7706 = vst.msk [vmem:[#allocation4 + $0x14] sm:$0x1] %vm7702, 0
      %7707 = vst.msk [vmem:[#allocation4 + $0x18] sm:$0xf] %vm7699, 0
      %7708 = vst.msk [vmem:[#allocation4 + $0x1c] sm:$0xf] %vm7699, 0
      %7709 = vst.msk [vmem:[#allocation4 + $0x20] sm:$0x1] %vm7702, 0
      %7710 = vst.msk [vmem:[#allocation4 + $0x24] sm:$0xf] %vm7699, 0
      %7711 = vst.msk [vmem:[#allocation4 + $0x28] sm:$0xf] %vm7699, 0
      %7712 = vst.msk [vmem:[#allocation4 + $0x2c] sm:$0x1] %vm7702, 0
      %7713 = vst.msk [vmem:[#allocation4 + $0x30] sm:$0xf] %vm7699, 0
      %7714 = vst.msk [vmem:[#allocation4 + $0x34] sm:$0xf] %vm7699, 0
      %7715 = vst.msk [vmem:[#allocation4 + $0x38] sm:$0x1] %vm7702, 0
      %7716 = vst.msk [vmem:[#allocation4 + $0x3c] sm:$0xf] %vm7699, 0
      %7717 = vst.msk [vmem:[#allocation4 + $0x40] sm:$0xf] %vm7699, 0
      %7718 = vst.msk [vmem:[#allocation4 + $0x44] sm:$0x1] %vm7702, 0
      %7719 = vst.msk [vmem:[#allocation4 + $0x48] sm:$0xf] %vm7699, 0
      %7720 = vst.msk [vmem:[#allocation4 + $0x4c] sm:$0xf] %vm7699, 0
      %7721 = vst.msk [vmem:[#allocation4 + $0x50] sm:$0x1] %vm7702, 0
      %7722 = vst.msk [vmem:[#allocation4 + $0x54] sm:$0xf] %vm7699, 0
      %7723 = vst.msk [vmem:[#allocation4 + $0x58] sm:$0xf] %vm7699, 0
      %7724 = vst.msk [vmem:[#allocation4 + $0x5c] sm:$0x1] %vm7702, 0
      %7725 = vst.msk [vmem:[#allocation4 + $0x60] sm:$0xf] %vm7699, 0
      %7726 = vst.msk [vmem:[#allocation4 + $0x64] sm:$0xf] %vm7699, 0
      %7727 = vst.msk [vmem:[#allocation4 + $0x68] sm:$0x1] %vm7702, 0
      %7728 = vst.msk [vmem:[#allocation4 + $0x6c] sm:$0xf] %vm7699, 0
      %7729 = vst.msk [vmem:[#allocation4 + $0x70] sm:$0xf] %vm7699, 0
      %7730 = vst.msk [vmem:[#allocation4 + $0x74] sm:$0x1] %vm7702, 0
      %7731 = vst.msk [vmem:[#allocation4 + $0x78] sm:$0xf] %vm7699, 0
      %7732 = vst.msk [vmem:[#allocation4 + $0x7c] sm:$0xf] %vm7699, 0
      %7733 = vst.msk [vmem:[#allocation4 + $0x80] sm:$0x1] %vm7702, 0
      %7734 = vst.msk [vmem:[#allocation4 + $0x84] sm:$0xf] %vm7699, 0
      %7735 = vst.msk [vmem:[#allocation4 + $0x88] sm:$0xf] %vm7699, 0
      %7736 = vst.msk [vmem:[#allocation4 + $0x8c] sm:$0x1] %vm7702, 0
      %7737 = vst.msk [vmem:[#allocation4 + $0x90] sm:$0xf] %vm7699, 0
      %7738 = vst.msk [vmem:[#allocation4 + $0x94] sm:$0xf] %vm7699, 0
      %7739 = vst.msk [vmem:[#allocation4 + $0x98] sm:$0x1] %vm7702, 0
      %7740 = vst.msk [vmem:[#allocation4 + $0x9c] sm:$0xf] %vm7699, 0
      %7741 = vst.msk [vmem:[#allocation4 + $0xa0] sm:$0xf] %vm7699, 0
      %7742 = vst.msk [vmem:[#allocation4 + $0xa4] sm:$0x1] %vm7702, 0
      %7743 = vst.msk [vmem:[#allocation4 + $0xa8] sm:$0xf] %vm7699, 0
      %7744 = vst.msk [vmem:[#allocation4 + $0xac] sm:$0xf] %vm7699, 0
      %7745 = vst.msk [vmem:[#allocation4 + $0xb0] sm:$0x1] %vm7702, 0
      %7746 = vst.msk [vmem:[#allocation4 + $0xb4] sm:$0xf] %vm7699, 0
      %7747 = vst.msk [vmem:[#allocation4 + $0xb8] sm:$0xf] %vm7699, 0
      %7748 = vst.msk [vmem:[#allocation4 + $0xbc] sm:$0x1] %vm7702, 0
      %7749 = vst.msk [vmem:[#allocation4 + $0xc0] sm:$0xf] %vm7699, 0
      %7750 = vst.msk [vmem:[#allocation4 + $0xc4] sm:$0xf] %vm7699, 0
      %7751 = vst.msk [vmem:[#allocation4 + $0xc8] sm:$0x1] %vm7702, 0
      %7752 = vst.msk [vmem:[#allocation4 + $0xcc] sm:$0xf] %vm7699, 0
      %7753 = vst.msk [vmem:[#allocation4 + $0xd0] sm:$0xf] %vm7699, 0
      %7754 = vst.msk [vmem:[#allocation4 + $0xd4] sm:$0x1] %vm7702, 0
      %v7755 = vpack.c.bf16 %v7667, %v7667
      %v7756 = vpack.c.bf16 %v7668, %v7668
      %v7757 = vpack.c.bf16 %v7669, %v7669
      %v7758 = vpack.c.bf16 %v7670, %v7670
      %v7759 = vpack.c.bf16 %v7671, %v7671
      %v7760 = vpack.c.bf16 %v7672, %v7672
      %v7761 = vpack.c.bf16 %v7673, %v7673
      %v7762 = vpack.c.bf16 %v7674, %v7674
      %v7763 = vpack.c.bf16 %v7675, %v7675
      %v7764 = vpack.c.bf16 %v7676, %v7676
      %v7765 = vpack.c.bf16 %v7677, %v7677
      %v7766 = vpack.c.bf16 %v7678, %v7678
      %v7767 = vpack.c.bf16 %v7679, %v7679
      %v7768 = vpack.c.bf16 %v7680, %v7680
      %v7769 = vpack.c.bf16 %v7681, %v7681
      %v7770 = vpack.c.bf16 %v7682, %v7682
      %v7771 = vpack.c.bf16 %v7683, %v7683
      %v7772 = vpack.c.bf16 %v7684, %v7684
      %v7773 = vpack.c.bf16 %v7685, %v7685
      %v7774 = vpack.c.bf16 %v7686, %v7686
      %v7775 = vpack.c.bf16 %v7687, %v7687
      %v7776 = vpack.c.bf16 %v7688, %v7688
      %v7777 = vpack.c.bf16 %v7689, %v7689
      %v7778 = vpack.c.bf16 %v7690, %v7690
      %v7779 = vpack.c.bf16 %v7691, %v7691
      %v7780 = vpack.c.bf16 %v7692, %v7692
      %v7781 = vpack.c.bf16 %v7693, %v7693
      %v7782 = vpack.c.bf16 %v7694, %v7694
      %v7783 = vpack.c.bf16 %v7695, %v7695
      %v7784 = vpack.c.bf16 %v7696, %v7696
      %v7785 = vpack.c.bf16 %v7697, %v7697
      %v7786 = vpack.c.bf16 %v7698, %v7698
      %v7788 = vshrl.u32 %v7755, 16
      %v7790 = vrot.slane %v7788, 7
      %v7791 = vshll.u32 %v7755, 16
      %v7793 = vor.u32 %v7790, %v7791
      %v7794 = vrot.slane %v7790, 4
      %v7796 = vshrl.u32 %v7756, 16
      %v7798 = vrot.slane %v7796, 7
      %v7799 = vshll.u32 %v7756, 16
      %v7801 = vor.u32 %v7798, %v7799
      %v7802 = vsel %vm456, %v7794, %v7801
      %v7803 = vrot.slane %v7798, 4
      %v7805 = vshrl.u32 %v7757, 16
      %v7807 = vrot.slane %v7805, 7
      %v7808 = vshll.u32 %v7757, 16
      %v7810 = vor.u32 %v7807, %v7808
      %v7811 = vrot.slane %v7807, 4
      %v7813 = vshrl.u32 %v7758, 16
      %v7815 = vrot.slane %v7813, 7
      %v7816 = vshll.u32 %v7758, 16
      %v7818 = vor.u32 %v7815, %v7816
      %v7819 = vsel %vm456, %v7811, %v7818
      %v7820 = vrot.slane %v7815, 4
      %v7822 = vshrl.u32 %v7759, 16
      %v7824 = vrot.slane %v7822, 7
      %v7825 = vshll.u32 %v7759, 16
      %v7827 = vor.u32 %v7824, %v7825
      %v7828 = vrot.slane %v7824, 4
      %v7830 = vshrl.u32 %v7760, 16
      %v7832 = vrot.slane %v7830, 7
      %v7833 = vshll.u32 %v7760, 16
      %v7835 = vor.u32 %v7832, %v7833
      %v7836 = vsel %vm456, %v7828, %v7835
      %v7837 = vrot.slane %v7832, 4
      %v7839 = vshrl.u32 %v7761, 16
      %v7841 = vrot.slane %v7839, 7
      %v7842 = vshll.u32 %v7761, 16
      %v7844 = vor.u32 %v7841, %v7842
      %v7845 = vrot.slane %v7841, 4
      %v7847 = vshrl.u32 %v7762, 16
      %v7849 = vrot.slane %v7847, 7
      %v7850 = vshll.u32 %v7762, 16
      %v7852 = vor.u32 %v7849, %v7850
      %v7853 = vsel %vm456, %v7845, %v7852
      %v7854 = vrot.slane %v7849, 4
      %v7856 = vshrl.u32 %v7763, 16
      %v7858 = vrot.slane %v7856, 7
      %v7859 = vshll.u32 %v7763, 16
      %v7861 = vor.u32 %v7858, %v7859
      %v7862 = vrot.slane %v7858, 4
      %v7864 = vshrl.u32 %v7764, 16
      %v7866 = vrot.slane %v7864, 7
      %v7867 = vshll.u32 %v7764, 16
      %v7869 = vor.u32 %v7866, %v7867
      %v7870 = vsel %vm456, %v7862, %v7869
      %v7871 = vrot.slane %v7866, 4
      %v7873 = vshrl.u32 %v7765, 16
      %v7875 = vrot.slane %v7873, 7
      %v7876 = vshll.u32 %v7765, 16
      %v7878 = vor.u32 %v7875, %v7876
      %v7879 = vrot.slane %v7875, 4
      %v7881 = vshrl.u32 %v7766, 16
      %v7883 = vrot.slane %v7881, 7
      %v7884 = vshll.u32 %v7766, 16
      %v7886 = vor.u32 %v7883, %v7884
      %v7887 = vsel %vm456, %v7879, %v7886
      %v7888 = vrot.slane %v7883, 4
      %v7890 = vshrl.u32 %v7767, 16
      %v7892 = vrot.slane %v7890, 7
      %v7893 = vshll.u32 %v7767, 16
      %v7895 = vor.u32 %v7892, %v7893
      %v7896 = vrot.slane %v7892, 4
      %v7898 = vshrl.u32 %v7768, 16
      %v7900 = vrot.slane %v7898, 7
      %v7901 = vshll.u32 %v7768, 16
      %v7903 = vor.u32 %v7900, %v7901
      %v7904 = vsel %vm456, %v7896, %v7903
      %v7905 = vrot.slane %v7900, 4
      %v7907 = vshrl.u32 %v7769, 16
      %v7909 = vrot.slane %v7907, 7
      %v7910 = vshll.u32 %v7769, 16
      %v7912 = vor.u32 %v7909, %v7910
      %v7913 = vrot.slane %v7909, 4
      %v7915 = vshrl.u32 %v7770, 16
      %v7917 = vrot.slane %v7915, 7
      %v7918 = vshll.u32 %v7770, 16
      %v7920 = vor.u32 %v7917, %v7918
      %v7921 = vsel %vm456, %v7913, %v7920
      %v7922 = vrot.slane %v7917, 4
      %v7924 = vshrl.u32 %v7771, 16
      %v7926 = vrot.slane %v7924, 7
      %v7927 = vshll.u32 %v7771, 16
      %v7929 = vor.u32 %v7926, %v7927
      %v7930 = vrot.slane %v7926, 4
      %v7932 = vshrl.u32 %v7772, 16
      %v7934 = vrot.slane %v7932, 7
      %v7935 = vshll.u32 %v7772, 16
      %v7937 = vor.u32 %v7934, %v7935
      %v7938 = vsel %vm456, %v7930, %v7937
      %v7939 = vrot.slane %v7934, 4
      %v7941 = vshrl.u32 %v7773, 16
      %v7943 = vrot.slane %v7941, 7
      %v7944 = vshll.u32 %v7773, 16
      %v7946 = vor.u32 %v7943, %v7944
      %v7947 = vrot.slane %v7943, 4
      %v7949 = vshrl.u32 %v7774, 16
      %v7951 = vrot.slane %v7949, 7
      %v7952 = vshll.u32 %v7774, 16
      %v7954 = vor.u32 %v7951, %v7952
      %v7955 = vsel %vm456, %v7947, %v7954
      %v7956 = vrot.slane %v7951, 4
      %v7958 = vshrl.u32 %v7775, 16
      %v7960 = vrot.slane %v7958, 7
      %v7961 = vshll.u32 %v7775, 16
      %v7963 = vor.u32 %v7960, %v7961
      %v7964 = vrot.slane %v7960, 4
      %v7966 = vshrl.u32 %v7776, 16
      %v7968 = vrot.slane %v7966, 7
      %v7969 = vshll.u32 %v7776, 16
      %v7971 = vor.u32 %v7968, %v7969
      %v7972 = vsel %vm456, %v7964, %v7971
      %v7973 = vrot.slane %v7968, 4
      %v7975 = vshrl.u32 %v7777, 16
      %v7977 = vrot.slane %v7975, 7
      %v7978 = vshll.u32 %v7777, 16
      %v7980 = vor.u32 %v7977, %v7978
      %v7981 = vrot.slane %v7977, 4
      %v7983 = vshrl.u32 %v7778, 16
      %v7985 = vrot.slane %v7983, 7
      %v7986 = vshll.u32 %v7778, 16
      %v7988 = vor.u32 %v7985, %v7986
      %v7989 = vsel %vm456, %v7981, %v7988
      %v7990 = vrot.slane %v7985, 4
      %v7992 = vshrl.u32 %v7779, 16
      %v7994 = vrot.slane %v7992, 7
      %v7995 = vshll.u32 %v7779, 16
      %v7997 = vor.u32 %v7994, %v7995
      %v7998 = vrot.slane %v7994, 4
      %v8000 = vshrl.u32 %v7780, 16
      %v8002 = vrot.slane %v8000, 7
      %v8003 = vshll.u32 %v7780, 16
      %v8005 = vor.u32 %v8002, %v8003
      %v8006 = vsel %vm456, %v7998, %v8005
      %v8007 = vrot.slane %v8002, 4
      %v8009 = vshrl.u32 %v7781, 16
      %v8011 = vrot.slane %v8009, 7
      %v8012 = vshll.u32 %v7781, 16
      %v8014 = vor.u32 %v8011, %v8012
      %v8015 = vrot.slane %v8011, 4
      %v8017 = vshrl.u32 %v7782, 16
      %v8019 = vrot.slane %v8017, 7
      %v8020 = vshll.u32 %v7782, 16
      %v8022 = vor.u32 %v8019, %v8020
      %v8023 = vsel %vm456, %v8015, %v8022
      %v8024 = vrot.slane %v8019, 4
      %v8026 = vshrl.u32 %v7783, 16
      %v8028 = vrot.slane %v8026, 7
      %v8029 = vshll.u32 %v7783, 16
      %v8031 = vor.u32 %v8028, %v8029
      %v8032 = vrot.slane %v8028, 4
      %v8034 = vshrl.u32 %v7784, 16
      %v8036 = vrot.slane %v8034, 7
      %v8037 = vshll.u32 %v7784, 16
      %v8039 = vor.u32 %v8036, %v8037
      %v8040 = vsel %vm456, %v8032, %v8039
      %v8041 = vrot.slane %v8036, 4
      %v8043 = vshrl.u32 %v7785, 16
      %v8045 = vrot.slane %v8043, 7
      %v8046 = vshll.u32 %v7785, 16
      %v8048 = vor.u32 %v8045, %v8046
      %v8049 = vrot.slane %v8045, 4
      %v8051 = vshrl.u32 %v7786, 16
      %v8053 = vrot.slane %v8051, 7
      %v8054 = vshll.u32 %v7786, 16
      %v8056 = vor.u32 %v8053, %v8054
      %v8057 = vsel %vm456, %v8049, %v8056
      %v8058 = vrot.slane %v8053, 4
      %s8107 = scalar_lea.vmem [#allocation4], 12
      %vm8108 = vcmask 519168
      %vm8109 = vmand %vm8108, %vm779
      %v8110 = vld [vmem:[%s8107] sm:$0xf]
      %v8111 = vsel %vm8109, %v7793, %v8110
      %8112 = vst [vmem:[%s8107] sm:$0xf] %v8111
      %8113 = vst.msk [vmem:[%s8107 + $0x4] sm:$0xf] %vm7699, %v7802
      %vm8114 = vcmask 516096
      %vm8115 = vmand %vm8114, %vm454
      %v8116 = vld [vmem:[%s8107 + $0x8] sm:$0x1]
      %v8117 = vsel %vm8115, %v7803, %v8116
      %8118 = vst [vmem:[%s8107 + $0x8] sm:$0x1] %v8117
      %v8119 = vld [vmem:[%s8107 + $0xc] sm:$0xf]
      %v8120 = vsel %vm8109, %v7810, %v8119
      %8121 = vst [vmem:[%s8107 + $0xc] sm:$0xf] %v8120
      %8122 = vst.msk [vmem:[%s8107 + $0x10] sm:$0xf] %vm7699, %v7819
      %v8123 = vld [vmem:[%s8107 + $0x14] sm:$0x1]
      %v8124 = vsel %vm8115, %v7820, %v8123
      %8125 = vst [vmem:[%s8107 + $0x14] sm:$0x1] %v8124
      %v8126 = vld [vmem:[%s8107 + $0x18] sm:$0xf]
      %v8127 = vsel %vm8109, %v7827, %v8126
      %8128 = vst [vmem:[%s8107 + $0x18] sm:$0xf] %v8127
      %8129 = vst.msk [vmem:[%s8107 + $0x1c] sm:$0xf] %vm7699, %v7836
      %v8130 = vld [vmem:[%s8107 + $0x20] sm:$0x1]
      %v8131 = vsel %vm8115, %v7837, %v8130
      %8132 = vst [vmem:[%s8107 + $0x20] sm:$0x1] %v8131
      %v8133 = vld [vmem:[%s8107 + $0x24] sm:$0xf]
      %v8134 = vsel %vm8109, %v7844, %v8133
      %8135 = vst [vmem:[%s8107 + $0x24] sm:$0xf] %v8134
      %8136 = vst.msk [vmem:[%s8107 + $0x28] sm:$0xf] %vm7699, %v7853
      %v8137 = vld [vmem:[%s8107 + $0x2c] sm:$0x1]
      %v8138 = vsel %vm8115, %v7854, %v8137
      %8139 = vst [vmem:[%s8107 + $0x2c] sm:$0x1] %v8138
      %v8140 = vld [vmem:[%s8107 + $0x30] sm:$0xf]
      %v8141 = vsel %vm8109, %v7861, %v8140
      %8142 = vst [vmem:[%s8107 + $0x30] sm:$0xf] %v8141
      %8143 = vst.msk [vmem:[%s8107 + $0x34] sm:$0xf] %vm7699, %v7870
      %v8144 = vld [vmem:[%s8107 + $0x38] sm:$0x1]
      %v8145 = vsel %vm8115, %v7871, %v8144
      %8146 = vst [vmem:[%s8107 + $0x38] sm:$0x1] %v8145
      %v8147 = vld [vmem:[%s8107 + $0x3c] sm:$0xf]
      %v8148 = vsel %vm8109, %v7878, %v8147
      %8149 = vst [vmem:[%s8107 + $0x3c] sm:$0xf] %v8148
      %8150 = vst.msk [vmem:[%s8107 + $0x40] sm:$0xf] %vm7699, %v7887
      %v8151 = vld [vmem:[%s8107 + $0x44] sm:$0x1]
      %v8152 = vsel %vm8115, %v7888, %v8151
      %8153 = vst [vmem:[%s8107 + $0x44] sm:$0x1] %v8152
      %v8154 = vld [vmem:[%s8107 + $0x48] sm:$0xf]
      %v8155 = vsel %vm8109, %v7895, %v8154
      %8156 = vst [vmem:[%s8107 + $0x48] sm:$0xf] %v8155
      %8157 = vst.msk [vmem:[%s8107 + $0x4c] sm:$0xf] %vm7699, %v7904
      %v8158 = vld [vmem:[%s8107 + $0x50] sm:$0x1]
      %v8159 = vsel %vm8115, %v7905, %v8158
      %8160 = vst [vmem:[%s8107 + $0x50] sm:$0x1] %v8159
      %v8161 = vld [vmem:[%s8107 + $0x54] sm:$0xf]
      %v8162 = vsel %vm8109, %v7912, %v8161
      %8163 = vst [vmem:[%s8107 + $0x54] sm:$0xf] %v8162
      %8164 = vst.msk [vmem:[%s8107 + $0x58] sm:$0xf] %vm7699, %v7921
      %v8165 = vld [vmem:[%s8107 + $0x5c] sm:$0x1]
      %v8166 = vsel %vm8115, %v7922, %v8165
      %8167 = vst [vmem:[%s8107 + $0x5c] sm:$0x1] %v8166
      %v8168 = vld [vmem:[%s8107 + $0x60] sm:$0xf]
      %v8169 = vsel %vm8109, %v7929, %v8168
      %8170 = vst [vmem:[%s8107 + $0x60] sm:$0xf] %v8169
      %8171 = vst.msk [vmem:[%s8107 + $0x64] sm:$0xf] %vm7699, %v7938
      %v8172 = vld [vmem:[%s8107 + $0x68] sm:$0x1]
      %v8173 = vsel %vm8115, %v7939, %v8172
      %8174 = vst [vmem:[%s8107 + $0x68] sm:$0x1] %v8173
      %v8175 = vld [vmem:[%s8107 + $0x6c] sm:$0xf]
      %v8176 = vsel %vm8109, %v7946, %v8175
      %8177 = vst [vmem:[%s8107 + $0x6c] sm:$0xf] %v8176
      %8178 = vst.msk [vmem:[%s8107 + $0x70] sm:$0xf] %vm7699, %v7955
      %v8179 = vld [vmem:[%s8107 + $0x74] sm:$0x1]
      %v8180 = vsel %vm8115, %v7956, %v8179
      %8181 = vst [vmem:[%s8107 + $0x74] sm:$0x1] %v8180
      %v8182 = vld [vmem:[%s8107 + $0x78] sm:$0xf]
      %v8183 = vsel %vm8109, %v7963, %v8182
      %8184 = vst [vmem:[%s8107 + $0x78] sm:$0xf] %v8183
      %8185 = vst.msk [vmem:[%s8107 + $0x7c] sm:$0xf] %vm7699, %v7972
      %v8186 = vld [vmem:[%s8107 + $0x80] sm:$0x1]
      %v8187 = vsel %vm8115, %v7973, %v8186
      %8188 = vst [vmem:[%s8107 + $0x80] sm:$0x1] %v8187
      %v8189 = vld [vmem:[%s8107 + $0x84] sm:$0xf]
      %v8190 = vsel %vm8109, %v7980, %v8189
      %8191 = vst [vmem:[%s8107 + $0x84] sm:$0xf] %v8190
      %8192 = vst.msk [vmem:[%s8107 + $0x88] sm:$0xf] %vm7699, %v7989
      %v8193 = vld [vmem:[%s8107 + $0x8c] sm:$0x1]
      %v8194 = vsel %vm8115, %v7990, %v8193
      %8195 = vst [vmem:[%s8107 + $0x8c] sm:$0x1] %v8194
      %v8196 = vld [vmem:[%s8107 + $0x90] sm:$0xf]
      %v8197 = vsel %vm8109, %v7997, %v8196
      %8198 = vst [vmem:[%s8107 + $0x90] sm:$0xf] %v8197
      %8199 = vst.msk [vmem:[%s8107 + $0x94] sm:$0xf] %vm7699, %v8006
      %v8200 = vld [vmem:[%s8107 + $0x98] sm:$0x1]
      %v8201 = vsel %vm8115, %v8007, %v8200
      %8202 = vst [vmem:[%s8107 + $0x98] sm:$0x1] %v8201
      %v8203 = vld [vmem:[%s8107 + $0x9c] sm:$0xf]
      %v8204 = vsel %vm8109, %v8014, %v8203
      %8205 = vst [vmem:[%s8107 + $0x9c] sm:$0xf] %v8204
      %8206 = vst.msk [vmem:[%s8107 + $0xa0] sm:$0xf] %vm7699, %v8023
      %v8207 = vld [vmem:[%s8107 + $0xa4] sm:$0x1]
      %v8208 = vsel %vm8115, %v8024, %v8207
      %8209 = vst [vmem:[%s8107 + $0xa4] sm:$0x1] %v8208
      %v8210 = vld [vmem:[%s8107 + $0xa8] sm:$0xf]
      %v8211 = vsel %vm8109, %v8031, %v8210
      %8212 = vst [vmem:[%s8107 + $0xa8] sm:$0xf] %v8211
      %8213 = vst.msk [vmem:[%s8107 + $0xac] sm:$0xf] %vm7699, %v8040
      %v8214 = vld [vmem:[%s8107 + $0xb0] sm:$0x1]
      %v8215 = vsel %vm8115, %v8041, %v8214
      %8216 = vst [vmem:[%s8107 + $0xb0] sm:$0x1] %v8215
      %v8217 = vld [vmem:[%s8107 + $0xb4] sm:$0xf]
      %v8218 = vsel %vm8109, %v8048, %v8217
      %8219 = vst [vmem:[%s8107 + $0xb4] sm:$0xf] %v8218
      %8220 = vst.msk [vmem:[%s8107 + $0xb8] sm:$0xf] %vm7699, %v8057
      %v8221 = vld [vmem:[%s8107 + $0xbc] sm:$0x1]
      %v8222 = vsel %vm8115, %v8058, %v8221
      %8223 = vst [vmem:[%s8107 + $0xbc] sm:$0x1] %v8222
      %v8224 = vld [vmem:[#allocation4] sm:$0xf]
      %v8225 = vld [vmem:[#allocation4 + $0x4] sm:$0xf]
      %v8226 = vld [vmem:[#allocation4 + $0xc] sm:$0xf]
      %v8227 = vld [vmem:[#allocation4 + $0x10] sm:$0xf]
      %v8228 = vld [vmem:[#allocation4 + $0x18] sm:$0xf]
      %v8229 = vld [vmem:[#allocation4 + $0x1c] sm:$0xf]
      %v8230 = vld [vmem:[#allocation4 + $0x24] sm:$0xf]
      %v8231 = vld [vmem:[#allocation4 + $0x28] sm:$0xf]
      %v8232 = vld [vmem:[#allocation4 + $0x30] sm:$0xf]
      %v8233 = vld [vmem:[#allocation4 + $0x34] sm:$0xf]
      %v8234 = vld [vmem:[#allocation4 + $0x3c] sm:$0xf]
      %v8235 = vld [vmem:[#allocation4 + $0x40] sm:$0xf]
      %v8236 = vld [vmem:[#allocation4 + $0x48] sm:$0xf]
      %v8237 = vld [vmem:[#allocation4 + $0x4c] sm:$0xf]
      %v8238 = vld [vmem:[#allocation4 + $0x54] sm:$0xf]
      %v8239 = vld [vmem:[#allocation4 + $0x58] sm:$0xf]
      %v8240 = vld [vmem:[#allocation4 + $0x60] sm:$0xf]
      %v8241 = vld [vmem:[#allocation4 + $0x64] sm:$0xf]
      %v8242 = vld [vmem:[#allocation4 + $0x6c] sm:$0xf]
      %v8243 = vld [vmem:[#allocation4 + $0x70] sm:$0xf]
      %v8244 = vld [vmem:[#allocation4 + $0x78] sm:$0xf]
      %v8245 = vld [vmem:[#allocation4 + $0x7c] sm:$0xf]
      %v8246 = vld [vmem:[#allocation4 + $0x84] sm:$0xf]
      %v8247 = vld [vmem:[#allocation4 + $0x88] sm:$0xf]
      %v8248 = vld [vmem:[#allocation4 + $0x90] sm:$0xf]
      %v8249 = vld [vmem:[#allocation4 + $0x94] sm:$0xf]
      %v8250 = vld [vmem:[#allocation4 + $0x9c] sm:$0xf]
      %v8251 = vld [vmem:[#allocation4 + $0xa0] sm:$0xf]
      %v8252 = vld [vmem:[#allocation4 + $0xa8] sm:$0xf]
      %v8253 = vld [vmem:[#allocation4 + $0xac] sm:$0xf]
      %v8254 = vld [vmem:[#allocation4 + $0xb4] sm:$0xf]
      %v8255 = vld [vmem:[#allocation4 + $0xb8] sm:$0xf]
      %v8256 = vld [vmem:[#allocation4 + $0x8] sm:$0x1]
      %v8257 = vld [vmem:[#allocation4 + $0x14] sm:$0x1]
      %v8258 = vld [vmem:[#allocation4 + $0x20] sm:$0x1]
      %v8259 = vld [vmem:[#allocation4 + $0x2c] sm:$0x1]
      %v8260 = vld [vmem:[#allocation4 + $0x38] sm:$0x1]
      %v8261 = vld [vmem:[#allocation4 + $0x44] sm:$0x1]
      %v8262 = vld [vmem:[#allocation4 + $0x50] sm:$0x1]
      %v8263 = vld [vmem:[#allocation4 + $0x5c] sm:$0x1]
      %v8264 = vld [vmem:[#allocation4 + $0x68] sm:$0x1]
      %v8265 = vld [vmem:[#allocation4 + $0x74] sm:$0x1]
      %v8266 = vld [vmem:[#allocation4 + $0x80] sm:$0x1]
      %v8267 = vld [vmem:[#allocation4 + $0x8c] sm:$0x1]
      %v8268 = vld [vmem:[#allocation4 + $0x98] sm:$0x1]
      %v8269 = vld [vmem:[#allocation4 + $0xa4] sm:$0x1]
      %v8270 = vld [vmem:[#allocation4 + $0xb0] sm:$0x1]
      %v8271 = vld [vmem:[#allocation4 + $0xbc] sm:$0x1]
      %v8273 = vshrl.u32 %v8224, 16
      %v8275 = vrot.slane %v8273, 4
      %v8276 = vshll.u32 %v8224, 16
      %v8278 = vrot.slane %v8276, 5
      %v8279 = vor.u32 %v8275, %v8278
      %v8280 = vrot.slane %v8279, 4
      %v8282 = vshll.u32 %v8225, 16
      %v8284 = vrot.slane %v8282, 5
      %v8285 = vsel %vm945, %v8280, %v8284
      %v8286 = vshrl.u32 %v8225, 16
      %v8288 = vrot.slane %v8286, 4
      %v8289 = vor.u32 %v8288, %v8284
      %v8290 = vrot.slane %v8289, 4
      %v8292 = vshll.u32 %v8256, 16
      %v8294 = vrot.slane %v8292, 5
      %v8295 = vsel %vm945, %v8290, %v8294
      %v8297 = vshrl.u32 %v8226, 16
      %v8299 = vrot.slane %v8297, 4
      %v8300 = vshll.u32 %v8226, 16
      %v8302 = vrot.slane %v8300, 5
      %v8303 = vor.u32 %v8299, %v8302
      %v8304 = vrot.slane %v8303, 4
      %v8306 = vshll.u32 %v8227, 16
      %v8308 = vrot.slane %v8306, 5
      %v8309 = vsel %vm945, %v8304, %v8308
      %v8310 = vshrl.u32 %v8227, 16
      %v8312 = vrot.slane %v8310, 4
      %v8313 = vor.u32 %v8312, %v8308
      %v8314 = vrot.slane %v8313, 4
      %v8316 = vshll.u32 %v8257, 16
      %v8318 = vrot.slane %v8316, 5
      %v8319 = vsel %vm945, %v8314, %v8318
      %v8321 = vshrl.u32 %v8228, 16
      %v8323 = vrot.slane %v8321, 4
      %v8324 = vshll.u32 %v8228, 16
      %v8326 = vrot.slane %v8324, 5
      %v8327 = vor.u32 %v8323, %v8326
      %v8328 = vrot.slane %v8327, 4
      %v8330 = vshll.u32 %v8229, 16
      %v8332 = vrot.slane %v8330, 5
      %v8333 = vsel %vm945, %v8328, %v8332
      %v8334 = vshrl.u32 %v8229, 16
      %v8336 = vrot.slane %v8334, 4
      %v8337 = vor.u32 %v8336, %v8332
      %v8338 = vrot.slane %v8337, 4
      %v8340 = vshll.u32 %v8258, 16
      %v8342 = vrot.slane %v8340, 5
      %v8343 = vsel %vm945, %v8338, %v8342
      %v8345 = vshrl.u32 %v8230, 16
      %v8347 = vrot.slane %v8345, 4
      %v8348 = vshll.u32 %v8230, 16
      %v8350 = vrot.slane %v8348, 5
      %v8351 = vor.u32 %v8347, %v8350
      %v8352 = vrot.slane %v8351, 4
      %v8354 = vshll.u32 %v8231, 16
      %v8356 = vrot.slane %v8354, 5
      %v8357 = vsel %vm945, %v8352, %v8356
      %v8358 = vshrl.u32 %v8231, 16
      %v8360 = vrot.slane %v8358, 4
      %v8361 = vor.u32 %v8360, %v8356
      %v8362 = vrot.slane %v8361, 4
      %v8364 = vshll.u32 %v8259, 16
      %v8366 = vrot.slane %v8364, 5
      %v8367 = vsel %vm945, %v8362, %v8366
      %v8369 = vshrl.u32 %v8232, 16
      %v8371 = vrot.slane %v8369, 4
      %v8372 = vshll.u32 %v8232, 16
      %v8374 = vrot.slane %v8372, 5
      %v8375 = vor.u32 %v8371, %v8374
      %v8376 = vrot.slane %v8375, 4
      %v8378 = vshll.u32 %v8233, 16
      %v8380 = vrot.slane %v8378, 5
      %v8381 = vsel %vm945, %v8376, %v8380
      %v8382 = vshrl.u32 %v8233, 16
      %v8384 = vrot.slane %v8382, 4
      %v8385 = vor.u32 %v8384, %v8380
      %v8386 = vrot.slane %v8385, 4
      %v8388 = vshll.u32 %v8260, 16
      %v8390 = vrot.slane %v8388, 5
      %v8391 = vsel %vm945, %v8386, %v8390
      %v8393 = vshrl.u32 %v8234, 16
      %v8395 = vrot.slane %v8393, 4
      %v8396 = vshll.u32 %v8234, 16
      %v8398 = vrot.slane %v8396, 5
      %v8399 = vor.u32 %v8395, %v8398
      %v8400 = vrot.slane %v8399, 4
      %v8402 = vshll.u32 %v8235, 16
      %v8404 = vrot.slane %v8402, 5
      %v8405 = vsel %vm945, %v8400, %v8404
      %v8406 = vshrl.u32 %v8235, 16
      %v8408 = vrot.slane %v8406, 4
      %v8409 = vor.u32 %v8408, %v8404
      %v8410 = vrot.slane %v8409, 4
      %v8412 = vshll.u32 %v8261, 16
      %v8414 = vrot.slane %v8412, 5
      %v8415 = vsel %vm945, %v8410, %v8414
      %v8417 = vshrl.u32 %v8236, 16
      %v8419 = vrot.slane %v8417, 4
      %v8420 = vshll.u32 %v8236, 16
      %v8422 = vrot.slane %v8420, 5
      %v8423 = vor.u32 %v8419, %v8422
      %v8424 = vrot.slane %v8423, 4
      %v8426 = vshll.u32 %v8237, 16
      %v8428 = vrot.slane %v8426, 5
      %v8429 = vsel %vm945, %v8424, %v8428
      %v8430 = vshrl.u32 %v8237, 16
      %v8432 = vrot.slane %v8430, 4
      %v8433 = vor.u32 %v8432, %v8428
      %v8434 = vrot.slane %v8433, 4
      %v8436 = vshll.u32 %v8262, 16
      %v8438 = vrot.slane %v8436, 5
      %v8439 = vsel %vm945, %v8434, %v8438
      %v8441 = vshrl.u32 %v8238, 16
      %v8443 = vrot.slane %v8441, 4
      %v8444 = vshll.u32 %v8238, 16
      %v8446 = vrot.slane %v8444, 5
      %v8447 = vor.u32 %v8443, %v8446
      %v8448 = vrot.slane %v8447, 4
      %v8450 = vshll.u32 %v8239, 16
      %v8452 = vrot.slane %v8450, 5
      %v8453 = vsel %vm945, %v8448, %v8452
      %v8454 = vshrl.u32 %v8239, 16
      %v8456 = vrot.slane %v8454, 4
      %v8457 = vor.u32 %v8456, %v8452
      %v8458 = vrot.slane %v8457, 4
      %v8460 = vshll.u32 %v8263, 16
      %v8462 = vrot.slane %v8460, 5
      %v8463 = vsel %vm945, %v8458, %v8462
      %v8465 = vshrl.u32 %v8240, 16
      %v8467 = vrot.slane %v8465, 4
      %v8468 = vshll.u32 %v8240, 16
      %v8470 = vrot.slane %v8468, 5
      %v8471 = vor.u32 %v8467, %v8470
      %v8472 = vrot.slane %v8471, 4
      %v8474 = vshll.u32 %v8241, 16
      %v8476 = vrot.slane %v8474, 5
      %v8477 = vsel %vm945, %v8472, %v8476
      %v8478 = vshrl.u32 %v8241, 16
      %v8480 = vrot.slane %v8478, 4
      %v8481 = vor.u32 %v8480, %v8476
      %v8482 = vrot.slane %v8481, 4
      %v8484 = vshll.u32 %v8264, 16
      %v8486 = vrot.slane %v8484, 5
      %v8487 = vsel %vm945, %v8482, %v8486
      %v8489 = vshrl.u32 %v8242, 16
      %v8491 = vrot.slane %v8489, 4
      %v8492 = vshll.u32 %v8242, 16
      %v8494 = vrot.slane %v8492, 5
      %v8495 = vor.u32 %v8491, %v8494
      %v8496 = vrot.slane %v8495, 4
      %v8498 = vshll.u32 %v8243, 16
      %v8500 = vrot.slane %v8498, 5
      %v8501 = vsel %vm945, %v8496, %v8500
      %v8502 = vshrl.u32 %v8243, 16
      %v8504 = vrot.slane %v8502, 4
      %v8505 = vor.u32 %v8504, %v8500
      %v8506 = vrot.slane %v8505, 4
      %v8508 = vshll.u32 %v8265, 16
      %v8510 = vrot.slane %v8508, 5
      %v8511 = vsel %vm945, %v8506, %v8510
      %v8513 = vshrl.u32 %v8244, 16
      %v8515 = vrot.slane %v8513, 4
      %v8516 = vshll.u32 %v8244, 16
      %v8518 = vrot.slane %v8516, 5
      %v8519 = vor.u32 %v8515, %v8518
      %v8520 = vrot.slane %v8519, 4
      %v8522 = vshll.u32 %v8245, 16
      %v8524 = vrot.slane %v8522, 5
      %v8525 = vsel %vm945, %v8520, %v8524
      %v8526 = vshrl.u32 %v8245, 16
      %v8528 = vrot.slane %v8526, 4
      %v8529 = vor.u32 %v8528, %v8524
      %v8530 = vrot.slane %v8529, 4
      %v8532 = vshll.u32 %v8266, 16
      %v8534 = vrot.slane %v8532, 5
      %v8535 = vsel %vm945, %v8530, %v8534
      %v8537 = vshrl.u32 %v8246, 16
      %v8539 = vrot.slane %v8537, 4
      %v8540 = vshll.u32 %v8246, 16
      %v8542 = vrot.slane %v8540, 5
      %v8543 = vor.u32 %v8539, %v8542
      %v8544 = vrot.slane %v8543, 4
      %v8546 = vshll.u32 %v8247, 16
      %v8548 = vrot.slane %v8546, 5
      %v8549 = vsel %vm945, %v8544, %v8548
      %v8550 = vshrl.u32 %v8247, 16
      %v8552 = vrot.slane %v8550, 4
      %v8553 = vor.u32 %v8552, %v8548
      %v8554 = vrot.slane %v8553, 4
      %v8556 = vshll.u32 %v8267, 16
      %v8558 = vrot.slane %v8556, 5
      %v8559 = vsel %vm945, %v8554, %v8558
      %v8561 = vshrl.u32 %v8248, 16
      %v8563 = vrot.slane %v8561, 4
      %v8564 = vshll.u32 %v8248, 16
      %v8566 = vrot.slane %v8564, 5
      %v8567 = vor.u32 %v8563, %v8566
      %v8568 = vrot.slane %v8567, 4
      %v8570 = vshll.u32 %v8249, 16
      %v8572 = vrot.slane %v8570, 5
      %v8573 = vsel %vm945, %v8568, %v8572
      %v8574 = vshrl.u32 %v8249, 16
      %v8576 = vrot.slane %v8574, 4
      %v8577 = vor.u32 %v8576, %v8572
      %v8578 = vrot.slane %v8577, 4
      %v8580 = vshll.u32 %v8268, 16
      %v8582 = vrot.slane %v8580, 5
      %v8583 = vsel %vm945, %v8578, %v8582
      %v8585 = vshrl.u32 %v8250, 16
      %v8587 = vrot.slane %v8585, 4
      %v8588 = vshll.u32 %v8250, 16
      %v8590 = vrot.slane %v8588, 5
      %v8591 = vor.u32 %v8587, %v8590
      %v8592 = vrot.slane %v8591, 4
      %v8594 = vshll.u32 %v8251, 16
      %v8596 = vrot.slane %v8594, 5
      %v8597 = vsel %vm945, %v8592, %v8596
      %v8598 = vshrl.u32 %v8251, 16
      %v8600 = vrot.slane %v8598, 4
      %v8601 = vor.u32 %v8600, %v8596
      %v8602 = vrot.slane %v8601, 4
      %v8604 = vshll.u32 %v8269, 16
      %v8606 = vrot.slane %v8604, 5
      %v8607 = vsel %vm945, %v8602, %v8606
      %v8609 = vshrl.u32 %v8252, 16
      %v8611 = vrot.slane %v8609, 4
      %v8612 = vshll.u32 %v8252, 16
      %v8614 = vrot.slane %v8612, 5
      %v8615 = vor.u32 %v8611, %v8614
      %v8616 = vrot.slane %v8615, 4
      %v8618 = vshll.u32 %v8253, 16
      %v8620 = vrot.slane %v8618, 5
      %v8621 = vsel %vm945, %v8616, %v8620
      %v8622 = vshrl.u32 %v8253, 16
      %v8624 = vrot.slane %v8622, 4
      %v8625 = vor.u32 %v8624, %v8620
      %v8626 = vrot.slane %v8625, 4
      %v8628 = vshll.u32 %v8270, 16
      %v8630 = vrot.slane %v8628, 5
      %v8631 = vsel %vm945, %v8626, %v8630
      %v8633 = vshrl.u32 %v8254, 16
      %v8635 = vrot.slane %v8633, 4
      %v8636 = vshll.u32 %v8254, 16
      %v8638 = vrot.slane %v8636, 5
      %v8639 = vor.u32 %v8635, %v8638
      %v8640 = vrot.slane %v8639, 4
      %v8642 = vshll.u32 %v8255, 16
      %v8644 = vrot.slane %v8642, 5
      %v8645 = vsel %vm945, %v8640, %v8644
      %v8646 = vshrl.u32 %v8255, 16
      %v8648 = vrot.slane %v8646, 4
      %v8649 = vor.u32 %v8648, %v8644
      %v8650 = vrot.slane %v8649, 4
      %v8652 = vshll.u32 %v8271, 16
      %v8654 = vrot.slane %v8652, 5
      %v8655 = vsel %vm945, %v8650, %v8654
      %v8656 = vld [vmem:[#allocation4] sm:$0xe]
      %v8657 = vld [vmem:[#allocation4 + $0xc] sm:$0xe]
      %v8658 = vld [vmem:[#allocation4 + $0x18] sm:$0xe]
      %v8659 = vld [vmem:[#allocation4 + $0x24] sm:$0xe]
      %v8660 = vld [vmem:[#allocation4 + $0x30] sm:$0xe]
      %v8661 = vld [vmem:[#allocation4 + $0x3c] sm:$0xe]
      %v8662 = vld [vmem:[#allocation4 + $0x48] sm:$0xe]
      %v8663 = vld [vmem:[#allocation4 + $0x54] sm:$0xe]
      %v8664 = vld [vmem:[#allocation4 + $0x60] sm:$0xe]
      %v8665 = vld [vmem:[#allocation4 + $0x6c] sm:$0xe]
      %v8666 = vld [vmem:[#allocation4 + $0x78] sm:$0xe]
      %v8667 = vld [vmem:[#allocation4 + $0x84] sm:$0xe]
      %v8668 = vld [vmem:[#allocation4 + $0x90] sm:$0xe]
      %v8669 = vld [vmem:[#allocation4 + $0x9c] sm:$0xe]
      %v8670 = vld [vmem:[#allocation4 + $0xa8] sm:$0xe]
      %v8671 = vld [vmem:[#allocation4 + $0xb4] sm:$0xe]
      %v8720 = vrot.slane %v8656, 5
      %v8721 = vrot.slane %v8720, 4
      %v8722 = vrot.slane %v8225, 5
      %v8723 = vsel %vm1396, %v8721, %v8722
      %v8724 = vrot.slane %v8722, 4
      %v8725 = vrot.slane %v8256, 5
      %v8726 = vsel %vm1396, %v8724, %v8725
      %v8727 = vrot.slane %v8657, 5
      %v8728 = vrot.slane %v8727, 4
      %v8729 = vrot.slane %v8227, 5
      %v8730 = vsel %vm1396, %v8728, %v8729
      %v8731 = vrot.slane %v8729, 4
      %v8732 = vrot.slane %v8257, 5
      %v8733 = vsel %vm1396, %v8731, %v8732
      %v8734 = vrot.slane %v8658, 5
      %v8735 = vrot.slane %v8734, 4
      %v8736 = vrot.slane %v8229, 5
      %v8737 = vsel %vm1396, %v8735, %v8736
      %v8738 = vrot.slane %v8736, 4
      %v8739 = vrot.slane %v8258, 5
      %v8740 = vsel %vm1396, %v8738, %v8739
      %v8741 = vrot.slane %v8659, 5
      %v8742 = vrot.slane %v8741, 4
      %v8743 = vrot.slane %v8231, 5
      %v8744 = vsel %vm1396, %v8742, %v8743
      %v8745 = vrot.slane %v8743, 4
      %v8746 = vrot.slane %v8259, 5
      %v8747 = vsel %vm1396, %v8745, %v8746
      %v8748 = vrot.slane %v8660, 5
      %v8749 = vrot.slane %v8748, 4
      %v8750 = vrot.slane %v8233, 5
      %v8751 = vsel %vm1396, %v8749, %v8750
      %v8752 = vrot.slane %v8750, 4
      %v8753 = vrot.slane %v8260, 5
      %v8754 = vsel %vm1396, %v8752, %v8753
      %v8755 = vrot.slane %v8661, 5
      %v8756 = vrot.slane %v8755, 4
      %v8757 = vrot.slane %v8235, 5
      %v8758 = vsel %vm1396, %v8756, %v8757
      %v8759 = vrot.slane %v8757, 4
      %v8760 = vrot.slane %v8261, 5
      %v8761 = vsel %vm1396, %v8759, %v8760
      %v8762 = vrot.slane %v8662, 5
      %v8763 = vrot.slane %v8762, 4
      %v8764 = vrot.slane %v8237, 5
      %v8765 = vsel %vm1396, %v8763, %v8764
      %v8766 = vrot.slane %v8764, 4
      %v8767 = vrot.slane %v8262, 5
      %v8768 = vsel %vm1396, %v8766, %v8767
      %v8769 = vrot.slane %v8663, 5
      %v8770 = vrot.slane %v8769, 4
      %v8771 = vrot.slane %v8239, 5
      %v8772 = vsel %vm1396, %v8770, %v8771
      %v8773 = vrot.slane %v8771, 4
      %v8774 = vrot.slane %v8263, 5
      %v8775 = vsel %vm1396, %v8773, %v8774
      %v8776 = vrot.slane %v8664, 5
      %v8777 = vrot.slane %v8776, 4
      %v8778 = vrot.slane %v8241, 5
      %v8779 = vsel %vm1396, %v8777, %v8778
      %v8780 = vrot.slane %v8778, 4
      %v8781 = vrot.slane %v8264, 5
      %v8782 = vsel %vm1396, %v8780, %v8781
      %v8783 = vrot.slane %v8665, 5
      %v8784 = vrot.slane %v8783, 4
      %v8785 = vrot.slane %v8243, 5
      %v8786 = vsel %vm1396, %v8784, %v8785
      %v8787 = vrot.slane %v8785, 4
      %v8788 = vrot.slane %v8265, 5
      %v8789 = vsel %vm1396, %v8787, %v8788
      %v8790 = vrot.slane %v8666, 5
      %v8791 = vrot.slane %v8790, 4
      %v8792 = vrot.slane %v8245, 5
      %v8793 = vsel %vm1396, %v8791, %v8792
      %v8794 = vrot.slane %v8792, 4
      %v8795 = vrot.slane %v8266, 5
      %v8796 = vsel %vm1396, %v8794, %v8795
      %v8797 = vrot.slane %v8667, 5
      %v8798 = vrot.slane %v8797, 4
      %v8799 = vrot.slane %v8247, 5
      %v8800 = vsel %vm1396, %v8798, %v8799
      %v8801 = vrot.slane %v8799, 4
      %v8802 = vrot.slane %v8267, 5
      %v8803 = vsel %vm1396, %v8801, %v8802
      %v8804 = vrot.slane %v8668, 5
      %v8805 = vrot.slane %v8804, 4
      %v8806 = vrot.slane %v8249, 5
      %v8807 = vsel %vm1396, %v8805, %v8806
      %v8808 = vrot.slane %v8806, 4
      %v8809 = vrot.slane %v8268, 5
      %v8810 = vsel %vm1396, %v8808, %v8809
      %v8811 = vrot.slane %v8669, 5
      %v8812 = vrot.slane %v8811, 4
      %v8813 = vrot.slane %v8251, 5
      %v8814 = vsel %vm1396, %v8812, %v8813
      %v8815 = vrot.slane %v8813, 4
      %v8816 = vrot.slane %v8269, 5
      %v8817 = vsel %vm1396, %v8815, %v8816
      %v8818 = vrot.slane %v8670, 5
      %v8819 = vrot.slane %v8818, 4
      %v8820 = vrot.slane %v8253, 5
      %v8821 = vsel %vm1396, %v8819, %v8820
      %v8822 = vrot.slane %v8820, 4
      %v8823 = vrot.slane %v8270, 5
      %v8824 = vsel %vm1396, %v8822, %v8823
      %v8825 = vrot.slane %v8671, 5
      %v8826 = vrot.slane %v8825, 4
      %v8827 = vrot.slane %v8255, 5
      %v8828 = vsel %vm1396, %v8826, %v8827
      %v8829 = vrot.slane %v8827, 4
      %v8830 = vrot.slane %v8271, 5
      %v8831 = vsel %vm1396, %v8829, %v8830
      %v8832 = vld [vmem:[%s8107] sm:$0xf]
      %v8833 = vld [vmem:[%s8107 + $0x4] sm:$0xf]
      %v8834 = vld [vmem:[%s8107 + $0xc] sm:$0xf]
      %v8835 = vld [vmem:[%s8107 + $0x10] sm:$0xf]
      %v8836 = vld [vmem:[%s8107 + $0x18] sm:$0xf]
      %v8837 = vld [vmem:[%s8107 + $0x1c] sm:$0xf]
      %v8838 = vld [vmem:[%s8107 + $0x24] sm:$0xf]
      %v8839 = vld [vmem:[%s8107 + $0x28] sm:$0xf]
      %v8840 = vld [vmem:[%s8107 + $0x30] sm:$0xf]
      %v8841 = vld [vmem:[%s8107 + $0x34] sm:$0xf]
      %v8842 = vld [vmem:[%s8107 + $0x3c] sm:$0xf]
      %v8843 = vld [vmem:[%s8107 + $0x40] sm:$0xf]
      %v8844 = vld [vmem:[%s8107 + $0x48] sm:$0xf]
      %v8845 = vld [vmem:[%s8107 + $0x4c] sm:$0xf]
      %v8846 = vld [vmem:[%s8107 + $0x54] sm:$0xf]
      %v8847 = vld [vmem:[%s8107 + $0x58] sm:$0xf]
      %v8848 = vld [vmem:[%s8107 + $0x60] sm:$0xf]
      %v8849 = vld [vmem:[%s8107 + $0x64] sm:$0xf]
      %v8850 = vld [vmem:[%s8107 + $0x6c] sm:$0xf]
      %v8851 = vld [vmem:[%s8107 + $0x70] sm:$0xf]
      %v8852 = vld [vmem:[%s8107 + $0x78] sm:$0xf]
      %v8853 = vld [vmem:[%s8107 + $0x7c] sm:$0xf]
      %v8854 = vld [vmem:[%s8107 + $0x84] sm:$0xf]
      %v8855 = vld [vmem:[%s8107 + $0x88] sm:$0xf]
      %v8856 = vld [vmem:[%s8107 + $0x90] sm:$0xf]
      %v8857 = vld [vmem:[%s8107 + $0x94] sm:$0xf]
      %v8858 = vld [vmem:[%s8107 + $0x9c] sm:$0xf]
      %v8859 = vld [vmem:[%s8107 + $0xa0] sm:$0xf]
      %v8860 = vld [vmem:[%s8107 + $0xa8] sm:$0xf]
      %v8861 = vld [vmem:[%s8107 + $0xac] sm:$0xf]
      %v8862 = vld [vmem:[%s8107 + $0xb4] sm:$0xf]
      %v8863 = vld [vmem:[%s8107 + $0xb8] sm:$0xf]
      %v8864 = vld [vmem:[%s8107 + $0x8] sm:$0x1]
      %v8865 = vld [vmem:[%s8107 + $0x14] sm:$0x1]
      %v8866 = vld [vmem:[%s8107 + $0x20] sm:$0x1]
      %v8867 = vld [vmem:[%s8107 + $0x2c] sm:$0x1]
      %v8868 = vld [vmem:[%s8107 + $0x38] sm:$0x1]
      %v8869 = vld [vmem:[%s8107 + $0x44] sm:$0x1]
      %v8870 = vld [vmem:[%s8107 + $0x50] sm:$0x1]
      %v8871 = vld [vmem:[%s8107 + $0x5c] sm:$0x1]
      %v8872 = vld [vmem:[%s8107 + $0x68] sm:$0x1]
      %v8873 = vld [vmem:[%s8107 + $0x74] sm:$0x1]
      %v8874 = vld [vmem:[%s8107 + $0x80] sm:$0x1]
      %v8875 = vld [vmem:[%s8107 + $0x8c] sm:$0x1]
      %v8876 = vld [vmem:[%s8107 + $0x98] sm:$0x1]
      %v8877 = vld [vmem:[%s8107 + $0xa4] sm:$0x1]
      %v8878 = vld [vmem:[%s8107 + $0xb0] sm:$0x1]
      %v8879 = vld [vmem:[%s8107 + $0xbc] sm:$0x1]
      %v8881 = vshrl.u32 %v8832, 16
      %v8883 = vrot.slane %v8881, 4
      %v8884 = vshll.u32 %v8832, 16
      %v8886 = vrot.slane %v8884, 5
      %v8887 = vor.u32 %v8883, %v8886
      %v8888 = vrot.slane %v8887, 4
      %v8890 = vshll.u32 %v8833, 16
      %v8892 = vrot.slane %v8890, 5
      %v8893 = vsel %vm945, %v8888, %v8892
      %v8894 = vshrl.u32 %v8833, 16
      %v8896 = vrot.slane %v8894, 4
      %v8897 = vor.u32 %v8896, %v8892
      %v8898 = vrot.slane %v8897, 4
      %v8900 = vshll.u32 %v8864, 16
      %v8902 = vrot.slane %v8900, 5
      %v8903 = vsel %vm945, %v8898, %v8902
      %v8905 = vshrl.u32 %v8834, 16
      %v8907 = vrot.slane %v8905, 4
      %v8908 = vshll.u32 %v8834, 16
      %v8910 = vrot.slane %v8908, 5
      %v8911 = vor.u32 %v8907, %v8910
      %v8912 = vrot.slane %v8911, 4
      %v8914 = vshll.u32 %v8835, 16
      %v8916 = vrot.slane %v8914, 5
      %v8917 = vsel %vm945, %v8912, %v8916
      %v8918 = vshrl.u32 %v8835, 16
      %v8920 = vrot.slane %v8918, 4
      %v8921 = vor.u32 %v8920, %v8916
      %v8922 = vrot.slane %v8921, 4
      %v8924 = vshll.u32 %v8865, 16
      %v8926 = vrot.slane %v8924, 5
      %v8927 = vsel %vm945, %v8922, %v8926
      %v8929 = vshrl.u32 %v8836, 16
      %v8931 = vrot.slane %v8929, 4
      %v8932 = vshll.u32 %v8836, 16
      %v8934 = vrot.slane %v8932, 5
      %v8935 = vor.u32 %v8931, %v8934
      %v8936 = vrot.slane %v8935, 4
      %v8938 = vshll.u32 %v8837, 16
      %v8940 = vrot.slane %v8938, 5
      %v8941 = vsel %vm945, %v8936, %v8940
      %v8942 = vshrl.u32 %v8837, 16
      %v8944 = vrot.slane %v8942, 4
      %v8945 = vor.u32 %v8944, %v8940
      %v8946 = vrot.slane %v8945, 4
      %v8948 = vshll.u32 %v8866, 16
      %v8950 = vrot.slane %v8948, 5
      %v8951 = vsel %vm945, %v8946, %v8950
      %v8953 = vshrl.u32 %v8838, 16
      %v8955 = vrot.slane %v8953, 4
      %v8956 = vshll.u32 %v8838, 16
      %v8958 = vrot.slane %v8956, 5
      %v8959 = vor.u32 %v8955, %v8958
      %v8960 = vrot.slane %v8959, 4
      %v8962 = vshll.u32 %v8839, 16
      %v8964 = vrot.slane %v8962, 5
      %v8965 = vsel %vm945, %v8960, %v8964
      %v8966 = vshrl.u32 %v8839, 16
      %v8968 = vrot.slane %v8966, 4
      %v8969 = vor.u32 %v8968, %v8964
      %v8970 = vrot.slane %v8969, 4
      %v8972 = vshll.u32 %v8867, 16
      %v8974 = vrot.slane %v8972, 5
      %v8975 = vsel %vm945, %v8970, %v8974
      %v8977 = vshrl.u32 %v8840, 16
      %v8979 = vrot.slane %v8977, 4
      %v8980 = vshll.u32 %v8840, 16
      %v8982 = vrot.slane %v8980, 5
      %v8983 = vor.u32 %v8979, %v8982
      %v8984 = vrot.slane %v8983, 4
      %v8986 = vshll.u32 %v8841, 16
      %v8988 = vrot.slane %v8986, 5
      %v8989 = vsel %vm945, %v8984, %v8988
      %v8990 = vshrl.u32 %v8841, 16
      %v8992 = vrot.slane %v8990, 4
      %v8993 = vor.u32 %v8992, %v8988
      %v8994 = vrot.slane %v8993, 4
      %v8996 = vshll.u32 %v8868, 16
      %v8998 = vrot.slane %v8996, 5
      %v8999 = vsel %vm945, %v8994, %v8998
      %v9001 = vshrl.u32 %v8842, 16
      %v9003 = vrot.slane %v9001, 4
      %v9004 = vshll.u32 %v8842, 16
      %v9006 = vrot.slane %v9004, 5
      %v9007 = vor.u32 %v9003, %v9006
      %v9008 = vrot.slane %v9007, 4
      %v9010 = vshll.u32 %v8843, 16
      %v9012 = vrot.slane %v9010, 5
      %v9013 = vsel %vm945, %v9008, %v9012
      %v9014 = vshrl.u32 %v8843, 16
      %v9016 = vrot.slane %v9014, 4
      %v9017 = vor.u32 %v9016, %v9012
      %v9018 = vrot.slane %v9017, 4
      %v9020 = vshll.u32 %v8869, 16
      %v9022 = vrot.slane %v9020, 5
      %v9023 = vsel %vm945, %v9018, %v9022
      %v9025 = vshrl.u32 %v8844, 16
      %v9027 = vrot.slane %v9025, 4
      %v9028 = vshll.u32 %v8844, 16
      %v9030 = vrot.slane %v9028, 5
      %v9031 = vor.u32 %v9027, %v9030
      %v9032 = vrot.slane %v9031, 4
      %v9034 = vshll.u32 %v8845, 16
      %v9036 = vrot.slane %v9034, 5
      %v9037 = vsel %vm945, %v9032, %v9036
      %v9038 = vshrl.u32 %v8845, 16
      %v9040 = vrot.slane %v9038, 4
      %v9041 = vor.u32 %v9040, %v9036
      %v9042 = vrot.slane %v9041, 4
      %v9044 = vshll.u32 %v8870, 16
      %v9046 = vrot.slane %v9044, 5
      %v9047 = vsel %vm945, %v9042, %v9046
      %v9049 = vshrl.u32 %v8846, 16
      %v9051 = vrot.slane %v9049, 4
      %v9052 = vshll.u32 %v8846, 16
      %v9054 = vrot.slane %v9052, 5
      %v9055 = vor.u32 %v9051, %v9054
      %v9056 = vrot.slane %v9055, 4
      %v9058 = vshll.u32 %v8847, 16
      %v9060 = vrot.slane %v9058, 5
      %v9061 = vsel %vm945, %v9056, %v9060
      %v9062 = vshrl.u32 %v8847, 16
      %v9064 = vrot.slane %v9062, 4
      %v9065 = vor.u32 %v9064, %v9060
      %v9066 = vrot.slane %v9065, 4
      %v9068 = vshll.u32 %v8871, 16
      %v9070 = vrot.slane %v9068, 5
      %v9071 = vsel %vm945, %v9066, %v9070
      %v9073 = vshrl.u32 %v8848, 16
      %v9075 = vrot.slane %v9073, 4
      %v9076 = vshll.u32 %v8848, 16
      %v9078 = vrot.slane %v9076, 5
      %v9079 = vor.u32 %v9075, %v9078
      %v9080 = vrot.slane %v9079, 4
      %v9082 = vshll.u32 %v8849, 16
      %v9084 = vrot.slane %v9082, 5
      %v9085 = vsel %vm945, %v9080, %v9084
      %v9086 = vshrl.u32 %v8849, 16
      %v9088 = vrot.slane %v9086, 4
      %v9089 = vor.u32 %v9088, %v9084
      %v9090 = vrot.slane %v9089, 4
      %v9092 = vshll.u32 %v8872, 16
      %v9094 = vrot.slane %v9092, 5
      %v9095 = vsel %vm945, %v9090, %v9094
      %v9097 = vshrl.u32 %v8850, 16
      %v9099 = vrot.slane %v9097, 4
      %v9100 = vshll.u32 %v8850, 16
      %v9102 = vrot.slane %v9100, 5
      %v9103 = vor.u32 %v9099, %v9102
      %v9104 = vrot.slane %v9103, 4
      %v9106 = vshll.u32 %v8851, 16
      %v9108 = vrot.slane %v9106, 5
      %v9109 = vsel %vm945, %v9104, %v9108
      %v9110 = vshrl.u32 %v8851, 16
      %v9112 = vrot.slane %v9110, 4
      %v9113 = vor.u32 %v9112, %v9108
      %v9114 = vrot.slane %v9113, 4
      %v9116 = vshll.u32 %v8873, 16
      %v9118 = vrot.slane %v9116, 5
      %v9119 = vsel %vm945, %v9114, %v9118
      %v9121 = vshrl.u32 %v8852, 16
      %v9123 = vrot.slane %v9121, 4
      %v9124 = vshll.u32 %v8852, 16
      %v9126 = vrot.slane %v9124, 5
      %v9127 = vor.u32 %v9123, %v9126
      %v9128 = vrot.slane %v9127, 4
      %v9130 = vshll.u32 %v8853, 16
      %v9132 = vrot.slane %v9130, 5
      %v9133 = vsel %vm945, %v9128, %v9132
      %v9134 = vshrl.u32 %v8853, 16
      %v9136 = vrot.slane %v9134, 4
      %v9137 = vor.u32 %v9136, %v9132
      %v9138 = vrot.slane %v9137, 4
      %v9140 = vshll.u32 %v8874, 16
      %v9142 = vrot.slane %v9140, 5
      %v9143 = vsel %vm945, %v9138, %v9142
      %v9145 = vshrl.u32 %v8854, 16
      %v9147 = vrot.slane %v9145, 4
      %v9148 = vshll.u32 %v8854, 16
      %v9150 = vrot.slane %v9148, 5
      %v9151 = vor.u32 %v9147, %v9150
      %v9152 = vrot.slane %v9151, 4
      %v9154 = vshll.u32 %v8855, 16
      %v9156 = vrot.slane %v9154, 5
      %v9157 = vsel %vm945, %v9152, %v9156
      %v9158 = vshrl.u32 %v8855, 16
      %v9160 = vrot.slane %v9158, 4
      %v9161 = vor.u32 %v9160, %v9156
      %v9162 = vrot.slane %v9161, 4
      %v9164 = vshll.u32 %v8875, 16
      %v9166 = vrot.slane %v9164, 5
      %v9167 = vsel %vm945, %v9162, %v9166
      %v9169 = vshrl.u32 %v8856, 16
      %v9171 = vrot.slane %v9169, 4
      %v9172 = vshll.u32 %v8856, 16
      %v9174 = vrot.slane %v9172, 5
      %v9175 = vor.u32 %v9171, %v9174
      %v9176 = vrot.slane %v9175, 4
      %v9178 = vshll.u32 %v8857, 16
      %v9180 = vrot.slane %v9178, 5
      %v9181 = vsel %vm945, %v9176, %v9180
      %v9182 = vshrl.u32 %v8857, 16
      %v9184 = vrot.slane %v9182, 4
      %v9185 = vor.u32 %v9184, %v9180
      %v9186 = vrot.slane %v9185, 4
      %v9188 = vshll.u32 %v8876, 16
      %v9190 = vrot.slane %v9188, 5
      %v9191 = vsel %vm945, %v9186, %v9190
      %v9193 = vshrl.u32 %v8858, 16
      %v9195 = vrot.slane %v9193, 4
      %v9196 = vshll.u32 %v8858, 16
      %v9198 = vrot.slane %v9196, 5
      %v9199 = vor.u32 %v9195, %v9198
      %v9200 = vrot.slane %v9199, 4
      %v9202 = vshll.u32 %v8859, 16
      %v9204 = vrot.slane %v9202, 5
      %v9205 = vsel %vm945, %v9200, %v9204
      %v9206 = vshrl.u32 %v8859, 16
      %v9208 = vrot.slane %v9206, 4
      %v9209 = vor.u32 %v9208, %v9204
      %v9210 = vrot.slane %v9209, 4
      %v9212 = vshll.u32 %v8877, 16
      %v9214 = vrot.slane %v9212, 5
      %v9215 = vsel %vm945, %v9210, %v9214
      %v9217 = vshrl.u32 %v8860, 16
      %v9219 = vrot.slane %v9217, 4
      %v9220 = vshll.u32 %v8860, 16
      %v9222 = vrot.slane %v9220, 5
      %v9223 = vor.u32 %v9219, %v9222
      %v9224 = vrot.slane %v9223, 4
      %v9226 = vshll.u32 %v8861, 16
      %v9228 = vrot.slane %v9226, 5
      %v9229 = vsel %vm945, %v9224, %v9228
      %v9230 = vshrl.u32 %v8861, 16
      %v9232 = vrot.slane %v9230, 4
      %v9233 = vor.u32 %v9232, %v9228
      %v9234 = vrot.slane %v9233, 4
      %v9236 = vshll.u32 %v8878, 16
      %v9238 = vrot.slane %v9236, 5
      %v9239 = vsel %vm945, %v9234, %v9238
      %v9241 = vshrl.u32 %v8862, 16
      %v9243 = vrot.slane %v9241, 4
      %v9244 = vshll.u32 %v8862, 16
      %v9246 = vrot.slane %v9244, 5
      %v9247 = vor.u32 %v9243, %v9246
      %v9248 = vrot.slane %v9247, 4
      %v9250 = vshll.u32 %v8863, 16
      %v9252 = vrot.slane %v9250, 5
      %v9253 = vsel %vm945, %v9248, %v9252
      %v9254 = vshrl.u32 %v8863, 16
      %v9256 = vrot.slane %v9254, 4
      %v9257 = vor.u32 %v9256, %v9252
      %v9258 = vrot.slane %v9257, 4
      %v9260 = vshll.u32 %v8879, 16
      %v9262 = vrot.slane %v9260, 5
      %v9263 = vsel %vm945, %v9258, %v9262
      %v9264 = vld [vmem:[%s8107] sm:$0xe]
      %v9265 = vld [vmem:[%s8107 + $0xc] sm:$0xe]
      %v9266 = vld [vmem:[%s8107 + $0x18] sm:$0xe]
      %v9267 = vld [vmem:[%s8107 + $0x24] sm:$0xe]
      %v9268 = vld [vmem:[%s8107 + $0x30] sm:$0xe]
      %v9269 = vld [vmem:[%s8107 + $0x3c] sm:$0xe]
      %v9270 = vld [vmem:[%s8107 + $0x48] sm:$0xe]
      %v9271 = vld [vmem:[%s8107 + $0x54] sm:$0xe]
      %v9272 = vld [vmem:[%s8107 + $0x60] sm:$0xe]
      %v9273 = vld [vmem:[%s8107 + $0x6c] sm:$0xe]
      %v9274 = vld [vmem:[%s8107 + $0x78] sm:$0xe]
      %v9275 = vld [vmem:[%s8107 + $0x84] sm:$0xe]
      %v9276 = vld [vmem:[%s8107 + $0x90] sm:$0xe]
      %v9277 = vld [vmem:[%s8107 + $0x9c] sm:$0xe]
      %v9278 = vld [vmem:[%s8107 + $0xa8] sm:$0xe]
      %v9279 = vld [vmem:[%s8107 + $0xb4] sm:$0xe]
      %v9328 = vrot.slane %v9264, 5
      %v9329 = vrot.slane %v9328, 4
      %v9330 = vrot.slane %v8833, 5
      %v9331 = vsel %vm1396, %v9329, %v9330
      %v9332 = vrot.slane %v9330, 4
      %v9333 = vrot.slane %v8864, 5
      %v9334 = vsel %vm1396, %v9332, %v9333
      %v9335 = vrot.slane %v9265, 5
      %v9336 = vrot.slane %v9335, 4
      %v9337 = vrot.slane %v8835, 5
      %v9338 = vsel %vm1396, %v9336, %v9337
      %v9339 = vrot.slane %v9337, 4
      %v9340 = vrot.slane %v8865, 5
      %v9341 = vsel %vm1396, %v9339, %v9340
      %v9342 = vrot.slane %v9266, 5
      %v9343 = vrot.slane %v9342, 4
      %v9344 = vrot.slane %v8837, 5
      %v9345 = vsel %vm1396, %v9343, %v9344
      %v9346 = vrot.slane %v9344, 4
      %v9347 = vrot.slane %v8866, 5
      %v9348 = vsel %vm1396, %v9346, %v9347
      %v9349 = vrot.slane %v9267, 5
      %v9350 = vrot.slane %v9349, 4
      %v9351 = vrot.slane %v8839, 5
      %v9352 = vsel %vm1396, %v9350, %v9351
      %v9353 = vrot.slane %v9351, 4
      %v9354 = vrot.slane %v8867, 5
      %v9355 = vsel %vm1396, %v9353, %v9354
      %v9356 = vrot.slane %v9268, 5
      %v9357 = vrot.slane %v9356, 4
      %v9358 = vrot.slane %v8841, 5
      %v9359 = vsel %vm1396, %v9357, %v9358
      %v9360 = vrot.slane %v9358, 4
      %v9361 = vrot.slane %v8868, 5
      %v9362 = vsel %vm1396, %v9360, %v9361
      %v9363 = vrot.slane %v9269, 5
      %v9364 = vrot.slane %v9363, 4
      %v9365 = vrot.slane %v8843, 5
      %v9366 = vsel %vm1396, %v9364, %v9365
      %v9367 = vrot.slane %v9365, 4
      %v9368 = vrot.slane %v8869, 5
      %v9369 = vsel %vm1396, %v9367, %v9368
      %v9370 = vrot.slane %v9270, 5
      %v9371 = vrot.slane %v9370, 4
      %v9372 = vrot.slane %v8845, 5
      %v9373 = vsel %vm1396, %v9371, %v9372
      %v9374 = vrot.slane %v9372, 4
      %v9375 = vrot.slane %v8870, 5
      %v9376 = vsel %vm1396, %v9374, %v9375
      %v9377 = vrot.slane %v9271, 5
      %v9378 = vrot.slane %v9377, 4
      %v9379 = vrot.slane %v8847, 5
      %v9380 = vsel %vm1396, %v9378, %v9379
      %v9381 = vrot.slane %v9379, 4
      %v9382 = vrot.slane %v8871, 5
      %v9383 = vsel %vm1396, %v9381, %v9382
      %v9384 = vrot.slane %v9272, 5
      %v9385 = vrot.slane %v9384, 4
      %v9386 = vrot.slane %v8849, 5
      %v9387 = vsel %vm1396, %v9385, %v9386
      %v9388 = vrot.slane %v9386, 4
      %v9389 = vrot.slane %v8872, 5
      %v9390 = vsel %vm1396, %v9388, %v9389
      %v9391 = vrot.slane %v9273, 5
      %v9392 = vrot.slane %v9391, 4
      %v9393 = vrot.slane %v8851, 5
      %v9394 = vsel %vm1396, %v9392, %v9393
      %v9395 = vrot.slane %v9393, 4
      %v9396 = vrot.slane %v8873, 5
      %v9397 = vsel %vm1396, %v9395, %v9396
      %v9398 = vrot.slane %v9274, 5
      %v9399 = vrot.slane %v9398, 4
      %v9400 = vrot.slane %v8853, 5
      %v9401 = vsel %vm1396, %v9399, %v9400
      %v9402 = vrot.slane %v9400, 4
      %v9403 = vrot.slane %v8874, 5
      %v9404 = vsel %vm1396, %v9402, %v9403
      %v9405 = vrot.slane %v9275, 5
      %v9406 = vrot.slane %v9405, 4
      %v9407 = vrot.slane %v8855, 5
      %v9408 = vsel %vm1396, %v9406, %v9407
      %v9409 = vrot.slane %v9407, 4
      %v9410 = vrot.slane %v8875, 5
      %v9411 = vsel %vm1396, %v9409, %v9410
      %v9412 = vrot.slane %v9276, 5
      %v9413 = vrot.slane %v9412, 4
      %v9414 = vrot.slane %v8857, 5
      %v9415 = vsel %vm1396, %v9413, %v9414
      %v9416 = vrot.slane %v9414, 4
      %v9417 = vrot.slane %v8876, 5
      %v9418 = vsel %vm1396, %v9416, %v9417
      %v9419 = vrot.slane %v9277, 5
      %v9420 = vrot.slane %v9419, 4
      %v9421 = vrot.slane %v8859, 5
      %v9422 = vsel %vm1396, %v9420, %v9421
      %v9423 = vrot.slane %v9421, 4
      %v9424 = vrot.slane %v8877, 5
      %v9425 = vsel %vm1396, %v9423, %v9424
      %v9426 = vrot.slane %v9278, 5
      %v9427 = vrot.slane %v9426, 4
      %v9428 = vrot.slane %v8861, 5
      %v9429 = vsel %vm1396, %v9427, %v9428
      %v9430 = vrot.slane %v9428, 4
      %v9431 = vrot.slane %v8878, 5
      %v9432 = vsel %vm1396, %v9430, %v9431
      %v9433 = vrot.slane %v9279, 5
      %v9434 = vrot.slane %v9433, 4
      %v9435 = vrot.slane %v8863, 5
      %v9436 = vsel %vm1396, %v9434, %v9435
      %v9437 = vrot.slane %v9435, 4
      %v9438 = vrot.slane %v8879, 5
      %v9439 = vsel %vm1396, %v9437, %v9438
      %s9440 = scalar_lea.vmem [#allocation4], 24
      %v9441 = vld [vmem:[%s9440] sm:$0xf]
      %v9442 = vld [vmem:[%s9440 + $0x4] sm:$0xf]
      %v9443 = vld [vmem:[%s9440 + $0xc] sm:$0xf]
      %v9444 = vld [vmem:[%s9440 + $0x10] sm:$0xf]
      %v9445 = vld [vmem:[%s9440 + $0x18] sm:$0xf]
      %v9446 = vld [vmem:[%s9440 + $0x1c] sm:$0xf]
      %v9447 = vld [vmem:[%s9440 + $0x24] sm:$0xf]
      %v9448 = vld [vmem:[%s9440 + $0x28] sm:$0xf]
      %v9449 = vld [vmem:[%s9440 + $0x30] sm:$0xf]
      %v9450 = vld [vmem:[%s9440 + $0x34] sm:$0xf]
      %v9451 = vld [vmem:[%s9440 + $0x3c] sm:$0xf]
      %v9452 = vld [vmem:[%s9440 + $0x40] sm:$0xf]
      %v9453 = vld [vmem:[%s9440 + $0x48] sm:$0xf]
      %v9454 = vld [vmem:[%s9440 + $0x4c] sm:$0xf]
      %v9455 = vld [vmem:[%s9440 + $0x54] sm:$0xf]
      %v9456 = vld [vmem:[%s9440 + $0x58] sm:$0xf]
      %v9457 = vld [vmem:[%s9440 + $0x60] sm:$0xf]
      %v9458 = vld [vmem:[%s9440 + $0x64] sm:$0xf]
      %v9459 = vld [vmem:[%s9440 + $0x6c] sm:$0xf]
      %v9460 = vld [vmem:[%s9440 + $0x70] sm:$0xf]
      %v9461 = vld [vmem:[%s9440 + $0x78] sm:$0xf]
      %v9462 = vld [vmem:[%s9440 + $0x7c] sm:$0xf]
      %v9463 = vld [vmem:[%s9440 + $0x84] sm:$0xf]
      %v9464 = vld [vmem:[%s9440 + $0x88] sm:$0xf]
      %v9465 = vld [vmem:[%s9440 + $0x90] sm:$0xf]
      %v9466 = vld [vmem:[%s9440 + $0x94] sm:$0xf]
      %v9467 = vld [vmem:[%s9440 + $0x9c] sm:$0xf]
      %v9468 = vld [vmem:[%s9440 + $0xa0] sm:$0xf]
      %v9469 = vld [vmem:[%s9440 + $0xa8] sm:$0xf]
      %v9470 = vld [vmem:[%s9440 + $0xac] sm:$0xf]
      %v9471 = vld [vmem:[%s9440 + $0xb4] sm:$0xf]
      %v9472 = vld [vmem:[%s9440 + $0xb8] sm:$0xf]
      %v9473 = vld [vmem:[%s9440 + $0x8] sm:$0x1]
      %v9474 = vld [vmem:[%s9440 + $0x14] sm:$0x1]
      %v9475 = vld [vmem:[%s9440 + $0x20] sm:$0x1]
      %v9476 = vld [vmem:[%s9440 + $0x2c] sm:$0x1]
      %v9477 = vld [vmem:[%s9440 + $0x38] sm:$0x1]
      %v9478 = vld [vmem:[%s9440 + $0x44] sm:$0x1]
      %v9479 = vld [vmem:[%s9440 + $0x50] sm:$0x1]
      %v9480 = vld [vmem:[%s9440 + $0x5c] sm:$0x1]
      %v9481 = vld [vmem:[%s9440 + $0x68] sm:$0x1]
      %v9482 = vld [vmem:[%s9440 + $0x74] sm:$0x1]
      %v9483 = vld [vmem:[%s9440 + $0x80] sm:$0x1]
      %v9484 = vld [vmem:[%s9440 + $0x8c] sm:$0x1]
      %v9485 = vld [vmem:[%s9440 + $0x98] sm:$0x1]
      %v9486 = vld [vmem:[%s9440 + $0xa4] sm:$0x1]
      %v9487 = vld [vmem:[%s9440 + $0xb0] sm:$0x1]
      %v9488 = vld [vmem:[%s9440 + $0xbc] sm:$0x1]
      %v9490 = vshrl.u32 %v9441, 16
      %v9492 = vrot.slane %v9490, 4
      %v9493 = vshll.u32 %v9441, 16
      %v9495 = vrot.slane %v9493, 5
      %v9496 = vor.u32 %v9492, %v9495
      %v9497 = vrot.slane %v9496, 4
      %v9499 = vshll.u32 %v9442, 16
      %v9501 = vrot.slane %v9499, 5
      %v9502 = vsel %vm945, %v9497, %v9501
      %v9503 = vshrl.u32 %v9442, 16
      %v9505 = vrot.slane %v9503, 4
      %v9506 = vor.u32 %v9505, %v9501
      %v9507 = vrot.slane %v9506, 4
      %v9509 = vshll.u32 %v9473, 16
      %v9511 = vrot.slane %v9509, 5
      %v9512 = vsel %vm945, %v9507, %v9511
      %v9514 = vshrl.u32 %v9443, 16
      %v9516 = vrot.slane %v9514, 4
      %v9517 = vshll.u32 %v9443, 16
      %v9519 = vrot.slane %v9517, 5
      %v9520 = vor.u32 %v9516, %v9519
      %v9521 = vrot.slane %v9520, 4
      %v9523 = vshll.u32 %v9444, 16
      %v9525 = vrot.slane %v9523, 5
      %v9526 = vsel %vm945, %v9521, %v9525
      %v9527 = vshrl.u32 %v9444, 16
      %v9529 = vrot.slane %v9527, 4
      %v9530 = vor.u32 %v9529, %v9525
      %v9531 = vrot.slane %v9530, 4
      %v9533 = vshll.u32 %v9474, 16
      %v9535 = vrot.slane %v9533, 5
      %v9536 = vsel %vm945, %v9531, %v9535
      %v9538 = vshrl.u32 %v9445, 16
      %v9540 = vrot.slane %v9538, 4
      %v9541 = vshll.u32 %v9445, 16
      %v9543 = vrot.slane %v9541, 5
      %v9544 = vor.u32 %v9540, %v9543
      %v9545 = vrot.slane %v9544, 4
      %v9547 = vshll.u32 %v9446, 16
      %v9549 = vrot.slane %v9547, 5
      %v9550 = vsel %vm945, %v9545, %v9549
      %v9551 = vshrl.u32 %v9446, 16
      %v9553 = vrot.slane %v9551, 4
      %v9554 = vor.u32 %v9553, %v9549
      %v9555 = vrot.slane %v9554, 4
      %v9557 = vshll.u32 %v9475, 16
      %v9559 = vrot.slane %v9557, 5
      %v9560 = vsel %vm945, %v9555, %v9559
      %v9562 = vshrl.u32 %v9447, 16
      %v9564 = vrot.slane %v9562, 4
      %v9565 = vshll.u32 %v9447, 16
      %v9567 = vrot.slane %v9565, 5
      %v9568 = vor.u32 %v9564, %v9567
      %v9569 = vrot.slane %v9568, 4
      %v9571 = vshll.u32 %v9448, 16
      %v9573 = vrot.slane %v9571, 5
      %v9574 = vsel %vm945, %v9569, %v9573
      %v9575 = vshrl.u32 %v9448, 16
      %v9577 = vrot.slane %v9575, 4
      %v9578 = vor.u32 %v9577, %v9573
      %v9579 = vrot.slane %v9578, 4
      %v9581 = vshll.u32 %v9476, 16
      %v9583 = vrot.slane %v9581, 5
      %v9584 = vsel %vm945, %v9579, %v9583
      %v9586 = vshrl.u32 %v9449, 16
      %v9588 = vrot.slane %v9586, 4
      %v9589 = vshll.u32 %v9449, 16
      %v9591 = vrot.slane %v9589, 5
      %v9592 = vor.u32 %v9588, %v9591
      %v9593 = vrot.slane %v9592, 4
      %v9595 = vshll.u32 %v9450, 16
      %v9597 = vrot.slane %v9595, 5
      %v9598 = vsel %vm945, %v9593, %v9597
      %v9599 = vshrl.u32 %v9450, 16
      %v9601 = vrot.slane %v9599, 4
      %v9602 = vor.u32 %v9601, %v9597
      %v9603 = vrot.slane %v9602, 4
      %v9605 = vshll.u32 %v9477, 16
      %v9607 = vrot.slane %v9605, 5
      %v9608 = vsel %vm945, %v9603, %v9607
      %v9610 = vshrl.u32 %v9451, 16
      %v9612 = vrot.slane %v9610, 4
      %v9613 = vshll.u32 %v9451, 16
      %v9615 = vrot.slane %v9613, 5
      %v9616 = vor.u32 %v9612, %v9615
      %v9617 = vrot.slane %v9616, 4
      %v9619 = vshll.u32 %v9452, 16
      %v9621 = vrot.slane %v9619, 5
      %v9622 = vsel %vm945, %v9617, %v9621
      %v9623 = vshrl.u32 %v9452, 16
      %v9625 = vrot.slane %v9623, 4
      %v9626 = vor.u32 %v9625, %v9621
      %v9627 = vrot.slane %v9626, 4
      %v9629 = vshll.u32 %v9478, 16
      %v9631 = vrot.slane %v9629, 5
      %v9632 = vsel %vm945, %v9627, %v9631
      %v9634 = vshrl.u32 %v9453, 16
      %v9636 = vrot.slane %v9634, 4
      %v9637 = vshll.u32 %v9453, 16
      %v9639 = vrot.slane %v9637, 5
      %v9640 = vor.u32 %v9636, %v9639
      %v9641 = vrot.slane %v9640, 4
      %v9643 = vshll.u32 %v9454, 16
      %v9645 = vrot.slane %v9643, 5
      %v9646 = vsel %vm945, %v9641, %v9645
      %v9647 = vshrl.u32 %v9454, 16
      %v9649 = vrot.slane %v9647, 4
      %v9650 = vor.u32 %v9649, %v9645
      %v9651 = vrot.slane %v9650, 4
      %v9653 = vshll.u32 %v9479, 16
      %v9655 = vrot.slane %v9653, 5
      %v9656 = vsel %vm945, %v9651, %v9655
      %v9658 = vshrl.u32 %v9455, 16
      %v9660 = vrot.slane %v9658, 4
      %v9661 = vshll.u32 %v9455, 16
      %v9663 = vrot.slane %v9661, 5
      %v9664 = vor.u32 %v9660, %v9663
      %v9665 = vrot.slane %v9664, 4
      %v9667 = vshll.u32 %v9456, 16
      %v9669 = vrot.slane %v9667, 5
      %v9670 = vsel %vm945, %v9665, %v9669
      %v9671 = vshrl.u32 %v9456, 16
      %v9673 = vrot.slane %v9671, 4
      %v9674 = vor.u32 %v9673, %v9669
      %v9675 = vrot.slane %v9674, 4
      %v9677 = vshll.u32 %v9480, 16
      %v9679 = vrot.slane %v9677, 5
      %v9680 = vsel %vm945, %v9675, %v9679
      %v9682 = vshrl.u32 %v9457, 16
      %v9684 = vrot.slane %v9682, 4
      %v9685 = vshll.u32 %v9457, 16
      %v9687 = vrot.slane %v9685, 5
      %v9688 = vor.u32 %v9684, %v9687
      %v9689 = vrot.slane %v9688, 4
      %v9691 = vshll.u32 %v9458, 16
      %v9693 = vrot.slane %v9691, 5
      %v9694 = vsel %vm945, %v9689, %v9693
      %v9695 = vshrl.u32 %v9458, 16
      %v9697 = vrot.slane %v9695, 4
      %v9698 = vor.u32 %v9697, %v9693
      %v9699 = vrot.slane %v9698, 4
      %v9701 = vshll.u32 %v9481, 16
      %v9703 = vrot.slane %v9701, 5
      %v9704 = vsel %vm945, %v9699, %v9703
      %v9706 = vshrl.u32 %v9459, 16
      %v9708 = vrot.slane %v9706, 4
      %v9709 = vshll.u32 %v9459, 16
      %v9711 = vrot.slane %v9709, 5
      %v9712 = vor.u32 %v9708, %v9711
      %v9713 = vrot.slane %v9712, 4
      %v9715 = vshll.u32 %v9460, 16
      %v9717 = vrot.slane %v9715, 5
      %v9718 = vsel %vm945, %v9713, %v9717
      %v9719 = vshrl.u32 %v9460, 16
      %v9721 = vrot.slane %v9719, 4
      %v9722 = vor.u32 %v9721, %v9717
      %v9723 = vrot.slane %v9722, 4
      %v9725 = vshll.u32 %v9482, 16
      %v9727 = vrot.slane %v9725, 5
      %v9728 = vsel %vm945, %v9723, %v9727
      %v9730 = vshrl.u32 %v9461, 16
      %v9732 = vrot.slane %v9730, 4
      %v9733 = vshll.u32 %v9461, 16
      %v9735 = vrot.slane %v9733, 5
      %v9736 = vor.u32 %v9732, %v9735
      %v9737 = vrot.slane %v9736, 4
      %v9739 = vshll.u32 %v9462, 16
      %v9741 = vrot.slane %v9739, 5
      %v9742 = vsel %vm945, %v9737, %v9741
      %v9743 = vshrl.u32 %v9462, 16
      %v9745 = vrot.slane %v9743, 4
      %v9746 = vor.u32 %v9745, %v9741
      %v9747 = vrot.slane %v9746, 4
      %v9749 = vshll.u32 %v9483, 16
      %v9751 = vrot.slane %v9749, 5
      %v9752 = vsel %vm945, %v9747, %v9751
      %v9754 = vshrl.u32 %v9463, 16
      %v9756 = vrot.slane %v9754, 4
      %v9757 = vshll.u32 %v9463, 16
      %v9759 = vrot.slane %v9757, 5
      %v9760 = vor.u32 %v9756, %v9759
      %v9761 = vrot.slane %v9760, 4
      %v9763 = vshll.u32 %v9464, 16
      %v9765 = vrot.slane %v9763, 5
      %v9766 = vsel %vm945, %v9761, %v9765
      %v9767 = vshrl.u32 %v9464, 16
      %v9769 = vrot.slane %v9767, 4
      %v9770 = vor.u32 %v9769, %v9765
      %v9771 = vrot.slane %v9770, 4
      %v9773 = vshll.u32 %v9484, 16
      %v9775 = vrot.slane %v9773, 5
      %v9776 = vsel %vm945, %v9771, %v9775
      %v9778 = vshrl.u32 %v9465, 16
      %v9780 = vrot.slane %v9778, 4
      %v9781 = vshll.u32 %v9465, 16
      %v9783 = vrot.slane %v9781, 5
      %v9784 = vor.u32 %v9780, %v9783
      %v9785 = vrot.slane %v9784, 4
      %v9787 = vshll.u32 %v9466, 16
      %v9789 = vrot.slane %v9787, 5
      %v9790 = vsel %vm945, %v9785, %v9789
      %v9791 = vshrl.u32 %v9466, 16
      %v9793 = vrot.slane %v9791, 4
      %v9794 = vor.u32 %v9793, %v9789
      %v9795 = vrot.slane %v9794, 4
      %v9797 = vshll.u32 %v9485, 16
      %v9799 = vrot.slane %v9797, 5
      %v9800 = vsel %vm945, %v9795, %v9799
      %v9802 = vshrl.u32 %v9467, 16
      %v9804 = vrot.slane %v9802, 4
      %v9805 = vshll.u32 %v9467, 16
      %v9807 = vrot.slane %v9805, 5
      %v9808 = vor.u32 %v9804, %v9807
      %v9809 = vrot.slane %v9808, 4
      %v9811 = vshll.u32 %v9468, 16
      %v9813 = vrot.slane %v9811, 5
      %v9814 = vsel %vm945, %v9809, %v9813
      %v9815 = vshrl.u32 %v9468, 16
      %v9817 = vrot.slane %v9815, 4
      %v9818 = vor.u32 %v9817, %v9813
      %v9819 = vrot.slane %v9818, 4
      %v9821 = vshll.u32 %v9486, 16
      %v9823 = vrot.slane %v9821, 5
      %v9824 = vsel %vm945, %v9819, %v9823
      %v9826 = vshrl.u32 %v9469, 16
      %v9828 = vrot.slane %v9826, 4
      %v9829 = vshll.u32 %v9469, 16
      %v9831 = vrot.slane %v9829, 5
      %v9832 = vor.u32 %v9828, %v9831
      %v9833 = vrot.slane %v9832, 4
      %v9835 = vshll.u32 %v9470, 16
      %v9837 = vrot.slane %v9835, 5
      %v9838 = vsel %vm945, %v9833, %v9837
      %v9839 = vshrl.u32 %v9470, 16
      %v9841 = vrot.slane %v9839, 4
      %v9842 = vor.u32 %v9841, %v9837
      %v9843 = vrot.slane %v9842, 4
      %v9845 = vshll.u32 %v9487, 16
      %v9847 = vrot.slane %v9845, 5
      %v9848 = vsel %vm945, %v9843, %v9847
      %v9850 = vshrl.u32 %v9471, 16
      %v9852 = vrot.slane %v9850, 4
      %v9853 = vshll.u32 %v9471, 16
      %v9855 = vrot.slane %v9853, 5
      %v9856 = vor.u32 %v9852, %v9855
      %v9857 = vrot.slane %v9856, 4
      %v9859 = vshll.u32 %v9472, 16
      %v9861 = vrot.slane %v9859, 5
      %v9862 = vsel %vm945, %v9857, %v9861
      %v9863 = vshrl.u32 %v9472, 16
      %v9865 = vrot.slane %v9863, 4
      %v9866 = vor.u32 %v9865, %v9861
      %v9867 = vrot.slane %v9866, 4
      %v9869 = vshll.u32 %v9488, 16
      %v9871 = vrot.slane %v9869, 5
      %v9872 = vsel %vm945, %v9867, %v9871
      %v9873 = vld [vmem:[%s9440] sm:$0xe]
      %v9874 = vld [vmem:[%s9440 + $0xc] sm:$0xe]
      %v9875 = vld [vmem:[%s9440 + $0x18] sm:$0xe]
      %v9876 = vld [vmem:[%s9440 + $0x24] sm:$0xe]
      %v9877 = vld [vmem:[%s9440 + $0x30] sm:$0xe]
      %v9878 = vld [vmem:[%s9440 + $0x3c] sm:$0xe]
      %v9879 = vld [vmem:[%s9440 + $0x48] sm:$0xe]
      %v9880 = vld [vmem:[%s9440 + $0x54] sm:$0xe]
      %v9881 = vld [vmem:[%s9440 + $0x60] sm:$0xe]
      %v9882 = vld [vmem:[%s9440 + $0x6c] sm:$0xe]
      %v9883 = vld [vmem:[%s9440 + $0x78] sm:$0xe]
      %v9884 = vld [vmem:[%s9440 + $0x84] sm:$0xe]
      %v9885 = vld [vmem:[%s9440 + $0x90] sm:$0xe]
      %v9886 = vld [vmem:[%s9440 + $0x9c] sm:$0xe]
      %v9887 = vld [vmem:[%s9440 + $0xa8] sm:$0xe]
      %v9888 = vld [vmem:[%s9440 + $0xb4] sm:$0xe]
      %v9937 = vrot.slane %v9873, 5
      %v9938 = vrot.slane %v9937, 4
      %v9939 = vrot.slane %v9442, 5
      %v9940 = vsel %vm1396, %v9938, %v9939
      %v9941 = vrot.slane %v9939, 4
      %v9942 = vrot.slane %v9473, 5
      %v9943 = vsel %vm1396, %v9941, %v9942
      %v9944 = vrot.slane %v9874, 5
      %v9945 = vrot.slane %v9944, 4
      %v9946 = vrot.slane %v9444, 5
      %v9947 = vsel %vm1396, %v9945, %v9946
      %v9948 = vrot.slane %v9946, 4
      %v9949 = vrot.slane %v9474, 5
      %v9950 = vsel %vm1396, %v9948, %v9949
      %v9951 = vrot.slane %v9875, 5
      %v9952 = vrot.slane %v9951, 4
      %v9953 = vrot.slane %v9446, 5
      %v9954 = vsel %vm1396, %v9952, %v9953
      %v9955 = vrot.slane %v9953, 4
      %v9956 = vrot.slane %v9475, 5
      %v9957 = vsel %vm1396, %v9955, %v9956
      %v9958 = vrot.slane %v9876, 5
      %v9959 = vrot.slane %v9958, 4
      %v9960 = vrot.slane %v9448, 5
      %v9961 = vsel %vm1396, %v9959, %v9960
      %v9962 = vrot.slane %v9960, 4
      %v9963 = vrot.slane %v9476, 5
      %v9964 = vsel %vm1396, %v9962, %v9963
      %v9965 = vrot.slane %v9877, 5
      %v9966 = vrot.slane %v9965, 4
      %v9967 = vrot.slane %v9450, 5
      %v9968 = vsel %vm1396, %v9966, %v9967
      %v9969 = vrot.slane %v9967, 4
      %v9970 = vrot.slane %v9477, 5
      %v9971 = vsel %vm1396, %v9969, %v9970
      %v9972 = vrot.slane %v9878, 5
      %v9973 = vrot.slane %v9972, 4
      %v9974 = vrot.slane %v9452, 5
      %v9975 = vsel %vm1396, %v9973, %v9974
      %v9976 = vrot.slane %v9974, 4
      %v9977 = vrot.slane %v9478, 5
      %v9978 = vsel %vm1396, %v9976, %v9977
      %v9979 = vrot.slane %v9879, 5
      %v9980 = vrot.slane %v9979, 4
      %v9981 = vrot.slane %v9454, 5
      %v9982 = vsel %vm1396, %v9980, %v9981
      %v9983 = vrot.slane %v9981, 4
      %v9984 = vrot.slane %v9479, 5
      %v9985 = vsel %vm1396, %v9983, %v9984
      %v9986 = vrot.slane %v9880, 5
      %v9987 = vrot.slane %v9986, 4
      %v9988 = vrot.slane %v9456, 5
      %v9989 = vsel %vm1396, %v9987, %v9988
      %v9990 = vrot.slane %v9988, 4
      %v9991 = vrot.slane %v9480, 5
      %v9992 = vsel %vm1396, %v9990, %v9991
      %v9993 = vrot.slane %v9881, 5
      %v9994 = vrot.slane %v9993, 4
      %v9995 = vrot.slane %v9458, 5
      %v9996 = vsel %vm1396, %v9994, %v9995
      %v9997 = vrot.slane %v9995, 4
      %v9998 = vrot.slane %v9481, 5
      %v9999 = vsel %vm1396, %v9997, %v9998
      %v10000 = vrot.slane %v9882, 5
      %v10001 = vrot.slane %v10000, 4
      %v10002 = vrot.slane %v9460, 5
      %v10003 = vsel %vm1396, %v10001, %v10002
      %v10004 = vrot.slane %v10002, 4
      %v10005 = vrot.slane %v9482, 5
      %v10006 = vsel %vm1396, %v10004, %v10005
      %v10007 = vrot.slane %v9883, 5
      %v10008 = vrot.slane %v10007, 4
      %v10009 = vrot.slane %v9462, 5
      %v10010 = vsel %vm1396, %v10008, %v10009
      %v10011 = vrot.slane %v10009, 4
      %v10012 = vrot.slane %v9483, 5
      %v10013 = vsel %vm1396, %v10011, %v10012
      %v10014 = vrot.slane %v9884, 5
      %v10015 = vrot.slane %v10014, 4
      %v10016 = vrot.slane %v9464, 5
      %v10017 = vsel %vm1396, %v10015, %v10016
      %v10018 = vrot.slane %v10016, 4
      %v10019 = vrot.slane %v9484, 5
      %v10020 = vsel %vm1396, %v10018, %v10019
      %v10021 = vrot.slane %v9885, 5
      %v10022 = vrot.slane %v10021, 4
      %v10023 = vrot.slane %v9466, 5
      %v10024 = vsel %vm1396, %v10022, %v10023
      %v10025 = vrot.slane %v10023, 4
      %v10026 = vrot.slane %v9485, 5
      %v10027 = vsel %vm1396, %v10025, %v10026
      %v10028 = vrot.slane %v9886, 5
      %v10029 = vrot.slane %v10028, 4
      %v10030 = vrot.slane %v9468, 5
      %v10031 = vsel %vm1396, %v10029, %v10030
      %v10032 = vrot.slane %v10030, 4
      %v10033 = vrot.slane %v9486, 5
      %v10034 = vsel %vm1396, %v10032, %v10033
      %v10035 = vrot.slane %v9887, 5
      %v10036 = vrot.slane %v10035, 4
      %v10037 = vrot.slane %v9470, 5
      %v10038 = vsel %vm1396, %v10036, %v10037
      %v10039 = vrot.slane %v10037, 4
      %v10040 = vrot.slane %v9487, 5
      %v10041 = vsel %vm1396, %v10039, %v10040
      %v10042 = vrot.slane %v9888, 5
      %v10043 = vrot.slane %v10042, 4
      %v10044 = vrot.slane %v9472, 5
      %v10045 = vsel %vm1396, %v10043, %v10044
      %v10046 = vrot.slane %v10044, 4
      %v10047 = vrot.slane %v9488, 5
      %v10048 = vsel %vm1396, %v10046, %v10047
      %v10065 = vunpack.c.l.b16 %v8224
      %v10066 = vunpack.c.l.b16 %v8225
      %v10067 = vunpack.c.l.b16 %v8226
      %v10068 = vunpack.c.l.b16 %v8227
      %v10069 = vunpack.c.l.b16 %v8228
      %v10070 = vunpack.c.l.b16 %v8229
      %v10071 = vunpack.c.l.b16 %v8230
      %v10072 = vunpack.c.l.b16 %v8231
      %v10073 = vunpack.c.l.b16 %v8232
      %v10074 = vunpack.c.l.b16 %v8233
      %v10075 = vunpack.c.l.b16 %v8234
      %v10076 = vunpack.c.l.b16 %v8235
      %v10077 = vunpack.c.l.b16 %v8236
      %v10078 = vunpack.c.l.b16 %v8237
      %v10079 = vunpack.c.l.b16 %v8238
      %v10080 = vunpack.c.l.b16 %v8239
      %v10081 = vunpack.c.l.b16 %v8240
      %v10082 = vunpack.c.l.b16 %v8241
      %v10083 = vunpack.c.l.b16 %v8242
      %v10084 = vunpack.c.l.b16 %v8243
      %v10085 = vunpack.c.l.b16 %v8244
      %v10086 = vunpack.c.l.b16 %v8245
      %v10087 = vunpack.c.l.b16 %v8246
      %v10088 = vunpack.c.l.b16 %v8247
      %v10089 = vunpack.c.l.b16 %v8248
      %v10090 = vunpack.c.l.b16 %v8249
      %v10091 = vunpack.c.l.b16 %v8250
      %v10092 = vunpack.c.l.b16 %v8251
      %v10093 = vunpack.c.l.b16 %v8252
      %v10094 = vunpack.c.l.b16 %v8253
      %v10095 = vunpack.c.l.b16 %v8254
      %v10096 = vunpack.c.l.b16 %v8255
      %v10097 = vpack.c.b16 %v10066, %v10065
      %v10098 = vpack.c.b16 %v10068, %v10067
      %v10099 = vpack.c.b16 %v10070, %v10069
      %v10100 = vpack.c.b16 %v10072, %v10071
      %v10101 = vpack.c.b16 %v10074, %v10073
      %v10102 = vpack.c.b16 %v10076, %v10075
      %v10103 = vpack.c.b16 %v10078, %v10077
      %v10104 = vpack.c.b16 %v10080, %v10079
      %v10105 = vpack.c.b16 %v10082, %v10081
      %v10106 = vpack.c.b16 %v10084, %v10083
      %v10107 = vpack.c.b16 %v10086, %v10085
      %v10108 = vpack.c.b16 %v10088, %v10087
      %v10109 = vpack.c.b16 %v10090, %v10089
      %v10110 = vpack.c.b16 %v10092, %v10091
      %v10111 = vpack.c.b16 %v10094, %v10093
      %v10112 = vpack.c.b16 %v10096, %v10095
      %v10113 = vunpack.c.l.b16 %v8285
      %v10114 = vunpack.c.l.b16 %v8295
      %v10115 = vunpack.c.l.b16 %v8309
      %v10116 = vunpack.c.l.b16 %v8319
      %v10117 = vunpack.c.l.b16 %v8333
      %v10118 = vunpack.c.l.b16 %v8343
      %v10119 = vunpack.c.l.b16 %v8357
      %v10120 = vunpack.c.l.b16 %v8367
      %v10121 = vunpack.c.l.b16 %v8381
      %v10122 = vunpack.c.l.b16 %v8391
      %v10123 = vunpack.c.l.b16 %v8405
      %v10124 = vunpack.c.l.b16 %v8415
      %v10125 = vunpack.c.l.b16 %v8429
      %v10126 = vunpack.c.l.b16 %v8439
      %v10127 = vunpack.c.l.b16 %v8453
      %v10128 = vunpack.c.l.b16 %v8463
      %v10129 = vunpack.c.l.b16 %v8477
      %v10130 = vunpack.c.l.b16 %v8487
      %v10131 = vunpack.c.l.b16 %v8501
      %v10132 = vunpack.c.l.b16 %v8511
      %v10133 = vunpack.c.l.b16 %v8525
      %v10134 = vunpack.c.l.b16 %v8535
      %v10135 = vunpack.c.l.b16 %v8549
      %v10136 = vunpack.c.l.b16 %v8559
      %v10137 = vunpack.c.l.b16 %v8573
      %v10138 = vunpack.c.l.b16 %v8583
      %v10139 = vunpack.c.l.b16 %v8597
      %v10140 = vunpack.c.l.b16 %v8607
      %v10141 = vunpack.c.l.b16 %v8621
      %v10142 = vunpack.c.l.b16 %v8631
      %v10143 = vunpack.c.l.b16 %v8645
      %v10144 = vunpack.c.l.b16 %v8655
      %v10145 = vpack.c.b16 %v10114, %v10113
      %v10146 = vpack.c.b16 %v10116, %v10115
      %v10147 = vpack.c.b16 %v10118, %v10117
      %v10148 = vpack.c.b16 %v10120, %v10119
      %v10149 = vpack.c.b16 %v10122, %v10121
      %v10150 = vpack.c.b16 %v10124, %v10123
      %v10151 = vpack.c.b16 %v10126, %v10125
      %v10152 = vpack.c.b16 %v10128, %v10127
      %v10153 = vpack.c.b16 %v10130, %v10129
      %v10154 = vpack.c.b16 %v10132, %v10131
      %v10155 = vpack.c.b16 %v10134, %v10133
      %v10156 = vpack.c.b16 %v10136, %v10135
      %v10157 = vpack.c.b16 %v10138, %v10137
      %v10158 = vpack.c.b16 %v10140, %v10139
      %v10159 = vpack.c.b16 %v10142, %v10141
      %v10160 = vpack.c.b16 %v10144, %v10143
      %10161 = vrot.lane.b32.xlu0 %v10145, 64
      %v10162 = vpop.permute.xlu0 %10161
      %10163 = vrot.lane.b32.xlu0 %v10146, 64
      %v10164 = vpop.permute.xlu0 %10163
      %10165 = vrot.lane.b32.xlu0 %v10147, 64
      %v10166 = vpop.permute.xlu0 %10165
      %10167 = vrot.lane.b32.xlu0 %v10148, 64
      %v10168 = vpop.permute.xlu0 %10167
      %10169 = vrot.lane.b32.xlu0 %v10149, 64
      %v10170 = vpop.permute.xlu0 %10169
      %10171 = vrot.lane.b32.xlu0 %v10150, 64
      %v10172 = vpop.permute.xlu0 %10171
      %10173 = vrot.lane.b32.xlu0 %v10151, 64
      %v10174 = vpop.permute.xlu0 %10173
      %10175 = vrot.lane.b32.xlu0 %v10152, 64
      %v10176 = vpop.permute.xlu0 %10175
      %10177 = vrot.lane.b32.xlu0 %v10153, 64
      %v10178 = vpop.permute.xlu0 %10177
      %10179 = vrot.lane.b32.xlu0 %v10154, 64
      %v10180 = vpop.permute.xlu0 %10179
      %10181 = vrot.lane.b32.xlu0 %v10155, 64
      %v10182 = vpop.permute.xlu0 %10181
      %10183 = vrot.lane.b32.xlu0 %v10156, 64
      %v10184 = vpop.permute.xlu0 %10183
      %10185 = vrot.lane.b32.xlu0 %v10157, 64
      %v10186 = vpop.permute.xlu0 %10185
      %10187 = vrot.lane.b32.xlu0 %v10158, 64
      %v10188 = vpop.permute.xlu0 %10187
      %10189 = vrot.lane.b32.xlu0 %v10159, 64
      %v10190 = vpop.permute.xlu0 %10189
      %10191 = vrot.lane.b32.xlu0 %v10160, 64
      %v10192 = vpop.permute.xlu0 %10191
      %v10193 = vunpack.c.l.b16 %v8723
      %v10194 = vunpack.c.l.b16 %v8726
      %v10195 = vunpack.c.l.b16 %v8730
      %v10196 = vunpack.c.l.b16 %v8733
      %v10197 = vunpack.c.l.b16 %v8737
      %v10198 = vunpack.c.l.b16 %v8740
      %v10199 = vunpack.c.l.b16 %v8744
      %v10200 = vunpack.c.l.b16 %v8747
      %v10201 = vunpack.c.l.b16 %v8751
      %v10202 = vunpack.c.l.b16 %v8754
      %v10203 = vunpack.c.l.b16 %v8758
      %v10204 = vunpack.c.l.b16 %v8761
      %v10205 = vunpack.c.l.b16 %v8765
      %v10206 = vunpack.c.l.b16 %v8768
      %v10207 = vunpack.c.l.b16 %v8772
      %v10208 = vunpack.c.l.b16 %v8775
      %v10209 = vunpack.c.l.b16 %v8779
      %v10210 = vunpack.c.l.b16 %v8782
      %v10211 = vunpack.c.l.b16 %v8786
      %v10212 = vunpack.c.l.b16 %v8789
      %v10213 = vunpack.c.l.b16 %v8793
      %v10214 = vunpack.c.l.b16 %v8796
      %v10215 = vunpack.c.l.b16 %v8800
      %v10216 = vunpack.c.l.b16 %v8803
      %v10217 = vunpack.c.l.b16 %v8807
      %v10218 = vunpack.c.l.b16 %v8810
      %v10219 = vunpack.c.l.b16 %v8814
      %v10220 = vunpack.c.l.b16 %v8817
      %v10221 = vunpack.c.l.b16 %v8821
      %v10222 = vunpack.c.l.b16 %v8824
      %v10223 = vunpack.c.l.b16 %v8828
      %v10224 = vunpack.c.l.b16 %v8831
      %v10225 = vpack.c.b16 %v10194, %v10193
      %v10226 = vpack.c.b16 %v10196, %v10195
      %v10227 = vpack.c.b16 %v10198, %v10197
      %v10228 = vpack.c.b16 %v10200, %v10199
      %v10229 = vpack.c.b16 %v10202, %v10201
      %v10230 = vpack.c.b16 %v10204, %v10203
      %v10231 = vpack.c.b16 %v10206, %v10205
      %v10232 = vpack.c.b16 %v10208, %v10207
      %v10233 = vpack.c.b16 %v10210, %v10209
      %v10234 = vpack.c.b16 %v10212, %v10211
      %v10235 = vpack.c.b16 %v10214, %v10213
      %v10236 = vpack.c.b16 %v10216, %v10215
      %v10237 = vpack.c.b16 %v10218, %v10217
      %v10238 = vpack.c.b16 %v10220, %v10219
      %v10239 = vpack.c.b16 %v10222, %v10221
      %v10240 = vpack.c.b16 %v10224, %v10223
      %v10257 = vunpack.c.l.b16 %v8832
      %v10258 = vunpack.c.l.b16 %v8833
      %v10259 = vunpack.c.l.b16 %v8834
      %v10260 = vunpack.c.l.b16 %v8835
      %v10261 = vunpack.c.l.b16 %v8836
      %v10262 = vunpack.c.l.b16 %v8837
      %v10263 = vunpack.c.l.b16 %v8838
      %v10264 = vunpack.c.l.b16 %v8839
      %v10265 = vunpack.c.l.b16 %v8840
      %v10266 = vunpack.c.l.b16 %v8841
      %v10267 = vunpack.c.l.b16 %v8842
      %v10268 = vunpack.c.l.b16 %v8843
      %v10269 = vunpack.c.l.b16 %v8844
      %v10270 = vunpack.c.l.b16 %v8845
      %v10271 = vunpack.c.l.b16 %v8846
      %v10272 = vunpack.c.l.b16 %v8847
      %v10273 = vunpack.c.l.b16 %v8848
      %v10274 = vunpack.c.l.b16 %v8849
      %v10275 = vunpack.c.l.b16 %v8850
      %v10276 = vunpack.c.l.b16 %v8851
      %v10277 = vunpack.c.l.b16 %v8852
      %v10278 = vunpack.c.l.b16 %v8853
      %v10279 = vunpack.c.l.b16 %v8854
      %v10280 = vunpack.c.l.b16 %v8855
      %v10281 = vunpack.c.l.b16 %v8856
      %v10282 = vunpack.c.l.b16 %v8857
      %v10283 = vunpack.c.l.b16 %v8858
      %v10284 = vunpack.c.l.b16 %v8859
      %v10285 = vunpack.c.l.b16 %v8860
      %v10286 = vunpack.c.l.b16 %v8861
      %v10287 = vunpack.c.l.b16 %v8862
      %v10288 = vunpack.c.l.b16 %v8863
      %v10289 = vpack.c.b16 %v10258, %v10257
      %v10290 = vpack.c.b16 %v10260, %v10259
      %v10291 = vpack.c.b16 %v10262, %v10261
      %v10292 = vpack.c.b16 %v10264, %v10263
      %v10293 = vpack.c.b16 %v10266, %v10265
      %v10294 = vpack.c.b16 %v10268, %v10267
      %v10295 = vpack.c.b16 %v10270, %v10269
      %v10296 = vpack.c.b16 %v10272, %v10271
      %v10297 = vpack.c.b16 %v10274, %v10273
      %v10298 = vpack.c.b16 %v10276, %v10275
      %v10299 = vpack.c.b16 %v10278, %v10277
      %v10300 = vpack.c.b16 %v10280, %v10279
      %v10301 = vpack.c.b16 %v10282, %v10281
      %v10302 = vpack.c.b16 %v10284, %v10283
      %v10303 = vpack.c.b16 %v10286, %v10285
      %v10304 = vpack.c.b16 %v10288, %v10287
      %10305 = vrot.lane.b32.xlu0 %v10289, 64
      %v10306 = vpop.permute.xlu0 %10305
      %10307 = vrot.lane.b32.xlu0 %v10290, 64
      %v10308 = vpop.permute.xlu0 %10307
      %10309 = vrot.lane.b32.xlu0 %v10291, 64
      %v10310 = vpop.permute.xlu0 %10309
      %10311 = vrot.lane.b32.xlu0 %v10292, 64
      %v10312 = vpop.permute.xlu0 %10311
      %10313 = vrot.lane.b32.xlu0 %v10293, 64
      %v10314 = vpop.permute.xlu0 %10313
      %10315 = vrot.lane.b32.xlu0 %v10294, 64
      %v10316 = vpop.permute.xlu0 %10315
      %10317 = vrot.lane.b32.xlu0 %v10295, 64
      %v10318 = vpop.permute.xlu0 %10317
      %10319 = vrot.lane.b32.xlu0 %v10296, 64
      %v10320 = vpop.permute.xlu0 %10319
      %10321 = vrot.lane.b32.xlu0 %v10297, 64
      %v10322 = vpop.permute.xlu0 %10321
      %10323 = vrot.lane.b32.xlu0 %v10298, 64
      %v10324 = vpop.permute.xlu0 %10323
      %10325 = vrot.lane.b32.xlu0 %v10299, 64
      %v10326 = vpop.permute.xlu0 %10325
      %10327 = vrot.lane.b32.xlu0 %v10300, 64
      %v10328 = vpop.permute.xlu0 %10327
      %10329 = vrot.lane.b32.xlu0 %v10301, 64
      %v10330 = vpop.permute.xlu0 %10329
      %10331 = vrot.lane.b32.xlu0 %v10302, 64
      %v10332 = vpop.permute.xlu0 %10331
      %10333 = vrot.lane.b32.xlu0 %v10303, 64
      %v10334 = vpop.permute.xlu0 %10333
      %10335 = vrot.lane.b32.xlu0 %v10304, 64
      %v10336 = vpop.permute.xlu0 %10335
      %v10337 = vunpack.c.l.b16 %v8893
      %v10338 = vunpack.c.l.b16 %v8903
      %v10339 = vunpack.c.l.b16 %v8917
      %v10340 = vunpack.c.l.b16 %v8927
      %v10341 = vunpack.c.l.b16 %v8941
      %v10342 = vunpack.c.l.b16 %v8951
      %v10343 = vunpack.c.l.b16 %v8965
      %v10344 = vunpack.c.l.b16 %v8975
      %v10345 = vunpack.c.l.b16 %v8989
      %v10346 = vunpack.c.l.b16 %v8999
      %v10347 = vunpack.c.l.b16 %v9013
      %v10348 = vunpack.c.l.b16 %v9023
      %v10349 = vunpack.c.l.b16 %v9037
      %v10350 = vunpack.c.l.b16 %v9047
      %v10351 = vunpack.c.l.b16 %v9061
      %v10352 = vunpack.c.l.b16 %v9071
      %v10353 = vunpack.c.l.b16 %v9085
      %v10354 = vunpack.c.l.b16 %v9095
      %v10355 = vunpack.c.l.b16 %v9109
      %v10356 = vunpack.c.l.b16 %v9119
      %v10357 = vunpack.c.l.b16 %v9133
      %v10358 = vunpack.c.l.b16 %v9143
      %v10359 = vunpack.c.l.b16 %v9157
      %v10360 = vunpack.c.l.b16 %v9167
      %v10361 = vunpack.c.l.b16 %v9181
      %v10362 = vunpack.c.l.b16 %v9191
      %v10363 = vunpack.c.l.b16 %v9205
      %v10364 = vunpack.c.l.b16 %v9215
      %v10365 = vunpack.c.l.b16 %v9229
      %v10366 = vunpack.c.l.b16 %v9239
      %v10367 = vunpack.c.l.b16 %v9253
      %v10368 = vunpack.c.l.b16 %v9263
      %v10369 = vpack.c.b16 %v10338, %v10337
      %v10370 = vpack.c.b16 %v10340, %v10339
      %v10371 = vpack.c.b16 %v10342, %v10341
      %v10372 = vpack.c.b16 %v10344, %v10343
      %v10373 = vpack.c.b16 %v10346, %v10345
      %v10374 = vpack.c.b16 %v10348, %v10347
      %v10375 = vpack.c.b16 %v10350, %v10349
      %v10376 = vpack.c.b16 %v10352, %v10351
      %v10377 = vpack.c.b16 %v10354, %v10353
      %v10378 = vpack.c.b16 %v10356, %v10355
      %v10379 = vpack.c.b16 %v10358, %v10357
      %v10380 = vpack.c.b16 %v10360, %v10359
      %v10381 = vpack.c.b16 %v10362, %v10361
      %v10382 = vpack.c.b16 %v10364, %v10363
      %v10383 = vpack.c.b16 %v10366, %v10365
      %v10384 = vpack.c.b16 %v10368, %v10367
      %v10385 = vunpack.c.l.b16 %v9331
      %v10386 = vunpack.c.l.b16 %v9334
      %v10387 = vunpack.c.l.b16 %v9338
      %v10388 = vunpack.c.l.b16 %v9341
      %v10389 = vunpack.c.l.b16 %v9345
      %v10390 = vunpack.c.l.b16 %v9348
      %v10391 = vunpack.c.l.b16 %v9352
      %v10392 = vunpack.c.l.b16 %v9355
      %v10393 = vunpack.c.l.b16 %v9359
      %v10394 = vunpack.c.l.b16 %v9362
      %v10395 = vunpack.c.l.b16 %v9366
      %v10396 = vunpack.c.l.b16 %v9369
      %v10397 = vunpack.c.l.b16 %v9373
      %v10398 = vunpack.c.l.b16 %v9376
      %v10399 = vunpack.c.l.b16 %v9380
      %v10400 = vunpack.c.l.b16 %v9383
      %v10401 = vunpack.c.l.b16 %v9387
      %v10402 = vunpack.c.l.b16 %v9390
      %v10403 = vunpack.c.l.b16 %v9394
      %v10404 = vunpack.c.l.b16 %v9397
      %v10405 = vunpack.c.l.b16 %v9401
      %v10406 = vunpack.c.l.b16 %v9404
      %v10407 = vunpack.c.l.b16 %v9408
      %v10408 = vunpack.c.l.b16 %v9411
      %v10409 = vunpack.c.l.b16 %v9415
      %v10410 = vunpack.c.l.b16 %v9418
      %v10411 = vunpack.c.l.b16 %v9422
      %v10412 = vunpack.c.l.b16 %v9425
      %v10413 = vunpack.c.l.b16 %v9429
      %v10414 = vunpack.c.l.b16 %v9432
      %v10415 = vunpack.c.l.b16 %v9436
      %v10416 = vunpack.c.l.b16 %v9439
      %v10417 = vpack.c.b16 %v10386, %v10385
      %v10418 = vpack.c.b16 %v10388, %v10387
      %v10419 = vpack.c.b16 %v10390, %v10389
      %v10420 = vpack.c.b16 %v10392, %v10391
      %v10421 = vpack.c.b16 %v10394, %v10393
      %v10422 = vpack.c.b16 %v10396, %v10395
      %v10423 = vpack.c.b16 %v10398, %v10397
      %v10424 = vpack.c.b16 %v10400, %v10399
      %v10425 = vpack.c.b16 %v10402, %v10401
      %v10426 = vpack.c.b16 %v10404, %v10403
      %v10427 = vpack.c.b16 %v10406, %v10405
      %v10428 = vpack.c.b16 %v10408, %v10407
      %v10429 = vpack.c.b16 %v10410, %v10409
      %v10430 = vpack.c.b16 %v10412, %v10411
      %v10431 = vpack.c.b16 %v10414, %v10413
      %v10432 = vpack.c.b16 %v10416, %v10415
      %10433 = vrot.lane.b32.xlu0 %v10417, 64
      %v10434 = vpop.permute.xlu0 %10433
      %10435 = vrot.lane.b32.xlu0 %v10418, 64
      %v10436 = vpop.permute.xlu0 %10435
      %10437 = vrot.lane.b32.xlu0 %v10419, 64
      %v10438 = vpop.permute.xlu0 %10437
      %10439 = vrot.lane.b32.xlu0 %v10420, 64
      %v10440 = vpop.permute.xlu0 %10439
      %10441 = vrot.lane.b32.xlu0 %v10421, 64
      %v10442 = vpop.permute.xlu0 %10441
      %10443 = vrot.lane.b32.xlu0 %v10422, 64
      %v10444 = vpop.permute.xlu0 %10443
      %10445 = vrot.lane.b32.xlu0 %v10423, 64
      %v10446 = vpop.permute.xlu0 %10445
      %10447 = vrot.lane.b32.xlu0 %v10424, 64
      %v10448 = vpop.permute.xlu0 %10447
      %10449 = vrot.lane.b32.xlu0 %v10425, 64
      %v10450 = vpop.permute.xlu0 %10449
      %10451 = vrot.lane.b32.xlu0 %v10426, 64
      %v10452 = vpop.permute.xlu0 %10451
      %10453 = vrot.lane.b32.xlu0 %v10427, 64
      %v10454 = vpop.permute.xlu0 %10453
      %10455 = vrot.lane.b32.xlu0 %v10428, 64
      %v10456 = vpop.permute.xlu0 %10455
      %10457 = vrot.lane.b32.xlu0 %v10429, 64
      %v10458 = vpop.permute.xlu0 %10457
      %10459 = vrot.lane.b32.xlu0 %v10430, 64
      %v10460 = vpop.permute.xlu0 %10459
      %10461 = vrot.lane.b32.xlu0 %v10431, 64
      %v10462 = vpop.permute.xlu0 %10461
      %10463 = vrot.lane.b32.xlu0 %v10432, 64
      %v10464 = vpop.permute.xlu0 %10463
      %v10481 = vunpack.c.l.b16 %v9441
      %v10482 = vunpack.c.l.b16 %v9442
      %v10483 = vunpack.c.l.b16 %v9443
      %v10484 = vunpack.c.l.b16 %v9444
      %v10485 = vunpack.c.l.b16 %v9445
      %v10486 = vunpack.c.l.b16 %v9446
      %v10487 = vunpack.c.l.b16 %v9447
      %v10488 = vunpack.c.l.b16 %v9448
      %v10489 = vunpack.c.l.b16 %v9449
      %v10490 = vunpack.c.l.b16 %v9450
      %v10491 = vunpack.c.l.b16 %v9451
      %v10492 = vunpack.c.l.b16 %v9452
      %v10493 = vunpack.c.l.b16 %v9453
      %v10494 = vunpack.c.l.b16 %v9454
      %v10495 = vunpack.c.l.b16 %v9455
      %v10496 = vunpack.c.l.b16 %v9456
      %v10497 = vunpack.c.l.b16 %v9457
      %v10498 = vunpack.c.l.b16 %v9458
      %v10499 = vunpack.c.l.b16 %v9459
      %v10500 = vunpack.c.l.b16 %v9460
      %v10501 = vunpack.c.l.b16 %v9461
      %v10502 = vunpack.c.l.b16 %v9462
      %v10503 = vunpack.c.l.b16 %v9463
      %v10504 = vunpack.c.l.b16 %v9464
      %v10505 = vunpack.c.l.b16 %v9465
      %v10506 = vunpack.c.l.b16 %v9466
      %v10507 = vunpack.c.l.b16 %v9467
      %v10508 = vunpack.c.l.b16 %v9468
      %v10509 = vunpack.c.l.b16 %v9469
      %v10510 = vunpack.c.l.b16 %v9470
      %v10511 = vunpack.c.l.b16 %v9471
      %v10512 = vunpack.c.l.b16 %v9472
      %v10513 = vpack.c.b16 %v10482, %v10481
      %v10514 = vpack.c.b16 %v10484, %v10483
      %v10515 = vpack.c.b16 %v10486, %v10485
      %v10516 = vpack.c.b16 %v10488, %v10487
      %v10517 = vpack.c.b16 %v10490, %v10489
      %v10518 = vpack.c.b16 %v10492, %v10491
      %v10519 = vpack.c.b16 %v10494, %v10493
      %v10520 = vpack.c.b16 %v10496, %v10495
      %v10521 = vpack.c.b16 %v10498, %v10497
      %v10522 = vpack.c.b16 %v10500, %v10499
      %v10523 = vpack.c.b16 %v10502, %v10501
      %v10524 = vpack.c.b16 %v10504, %v10503
      %v10525 = vpack.c.b16 %v10506, %v10505
      %v10526 = vpack.c.b16 %v10508, %v10507
      %v10527 = vpack.c.b16 %v10510, %v10509
      %v10528 = vpack.c.b16 %v10512, %v10511
      %v10529 = vunpack.c.l.b16 %v9502
      %v10530 = vunpack.c.l.b16 %v9512
      %v10531 = vunpack.c.l.b16 %v9526
      %v10532 = vunpack.c.l.b16 %v9536
      %v10533 = vunpack.c.l.b16 %v9550
      %v10534 = vunpack.c.l.b16 %v9560
      %v10535 = vunpack.c.l.b16 %v9574
      %v10536 = vunpack.c.l.b16 %v9584
      %v10537 = vunpack.c.l.b16 %v9598
      %v10538 = vunpack.c.l.b16 %v9608
      %v10539 = vunpack.c.l.b16 %v9622
      %v10540 = vunpack.c.l.b16 %v9632
      %v10541 = vunpack.c.l.b16 %v9646
      %v10542 = vunpack.c.l.b16 %v9656
      %v10543 = vunpack.c.l.b16 %v9670
      %v10544 = vunpack.c.l.b16 %v9680
      %v10545 = vunpack.c.l.b16 %v9694
      %v10546 = vunpack.c.l.b16 %v9704
      %v10547 = vunpack.c.l.b16 %v9718
      %v10548 = vunpack.c.l.b16 %v9728
      %v10549 = vunpack.c.l.b16 %v9742
      %v10550 = vunpack.c.l.b16 %v9752
      %v10551 = vunpack.c.l.b16 %v9766
      %v10552 = vunpack.c.l.b16 %v9776
      %v10553 = vunpack.c.l.b16 %v9790
      %v10554 = vunpack.c.l.b16 %v9800
      %v10555 = vunpack.c.l.b16 %v9814
      %v10556 = vunpack.c.l.b16 %v9824
      %v10557 = vunpack.c.l.b16 %v9838
      %v10558 = vunpack.c.l.b16 %v9848
      %v10559 = vunpack.c.l.b16 %v9862
      %v10560 = vunpack.c.l.b16 %v9872
      %v10561 = vpack.c.b16 %v10530, %v10529
      %v10562 = vpack.c.b16 %v10532, %v10531
      %v10563 = vpack.c.b16 %v10534, %v10533
      %v10564 = vpack.c.b16 %v10536, %v10535
      %v10565 = vpack.c.b16 %v10538, %v10537
      %v10566 = vpack.c.b16 %v10540, %v10539
      %v10567 = vpack.c.b16 %v10542, %v10541
      %v10568 = vpack.c.b16 %v10544, %v10543
      %v10569 = vpack.c.b16 %v10546, %v10545
      %v10570 = vpack.c.b16 %v10548, %v10547
      %v10571 = vpack.c.b16 %v10550, %v10549
      %v10572 = vpack.c.b16 %v10552, %v10551
      %v10573 = vpack.c.b16 %v10554, %v10553
      %v10574 = vpack.c.b16 %v10556, %v10555
      %v10575 = vpack.c.b16 %v10558, %v10557
      %v10576 = vpack.c.b16 %v10560, %v10559
      %10577 = vrot.lane.b32.xlu0 %v10561, 64
      %v10578 = vpop.permute.xlu0 %10577
      %10579 = vrot.lane.b32.xlu0 %v10562, 64
      %v10580 = vpop.permute.xlu0 %10579
      %10581 = vrot.lane.b32.xlu0 %v10563, 64
      %v10582 = vpop.permute.xlu0 %10581
      %10583 = vrot.lane.b32.xlu0 %v10564, 64
      %v10584 = vpop.permute.xlu0 %10583
      %10585 = vrot.lane.b32.xlu0 %v10565, 64
      %v10586 = vpop.permute.xlu0 %10585
      %10587 = vrot.lane.b32.xlu0 %v10566, 64
      %v10588 = vpop.permute.xlu0 %10587
      %10589 = vrot.lane.b32.xlu0 %v10567, 64
      %v10590 = vpop.permute.xlu0 %10589
      %10591 = vrot.lane.b32.xlu0 %v10568, 64
      %v10592 = vpop.permute.xlu0 %10591
      %10593 = vrot.lane.b32.xlu0 %v10569, 64
      %v10594 = vpop.permute.xlu0 %10593
      %10595 = vrot.lane.b32.xlu0 %v10570, 64
      %v10596 = vpop.permute.xlu0 %10595
      %10597 = vrot.lane.b32.xlu0 %v10571, 64
      %v10598 = vpop.permute.xlu0 %10597
      %10599 = vrot.lane.b32.xlu0 %v10572, 64
      %v10600 = vpop.permute.xlu0 %10599
      %10601 = vrot.lane.b32.xlu0 %v10573, 64
      %v10602 = vpop.permute.xlu0 %10601
      %10603 = vrot.lane.b32.xlu0 %v10574, 64
      %v10604 = vpop.permute.xlu0 %10603
      %10605 = vrot.lane.b32.xlu0 %v10575, 64
      %v10606 = vpop.permute.xlu0 %10605
      %10607 = vrot.lane.b32.xlu0 %v10576, 64
      %v10608 = vpop.permute.xlu0 %10607
      %v10609 = vunpack.c.l.b16 %v9940
      %v10610 = vunpack.c.l.b16 %v9943
      %v10611 = vunpack.c.l.b16 %v9947
      %v10612 = vunpack.c.l.b16 %v9950
      %v10613 = vunpack.c.l.b16 %v9954
      %v10614 = vunpack.c.l.b16 %v9957
      %v10615 = vunpack.c.l.b16 %v9961
      %v10616 = vunpack.c.l.b16 %v9964
      %v10617 = vunpack.c.l.b16 %v9968
      %v10618 = vunpack.c.l.b16 %v9971
      %v10619 = vunpack.c.l.b16 %v9975
      %v10620 = vunpack.c.l.b16 %v9978
      %v10621 = vunpack.c.l.b16 %v9982
      %v10622 = vunpack.c.l.b16 %v9985
      %v10623 = vunpack.c.l.b16 %v9989
      %v10624 = vunpack.c.l.b16 %v9992
      %v10625 = vunpack.c.l.b16 %v9996
      %v10626 = vunpack.c.l.b16 %v9999
      %v10627 = vunpack.c.l.b16 %v10003
      %v10628 = vunpack.c.l.b16 %v10006
      %v10629 = vunpack.c.l.b16 %v10010
      %v10630 = vunpack.c.l.b16 %v10013
      %v10631 = vunpack.c.l.b16 %v10017
      %v10632 = vunpack.c.l.b16 %v10020
      %v10633 = vunpack.c.l.b16 %v10024
      %v10634 = vunpack.c.l.b16 %v10027
      %v10635 = vunpack.c.l.b16 %v10031
      %v10636 = vunpack.c.l.b16 %v10034
      %v10637 = vunpack.c.l.b16 %v10038
      %v10638 = vunpack.c.l.b16 %v10041
      %v10639 = vunpack.c.l.b16 %v10045
      %v10640 = vunpack.c.l.b16 %v10048
      %v10641 = vpack.c.b16 %v10610, %v10609
      %v10642 = vpack.c.b16 %v10612, %v10611
      %v10643 = vpack.c.b16 %v10614, %v10613
      %v10644 = vpack.c.b16 %v10616, %v10615
      %v10645 = vpack.c.b16 %v10618, %v10617
      %v10646 = vpack.c.b16 %v10620, %v10619
      %v10647 = vpack.c.b16 %v10622, %v10621
      %v10648 = vpack.c.b16 %v10624, %v10623
      %v10649 = vpack.c.b16 %v10626, %v10625
      %v10650 = vpack.c.b16 %v10628, %v10627
      %v10651 = vpack.c.b16 %v10630, %v10629
      %v10652 = vpack.c.b16 %v10632, %v10631
      %v10653 = vpack.c.b16 %v10634, %v10633
      %v10654 = vpack.c.b16 %v10636, %v10635
      %v10655 = vpack.c.b16 %v10638, %v10637
      %v10656 = vpack.c.b16 %v10640, %v10639
      %v10659 = vsel %vm6994, %v10097, %v10162
      %v10663 = vsel %vm6994, %v10098, %v10164
      %v10667 = vsel %vm6994, %v10099, %v10166
      %v10671 = vsel %vm6994, %v10100, %v10168
      %v10675 = vsel %vm6994, %v10101, %v10170
      %v10679 = vsel %vm6994, %v10102, %v10172
      %v10683 = vsel %vm6994, %v10103, %v10174
      %v10687 = vsel %vm6994, %v10104, %v10176
      %v10691 = vsel %vm6994, %v10105, %v10178
      %v10695 = vsel %vm6994, %v10106, %v10180
      %v10699 = vsel %vm6994, %v10107, %v10182
      %v10703 = vsel %vm6994, %v10108, %v10184
      %v10707 = vsel %vm6994, %v10109, %v10186
      %v10711 = vsel %vm6994, %v10110, %v10188
      %v10715 = vsel %vm6994, %v10111, %v10190
      %v10719 = vsel %vm6994, %v10112, %v10192
      %v10723 = vsel %vm6994, %v10225, %v10306
      %v10727 = vsel %vm6994, %v10226, %v10308
      %v10731 = vsel %vm6994, %v10227, %v10310
      %v10735 = vsel %vm6994, %v10228, %v10312
      %v10739 = vsel %vm6994, %v10229, %v10314
      %v10743 = vsel %vm6994, %v10230, %v10316
      %v10747 = vsel %vm6994, %v10231, %v10318
      %v10751 = vsel %vm6994, %v10232, %v10320
      %v10755 = vsel %vm6994, %v10233, %v10322
      %v10759 = vsel %vm6994, %v10234, %v10324
      %v10763 = vsel %vm6994, %v10235, %v10326
      %v10767 = vsel %vm6994, %v10236, %v10328
      %v10771 = vsel %vm6994, %v10237, %v10330
      %v10775 = vsel %vm6994, %v10238, %v10332
      %v10779 = vsel %vm6994, %v10239, %v10334
      %v10783 = vsel %vm6994, %v10240, %v10336
      %v10787 = vsel %vm6994, %v10369, %v10434
      %v10791 = vsel %vm6994, %v10370, %v10436
      %v10795 = vsel %vm6994, %v10371, %v10438
      %v10799 = vsel %vm6994, %v10372, %v10440
      %v10803 = vsel %vm6994, %v10373, %v10442
      %v10807 = vsel %vm6994, %v10374, %v10444
      %v10811 = vsel %vm6994, %v10375, %v10446
      %v10815 = vsel %vm6994, %v10376, %v10448
      %v10819 = vsel %vm6994, %v10377, %v10450
      %v10823 = vsel %vm6994, %v10378, %v10452
      %v10827 = vsel %vm6994, %v10379, %v10454
      %v10831 = vsel %vm6994, %v10380, %v10456
      %v10835 = vsel %vm6994, %v10381, %v10458
      %v10839 = vsel %vm6994, %v10382, %v10460
      %v10843 = vsel %vm6994, %v10383, %v10462
      %v10847 = vsel %vm6994, %v10384, %v10464
      %v10851 = vsel %vm6994, %v10513, %v10578
      %v10855 = vsel %vm6994, %v10514, %v10580
      %v10859 = vsel %vm6994, %v10515, %v10582
      %v10863 = vsel %vm6994, %v10516, %v10584
      %v10867 = vsel %vm6994, %v10517, %v10586
      %v10871 = vsel %vm6994, %v10518, %v10588
      %v10875 = vsel %vm6994, %v10519, %v10590
      %v10879 = vsel %vm6994, %v10520, %v10592
      %v10883 = vsel %vm6994, %v10521, %v10594
      %v10887 = vsel %vm6994, %v10522, %v10596
      %v10891 = vsel %vm6994, %v10523, %v10598
      %v10895 = vsel %vm6994, %v10524, %v10600
      %v10899 = vsel %vm6994, %v10525, %v10602
      %v10903 = vsel %vm6994, %v10526, %v10604
      %v10907 = vsel %vm6994, %v10527, %v10606
      %v10911 = vsel %vm6994, %v10528, %v10608
      %v10913 = vld [vmem:[%s5] sm:$0xf]
      %v10914 = vld [vmem:[%s5 + $0x4] sm:$0xf]
      %v10915 = vld [vmem:[%s5 + $0x8] sm:$0xf]
      %v10916 = vld [vmem:[%s5 + $0xc] sm:$0xf]
      %v10917 = vld [vmem:[%s5 + $0x10] sm:$0xf]
      %v10918 = vld [vmem:[%s5 + $0x14] sm:$0xf]
      %v10919 = vld [vmem:[%s5 + $0x18] sm:$0xf]
      %v10920 = vld [vmem:[%s5 + $0x1c] sm:$0xf]
      %v10921 = vld [vmem:[%s5 + $0x20] sm:$0xf]
      %v10922 = vld [vmem:[%s5 + $0x24] sm:$0xf]
      %v10923 = vld [vmem:[%s5 + $0x28] sm:$0xf]
      %v10924 = vld [vmem:[%s5 + $0x2c] sm:$0xf]
      %v10925 = vld [vmem:[%s5 + $0x30] sm:$0xf]
      %v10926 = vld [vmem:[%s5 + $0x34] sm:$0xf]
      %v10927 = vld [vmem:[%s5 + $0x38] sm:$0xf]
      %v10928 = vld [vmem:[%s5 + $0x3c] sm:$0xf]
      %v10929 = vld [vmem:[%s5 + $0x40] sm:$0xf]
      %v10930 = vld [vmem:[%s5 + $0x44] sm:$0xf]
      %v10931 = vld [vmem:[%s5 + $0x48] sm:$0xf]
      %v10932 = vld [vmem:[%s5 + $0x4c] sm:$0xf]
      %v10933 = vld [vmem:[%s5 + $0x50] sm:$0xf]
      %v10934 = vld [vmem:[%s5 + $0x54] sm:$0xf]
      %v10935 = vld [vmem:[%s5 + $0x58] sm:$0xf]
      %v10936 = vld [vmem:[%s5 + $0x5c] sm:$0xf]
      %v10937 = vld [vmem:[%s5 + $0x60] sm:$0xf]
      %v10938 = vld [vmem:[%s5 + $0x64] sm:$0xf]
      %v10939 = vld [vmem:[%s5 + $0x68] sm:$0xf]
      %v10940 = vld [vmem:[%s5 + $0x6c] sm:$0xf]
      %v10941 = vld [vmem:[%s5 + $0x70] sm:$0xf]
      %v10942 = vld [vmem:[%s5 + $0x74] sm:$0xf]
      %v10943 = vld [vmem:[%s5 + $0x78] sm:$0xf]
      %v10944 = vld [vmem:[%s5 + $0x7c] sm:$0xf]
      %v10945 = vld [vmem:[%s5 + $0x80] sm:$0xf]
      %v10946 = vld [vmem:[%s5 + $0x84] sm:$0xf]
      %v10947 = vld [vmem:[%s5 + $0x88] sm:$0xf]
      %v10948 = vld [vmem:[%s5 + $0x8c] sm:$0xf]
      %v10949 = vld [vmem:[%s5 + $0x90] sm:$0xf]
      %v10950 = vld [vmem:[%s5 + $0x94] sm:$0xf]
      %v10951 = vld [vmem:[%s5 + $0x98] sm:$0xf]
      %v10952 = vld [vmem:[%s5 + $0x9c] sm:$0xf]
      %v10953 = vld [vmem:[%s5 + $0xa0] sm:$0xf]
      %v10954 = vld [vmem:[%s5 + $0xa4] sm:$0xf]
      %v10955 = vld [vmem:[%s5 + $0xa8] sm:$0xf]
      %v10956 = vld [vmem:[%s5 + $0xac] sm:$0xf]
      %v10957 = vld [vmem:[%s5 + $0xb0] sm:$0xf]
      %v10958 = vld [vmem:[%s5 + $0xb4] sm:$0xf]
      %v10959 = vld [vmem:[%s5 + $0xb8] sm:$0xf]
      %v10960 = vld [vmem:[%s5 + $0xbc] sm:$0xf]
      %v10961 = vld [vmem:[%s5 + $0xc0] sm:$0xf]
      %v10962 = vld [vmem:[%s5 + $0xc4] sm:$0xf]
      %v10963 = vld [vmem:[%s5 + $0xc8] sm:$0xf]
      %v10964 = vld [vmem:[%s5 + $0xcc] sm:$0xf]
      %v10965 = vld [vmem:[%s5 + $0xd0] sm:$0xf]
      %v10966 = vld [vmem:[%s5 + $0xd4] sm:$0xf]
      %v10967 = vld [vmem:[%s5 + $0xd8] sm:$0xf]
      %v10968 = vld [vmem:[%s5 + $0xdc] sm:$0xf]
      %v10969 = vld [vmem:[%s5 + $0xe0] sm:$0xf]
      %v10970 = vld [vmem:[%s5 + $0xe4] sm:$0xf]
      %v10971 = vld [vmem:[%s5 + $0xe8] sm:$0xf]
      %v10972 = vld [vmem:[%s5 + $0xec] sm:$0xf]
      %v10973 = vld [vmem:[%s5 + $0xf0] sm:$0xf]
      %v10974 = vld [vmem:[%s5 + $0xf4] sm:$0xf]
      %v10975 = vld [vmem:[%s5 + $0xf8] sm:$0xf]
      %v10976 = vld [vmem:[%s5 + $0xfc] sm:$0xf]
      %v10977 = vld [vmem:[%s5 + $0x100] sm:$0xf]
      %v10978 = vld [vmem:[%s5 + $0x104] sm:$0xf]
      %v10979 = vld [vmem:[%s5 + $0x108] sm:$0xf]
      %v10980 = vld [vmem:[%s5 + $0x10c] sm:$0xf]
      %v10981 = vld [vmem:[%s5 + $0x110] sm:$0xf]
      %v10982 = vld [vmem:[%s5 + $0x114] sm:$0xf]
      %v10983 = vld [vmem:[%s5 + $0x118] sm:$0xf]
      %v10984 = vld [vmem:[%s5 + $0x11c] sm:$0xf]
      %v10985 = vld [vmem:[%s6] sm:$0x1]
      %v10987 = vperm.slane %v10985, 0
      %v11061 = vunpack.c.l.b16 %v10913
      %v11062 = vunpack.c.l.b16 %v10914
      %v11063 = vunpack.c.l.b16 %v10915
      %v11064 = vunpack.c.l.b16 %v10916
      %v11065 = vunpack.c.l.b16 %v10917
      %v11066 = vunpack.c.l.b16 %v10918
      %v11067 = vunpack.c.l.b16 %v10919
      %v11068 = vunpack.c.l.b16 %v10920
      %v11069 = vunpack.c.l.b16 %v10921
      %v11070 = vunpack.c.l.b16 %v10922
      %v11071 = vunpack.c.l.b16 %v10923
      %v11072 = vunpack.c.l.b16 %v10924
      %v11073 = vunpack.c.l.b16 %v10925
      %v11074 = vunpack.c.l.b16 %v10926
      %v11075 = vunpack.c.l.b16 %v10927
      %v11076 = vunpack.c.l.b16 %v10928
      %v11077 = vunpack.c.l.b16 %v10929
      %v11078 = vunpack.c.l.b16 %v10930
      %v11079 = vunpack.c.l.b16 %v10931
      %v11080 = vunpack.c.l.b16 %v10932
      %v11081 = vunpack.c.l.b16 %v10933
      %v11082 = vunpack.c.l.b16 %v10934
      %v11083 = vunpack.c.l.b16 %v10935
      %v11084 = vunpack.c.l.b16 %v10936
      %v11085 = vunpack.c.l.b16 %v10937
      %v11086 = vunpack.c.l.b16 %v10938
      %v11087 = vunpack.c.l.b16 %v10939
      %v11088 = vunpack.c.l.b16 %v10940
      %v11089 = vunpack.c.l.b16 %v10941
      %v11090 = vunpack.c.l.b16 %v10942
      %v11091 = vunpack.c.l.b16 %v10943
      %v11092 = vunpack.c.l.b16 %v10944
      %v11093 = vunpack.c.l.b16 %v10945
      %v11094 = vunpack.c.l.b16 %v10946
      %v11095 = vunpack.c.l.b16 %v10947
      %v11096 = vunpack.c.l.b16 %v10948
      %v11097 = vunpack.c.l.b16 %v10949
      %v11098 = vunpack.c.l.b16 %v10950
      %v11099 = vunpack.c.l.b16 %v10951
      %v11100 = vunpack.c.l.b16 %v10952
      %v11101 = vunpack.c.l.b16 %v10953
      %v11102 = vunpack.c.l.b16 %v10954
      %v11103 = vunpack.c.l.b16 %v10955
      %v11104 = vunpack.c.l.b16 %v10956
      %v11105 = vunpack.c.l.b16 %v10957
      %v11106 = vunpack.c.l.b16 %v10958
      %v11107 = vunpack.c.l.b16 %v10959
      %v11108 = vunpack.c.l.b16 %v10960
      %v11109 = vunpack.c.l.b16 %v10961
      %v11110 = vunpack.c.l.b16 %v10962
      %v11111 = vunpack.c.l.b16 %v10963
      %v11112 = vunpack.c.l.b16 %v10964
      %v11113 = vunpack.c.l.b16 %v10965
      %v11114 = vunpack.c.l.b16 %v10966
      %v11115 = vunpack.c.l.b16 %v10967
      %v11116 = vunpack.c.l.b16 %v10968
      %v11117 = vunpack.c.l.b16 %v10969
      %v11118 = vunpack.c.l.b16 %v10970
      %v11119 = vunpack.c.l.b16 %v10971
      %v11120 = vunpack.c.l.b16 %v10972
      %v11121 = vunpack.c.l.b16 %v10973
      %v11122 = vunpack.c.l.b16 %v10974
      %v11123 = vunpack.c.l.b16 %v10975
      %v11124 = vunpack.c.l.b16 %v10976
      %v11125 = vunpack.c.l.b16 %v10977
      %v11126 = vunpack.c.l.b16 %v10978
      %v11127 = vunpack.c.l.b16 %v10979
      %v11128 = vunpack.c.l.b16 %v10980
      %v11129 = vunpack.c.l.b16 %v10981
      %v11130 = vunpack.c.l.b16 %v10982
      %v11131 = vunpack.c.l.b16 %v10983
      %v11132 = vunpack.c.l.b16 %v10984
      %v11133 = vpack.c.b16 %v11062, %v11061
      %v11134 = vpack.c.b16 %v11064, %v11063
      %v11135 = vpack.c.b16 %v11066, %v11065
      %v11136 = vpack.c.b16 %v11068, %v11067
      %v11137 = vpack.c.b16 %v11070, %v11069
      %v11138 = vpack.c.b16 %v11072, %v11071
      %v11139 = vpack.c.b16 %v11074, %v11073
      %v11140 = vpack.c.b16 %v11076, %v11075
      %v11141 = vpack.c.b16 %v11078, %v11077
      %v11142 = vpack.c.b16 %v11080, %v11079
      %v11143 = vpack.c.b16 %v11082, %v11081
      %v11144 = vpack.c.b16 %v11084, %v11083
      %v11145 = vpack.c.b16 %v11086, %v11085
      %v11146 = vpack.c.b16 %v11088, %v11087
      %v11147 = vpack.c.b16 %v11090, %v11089
      %v11148 = vpack.c.b16 %v11092, %v11091
      %v11149 = vpack.c.b16 %v11094, %v11093
      %v11150 = vpack.c.b16 %v11096, %v11095
      %v11151 = vpack.c.b16 %v11098, %v11097
      %v11152 = vpack.c.b16 %v11100, %v11099
      %v11153 = vpack.c.b16 %v11102, %v11101
      %v11154 = vpack.c.b16 %v11104, %v11103
      %v11155 = vpack.c.b16 %v11106, %v11105
      %v11156 = vpack.c.b16 %v11108, %v11107
      %v11157 = vpack.c.b16 %v11110, %v11109
      %v11158 = vpack.c.b16 %v11112, %v11111
      %v11159 = vpack.c.b16 %v11114, %v11113
      %v11160 = vpack.c.b16 %v11116, %v11115
      %v11161 = vpack.c.b16 %v11118, %v11117
      %v11162 = vpack.c.b16 %v11120, %v11119
      %v11163 = vpack.c.b16 %v11122, %v11121
      %v11164 = vpack.c.b16 %v11124, %v11123
      %v11165 = vpack.c.b16 %v11126, %v11125
      %v11166 = vpack.c.b16 %v11128, %v11127
      %v11167 = vpack.c.b16 %v11130, %v11129
      %v11168 = vpack.c.b16 %v11132, %v11131
      %v11206 = vsel %vm6994, %v10641, 0
      %v11209 = vsel %vm6994, %v10642, 0
      %v11212 = vsel %vm6994, %v10643, 0
      %v11215 = vsel %vm6994, %v10644, 0
      %v11218 = vsel %vm6994, %v10645, 0
      %v11221 = vsel %vm6994, %v10646, 0
      %v11224 = vsel %vm6994, %v10647, 0
      %v11227 = vsel %vm6994, %v10648, 0
      %v11230 = vsel %vm6994, %v10649, 0
      %v11233 = vsel %vm6994, %v10650, 0
      %v11236 = vsel %vm6994, %v10651, 0
      %v11239 = vsel %vm6994, %v10652, 0
      %v11242 = vsel %vm6994, %v10653, 0
      %v11245 = vsel %vm6994, %v10654, 0
      %v11248 = vsel %vm6994, %v10655, 0
      %v11251 = vsel %vm6994, %v10656, 0
      %11253 = vmatpush.bf16.msra.mxu0 %v11140
      %11254 = vmatpush.bf16.msra.mxu0 %v11139
      %11255 = vmatpush.bf16.msra.mxu0 %v11138
      %11256 = vmatpush.bf16.msra.mxu0 %v11137
      %11257 = vmatpush.bf16.msra.mxu0 %v11136
      %11258 = vmatpush.bf16.msra.mxu0 %v11135
      %11259 = vmatpush.bf16.msra.mxu0 %v11134
      %11260 = vmatpush.bf16.msra.mxu0 %v11133
      %11261 = vmatmul.bf16.gmra.mxu0 %v10659
      %v11262 = vpop.f32.mrf.mxu0
      %v11263 = vadd.f32 %v10987, %v11262
      %v11264 = vpop.f32.mrf.mxu0
      %v11265 = vadd.f32 %v10987, %v11264
      %11266 = vmatmul.bf16.gmra.mxu0 %v10663
      %v11267 = vpop.f32.mrf.mxu0
      %v11268 = vadd.f32 %v10987, %v11267
      %v11269 = vpop.f32.mrf.mxu0
      %v11270 = vadd.f32 %v10987, %v11269
      %11271 = vmatmul.bf16.gmra.mxu0 %v10667
      %v11272 = vpop.f32.mrf.mxu0
      %v11273 = vadd.f32 %v10987, %v11272
      %v11274 = vpop.f32.mrf.mxu0
      %v11275 = vadd.f32 %v10987, %v11274
      %11276 = vmatmul.bf16.gmra.mxu0 %v10671
      %v11277 = vpop.f32.mrf.mxu0
      %v11278 = vadd.f32 %v10987, %v11277
      %v11279 = vpop.f32.mrf.mxu0
      %v11280 = vadd.f32 %v10987, %v11279
      %11281 = vmatmul.bf16.gmra.mxu0 %v10675
      %v11282 = vpop.f32.mrf.mxu0
      %v11283 = vadd.f32 %v10987, %v11282
      %v11284 = vpop.f32.mrf.mxu0
      %v11285 = vadd.f32 %v10987, %v11284
      %11286 = vmatmul.bf16.gmra.mxu0 %v10679
      %v11287 = vpop.f32.mrf.mxu0
      %v11288 = vadd.f32 %v10987, %v11287
      %v11289 = vpop.f32.mrf.mxu0
      %v11290 = vadd.f32 %v10987, %v11289
      %11291 = vmatmul.bf16.gmra.mxu0 %v10683
      %v11292 = vpop.f32.mrf.mxu0
      %v11293 = vadd.f32 %v10987, %v11292
      %v11294 = vpop.f32.mrf.mxu0
      %v11295 = vadd.f32 %v10987, %v11294
      %11296 = vmatmul.bf16.gmra.mxu0 %v10687
      %v11297 = vpop.f32.mrf.mxu0
      %v11298 = vadd.f32 %v10987, %v11297
      %v11299 = vpop.f32.mrf.mxu0
      %v11300 = vadd.f32 %v10987, %v11299
      %11301 = vmatmul.bf16.gmra.mxu0 %v10691
      %v11302 = vpop.f32.mrf.mxu0
      %v11303 = vadd.f32 %v10987, %v11302
      %v11304 = vpop.f32.mrf.mxu0
      %v11305 = vadd.f32 %v10987, %v11304
      %11306 = vmatmul.bf16.gmra.mxu0 %v10695
      %v11307 = vpop.f32.mrf.mxu0
      %v11308 = vadd.f32 %v10987, %v11307
      %v11309 = vpop.f32.mrf.mxu0
      %v11310 = vadd.f32 %v10987, %v11309
      %11311 = vmatmul.bf16.gmra.mxu0 %v10699
      %v11312 = vpop.f32.mrf.mxu0
      %v11313 = vadd.f32 %v10987, %v11312
      %v11314 = vpop.f32.mrf.mxu0
      %v11315 = vadd.f32 %v10987, %v11314
      %11316 = vmatmul.bf16.gmra.mxu0 %v10703
      %v11317 = vpop.f32.mrf.mxu0
      %v11318 = vadd.f32 %v10987, %v11317
      %v11319 = vpop.f32.mrf.mxu0
      %v11320 = vadd.f32 %v10987, %v11319
      %11321 = vmatmul.bf16.gmra.mxu0 %v10707
      %v11322 = vpop.f32.mrf.mxu0
      %v11323 = vadd.f32 %v10987, %v11322
      %v11324 = vpop.f32.mrf.mxu0
      %v11325 = vadd.f32 %v10987, %v11324
      %11326 = vmatmul.bf16.gmra.mxu0 %v10711
      %v11327 = vpop.f32.mrf.mxu0
      %v11328 = vadd.f32 %v10987, %v11327
      %v11329 = vpop.f32.mrf.mxu0
      %v11330 = vadd.f32 %v10987, %v11329
      %11331 = vmatmul.bf16.gmra.mxu0 %v10715
      %v11332 = vpop.f32.mrf.mxu0
      %v11333 = vadd.f32 %v10987, %v11332
      %v11334 = vpop.f32.mrf.mxu0
      %v11335 = vadd.f32 %v10987, %v11334
      %11336 = vmatmul.bf16.gmra.mxu0 %v10719
      %v11337 = vpop.f32.mrf.mxu0
      %v11338 = vadd.f32 %v10987, %v11337
      %v11339 = vpop.f32.mrf.mxu0
      %v11340 = vadd.f32 %v10987, %v11339
      %11341 = vdwg.mxu0
      %11342 = vmatpush.bf16.msra.mxu0 %v11148
      %11343 = vmatpush.bf16.msra.mxu0 %v11147
      %11344 = vmatpush.bf16.msra.mxu0 %v11146
      %11345 = vmatpush.bf16.msra.mxu0 %v11145
      %11346 = vmatpush.bf16.msra.mxu0 %v11144
      %11347 = vmatpush.bf16.msra.mxu0 %v11143
      %11348 = vmatpush.bf16.msra.mxu0 %v11142
      %11349 = vmatpush.bf16.msra.mxu0 %v11141
      %11350 = vmatmul.bf16.gmra.mxu0 %v10723
      %v11351 = vpop.f32.mrf.mxu0
      %v11352 = vadd.f32 %v11263, %v11351
      %v11353 = vpop.f32.mrf.mxu0
      %v11354 = vadd.f32 %v11265, %v11353
      %11355 = vmatmul.bf16.gmra.mxu0 %v10727
      %v11356 = vpop.f32.mrf.mxu0
      %v11357 = vadd.f32 %v11268, %v11356
      %v11358 = vpop.f32.mrf.mxu0
      %v11359 = vadd.f32 %v11270, %v11358
      %11360 = vmatmul.bf16.gmra.mxu0 %v10731
      %v11361 = vpop.f32.mrf.mxu0
      %v11362 = vadd.f32 %v11273, %v11361
      %v11363 = vpop.f32.mrf.mxu0
      %v11364 = vadd.f32 %v11275, %v11363
      %11365 = vmatmul.bf16.gmra.mxu0 %v10735
      %v11366 = vpop.f32.mrf.mxu0
      %v11367 = vadd.f32 %v11278, %v11366
      %v11368 = vpop.f32.mrf.mxu0
      %v11369 = vadd.f32 %v11280, %v11368
      %11370 = vmatmul.bf16.gmra.mxu0 %v10739
      %v11371 = vpop.f32.mrf.mxu0
      %v11372 = vadd.f32 %v11283, %v11371
      %v11373 = vpop.f32.mrf.mxu0
      %v11374 = vadd.f32 %v11285, %v11373
      %11375 = vmatmul.bf16.gmra.mxu0 %v10743
      %v11376 = vpop.f32.mrf.mxu0
      %v11377 = vadd.f32 %v11288, %v11376
      %v11378 = vpop.f32.mrf.mxu0
      %v11379 = vadd.f32 %v11290, %v11378
      %11380 = vmatmul.bf16.gmra.mxu0 %v10747
      %v11381 = vpop.f32.mrf.mxu0
      %v11382 = vadd.f32 %v11293, %v11381
      %v11383 = vpop.f32.mrf.mxu0
      %v11384 = vadd.f32 %v11295, %v11383
      %11385 = vmatmul.bf16.gmra.mxu0 %v10751
      %v11386 = vpop.f32.mrf.mxu0
      %v11387 = vadd.f32 %v11298, %v11386
      %v11388 = vpop.f32.mrf.mxu0
      %v11389 = vadd.f32 %v11300, %v11388
      %11390 = vmatmul.bf16.gmra.mxu0 %v10755
      %v11391 = vpop.f32.mrf.mxu0
      %v11392 = vadd.f32 %v11303, %v11391
      %v11393 = vpop.f32.mrf.mxu0
      %v11394 = vadd.f32 %v11305, %v11393
      %11395 = vmatmul.bf16.gmra.mxu0 %v10759
      %v11396 = vpop.f32.mrf.mxu0
      %v11397 = vadd.f32 %v11308, %v11396
      %v11398 = vpop.f32.mrf.mxu0
      %v11399 = vadd.f32 %v11310, %v11398
      %11400 = vmatmul.bf16.gmra.mxu0 %v10763
      %v11401 = vpop.f32.mrf.mxu0
      %v11402 = vadd.f32 %v11313, %v11401
      %v11403 = vpop.f32.mrf.mxu0
      %v11404 = vadd.f32 %v11315, %v11403
      %11405 = vmatmul.bf16.gmra.mxu0 %v10767
      %v11406 = vpop.f32.mrf.mxu0
      %v11407 = vadd.f32 %v11318, %v11406
      %v11408 = vpop.f32.mrf.mxu0
      %v11409 = vadd.f32 %v11320, %v11408
      %11410 = vmatmul.bf16.gmra.mxu0 %v10771
      %v11411 = vpop.f32.mrf.mxu0
      %v11412 = vadd.f32 %v11323, %v11411
      %v11413 = vpop.f32.mrf.mxu0
      %v11414 = vadd.f32 %v11325, %v11413
      %11415 = vmatmul.bf16.gmra.mxu0 %v10775
      %v11416 = vpop.f32.mrf.mxu0
      %v11417 = vadd.f32 %v11328, %v11416
      %v11418 = vpop.f32.mrf.mxu0
      %v11419 = vadd.f32 %v11330, %v11418
      %11420 = vmatmul.bf16.gmra.mxu0 %v10779
      %v11421 = vpop.f32.mrf.mxu0
      %v11422 = vadd.f32 %v11333, %v11421
      %v11423 = vpop.f32.mrf.mxu0
      %v11424 = vadd.f32 %v11335, %v11423
      %11425 = vmatmul.bf16.gmra.mxu0 %v10783
      %v11426 = vpop.f32.mrf.mxu0
      %v11427 = vadd.f32 %v11338, %v11426
      %v11428 = vpop.f32.mrf.mxu0
      %v11429 = vadd.f32 %v11340, %v11428
      %11430 = vdwg.mxu0
      %11431 = vmatpush.bf16.msra.mxu0 %v11156
      %11432 = vmatpush.bf16.msra.mxu0 %v11155
      %11433 = vmatpush.bf16.msra.mxu0 %v11154
      %11434 = vmatpush.bf16.msra.mxu0 %v11153
      %11435 = vmatpush.bf16.msra.mxu0 %v11152
      %11436 = vmatpush.bf16.msra.mxu0 %v11151
      %11437 = vmatpush.bf16.msra.mxu0 %v11150
      %11438 = vmatpush.bf16.msra.mxu0 %v11149
      %11439 = vmatmul.bf16.gmra.mxu0 %v10787
      %v11440 = vpop.f32.mrf.mxu0
      %v11441 = vadd.f32 %v11352, %v11440
      %v11442 = vpop.f32.mrf.mxu0
      %v11443 = vadd.f32 %v11354, %v11442
      %11444 = vmatmul.bf16.gmra.mxu0 %v10791
      %v11445 = vpop.f32.mrf.mxu0
      %v11446 = vadd.f32 %v11357, %v11445
      %v11447 = vpop.f32.mrf.mxu0
      %v11448 = vadd.f32 %v11359, %v11447
      %11449 = vmatmul.bf16.gmra.mxu0 %v10795
      %v11450 = vpop.f32.mrf.mxu0
      %v11451 = vadd.f32 %v11362, %v11450
      %v11452 = vpop.f32.mrf.mxu0
      %v11453 = vadd.f32 %v11364, %v11452
      %11454 = vmatmul.bf16.gmra.mxu0 %v10799
      %v11455 = vpop.f32.mrf.mxu0
      %v11456 = vadd.f32 %v11367, %v11455
      %v11457 = vpop.f32.mrf.mxu0
      %v11458 = vadd.f32 %v11369, %v11457
      %11459 = vmatmul.bf16.gmra.mxu0 %v10803
      %v11460 = vpop.f32.mrf.mxu0
      %v11461 = vadd.f32 %v11372, %v11460
      %v11462 = vpop.f32.mrf.mxu0
      %v11463 = vadd.f32 %v11374, %v11462
      %11464 = vmatmul.bf16.gmra.mxu0 %v10807
      %v11465 = vpop.f32.mrf.mxu0
      %v11466 = vadd.f32 %v11377, %v11465
      %v11467 = vpop.f32.mrf.mxu0
      %v11468 = vadd.f32 %v11379, %v11467
      %11469 = vmatmul.bf16.gmra.mxu0 %v10811
      %v11470 = vpop.f32.mrf.mxu0
      %v11471 = vadd.f32 %v11382, %v11470
      %v11472 = vpop.f32.mrf.mxu0
      %v11473 = vadd.f32 %v11384, %v11472
      %11474 = vmatmul.bf16.gmra.mxu0 %v10815
      %v11475 = vpop.f32.mrf.mxu0
      %v11476 = vadd.f32 %v11387, %v11475
      %v11477 = vpop.f32.mrf.mxu0
      %v11478 = vadd.f32 %v11389, %v11477
      %11479 = vmatmul.bf16.gmra.mxu0 %v10819
      %v11480 = vpop.f32.mrf.mxu0
      %v11481 = vadd.f32 %v11392, %v11480
      %v11482 = vpop.f32.mrf.mxu0
      %v11483 = vadd.f32 %v11394, %v11482
      %11484 = vmatmul.bf16.gmra.mxu0 %v10823
      %v11485 = vpop.f32.mrf.mxu0
      %v11486 = vadd.f32 %v11397, %v11485
      %v11487 = vpop.f32.mrf.mxu0
      %v11488 = vadd.f32 %v11399, %v11487
      %11489 = vmatmul.bf16.gmra.mxu0 %v10827
      %v11490 = vpop.f32.mrf.mxu0
      %v11491 = vadd.f32 %v11402, %v11490
      %v11492 = vpop.f32.mrf.mxu0
      %v11493 = vadd.f32 %v11404, %v11492
      %11494 = vmatmul.bf16.gmra.mxu0 %v10831
      %v11495 = vpop.f32.mrf.mxu0
      %v11496 = vadd.f32 %v11407, %v11495
      %v11497 = vpop.f32.mrf.mxu0
      %v11498 = vadd.f32 %v11409, %v11497
      %11499 = vmatmul.bf16.gmra.mxu0 %v10835
      %v11500 = vpop.f32.mrf.mxu0
      %v11501 = vadd.f32 %v11412, %v11500
      %v11502 = vpop.f32.mrf.mxu0
      %v11503 = vadd.f32 %v11414, %v11502
      %11504 = vmatmul.bf16.gmra.mxu0 %v10839
      %v11505 = vpop.f32.mrf.mxu0
      %v11506 = vadd.f32 %v11417, %v11505
      %v11507 = vpop.f32.mrf.mxu0
      %v11508 = vadd.f32 %v11419, %v11507
      %11509 = vmatmul.bf16.gmra.mxu0 %v10843
      %v11510 = vpop.f32.mrf.mxu0
      %v11511 = vadd.f32 %v11422, %v11510
      %v11512 = vpop.f32.mrf.mxu0
      %v11513 = vadd.f32 %v11424, %v11512
      %11514 = vmatmul.bf16.gmra.mxu0 %v10847
      %v11515 = vpop.f32.mrf.mxu0
      %v11516 = vadd.f32 %v11427, %v11515
      %v11517 = vpop.f32.mrf.mxu0
      %v11518 = vadd.f32 %v11429, %v11517
      %11519 = vdwg.mxu0
      %11520 = vmatpush.bf16.msra.mxu0 %v11164
      %11521 = vmatpush.bf16.msra.mxu0 %v11163
      %11522 = vmatpush.bf16.msra.mxu0 %v11162
      %11523 = vmatpush.bf16.msra.mxu0 %v11161
      %11524 = vmatpush.bf16.msra.mxu0 %v11160
      %11525 = vmatpush.bf16.msra.mxu0 %v11159
      %11526 = vmatpush.bf16.msra.mxu0 %v11158
      %11527 = vmatpush.bf16.msra.mxu0 %v11157
      %11528 = vmatmul.bf16.gmra.mxu0 %v10851
      %v11529 = vpop.f32.mrf.mxu0
      %v11530 = vadd.f32 %v11441, %v11529
      %v11531 = vpop.f32.mrf.mxu0
      %v11532 = vadd.f32 %v11443, %v11531
      %11533 = vmatmul.bf16.gmra.mxu0 %v10855
      %v11534 = vpop.f32.mrf.mxu0
      %v11535 = vadd.f32 %v11446, %v11534
      %v11536 = vpop.f32.mrf.mxu0
      %v11537 = vadd.f32 %v11448, %v11536
      %11538 = vmatmul.bf16.gmra.mxu0 %v10859
      %v11539 = vpop.f32.mrf.mxu0
      %v11540 = vadd.f32 %v11451, %v11539
      %v11541 = vpop.f32.mrf.mxu0
      %v11542 = vadd.f32 %v11453, %v11541
      %11543 = vmatmul.bf16.gmra.mxu0 %v10863
      %v11544 = vpop.f32.mrf.mxu0
      %v11545 = vadd.f32 %v11456, %v11544
      %v11546 = vpop.f32.mrf.mxu0
      %v11547 = vadd.f32 %v11458, %v11546
      %11548 = vmatmul.bf16.gmra.mxu0 %v10867
      %v11549 = vpop.f32.mrf.mxu0
      %v11550 = vadd.f32 %v11461, %v11549
      %v11551 = vpop.f32.mrf.mxu0
      %v11552 = vadd.f32 %v11463, %v11551
      %11553 = vmatmul.bf16.gmra.mxu0 %v10871
      %v11554 = vpop.f32.mrf.mxu0
      %v11555 = vadd.f32 %v11466, %v11554
      %v11556 = vpop.f32.mrf.mxu0
      %v11557 = vadd.f32 %v11468, %v11556
      %11558 = vmatmul.bf16.gmra.mxu0 %v10875
      %v11559 = vpop.f32.mrf.mxu0
      %v11560 = vadd.f32 %v11471, %v11559
      %v11561 = vpop.f32.mrf.mxu0
      %v11562 = vadd.f32 %v11473, %v11561
      %11563 = vmatmul.bf16.gmra.mxu0 %v10879
      %v11564 = vpop.f32.mrf.mxu0
      %v11565 = vadd.f32 %v11476, %v11564
      %v11566 = vpop.f32.mrf.mxu0
      %v11567 = vadd.f32 %v11478, %v11566
      %11568 = vmatmul.bf16.gmra.mxu0 %v10883
      %v11569 = vpop.f32.mrf.mxu0
      %v11570 = vadd.f32 %v11481, %v11569
      %v11571 = vpop.f32.mrf.mxu0
      %v11572 = vadd.f32 %v11483, %v11571
      %11573 = vmatmul.bf16.gmra.mxu0 %v10887
      %v11574 = vpop.f32.mrf.mxu0
      %v11575 = vadd.f32 %v11486, %v11574
      %v11576 = vpop.f32.mrf.mxu0
      %v11577 = vadd.f32 %v11488, %v11576
      %11578 = vmatmul.bf16.gmra.mxu0 %v10891
      %v11579 = vpop.f32.mrf.mxu0
      %v11580 = vadd.f32 %v11491, %v11579
      %v11581 = vpop.f32.mrf.mxu0
      %v11582 = vadd.f32 %v11493, %v11581
      %11583 = vmatmul.bf16.gmra.mxu0 %v10895
      %v11584 = vpop.f32.mrf.mxu0
      %v11585 = vadd.f32 %v11496, %v11584
      %v11586 = vpop.f32.mrf.mxu0
      %v11587 = vadd.f32 %v11498, %v11586
      %11588 = vmatmul.bf16.gmra.mxu0 %v10899
      %v11589 = vpop.f32.mrf.mxu0
      %v11590 = vadd.f32 %v11501, %v11589
      %v11591 = vpop.f32.mrf.mxu0
      %v11592 = vadd.f32 %v11503, %v11591
      %11593 = vmatmul.bf16.gmra.mxu0 %v10903
      %v11594 = vpop.f32.mrf.mxu0
      %v11595 = vadd.f32 %v11506, %v11594
      %v11596 = vpop.f32.mrf.mxu0
      %v11597 = vadd.f32 %v11508, %v11596
      %11598 = vmatmul.bf16.gmra.mxu0 %v10907
      %v11599 = vpop.f32.mrf.mxu0
      %v11600 = vadd.f32 %v11511, %v11599
      %v11601 = vpop.f32.mrf.mxu0
      %v11602 = vadd.f32 %v11513, %v11601
      %11603 = vmatmul.bf16.gmra.mxu0 %v10911
      %v11604 = vpop.f32.mrf.mxu0
      %v11605 = vadd.f32 %v11516, %v11604
      %v11606 = vpop.f32.mrf.mxu0
      %v11607 = vadd.f32 %v11518, %v11606
      %11608 = vdwg.mxu0
      %11609 = vmatpush.bf16.msra.mxu0 0
      %11610 = vmatpush.bf16.msra.mxu0 0
      %11611 = vmatpush.bf16.msra.mxu0 0
      %11612 = vmatpush.bf16.msra.mxu0 0
      %11613 = vmatpush.bf16.msra.mxu0 %v11168
      %11614 = vmatpush.bf16.msra.mxu0 %v11167
      %11615 = vmatpush.bf16.msra.mxu0 %v11166
      %11616 = vmatpush.bf16.msra.mxu0 %v11165
      %11617 = vmatmul.bf16.gmra.mxu0 %v11206
      %v11618 = vpop.f32.mrf.mxu0
      %v11619 = vadd.f32 %v11530, %v11618
      %v11620 = vpop.f32.mrf.mxu0
      %v11621 = vadd.f32 %v11532, %v11620
      %11622 = vmatmul.bf16.gmra.mxu0 %v11209
      %v11623 = vpop.f32.mrf.mxu0
      %v11624 = vadd.f32 %v11535, %v11623
      %v11625 = vpop.f32.mrf.mxu0
      %v11626 = vadd.f32 %v11537, %v11625
      %11627 = vmatmul.bf16.gmra.mxu0 %v11212
      %v11628 = vpop.f32.mrf.mxu0
      %v11629 = vadd.f32 %v11540, %v11628
      %v11630 = vpop.f32.mrf.mxu0
      %v11631 = vadd.f32 %v11542, %v11630
      %11632 = vmatmul.bf16.gmra.mxu0 %v11215
      %v11633 = vpop.f32.mrf.mxu0
      %v11634 = vadd.f32 %v11545, %v11633
      %v11635 = vpop.f32.mrf.mxu0
      %v11636 = vadd.f32 %v11547, %v11635
      %11637 = vmatmul.bf16.gmra.mxu0 %v11218
      %v11638 = vpop.f32.mrf.mxu0
      %v11639 = vadd.f32 %v11550, %v11638
      %v11640 = vpop.f32.mrf.mxu0
      %v11641 = vadd.f32 %v11552, %v11640
      %11642 = vmatmul.bf16.gmra.mxu0 %v11221
      %v11643 = vpop.f32.mrf.mxu0
      %v11644 = vadd.f32 %v11555, %v11643
      %v11645 = vpop.f32.mrf.mxu0
      %v11646 = vadd.f32 %v11557, %v11645
      %11647 = vmatmul.bf16.gmra.mxu0 %v11224
      %v11648 = vpop.f32.mrf.mxu0
      %v11649 = vadd.f32 %v11560, %v11648
      %v11650 = vpop.f32.mrf.mxu0
      %v11651 = vadd.f32 %v11562, %v11650
      %11652 = vmatmul.bf16.gmra.mxu0 %v11227
      %v11653 = vpop.f32.mrf.mxu0
      %v11654 = vadd.f32 %v11565, %v11653
      %v11655 = vpop.f32.mrf.mxu0
      %v11656 = vadd.f32 %v11567, %v11655
      %11657 = vmatmul.bf16.gmra.mxu0 %v11230
      %v11658 = vpop.f32.mrf.mxu0
      %v11659 = vadd.f32 %v11570, %v11658
      %v11660 = vpop.f32.mrf.mxu0
      %v11661 = vadd.f32 %v11572, %v11660
      %11662 = vmatmul.bf16.gmra.mxu0 %v11233
      %v11663 = vpop.f32.mrf.mxu0
      %v11664 = vadd.f32 %v11575, %v11663
      %v11665 = vpop.f32.mrf.mxu0
      %v11666 = vadd.f32 %v11577, %v11665
      %11667 = vmatmul.bf16.gmra.mxu0 %v11236
      %v11668 = vpop.f32.mrf.mxu0
      %v11669 = vadd.f32 %v11580, %v11668
      %v11670 = vpop.f32.mrf.mxu0
      %v11671 = vadd.f32 %v11582, %v11670
      %11672 = vmatmul.bf16.gmra.mxu0 %v11239
      %v11673 = vpop.f32.mrf.mxu0
      %v11674 = vadd.f32 %v11585, %v11673
      %v11675 = vpop.f32.mrf.mxu0
      %v11676 = vadd.f32 %v11587, %v11675
      %11677 = vmatmul.bf16.gmra.mxu0 %v11242
      %v11678 = vpop.f32.mrf.mxu0
      %v11679 = vadd.f32 %v11590, %v11678
      %v11680 = vpop.f32.mrf.mxu0
      %v11681 = vadd.f32 %v11592, %v11680
      %11682 = vmatmul.bf16.gmra.mxu0 %v11245
      %v11683 = vpop.f32.mrf.mxu0
      %v11684 = vadd.f32 %v11595, %v11683
      %v11685 = vpop.f32.mrf.mxu0
      %v11686 = vadd.f32 %v11597, %v11685
      %11687 = vmatmul.bf16.gmra.mxu0 %v11248
      %v11688 = vpop.f32.mrf.mxu0
      %v11689 = vadd.f32 %v11600, %v11688
      %v11690 = vpop.f32.mrf.mxu0
      %v11691 = vadd.f32 %v11602, %v11690
      %11692 = vmatmul.bf16.gmra.mxu0 %v11251
      %v11693 = vpop.f32.mrf.mxu0
      %v11694 = vadd.f32 %v11605, %v11693
      %v11695 = vpop.f32.mrf.mxu0
      %v11696 = vadd.f32 %v11607, %v11695
      %11697 = vdwg.mxu0
      %v11698 = vmax.f32 %v11619, 0.0
      %v11699 = vmax.f32 %v11621, 0.0
      %v11700 = vmax.f32 %v11624, 0.0
      %v11701 = vmax.f32 %v11626, 0.0
      %v11702 = vmax.f32 %v11629, 0.0
      %v11703 = vmax.f32 %v11631, 0.0
      %v11704 = vmax.f32 %v11634, 0.0
      %v11705 = vmax.f32 %v11636, 0.0
      %v11706 = vmax.f32 %v11639, 0.0
      %v11707 = vmax.f32 %v11641, 0.0
      %v11708 = vmax.f32 %v11644, 0.0
      %v11709 = vmax.f32 %v11646, 0.0
      %v11710 = vmax.f32 %v11649, 0.0
      %v11711 = vmax.f32 %v11651, 0.0
      %v11712 = vmax.f32 %v11654, 0.0
      %v11713 = vmax.f32 %v11656, 0.0
      %v11714 = vmax.f32 %v11659, 0.0
      %v11715 = vmax.f32 %v11661, 0.0
      %v11716 = vmax.f32 %v11664, 0.0
      %v11717 = vmax.f32 %v11666, 0.0
      %v11718 = vmax.f32 %v11669, 0.0
      %v11719 = vmax.f32 %v11671, 0.0
      %v11720 = vmax.f32 %v11674, 0.0
      %v11721 = vmax.f32 %v11676, 0.0
      %v11722 = vmax.f32 %v11679, 0.0
      %v11723 = vmax.f32 %v11681, 0.0
      %v11724 = vmax.f32 %v11684, 0.0
      %v11725 = vmax.f32 %v11686, 0.0
      %v11726 = vmax.f32 %v11689, 0.0
      %v11727 = vmax.f32 %v11691, 0.0
      %v11728 = vmax.f32 %v11694, 0.0
      %v11729 = vmax.f32 %v11696, 0.0
      %v11730 = vld [vmem:[%s7] sm:$0x1]
      %v11731 = vld [vmem:[#allocation5] sm:$0x1]
      %11733 = vset.pattern.permute.xlu0 0
      %11734 = vperm.xlu0 %11733, %v11731
      %v11735 = vpop.permute.xlu0 %11734
      %v11737 = vperm.slane %v11735, 0
      %11738 = vmatpush.xpose.msra.mxu0 %v11713
      %11739 = vmatpush.xpose.msra.mxu0 %v11712
      %11740 = vmatpush.xpose.msra.mxu0 %v11711
      %11741 = vmatpush.xpose.msra.mxu0 %v11710
      %11742 = vmatpush.xpose.msra.mxu0 %v11709
      %11743 = vmatpush.xpose.msra.mxu0 %v11708
      %11744 = vmatpush.xpose.msra.mxu0 %v11707
      %11745 = vmatpush.xpose.msra.mxu0 %v11706
      %11746 = vmatpush.xpose.msra.mxu0 %v11705
      %11747 = vmatpush.xpose.msra.mxu0 %v11704
      %11748 = vmatpush.xpose.msra.mxu0 %v11703
      %11749 = vmatpush.xpose.msra.mxu0 %v11702
      %11750 = vmatpush.xpose.msra.mxu0 %v11701
      %11751 = vmatpush.xpose.msra.mxu0 %v11700
      %11752 = vmatpush.xpose.msra.mxu0 %v11699
      %11753 = vmatpush.xpose.msra.mxu0 %v11698
      %11754 = vmatmul.f32.gmra.mxu0 %v11730
      %v11755 = vpop.f32.mrf.mxu0
      %v11756 = vadd.f32 %v11737, %v11755
      %11757 = vdwg.mxu0
      %11758 = vmatpush.xpose.msra.mxu0 %v11729
      %11759 = vmatpush.xpose.msra.mxu0 %v11728
      %11760 = vmatpush.xpose.msra.mxu0 %v11727
      %11761 = vmatpush.xpose.msra.mxu0 %v11726
      %11762 = vmatpush.xpose.msra.mxu0 %v11725
      %11763 = vmatpush.xpose.msra.mxu0 %v11724
      %11764 = vmatpush.xpose.msra.mxu0 %v11723
      %11765 = vmatpush.xpose.msra.mxu0 %v11722
      %11766 = vmatpush.xpose.msra.mxu0 %v11721
      %11767 = vmatpush.xpose.msra.mxu0 %v11720
      %11768 = vmatpush.xpose.msra.mxu0 %v11719
      %11769 = vmatpush.xpose.msra.mxu0 %v11718
      %11770 = vmatpush.xpose.msra.mxu0 %v11717
      %11771 = vmatpush.xpose.msra.mxu0 %v11716
      %11772 = vmatpush.xpose.msra.mxu0 %v11715
      %11773 = vmatpush.xpose.msra.mxu0 %v11714
      %11774 = vmatmul.f32.gmra.mxu0 %v11730
      %v11775 = vpop.f32.mrf.mxu0
      %v11776 = vadd.f32 %v11737, %v11775
      %11777 = vdwg.mxu0
      %v11780 = vrot.slane %v11776, 7
      %vm11781 = vcmask 1040384
      %v11782 = vsel %vm11781, %v11756, %v11780
      %v11784 = vlaneseq
      %vm11785 = vcmp.ge.s32.totalorder %v11784, 0
      %vm11786 = vcmp.lt.s32.totalorder %v11784, 256
      %vm11787 = vmand %vm11785, %vm11786
      %11788 = vst.msk [vmem:[%s332] sm:$0x3] %vm11787, %v11782
      %p11789 = scmp.lt.s32.totalorder %s22, 1
      %s11790 = scalar_select %p11789, %s22, 1
      %s11791 = smul.addr %s11790, 2
      %s11792 = scalar_lea.vmem %s9, %s11791
      // Predicated region
      $region57: #{baseline_cnn_pallas.1} parent=55 // pred_check
        %p11793 = pneg %p234
      $region58: #{baseline_cnn_pallas.1} parent=55 // pred_check_branch
        %11795 = sbr.rel (%p11793) target = $region60
      $region59: #{baseline_cnn_pallas.1} parent=55 // pred_region
        _
      $region60: #{baseline_cnn_pallas.1} parent=55 // pred_fallthru
        _
    $region56: #{baseline_cnn_pallas.1} parent=5 // pred_fallthru
      _
    %p11796 = scmp.le.s32.totalorder 2, %s17
    // Predicated region
    $region61: #{baseline_cnn_pallas.1} parent=5 // pred_check
      %p11797 = pneg %p11796
    $region62: #{baseline_cnn_pallas.1} parent=5 // pred_check_branch
      %11799 = sbr.rel (%p11797) target = $region64
    $region63: #{baseline_cnn_pallas.1} parent=5 // pred_region
      %s11800 = ssub.s32 %s17, 2
      // Predicated region
      $region65: #{baseline_cnn_pallas.1} parent=63 // pred_check
        %p11801 = pneg %p240
      $region66: #{baseline_cnn_pallas.1} parent=63 // pred_check_branch
        %11803 = sbr.rel (%p11801) target = $region68
      $region67: #{baseline_cnn_pallas.1} parent=63 // pred_region
        %p11804 = scmp.lt.s32.totalorder %s23, 1
        %s11805 = scalar_select %p11804, %s23, 1
        %s11806 = smul.addr %s11805, 2
        %s11807 = scalar_lea.vmem %s9, %s11806
      $region68: #{baseline_cnn_pallas.1} parent=63 // pred_fallthru
        _
    $region64: #{baseline_cnn_pallas.1} parent=5 // pred_fallthru
      _
  $region6: #{baseline_cnn_pallas.1} parent=0 // loop_footer
    %s21 = sadd.s32 1, %s17
  $region7: #{baseline_cnn_pallas.1} parent=0 // loop_footer_branch
    %16 = sbr.rel target = $region3
  $region8: #{baseline_cnn_pallas.1} parent=0 // loop_exit
    _

</llo_original>
